<compile_context>
chip_gen: v7x
topology: tpu7x:2x2x1
jax: 0.10.0
libtpu: 0.0.40
codegen_flags: <defaults>
</compile_context>

<pallas_src>
import numpy as np

import jax
import jax.numpy as jnp
from jax import lax
from jax.experimental import pallas as pl
from jax.experimental.pallas import tpu as pltpu


# ----------------------------------------------------------------------------
# Fused Pallas kernel
# ----------------------------------------------------------------------------
def _make_fused_kernel(nb, T, dim, num_heads, relational):
    hd = dim // num_heads
    rows = nb * T

    def kernel(*refs):
        if relational:
            (x_ref, wqkv_ref, bias_ref, wproj_ref, bproj_ref,
             rel_ref, alpha_ref, o_ref, qkv_scr, head_out_scr) = refs
        else:
            (x_ref, wqkv_ref, bias_ref, wproj_ref, bproj_ref,
             o_ref, qkv_scr, head_out_scr) = refs

        # (nb, T, Cin) -> (nb*T, Cin), bf16 operands for the MXU.
        x = x_ref[...].reshape(rows, -1).astype(jnp.bfloat16)

        # One wide fused QKV projection (fills the 256-wide MXU; a single
        # weight push instead of 3*H narrow N=head_dim matmuls).  The softmax
        # scale is already folded into the q columns of the packed weight.
        qkv_scr[...] = jnp.dot(
            x, wqkv_ref[...], preferred_element_type=jnp.float32
        ).astype(jnp.bfloat16)

        if relational:
            alpha = alpha_ref[0]          # SMEM read hoisted out of the loop

        # Static unroll over heads (fine at this H/T).
        # TODO(synk): for larger H or T move heads onto a second "arbitrary"
        # grid axis with per-head (1, T, T) bias blocks to bound live ranges
        # and stream the bias tables (VMEM headroom on v7x's 64 MiB part).
        for h in range(num_heads):
            q_sl = slice(h * hd, (h + 1) * hd)
            k_sl = slice(dim + h * hd, dim + (h + 1) * hd)
            v_sl = slice(2 * dim + h * hd, 2 * dim + (h + 1) * hd)
            qh = qkv_scr[:, q_sl].reshape(nb, T, hd)
            kh = qkv_scr[:, k_sl].reshape(nb, T, hd)
            vh = qkv_scr[:, v_sl].reshape(nb, T, hd)

            # scores q @ k^T (f32 accumulate) + pre-combined, pre-scaled bias.
            s = jnp.einsum("bqd,bkd->bqk", qh, kh,
                           preferred_element_type=jnp.float32)        # (nb,T,T)
            s = s + bias_ref[h].astype(jnp.float32)

            # softmax: max-subtracted, divide via the EUP reciprocal slot.
            s = s - jnp.max(s, axis=-1, keepdims=True)
            p = jnp.exp(s)
            p = p * pl.reciprocal(jnp.sum(p, axis=-1, keepdims=True), approx=True)

            if relational:
                p = alpha * p + rel_ref[h].astype(jnp.float32)

            oh = jnp.einsum("bqk,bkd->bqd", p.astype(jnp.bfloat16), vh,
                            preferred_element_type=jnp.float32)       # (nb,T,hd)
            # Stash this head's output at its lane offset so the output
            # projection becomes ONE K=dim matmul (instead of H K=hd matmuls
            # plus H full-tile f32 adds); also bounds the acc live range.
            head_out_scr[:, q_sl] = oh.reshape(rows, hd).astype(jnp.bfloat16)

        out = jnp.dot(head_out_scr[...], wproj_ref[...],
                      preferred_element_type=jnp.float32) + bproj_ref[...]
        o_ref[...] = out.reshape(nb, T, dim)

    return kernel


def coupled_attention_pallas(x, prepared, num_heads, *, batch_block=None,
                             single_buffer_consts=True):
    """Fused CoupledAttention forward.  x: (N, T, Cin) f32 -> (N, T, dim) f32."""
    N, T, Cin = x.shape
    dim = prepared["b_proj"].shape[-1]
    hd = dim // num_heads
    rel = prepared.get("rel")
    relational = rel is not None

    if batch_block is None:
        # Largest divisor of N that keeps >=2 grid steps (megacore balance) and
        # at most ~1024 rows of matmul work per step.
        batch_block = 1
        for cand in range(1, N + 1):
            if N % cand == 0 and cand * T <= 1024 and (N // cand >= 2 or N <= 1):
                batch_block = cand
    nb = batch_block
    rows = nb * T
    grid = (N // nb,)

    kernel = _make_fused_kernel(nb, T, dim, num_heads, relational)

    def const_spec(shape):
        ndim = len(shape)

        def index_map(n):
            return (0,) * ndim

        if single_buffer_consts:
            # Constant over the grid -> single buffer (halves resident VMEM).
            return pl.BlockSpec(shape, index_map, pipeline_mode=pl.Buffered(1))
        return pl.BlockSpec(shape, index_map)

    in_specs = [
        pl.BlockSpec((nb, T, Cin), lambda n: (n, 0, 0)),
        const_spec(prepared["wqkv_t"].shape),
        const_spec(prepared["bias"].shape),
        const_spec(prepared["wproj_t"].shape),
        const_spec(prepared["b_proj"].shape),
    ]
    inputs = [x, prepared["wqkv_t"], prepared["bias"],
              prepared["wproj_t"], prepared["b_proj"]]
    if relational:
        in_specs += [const_spec(rel.shape),
                     pl.BlockSpec(memory_space=pltpu.MemorySpace.SMEM)]  # alpha
        inputs += [rel, prepared["alpha"]]

    # Advisory cost estimate for XLA's scheduler around the custom call.
    flops = (2 * N * T * Cin * 3 * dim            # fused qkv projection
             + 4 * N * num_heads * T * T * hd     # scores + attn @ v
             + 2 * N * T * dim * dim)             # output projection
    const_bytes = sum(int(a.size) * a.dtype.itemsize for a in inputs[1:])
    cost = pl.CostEstimate(
        flops=int(flops),
        transcendentals=int(N * num_heads * T * T),
        bytes_accessed=int(x.size * x.dtype.itemsize + N * T * dim * 4
                           + const_bytes))

    # Only raise the scoped VMEM limit when the resident tables actually need
    # it (matters once H*T^2 grows, esp. on v7x); no-op at these shapes.
    resident = (const_bytes * (1 if single_buffer_consts else 2)
                + 2 * (rows * Cin * 4 + rows * dim * 4)      # x / out, 2 bufs
                + rows * 3 * dim * 2 + rows * dim * 2)       # bf16 scratches
    compiler_kwargs = dict(dimension_semantics=("parallel",))
    if resident > (30 << 20):
        compiler_kwargs["vmem_limit_bytes"] = min(int(resident * 5 // 4), 100 << 20)

    return pl.pallas_call(
        kernel,
        out_shape=jax.ShapeDtypeStruct((N, T, dim), jnp.float32),
        grid_spec=pltpu.PrefetchScalarGridSpec(
            num_scalar_prefetch=0,
            grid=grid,
            in_specs=in_specs,
            out_specs=pl.BlockSpec((nb, T, dim), lambda n: (n, 0, 0)),
            scratch_shapes=[
                pltpu.VMEM((rows, 3 * dim), jnp.bfloat16),   # fused QKV acts
                pltpu.VMEM((rows, dim), jnp.bfloat16),       # per-head outputs
            ],
        ),
        compiler_params=pltpu.CompilerParams(**compiler_kwargs),
        cost_estimate=cost,
    )(*inputs)


def coupled_forward(x, prepared, num_heads):
    """Forward with graceful fallback if single-buffered constants are rejected."""
    try:
        out = coupled_attention_pallas(x, prepared, num_heads,
                                       single_buffer_consts=True)
        return jax.block_until_ready(out)
    except Exception:
        # pl.Buffered(1) not supported on this jax/libtpu build: identical
        # semantics with default double-buffering.
        out = coupled_attention_pallas(x, prepared, num_heads,
                                       single_buffer_consts=False)
        return jax.block_until_ready(out)


# ----------------------------------------------------------------------------
# One-time parameter repacking (input independent; done outside the hot path).
# ----------------------------------------------------------------------------
def prepare_params(params, bias_hop, bias_temp, num_heads, scale,
                   rel=None, alpha=None):
    dim = params["w_proj"].shape[0]
    w_qkv = params["w_qkv"]                                   # (3*dim, Cin)
    w_q, w_k, w_v = w_qkv[:dim], w_qkv[dim:2 * dim], w_qkv[2 * dim:]

    # One fused, pre-transposed (Cin, 3*dim) bf16 weight; softmax scale folded
    # into the q columns so the kernel never multiplies scores by `scale`.
    wqkv_t = jnp.concatenate([w_q.T * scale, w_k.T, w_v.T], axis=1)

    # Small (H, T, T) tables stay f32 (v5e has no bf16 VPU path; avoids the
    # per-head in-loop upcast); switch to bf16 only once they get large.
    H, T, _ = bias_hop.shape
    table_dtype = jnp.float32 if (H * T * T * 4) <= (8 << 20) else jnp.bfloat16

    prepared = {
        "wqkv_t": wqkv_t.astype(jnp.bfloat16),                           # (Cin, 3*dim)
        "wproj_t": params["w_proj"].T.astype(jnp.bfloat16),              # (dim, dim)
        "b_proj": params["b_proj"].reshape(1, dim).astype(jnp.float32),  # (1, dim)
        "bias": ((bias_hop + bias_temp) * scale).astype(table_dtype),    # (H, T, T)
    }
    if rel is not None:
        prepared["rel"] = rel.astype(table_dtype)
        prepared["alpha"] = alpha.reshape(1).astype(jnp.float32)
    return prepared


# ----------------------------------------------------------------------------
# Parameter setup & relative-position-bias "modules" (plain JAX glue).
# TODO(synk): DynamicRelativePositionBias1D / HopRelativePositionBias internals
# are not given in the reference source; they are implemented here as small
# MLPs over (relative frame index) / (graph hop distance) producing per-head
# (T, T) bias tables, computed deterministically as parameter-only setup.
# ----------------------------------------------------------------------------
def init_params(key, dim_in, dim, num_heads):
    ks = jax.random.split(key, 8)

    def lin(k, out_f, in_f):
        return (jax.random.normal(k, (out_f, in_f), jnp.float32)
                / np.sqrt(float(in_f)))

    return {
        "w_qkv": lin(ks[0], 3 * dim, dim_in),                 # qkv_bias=False
        "w_proj": lin(ks[1], dim, dim),
        "b_proj": 0.02 * jax.random.normal(ks[2], (dim,), jnp.float32),
        # temporal RPB mlp (1 -> dim -> num_heads)
        "t_w1": lin(ks[3], dim, 1), "t_b1": jnp.zeros((dim,), jnp.float32),
        "t_w2": lin(ks[4], num_heads, dim), "t_b2": jnp.zeros((num_heads,), jnp.float32),
        # hop RPB mlp (1 -> dim -> num_heads)
        "h_w1": lin(ks[5], dim, 1), "h_b1": jnp.zeros((dim,), jnp.float32),
        "h_w2": lin(ks[6], num_heads, dim), "h_b2": jnp.zeros((num_heads,), jnp.float32),
    }


def _mlp_table(vals, w1, b1, w2, b2):
    h = jax.nn.relu(vals @ w1.T + b1)          # (K, mlp_dim)
    return h @ w2.T + b2                       # (K, num_heads)


def temporal_rpb_bias(params, num_heads, num_frames, num_points):
    F, P = num_frames, num_points
    rel = (jnp.arange(2 * F - 1, dtype=jnp.float32) - (F - 1)) / max(F - 1, 1)
    table = _mlp_table(rel[:, None], params["t_w1"], params["t_b1"],
                       params["t_w2"], params["t_b2"])                 # (2F-1, H)
    idx = jnp.arange(F)[:, None] - jnp.arange(F)[None, :] + (F - 1)     # (F, F)
    bias_f = jnp.transpose(table[idx], (2, 0, 1))                       # (H, F, F)
    # expand each frame entry to a (P, P) block (frame-major token ordering)
    return jnp.repeat(jnp.repeat(bias_f, P, axis=1), P, axis=2)         # (H, T, T)


def get_hop_distance(adj, max_hop):
    V = adj.shape[0]
    mats = [np.linalg.matrix_power(adj.astype(np.int64), d) > 0
            for d in range(max_hop + 1)]
    hop = np.full((V, V), max_hop + 1, dtype=np.int32)
    for d in range(max_hop, -1, -1):
        hop[mats[d]] = d
    return hop


def hop_rpb_bias(params, hop, num_heads, num_frames, max_hop):
    vals = jnp.arange(max_hop + 2, dtype=jnp.float32)[:, None] / (max_hop + 1)
    table = _mlp_table(vals, params["h_w1"], params["h_b1"],
                       params["h_w2"], params["h_b2"])                  # (max_hop+2, H)
    bias_j = jnp.transpose(table[jnp.asarray(hop)], (2, 0, 1))           # (H, V, V)
    return jnp.tile(bias_j, (1, num_frames, num_frames))                 # (H, T, T)


# ----------------------------------------------------------------------------
# Pure-JAX reference (full f32, original bias/scale formulation) for checking.
# ----------------------------------------------------------------------------
def reference_forward(x, params, bias_hop, bias_temp, num_heads, scale,
                      rel=None, alpha=None):
    HI = lax.Precision.HIGHEST
    N, T, _ = x.shape
    dim = params["w_proj"].shape[0]
    head_dim = dim // num_heads
    qkv = jnp.einsum("ntc,oc->nto", x, params["w_qkv"], precision=HI)
    qkv = qkv.reshape(N, T, 3, num_heads, head_dim)
    qkv = jnp.transpose(qkv, (2, 0, 3, 1, 4))
    q, k, v = qkv[0], qkv[1], qkv[2]
    attn = jnp.einsum("nhtc,nhsc->nhts", q, k, precision=HI)
    attn = (attn + bias_hop + bias_temp) * scale
    attn = jax.nn.softmax(attn, axis=-1)
    if rel is not None:
        attn = alpha[0] * attn + rel
    xo = jnp.einsum("nhts,nhsc->nhtc", attn, v, precision=HI)
    xo = jnp.transpose(xo, (0, 2, 1, 3)).reshape(N, T, dim)
    return jnp.einsum("ntc,oc->nto", xo, params["w_proj"], precision=HI) + params["b_proj"]


if __name__ == "__main__":
    # Small, module-consistent shapes.
    num_heads = 4
    dim = 128
    dim_in = 64
    num_points = 8
    num_frames = 16
    T = num_points * num_frames          # 128
    N = 4                                # -> batch-blocked grid of 2 parallel steps
    head_dim = dim // num_heads
    scale = head_dim ** (-0.5)

    # Deterministic skeleton adjacency A (3 partitions over a ring of joints).
    eye = np.eye(num_points, dtype=np.float32)
    A_np = np.stack([eye, np.roll(eye, 1, axis=1), np.roll(eye, -1, axis=1)])  # (3, V, V)
    max_hop = num_points // 2
    hop = get_hop_distance(A_np.sum(0) > 0, max_hop)

    key = jax.random.PRNGKey(0)
    kx, kp = jax.random.split(key)
    params = init_params(kp, dim_in, dim, num_heads)
    x = jax.random.normal(kx, (N, T, dim_in), jnp.float32)

    bias_temp = temporal_rpb_bias(params, num_heads, num_frames, num_points)   # (H, T, T)
    bias_hop = hop_rpb_bias(params, hop, num_heads, num_frames, max_hop)       # (H, T, T)

    # relational_bias parameters (torch: outer = per-head row-normalized A.sum(0),
    # alpha = zeros(1), attn_relational = block_diag of outer over frames).
    A2 = A_np.sum(0)
    A2 = A2 / A2.sum(axis=-1, keepdims=True)
    outer = jnp.stack([jnp.asarray(A2, jnp.float32)] * num_heads)               # (H, V, V)
    rel = jnp.stack([jnp.kron(jnp.eye(num_frames, dtype=jnp.float32), outer[h])
                     for h in range(num_heads)])                                # (H, T, T)
    alpha = jnp.zeros((1,), jnp.float32)

    for relational in (False, True):
        r = rel if relational else None
        a = alpha if relational else None
        prepared = prepare_params(params, bias_hop, bias_temp, num_heads, scale,
                                  rel=r, alpha=a)
        out = coupled_forward(x, prepared, num_heads)
        ref = reference_forward(x, params, bias_hop, bias_temp,
                                num_heads, scale, rel=r, alpha=a)
        assert out.shape == (N, T, dim)
        assert bool(jnp.all(jnp.isfinite(out)))
        max_err = float(jnp.max(jnp.abs(out - ref)))
        assert max_err < 2e-2, f"mismatch (relational={relational}): {max_err}"

    print("KERNEL_OK")
</pallas_src>

<mosaic_0001>
module attributes {stable_mosaic.version = 11 : i64} {
  func.func @kernel(%arg0: i32, %arg1: memref<2x128x64xf32, #tpu.memory_space<vmem>>, %arg2: memref<64x384xbf16, #tpu.memory_space<vmem>>, %arg3: memref<4x128x128xf32, #tpu.memory_space<vmem>>, %arg4: memref<128x128xbf16, #tpu.memory_space<vmem>>, %arg5: memref<1x128xf32, #tpu.memory_space<vmem>>, %arg6: memref<2x128x128xf32, #tpu.memory_space<vmem>>, %arg7: memref<256x384xbf16, #tpu.memory_space<vmem>>, %arg8: memref<256x128xbf16, #tpu.memory_space<vmem>>) attributes {dimension_semantics = [#tpu.dimension_semantics<parallel>], iteration_bounds = array<i64: 2>, scalar_prefetch = 0 : i64, scratch_operands = 2 : i64, tpu.core_type = #tpu.core_type<tc>, window_params = [{transform_indices = @transform_0, window_bounds = array<i64: 2, 128, 64>}, {pipeline_mode = #tpu.pipeline_mode<synchronous>, transform_indices = @transform_1, window_bounds = array<i64: 64, 384>}, {pipeline_mode = #tpu.pipeline_mode<synchronous>, transform_indices = @transform_2, window_bounds = array<i64: 4, 128, 128>}, {pipeline_mode = #tpu.pipeline_mode<synchronous>, transform_indices = @transform_3, window_bounds = array<i64: 128, 128>}, {pipeline_mode = #tpu.pipeline_mode<synchronous>, transform_indices = @transform_4, window_bounds = array<i64: 1, 128>}, {transform_indices = @transform_5, window_bounds = array<i64: 2, 128, 128>}]} {
    %c0 = arith.constant 0 : index
    %c0_0 = arith.constant 0 : index
    %c0_1 = arith.constant 0 : index
    %0 = vector.load %arg1[%c0, %c0_0, %c0_1] : memref<2x128x64xf32, #tpu.memory_space<vmem>>, vector<2x128x64xf32>
    %1 = vector.shape_cast %0 : vector<2x128x64xf32> to vector<256x64xf32>
    %2 = arith.truncf %1 : vector<256x64xf32> to vector<256x64xbf16>
    %c0_2 = arith.constant 0 : index
    %c0_3 = arith.constant 0 : index
    %3 = vector.load %arg2[%c0_2, %c0_3] : memref<64x384xbf16, #tpu.memory_space<vmem>>, vector<64x384xbf16>
    %cst = arith.constant dense<0.000000e+00> : vector<256x384xf32>
    %4 = tpu.matmul %2, %3, %cst {dimension_numbers = #tpu.dot_dimension_numbers<[1], [0], [0], [1], [0, 0, 1, 1], [], []>} : vector<256x64xbf16>, vector<64x384xbf16>, vector<256x384xf32> -> vector<256x384xf32>
    %5 = arith.truncf %4 : vector<256x384xf32> to vector<256x384xbf16>
    %c0_4 = arith.constant 0 : index
    %c0_5 = arith.constant 0 : index
    %6 = vector.load %arg7[%c0_4, %c0_5] : memref<256x384xbf16, #tpu.memory_space<vmem>>, vector<256x384xbf16>
    tpu.vector_store %arg7[%c0_4, %c0_5], %5 {strides = array<i32>} : memref<256x384xbf16, #tpu.memory_space<vmem>>, vector<256x384xbf16>,
    %c0_6 = arith.constant 0 : index
    %c0_7 = arith.constant 0 : index
    %7 = vector.load %arg7[%c0_6, %c0_7] : memref<256x384xbf16, #tpu.memory_space<vmem>>, vector<256x32xbf16>
    %8 = vector.shape_cast %7 : vector<256x32xbf16> to vector<2x128x32xbf16>
    %c0_8 = arith.constant 0 : index
    %c128 = arith.constant 128 : index
    %9 = vector.load %arg7[%c0_8, %c128] : memref<256x384xbf16, #tpu.memory_space<vmem>>, vector<256x32xbf16>
    %10 = vector.shape_cast %9 : vector<256x32xbf16> to vector<2x128x32xbf16>
    %c0_9 = arith.constant 0 : index
    %c256 = arith.constant 256 : index
    %11 = vector.load %arg7[%c0_9, %c256] : memref<256x384xbf16, #tpu.memory_space<vmem>>, vector<256x32xbf16>
    %12 = vector.shape_cast %11 : vector<256x32xbf16> to vector<2x128x32xbf16>
    "tpu.trace_start"() <{level = 10 : i32, message = "bqd,bkd->bqk"}> : () -> ()
    %cst_10 = arith.constant dense<0.000000e+00> : vector<2x128x128xf32>
    %13 = tpu.matmul %8, %10, %cst_10 {dimension_numbers = #tpu.dot_dimension_numbers<[2], [2], [1], [1], [0, 0, 0, 1, 1, 1], [0], [0]>} : vector<2x128x32xbf16>, vector<2x128x32xbf16>, vector<2x128x128xf32> -> vector<2x128x128xf32>
    "tpu.trace_stop"() : () -> ()
    %c0_11 = arith.constant 0 : index
    %c0_12 = arith.constant 0 : index
    %c0_13 = arith.constant 0 : index
    %14 = vector.load %arg3[%c0_11, %c0_12, %c0_13] : memref<4x128x128xf32, #tpu.memory_space<vmem>>, vector<1x128x128xf32>
    %15 = vector.shape_cast %14 : vector<1x128x128xf32> to vector<128x128xf32>
    %16 = vector.shape_cast %15 : vector<128x128xf32> to vector<1x128x128xf32>
    %17 = vector.broadcast %16 : vector<1x128x128xf32> to vector<2x128x128xf32>
    %18 = arith.addf %13, %17 : vector<2x128x128xf32>
    %cst_14 = arith.constant dense<0xFF800000> : vector<2x128xf32>
    %19 = vector.multi_reduction <maximumf>, %18, %cst_14 [2] : vector<2x128x128xf32> to vector<2x128xf32>
    %20 = vector.shape_cast %19 : vector<2x128xf32> to vector<2x128x1xf32>
    %21 = vector.broadcast %20 : vector<2x128x1xf32> to vector<2x128x128xf32>
    %22 = arith.subf %18, %21 : vector<2x128x128xf32>
    %23 = math.exp %22 : vector<2x128x128xf32>
    %cst_15 = arith.constant dense<0.000000e+00> : vector<2x128xf32>
    %24 = vector.multi_reduction <add>, %23, %cst_15 [2] : vector<2x128x128xf32> to vector<2x128xf32>
    %25 = vector.shape_cast %24 : vector<2x128xf32> to vector<2x128x1xf32>
    %26 = tpu.reciprocal %25 {approx = true} : vector<2x128x1xf32> -> vector<2x128x1xf32>
    %27 = vector.broadcast %26 : vector<2x128x1xf32> to vector<2x128x128xf32>
    %28 = arith.mulf %23, %27 : vector<2x128x128xf32>
    %29 = arith.truncf %28 : vector<2x128x128xf32> to vector<2x128x128xbf16>
    "tpu.trace_start"() <{level = 10 : i32, message = "bqk,bkd->bqd"}> : () -> ()
    %cst_16 = arith.constant dense<0.000000e+00> : vector<2x128x32xf32>
    %30 = tpu.matmul %29, %12, %cst_16 {dimension_numbers = #tpu.dot_dimension_numbers<[2], [1], [1], [2], [0, 0, 0, 1, 1, 2], [0], [0]>} : vector<2x128x128xbf16>, vector<2x128x32xbf16>, vector<2x128x32xf32> -> vector<2x128x32xf32>
    "tpu.trace_stop"() : () -> ()
    %31 = vector.shape_cast %30 : vector<2x128x32xf32> to vector<256x32xf32>
    %32 = arith.truncf %31 : vector<256x32xf32> to vector<256x32xbf16>
    %c0_17 = arith.constant 0 : index
    %c0_18 = arith.constant 0 : index
    %33 = vector.load %arg8[%c0_17, %c0_18] : memref<256x128xbf16, #tpu.memory_space<vmem>>, vector<256x32xbf16>
    tpu.vector_store %arg8[%c0_17, %c0_18], %32 {strides = array<i32>} : memref<256x128xbf16, #tpu.memory_space<vmem>>, vector<256x32xbf16>,
    %c0_19 = arith.constant 0 : index
    %c32 = arith.constant 32 : index
    %34 = vector.load %arg7[%c0_19, %c32] : memref<256x384xbf16, #tpu.memory_space<vmem>>, vector<256x32xbf16>
    %35 = vector.shape_cast %34 : vector<256x32xbf16> to vector<2x128x32xbf16>
    %c0_20 = arith.constant 0 : index
    %c160 = arith.constant 160 : index
    %36 = vector.load %arg7[%c0_20, %c160] : memref<256x384xbf16, #tpu.memory_space<vmem>>, vector<256x32xbf16>
    %37 = vector.shape_cast %36 : vector<256x32xbf16> to vector<2x128x32xbf16>
    %c0_21 = arith.constant 0 : index
    %c288 = arith.constant 288 : index
    %38 = vector.load %arg7[%c0_21, %c288] : memref<256x384xbf16, #tpu.memory_space<vmem>>, vector<256x32xbf16>
    %39 = vector.shape_cast %38 : vector<256x32xbf16> to vector<2x128x32xbf16>
    "tpu.trace_start"() <{level = 10 : i32, message = "bqd,bkd->bqk"}> : () -> ()
    %cst_22 = arith.constant dense<0.000000e+00> : vector<2x128x128xf32>
    %40 = tpu.matmul %35, %37, %cst_22 {dimension_numbers = #tpu.dot_dimension_numbers<[2], [2], [1], [1], [0, 0, 0, 1, 1, 1], [0], [0]>} : vector<2x128x32xbf16>, vector<2x128x32xbf16>, vector<2x128x128xf32> -> vector<2x128x128xf32>
    "tpu.trace_stop"() : () -> ()
    %c1 = arith.constant 1 : index
    %c0_23 = arith.constant 0 : index
    %c0_24 = arith.constant 0 : index
    %41 = vector.load %arg3[%c1, %c0_23, %c0_24] : memref<4x128x128xf32, #tpu.memory_space<vmem>>, vector<1x128x128xf32>
    %42 = vector.shape_cast %41 : vector<1x128x128xf32> to vector<128x128xf32>
    %43 = vector.shape_cast %42 : vector<128x128xf32> to vector<1x128x128xf32>
    %44 = vector.broadcast %43 : vector<1x128x128xf32> to vector<2x128x128xf32>
    %45 = arith.addf %40, %44 : vector<2x128x128xf32>
    %cst_25 = arith.constant dense<0xFF800000> : vector<2x128xf32>
    %46 = vector.multi_reduction <maximumf>, %45, %cst_25 [2] : vector<2x128x128xf32> to vector<2x128xf32>
    %47 = vector.shape_cast %46 : vector<2x128xf32> to vector<2x128x1xf32>
    %48 = vector.broadcast %47 : vector<2x128x1xf32> to vector<2x128x128xf32>
    %49 = arith.subf %45, %48 : vector<2x128x128xf32>
    %50 = math.exp %49 : vector<2x128x128xf32>
    %cst_26 = arith.constant dense<0.000000e+00> : vector<2x128xf32>
    %51 = vector.multi_reduction <add>, %50, %cst_26 [2] : vector<2x128x128xf32> to vector<2x128xf32>
    %52 = vector.shape_cast %51 : vector<2x128xf32> to vector<2x128x1xf32>
    %53 = tpu.reciprocal %52 {approx = true} : vector<2x128x1xf32> -> vector<2x128x1xf32>
    %54 = vector.broadcast %53 : vector<2x128x1xf32> to vector<2x128x128xf32>
    %55 = arith.mulf %50, %54 : vector<2x128x128xf32>
    %56 = arith.truncf %55 : vector<2x128x128xf32> to vector<2x128x128xbf16>
    "tpu.trace_start"() <{level = 10 : i32, message = "bqk,bkd->bqd"}> : () -> ()
    %cst_27 = arith.constant dense<0.000000e+00> : vector<2x128x32xf32>
    %57 = tpu.matmul %56, %39, %cst_27 {dimension_numbers = #tpu.dot_dimension_numbers<[2], [1], [1], [2], [0, 0, 0, 1, 1, 2], [0], [0]>} : vector<2x128x128xbf16>, vector<2x128x32xbf16>, vector<2x128x32xf32> -> vector<2x128x32xf32>
    "tpu.trace_stop"() : () -> ()
    %58 = vector.shape_cast %57 : vector<2x128x32xf32> to vector<256x32xf32>
    %59 = arith.truncf %58 : vector<256x32xf32> to vector<256x32xbf16>
    %c0_28 = arith.constant 0 : index
    %c32_29 = arith.constant 32 : index
    %60 = vector.load %arg8[%c0_28, %c32_29] : memref<256x128xbf16, #tpu.memory_space<vmem>>, vector<256x32xbf16>
    tpu.vector_store %arg8[%c0_28, %c32_29], %59 {strides = array<i32>} : memref<256x128xbf16, #tpu.memory_space<vmem>>, vector<256x32xbf16>,
    %c0_30 = arith.constant 0 : index
    %c64 = arith.constant 64 : index
    %61 = vector.load %arg7[%c0_30, %c64] : memref<256x384xbf16, #tpu.memory_space<vmem>>, vector<256x32xbf16>
    %62 = vector.shape_cast %61 : vector<256x32xbf16> to vector<2x128x32xbf16>
    %c0_31 = arith.constant 0 : index
    %c192 = arith.constant 192 : index
    %63 = vector.load %arg7[%c0_31, %c192] : memref<256x384xbf16, #tpu.memory_space<vmem>>, vector<256x32xbf16>
    %64 = vector.shape_cast %63 : vector<256x32xbf16> to vector<2x128x32xbf16>
    %c0_32 = arith.constant 0 : index
    %c320 = arith.constant 320 : index
    %65 = vector.load %arg7[%c0_32, %c320] : memref<256x384xbf16, #tpu.memory_space<vmem>>, vector<256x32xbf16>
    %66 = vector.shape_cast %65 : vector<256x32xbf16> to vector<2x128x32xbf16>
    "tpu.trace_start"() <{level = 10 : i32, message = "bqd,bkd->bqk"}> : () -> ()
    %cst_33 = arith.constant dense<0.000000e+00> : vector<2x128x128xf32>
    %67 = tpu.matmul %62, %64, %cst_33 {dimension_numbers = #tpu.dot_dimension_numbers<[2], [2], [1], [1], [0, 0, 0, 1, 1, 1], [0], [0]>} : vector<2x128x32xbf16>, vector<2x128x32xbf16>, vector<2x128x128xf32> -> vector<2x128x128xf32>
    "tpu.trace_stop"() : () -> ()
    %c2 = arith.constant 2 : index
    %c0_34 = arith.constant 0 : index
    %c0_35 = arith.constant 0 : index
    %68 = vector.load %arg3[%c2, %c0_34, %c0_35] : memref<4x128x128xf32, #tpu.memory_space<vmem>>, vector<1x128x128xf32>
    %69 = vector.shape_cast %68 : vector<1x128x128xf32> to vector<128x128xf32>
    %70 = vector.shape_cast %69 : vector<128x128xf32> to vector<1x128x128xf32>
    %71 = vector.broadcast %70 : vector<1x128x128xf32> to vector<2x128x128xf32>
    %72 = arith.addf %67, %71 : vector<2x128x128xf32>
    %cst_36 = arith.constant dense<0xFF800000> : vector<2x128xf32>
    %73 = vector.multi_reduction <maximumf>, %72, %cst_36 [2] : vector<2x128x128xf32> to vector<2x128xf32>
    %74 = vector.shape_cast %73 : vector<2x128xf32> to vector<2x128x1xf32>
    %75 = vector.broadcast %74 : vector<2x128x1xf32> to vector<2x128x128xf32>
    %76 = arith.subf %72, %75 : vector<2x128x128xf32>
    %77 = math.exp %76 : vector<2x128x128xf32>
    %cst_37 = arith.constant dense<0.000000e+00> : vector<2x128xf32>
    %78 = vector.multi_reduction <add>, %77, %cst_37 [2] : vector<2x128x128xf32> to vector<2x128xf32>
    %79 = vector.shape_cast %78 : vector<2x128xf32> to vector<2x128x1xf32>
    %80 = tpu.reciprocal %79 {approx = true} : vector<2x128x1xf32> -> vector<2x128x1xf32>
    %81 = vector.broadcast %80 : vector<2x128x1xf32> to vector<2x128x128xf32>
    %82 = arith.mulf %77, %81 : vector<2x128x128xf32>
    %83 = arith.truncf %82 : vector<2x128x128xf32> to vector<2x128x128xbf16>
    "tpu.trace_start"() <{level = 10 : i32, message = "bqk,bkd->bqd"}> : () -> ()
    %cst_38 = arith.constant dense<0.000000e+00> : vector<2x128x32xf32>
    %84 = tpu.matmul %83, %66, %cst_38 {dimension_numbers = #tpu.dot_dimension_numbers<[2], [1], [1], [2], [0, 0, 0, 1, 1, 2], [0], [0]>} : vector<2x128x128xbf16>, vector<2x128x32xbf16>, vector<2x128x32xf32> -> vector<2x128x32xf32>
    "tpu.trace_stop"() : () -> ()
    %85 = vector.shape_cast %84 : vector<2x128x32xf32> to vector<256x32xf32>
    %86 = arith.truncf %85 : vector<256x32xf32> to vector<256x32xbf16>
    %c0_39 = arith.constant 0 : index
    %c64_40 = arith.constant 64 : index
    %87 = vector.load %arg8[%c0_39, %c64_40] : memref<256x128xbf16, #tpu.memory_space<vmem>>, vector<256x32xbf16>
    tpu.vector_store %arg8[%c0_39, %c64_40], %86 {strides = array<i32>} : memref<256x128xbf16, #tpu.memory_space<vmem>>, vector<256x32xbf16>,
    %c0_41 = arith.constant 0 : index
    %c96 = arith.constant 96 : index
    %88 = vector.load %arg7[%c0_41, %c96] : memref<256x384xbf16, #tpu.memory_space<vmem>>, vector<256x32xbf16>
    %89 = vector.shape_cast %88 : vector<256x32xbf16> to vector<2x128x32xbf16>
    %c0_42 = arith.constant 0 : index
    %c224 = arith.constant 224 : index
    %90 = vector.load %arg7[%c0_42, %c224] : memref<256x384xbf16, #tpu.memory_space<vmem>>, vector<256x32xbf16>
    %91 = vector.shape_cast %90 : vector<256x32xbf16> to vector<2x128x32xbf16>
    %c0_43 = arith.constant 0 : index
    %c352 = arith.constant 352 : index
    %92 = vector.load %arg7[%c0_43, %c352] : memref<256x384xbf16, #tpu.memory_space<vmem>>, vector<256x32xbf16>
    %93 = vector.shape_cast %92 : vector<256x32xbf16> to vector<2x128x32xbf16>
    "tpu.trace_start"() <{level = 10 : i32, message = "bqd,bkd->bqk"}> : () -> ()
    %cst_44 = arith.constant dense<0.000000e+00> : vector<2x128x128xf32>
    %94 = tpu.matmul %89, %91, %cst_44 {dimension_numbers = #tpu.dot_dimension_numbers<[2], [2], [1], [1], [0, 0, 0, 1, 1, 1], [0], [0]>} : vector<2x128x32xbf16>, vector<2x128x32xbf16>, vector<2x128x128xf32> -> vector<2x128x128xf32>
    "tpu.trace_stop"() : () -> ()
    %c3 = arith.constant 3 : index
    %c0_45 = arith.constant 0 : index
    %c0_46 = arith.constant 0 : index
    %95 = vector.load %arg3[%c3, %c0_45, %c0_46] : memref<4x128x128xf32, #tpu.memory_space<vmem>>, vector<1x128x128xf32>
    %96 = vector.shape_cast %95 : vector<1x128x128xf32> to vector<128x128xf32>
    %97 = vector.shape_cast %96 : vector<128x128xf32> to vector<1x128x128xf32>
    %98 = vector.broadcast %97 : vector<1x128x128xf32> to vector<2x128x128xf32>
    %99 = arith.addf %94, %98 : vector<2x128x128xf32>
    %cst_47 = arith.constant dense<0xFF800000> : vector<2x128xf32>
    %100 = vector.multi_reduction <maximumf>, %99, %cst_47 [2] : vector<2x128x128xf32> to vector<2x128xf32>
    %101 = vector.shape_cast %100 : vector<2x128xf32> to vector<2x128x1xf32>
    %102 = vector.broadcast %101 : vector<2x128x1xf32> to vector<2x128x128xf32>
    %103 = arith.subf %99, %102 : vector<2x128x128xf32>
    %104 = math.exp %103 : vector<2x128x128xf32>
    %cst_48 = arith.constant dense<0.000000e+00> : vector<2x128xf32>
    %105 = vector.multi_reduction <add>, %104, %cst_48 [2] : vector<2x128x128xf32> to vector<2x128xf32>
    %106 = vector.shape_cast %105 : vector<2x128xf32> to vector<2x128x1xf32>
    %107 = tpu.reciprocal %106 {approx = true} : vector<2x128x1xf32> -> vector<2x128x1xf32>
    %108 = vector.broadcast %107 : vector<2x128x1xf32> to vector<2x128x128xf32>
    %109 = arith.mulf %104, %108 : vector<2x128x128xf32>
    %110 = arith.truncf %109 : vector<2x128x128xf32> to vector<2x128x128xbf16>
    "tpu.trace_start"() <{level = 10 : i32, message = "bqk,bkd->bqd"}> : () -> ()
    %cst_49 = arith.constant dense<0.000000e+00> : vector<2x128x32xf32>
    %111 = tpu.matmul %110, %93, %cst_49 {dimension_numbers = #tpu.dot_dimension_numbers<[2], [1], [1], [2], [0, 0, 0, 1, 1, 2], [0], [0]>} : vector<2x128x128xbf16>, vector<2x128x32xbf16>, vector<2x128x32xf32> -> vector<2x128x32xf32>
    "tpu.trace_stop"() : () -> ()
    %112 = vector.shape_cast %111 : vector<2x128x32xf32> to vector<256x32xf32>
    %113 = arith.truncf %112 : vector<256x32xf32> to vector<256x32xbf16>
    %c0_50 = arith.constant 0 : index
    %c96_51 = arith.constant 96 : index
    %114 = vector.load %arg8[%c0_50, %c96_51] : memref<256x128xbf16, #tpu.memory_space<vmem>>, vector<256x32xbf16>
    tpu.vector_store %arg8[%c0_50, %c96_51], %113 {strides = array<i32>} : memref<256x128xbf16, #tpu.memory_space<vmem>>, vector<256x32xbf16>,
    %c0_52 = arith.constant 0 : index
    %c0_53 = arith.constant 0 : index
    %115 = vector.load %arg8[%c0_52, %c0_53] : memref<256x128xbf16, #tpu.memory_space<vmem>>, vector<256x128xbf16>
    %c0_54 = arith.constant 0 : index
    %c0_55 = arith.constant 0 : index
    %116 = vector.load %arg4[%c0_54, %c0_55] : memref<128x128xbf16, #tpu.memory_space<vmem>>, vector<128x128xbf16>
    %cst_56 = arith.constant dense<0.000000e+00> : vector<256x128xf32>
    %117 = tpu.matmul %115, %116, %cst_56 {dimension_numbers = #tpu.dot_dimension_numbers<[1], [0], [0], [1], [0, 0, 1, 1], [], []>} : vector<256x128xbf16>, vector<128x128xbf16>, vector<256x128xf32> -> vector<256x128xf32>
    %c0_57 = arith.constant 0 : index
    %c0_58 = arith.constant 0 : index
    %118 = vector.load %arg5[%c0_57, %c0_58] : memref<1x128xf32, #tpu.memory_space<vmem>>, vector<1x128xf32>
    %119 = vector.broadcast %118 : vector<1x128xf32> to vector<256x128xf32>
    %120 = arith.addf %117, %119 : vector<256x128xf32>
    %121 = vector.shape_cast %120 : vector<256x128xf32> to vector<2x128x128xf32>
    %c0_59 = arith.constant 0 : index
    %c0_60 = arith.constant 0 : index
    %c0_61 = arith.constant 0 : index
    %122 = vector.load %arg6[%c0_59, %c0_60, %c0_61] : memref<2x128x128xf32, #tpu.memory_space<vmem>>, vector<2x128x128xf32>
    tpu.vector_store %arg6[%c0_59, %c0_60, %c0_61], %121 {strides = array<i32>} : memref<2x128x128xf32, #tpu.memory_space<vmem>>, vector<2x128x128xf32>,
    return
  }
  func.func @transform_0(%arg0: i32) -> (i32, i32, i32) {
    %c0_i32 = arith.constant 0 : i32
    %c0_i32_0 = arith.constant 0 : i32
    %c0_i32_1 = arith.constant 0 : i32
    return %arg0, %c0_i32, %c0_i32_0 : i32, i32, i32
  }
  func.func @transform_1(%arg0: i32) -> (i32, i32) {
    %c0_i32 = arith.constant 0 : i32
    %c0_i32_0 = arith.constant 0 : i32
    %c0_i32_1 = arith.constant 0 : i32
    return %c0_i32, %c0_i32_0 : i32, i32
  }
  func.func @transform_2(%arg0: i32) -> (i32, i32, i32) {
    %c0_i32 = arith.constant 0 : i32
    %c0_i32_0 = arith.constant 0 : i32
    %c0_i32_1 = arith.constant 0 : i32
    %c0_i32_2 = arith.constant 0 : i32
    return %c0_i32, %c0_i32_0, %c0_i32_1 : i32, i32, i32
  }
  func.func @transform_3(%arg0: i32) -> (i32, i32) {
    %c0_i32 = arith.constant 0 : i32
    %c0_i32_0 = arith.constant 0 : i32
    %c0_i32_1 = arith.constant 0 : i32
    return %c0_i32, %c0_i32_0 : i32, i32
  }
  func.func @transform_4(%arg0: i32) -> (i32, i32) {
    %c0_i32 = arith.constant 0 : i32
    %c0_i32_0 = arith.constant 0 : i32
    %c0_i32_1 = arith.constant 0 : i32
    return %c0_i32, %c0_i32_0 : i32, i32
  }
  func.func @transform_5(%arg0: i32) -> (i32, i32, i32) {
    %c0_i32 = arith.constant 0 : i32
    %c0_i32_0 = arith.constant 0 : i32
    %c0_i32_1 = arith.constant 0 : i32
    return %arg0, %c0_i32, %c0_i32_0 : i32, i32, i32
  }
}

module attributes {stable_mosaic.version = 11 : i64} {
  func.func @kernel(%arg0: i32, %arg1: memref<2x128x64xf32, #tpu.memory_space<vmem>>, %arg2: memref<64x384xbf16, #tpu.memory_space<vmem>>, %arg3: memref<4x128x128xf32, #tpu.memory_space<vmem>>, %arg4: memref<128x128xbf16, #tpu.memory_space<vmem>>, %arg5: memref<1x128xf32, #tpu.memory_space<vmem>>, %arg6: memref<2x128x128xf32, #tpu.memory_space<vmem>>, %arg7: memref<256x384xbf16, #tpu.memory_space<vmem>>, %arg8: memref<256x128xbf16, #tpu.memory_space<vmem>>) attributes {dimension_semantics = [#tpu.dimension_semantics<parallel>], iteration_bounds = array<i64: 2>, scalar_prefetch = 0 : i64, scratch_operands = 2 : i64, tpu.core_type = #tpu.core_type<tc>, window_params = [{transform_indices = @transform_0, window_bounds = array<i64: 2, 128, 64>}, {pipeline_mode = #tpu.pipeline_mode<synchronous>, transform_indices = @transform_1, window_bounds = array<i64: 64, 384>}, {pipeline_mode = #tpu.pipeline_mode<synchronous>, transform_indices = @transform_2, window_bounds = array<i64: 4, 128, 128>}, {pipeline_mode = #tpu.pipeline_mode<synchronous>, transform_indices = @transform_3, window_bounds = array<i64: 128, 128>}, {pipeline_mode = #tpu.pipeline_mode<synchronous>, transform_indices = @transform_4, window_bounds = array<i64: 1, 128>}, {transform_indices = @transform_5, window_bounds = array<i64: 2, 128, 128>}]} {
    %c0 = arith.constant 0 : index
    %c0_0 = arith.constant 0 : index
    %c0_1 = arith.constant 0 : index
    %0 = vector.load %arg1[%c0, %c0_0, %c0_1] : memref<2x128x64xf32, #tpu.memory_space<vmem>>, vector<2x128x64xf32>
    %1 = vector.shape_cast %0 : vector<2x128x64xf32> to vector<256x64xf32>
    %2 = arith.truncf %1 : vector<256x64xf32> to vector<256x64xbf16>
    %c0_2 = arith.constant 0 : index
    %c0_3 = arith.constant 0 : index
    %3 = vector.load %arg2[%c0_2, %c0_3] : memref<64x384xbf16, #tpu.memory_space<vmem>>, vector<64x384xbf16>
    %cst = arith.constant dense<0.000000e+00> : vector<256x384xf32>
    %4 = tpu.matmul %2, %3, %cst {dimension_numbers = #tpu.dot_dimension_numbers<[1], [0], [0], [1], [0, 0, 1, 1], [], []>} : vector<256x64xbf16>, vector<64x384xbf16>, vector<256x384xf32> -> vector<256x384xf32>
    %5 = arith.truncf %4 : vector<256x384xf32> to vector<256x384xbf16>
    %c0_4 = arith.constant 0 : index
    %c0_5 = arith.constant 0 : index
    %6 = vector.load %arg7[%c0_4, %c0_5] : memref<256x384xbf16, #tpu.memory_space<vmem>>, vector<256x384xbf16>
    tpu.vector_store %arg7[%c0_4, %c0_5], %5 {strides = array<i32>} : memref<256x384xbf16, #tpu.memory_space<vmem>>, vector<256x384xbf16>,
    %c0_6 = arith.constant 0 : index
    %c0_7 = arith.constant 0 : index
    %7 = vector.load %arg7[%c0_6, %c0_7] : memref<256x384xbf16, #tpu.memory_space<vmem>>, vector<256x32xbf16>
    %8 = vector.shape_cast %7 : vector<256x32xbf16> to vector<2x128x32xbf16>
    %c0_8 = arith.constant 0 : index
    %c128 = arith.constant 128 : index
    %9 = vector.load %arg7[%c0_8, %c128] : memref<256x384xbf16, #tpu.memory_space<vmem>>, vector<256x32xbf16>
    %10 = vector.shape_cast %9 : vector<256x32xbf16> to vector<2x128x32xbf16>
    %c0_9 = arith.constant 0 : index
    %c256 = arith.constant 256 : index
    %11 = vector.load %arg7[%c0_9, %c256] : memref<256x384xbf16, #tpu.memory_space<vmem>>, vector<256x32xbf16>
    %12 = vector.shape_cast %11 : vector<256x32xbf16> to vector<2x128x32xbf16>
    "tpu.trace_start"() <{level = 10 : i32, message = "bqd,bkd->bqk"}> : () -> ()
    %cst_10 = arith.constant dense<0.000000e+00> : vector<2x128x128xf32>
    %13 = tpu.matmul %8, %10, %cst_10 {dimension_numbers = #tpu.dot_dimension_numbers<[2], [2], [1], [1], [0, 0, 0, 1, 1, 1], [0], [0]>} : vector<2x128x32xbf16>, vector<2x128x32xbf16>, vector<2x128x128xf32> -> vector<2x128x128xf32>
    "tpu.trace_stop"() : () -> ()
    %c0_11 = arith.constant 0 : index
    %c0_12 = arith.constant 0 : index
    %c0_13 = arith.constant 0 : index
    %14 = vector.load %arg3[%c0_11, %c0_12, %c0_13] : memref<4x128x128xf32, #tpu.memory_space<vmem>>, vector<1x128x128xf32>
    %15 = vector.shape_cast %14 : vector<1x128x128xf32> to vector<128x128xf32>
    %16 = vector.shape_cast %15 : vector<128x128xf32> to vector<1x128x128xf32>
    %17 = vector.broadcast %16 : vector<1x128x128xf32> to vector<2x128x128xf32>
    %18 = arith.addf %13, %17 : vector<2x128x128xf32>
    %cst_14 = arith.constant dense<0xFF800000> : vector<2x128xf32>
    %19 = vector.multi_reduction <maximumf>, %18, %cst_14 [2] : vector<2x128x128xf32> to vector<2x128xf32>
    %20 = vector.shape_cast %19 : vector<2x128xf32> to vector<2x128x1xf32>
    %21 = vector.broadcast %20 : vector<2x128x1xf32> to vector<2x128x128xf32>
    %22 = arith.subf %18, %21 : vector<2x128x128xf32>
    %23 = math.exp %22 : vector<2x128x128xf32>
    %cst_15 = arith.constant dense<0.000000e+00> : vector<2x128xf32>
    %24 = vector.multi_reduction <add>, %23, %cst_15 [2] : vector<2x128x128xf32> to vector<2x128xf32>
    %25 = vector.shape_cast %24 : vector<2x128xf32> to vector<2x128x1xf32>
    %26 = tpu.reciprocal %25 {approx = true} : vector<2x128x1xf32> -> vector<2x128x1xf32>
    %27 = vector.broadcast %26 : vector<2x128x1xf32> to vector<2x128x128xf32>
    %28 = arith.mulf %23, %27 : vector<2x128x128xf32>
    %29 = arith.truncf %28 : vector<2x128x128xf32> to vector<2x128x128xbf16>
    "tpu.trace_start"() <{level = 10 : i32, message = "bqk,bkd->bqd"}> : () -> ()
    %cst_16 = arith.constant dense<0.000000e+00> : vector<2x128x32xf32>
    %30 = tpu.matmul %29, %12, %cst_16 {dimension_numbers = #tpu.dot_dimension_numbers<[2], [1], [1], [2], [0, 0, 0, 1, 1, 2], [0], [0]>} : vector<2x128x128xbf16>, vector<2x128x32xbf16>, vector<2x128x32xf32> -> vector<2x128x32xf32>
    "tpu.trace_stop"() : () -> ()
    %31 = vector.shape_cast %30 : vector<2x128x32xf32> to vector<256x32xf32>
    %32 = arith.truncf %31 : vector<256x32xf32> to vector<256x32xbf16>
    %c0_17 = arith.constant 0 : index
    %c0_18 = arith.constant 0 : index
    %33 = vector.load %arg8[%c0_17, %c0_18] : memref<256x128xbf16, #tpu.memory_space<vmem>>, vector<256x32xbf16>
    tpu.vector_store %arg8[%c0_17, %c0_18], %32 {strides = array<i32>} : memref<256x128xbf16, #tpu.memory_space<vmem>>, vector<256x32xbf16>,
    %c0_19 = arith.constant 0 : index
    %c32 = arith.constant 32 : index
    %34 = vector.load %arg7[%c0_19, %c32] : memref<256x384xbf16, #tpu.memory_space<vmem>>, vector<256x32xbf16>
    %35 = vector.shape_cast %34 : vector<256x32xbf16> to vector<2x128x32xbf16>
    %c0_20 = arith.constant 0 : index
    %c160 = arith.constant 160 : index
    %36 = vector.load %arg7[%c0_20, %c160] : memref<256x384xbf16, #tpu.memory_space<vmem>>, vector<256x32xbf16>
    %37 = vector.shape_cast %36 : vector<256x32xbf16> to vector<2x128x32xbf16>
    %c0_21 = arith.constant 0 : index
    %c288 = arith.constant 288 : index
    %38 = vector.load %arg7[%c0_21, %c288] : memref<256x384xbf16, #tpu.memory_space<vmem>>, vector<256x32xbf16>
    %39 = vector.shape_cast %38 : vector<256x32xbf16> to vector<2x128x32xbf16>
    "tpu.trace_start"() <{level = 10 : i32, message = "bqd,bkd->bqk"}> : () -> ()
    %cst_22 = arith.constant dense<0.000000e+00> : vector<2x128x128xf32>
    %40 = tpu.matmul %35, %37, %cst_22 {dimension_numbers = #tpu.dot_dimension_numbers<[2], [2], [1], [1], [0, 0, 0, 1, 1, 1], [0], [0]>} : vector<2x128x32xbf16>, vector<2x128x32xbf16>, vector<2x128x128xf32> -> vector<2x128x128xf32>
    "tpu.trace_stop"() : () -> ()
    %c1 = arith.constant 1 : index
    %c0_23 = arith.constant 0 : index
    %c0_24 = arith.constant 0 : index
    %41 = vector.load %arg3[%c1, %c0_23, %c0_24] : memref<4x128x128xf32, #tpu.memory_space<vmem>>, vector<1x128x128xf32>
    %42 = vector.shape_cast %41 : vector<1x128x128xf32> to vector<128x128xf32>
    %43 = vector.shape_cast %42 : vector<128x128xf32> to vector<1x128x128xf32>
    %44 = vector.broadcast %43 : vector<1x128x128xf32> to vector<2x128x128xf32>
    %45 = arith.addf %40, %44 : vector<2x128x128xf32>
    %cst_25 = arith.constant dense<0xFF800000> : vector<2x128xf32>
    %46 = vector.multi_reduction <maximumf>, %45, %cst_25 [2] : vector<2x128x128xf32> to vector<2x128xf32>
    %47 = vector.shape_cast %46 : vector<2x128xf32> to vector<2x128x1xf32>
    %48 = vector.broadcast %47 : vector<2x128x1xf32> to vector<2x128x128xf32>
    %49 = arith.subf %45, %48 : vector<2x128x128xf32>
    %50 = math.exp %49 : vector<2x128x128xf32>
    %cst_26 = arith.constant dense<0.000000e+00> : vector<2x128xf32>
    %51 = vector.multi_reduction <add>, %50, %cst_26 [2] : vector<2x128x128xf32> to vector<2x128xf32>
    %52 = vector.shape_cast %51 : vector<2x128xf32> to vector<2x128x1xf32>
    %53 = tpu.reciprocal %52 {approx = true} : vector<2x128x1xf32> -> vector<2x128x1xf32>
    %54 = vector.broadcast %53 : vector<2x128x1xf32> to vector<2x128x128xf32>
    %55 = arith.mulf %50, %54 : vector<2x128x128xf32>
    %56 = arith.truncf %55 : vector<2x128x128xf32> to vector<2x128x128xbf16>
    "tpu.trace_start"() <{level = 10 : i32, message = "bqk,bkd->bqd"}> : () -> ()
    %cst_27 = arith.constant dense<0.000000e+00> : vector<2x128x32xf32>
    %57 = tpu.matmul %56, %39, %cst_27 {dimension_numbers = #tpu.dot_dimension_numbers<[2], [1], [1], [2], [0, 0, 0, 1, 1, 2], [0], [0]>} : vector<2x128x128xbf16>, vector<2x128x32xbf16>, vector<2x128x32xf32> -> vector<2x128x32xf32>
    "tpu.trace_stop"() : () -> ()
    %58 = vector.shape_cast %57 : vector<2x128x32xf32> to vector<256x32xf32>
    %59 = arith.truncf %58 : vector<256x32xf32> to vector<256x32xbf16>
    %c0_28 = arith.constant 0 : index
    %c32_29 = arith.constant 32 : index
    %60 = vector.load %arg8[%c0_28, %c32_29] : memref<256x128xbf16, #tpu.memory_space<vmem>>, vector<256x32xbf16>
    tpu.vector_store %arg8[%c0_28, %c32_29], %59 {strides = array<i32>} : memref<256x128xbf16, #tpu.memory_space<vmem>>, vector<256x32xbf16>,
    %c0_30 = arith.constant 0 : index
    %c64 = arith.constant 64 : index
    %61 = vector.load %arg7[%c0_30, %c64] : memref<256x384xbf16, #tpu.memory_space<vmem>>, vector<256x32xbf16>
    %62 = vector.shape_cast %61 : vector<256x32xbf16> to vector<2x128x32xbf16>
    %c0_31 = arith.constant 0 : index
    %c192 = arith.constant 192 : index
    %63 = vector.load %arg7[%c0_31, %c192] : memref<256x384xbf16, #tpu.memory_space<vmem>>, vector<256x32xbf16>
    %64 = vector.shape_cast %63 : vector<256x32xbf16> to vector<2x128x32xbf16>
    %c0_32 = arith.constant 0 : index
    %c320 = arith.constant 320 : index
    %65 = vector.load %arg7[%c0_32, %c320] : memref<256x384xbf16, #tpu.memory_space<vmem>>, vector<256x32xbf16>
    %66 = vector.shape_cast %65 : vector<256x32xbf16> to vector<2x128x32xbf16>
    "tpu.trace_start"() <{level = 10 : i32, message = "bqd,bkd->bqk"}> : () -> ()
    %cst_33 = arith.constant dense<0.000000e+00> : vector<2x128x128xf32>
    %67 = tpu.matmul %62, %64, %cst_33 {dimension_numbers = #tpu.dot_dimension_numbers<[2], [2], [1], [1], [0, 0, 0, 1, 1, 1], [0], [0]>} : vector<2x128x32xbf16>, vector<2x128x32xbf16>, vector<2x128x128xf32> -> vector<2x128x128xf32>
    "tpu.trace_stop"() : () -> ()
    %c2 = arith.constant 2 : index
    %c0_34 = arith.constant 0 : index
    %c0_35 = arith.constant 0 : index
    %68 = vector.load %arg3[%c2, %c0_34, %c0_35] : memref<4x128x128xf32, #tpu.memory_space<vmem>>, vector<1x128x128xf32>
    %69 = vector.shape_cast %68 : vector<1x128x128xf32> to vector<128x128xf32>
    %70 = vector.shape_cast %69 : vector<128x128xf32> to vector<1x128x128xf32>
    %71 = vector.broadcast %70 : vector<1x128x128xf32> to vector<2x128x128xf32>
    %72 = arith.addf %67, %71 : vector<2x128x128xf32>
    %cst_36 = arith.constant dense<0xFF800000> : vector<2x128xf32>
    %73 = vector.multi_reduction <maximumf>, %72, %cst_36 [2] : vector<2x128x128xf32> to vector<2x128xf32>
    %74 = vector.shape_cast %73 : vector<2x128xf32> to vector<2x128x1xf32>
    %75 = vector.broadcast %74 : vector<2x128x1xf32> to vector<2x128x128xf32>
    %76 = arith.subf %72, %75 : vector<2x128x128xf32>
    %77 = math.exp %76 : vector<2x128x128xf32>
    %cst_37 = arith.constant dense<0.000000e+00> : vector<2x128xf32>
    %78 = vector.multi_reduction <add>, %77, %cst_37 [2] : vector<2x128x128xf32> to vector<2x128xf32>
    %79 = vector.shape_cast %78 : vector<2x128xf32> to vector<2x128x1xf32>
    %80 = tpu.reciprocal %79 {approx = true} : vector<2x128x1xf32> -> vector<2x128x1xf32>
    %81 = vector.broadcast %80 : vector<2x128x1xf32> to vector<2x128x128xf32>
    %82 = arith.mulf %77, %81 : vector<2x128x128xf32>
    %83 = arith.truncf %82 : vector<2x128x128xf32> to vector<2x128x128xbf16>
    "tpu.trace_start"() <{level = 10 : i32, message = "bqk,bkd->bqd"}> : () -> ()
    %cst_38 = arith.constant dense<0.000000e+00> : vector<2x128x32xf32>
    %84 = tpu.matmul %83, %66, %cst_38 {dimension_numbers = #tpu.dot_dimension_numbers<[2], [1], [1], [2], [0, 0, 0, 1, 1, 2], [0], [0]>} : vector<2x128x128xbf16>, vector<2x128x32xbf16>, vector<2x128x32xf32> -> vector<2x128x32xf32>
    "tpu.trace_stop"() : () -> ()
    %85 = vector.shape_cast %84 : vector<2x128x32xf32> to vector<256x32xf32>
    %86 = arith.truncf %85 : vector<256x32xf32> to vector<256x32xbf16>
    %c0_39 = arith.constant 0 : index
    %c64_40 = arith.constant 64 : index
    %87 = vector.load %arg8[%c0_39, %c64_40] : memref<256x128xbf16, #tpu.memory_space<vmem>>, vector<256x32xbf16>
    tpu.vector_store %arg8[%c0_39, %c64_40], %86 {strides = array<i32>} : memref<256x128xbf16, #tpu.memory_space<vmem>>, vector<256x32xbf16>,
    %c0_41 = arith.constant 0 : index
    %c96 = arith.constant 96 : index
    %88 = vector.load %arg7[%c0_41, %c96] : memref<256x384xbf16, #tpu.memory_space<vmem>>, vector<256x32xbf16>
    %89 = vector.shape_cast %88 : vector<256x32xbf16> to vector<2x128x32xbf16>
    %c0_42 = arith.constant 0 : index
    %c224 = arith.constant 224 : index
    %90 = vector.load %arg7[%c0_42, %c224] : memref<256x384xbf16, #tpu.memory_space<vmem>>, vector<256x32xbf16>
    %91 = vector.shape_cast %90 : vector<256x32xbf16> to vector<2x128x32xbf16>
    %c0_43 = arith.constant 0 : index
    %c352 = arith.constant 352 : index
    %92 = vector.load %arg7[%c0_43, %c352] : memref<256x384xbf16, #tpu.memory_space<vmem>>, vector<256x32xbf16>
    %93 = vector.shape_cast %92 : vector<256x32xbf16> to vector<2x128x32xbf16>
    "tpu.trace_start"() <{level = 10 : i32, message = "bqd,bkd->bqk"}> : () -> ()
    %cst_44 = arith.constant dense<0.000000e+00> : vector<2x128x128xf32>
    %94 = tpu.matmul %89, %91, %cst_44 {dimension_numbers = #tpu.dot_dimension_numbers<[2], [2], [1], [1], [0, 0, 0, 1, 1, 1], [0], [0]>} : vector<2x128x32xbf16>, vector<2x128x32xbf16>, vector<2x128x128xf32> -> vector<2x128x128xf32>
    "tpu.trace_stop"() : () -> ()
    %c3 = arith.constant 3 : index
    %c0_45 = arith.constant 0 : index
    %c0_46 = arith.constant 0 : index
    %95 = vector.load %arg3[%c3, %c0_45, %c0_46] : memref<4x128x128xf32, #tpu.memory_space<vmem>>, vector<1x128x128xf32>
    %96 = vector.shape_cast %95 : vector<1x128x128xf32> to vector<128x128xf32>
    %97 = vector.shape_cast %96 : vector<128x128xf32> to vector<1x128x128xf32>
    %98 = vector.broadcast %97 : vector<1x128x128xf32> to vector<2x128x128xf32>
    %99 = arith.addf %94, %98 : vector<2x128x128xf32>
    %cst_47 = arith.constant dense<0xFF800000> : vector<2x128xf32>
    %100 = vector.multi_reduction <maximumf>, %99, %cst_47 [2] : vector<2x128x128xf32> to vector<2x128xf32>
    %101 = vector.shape_cast %100 : vector<2x128xf32> to vector<2x128x1xf32>
    %102 = vector.broadcast %101 : vector<2x128x1xf32> to vector<2x128x128xf32>
    %103 = arith.subf %99, %102 : vector<2x128x128xf32>
    %104 = math.exp %103 : vector<2x128x128xf32>
    %cst_48 = arith.constant dense<0.000000e+00> : vector<2x128xf32>
    %105 = vector.multi_reduction <add>, %104, %cst_48 [2] : vector<2x128x128xf32> to vector<2x128xf32>
    %106 = vector.shape_cast %105 : vector<2x128xf32> to vector<2x128x1xf32>
    %107 = tpu.reciprocal %106 {approx = true} : vector<2x128x1xf32> -> vector<2x128x1xf32>
    %108 = vector.broadcast %107 : vector<2x128x1xf32> to vector<2x128x128xf32>
    %109 = arith.mulf %104, %108 : vector<2x128x128xf32>
    %110 = arith.truncf %109 : vector<2x128x128xf32> to vector<2x128x128xbf16>
    "tpu.trace_start"() <{level = 10 : i32, message = "bqk,bkd->bqd"}> : () -> ()
    %cst_49 = arith.constant dense<0.000000e+00> : vector<2x128x32xf32>
    %111 = tpu.matmul %110, %93, %cst_49 {dimension_numbers = #tpu.dot_dimension_numbers<[2], [1], [1], [2], [0, 0, 0, 1, 1, 2], [0], [0]>} : vector<2x128x128xbf16>, vector<2x128x32xbf16>, vector<2x128x32xf32> -> vector<2x128x32xf32>
    "tpu.trace_stop"() : () -> ()
    %112 = vector.shape_cast %111 : vector<2x128x32xf32> to vector<256x32xf32>
    %113 = arith.truncf %112 : vector<256x32xf32> to vector<256x32xbf16>
    %c0_50 = arith.constant 0 : index
    %c96_51 = arith.constant 96 : index
    %114 = vector.load %arg8[%c0_50, %c96_51] : memref<256x128xbf16, #tpu.memory_space<vmem>>, vector<256x32xbf16>
    tpu.vector_store %arg8[%c0_50, %c96_51], %113 {strides = array<i32>} : memref<256x128xbf16, #tpu.memory_space<vmem>>, vector<256x32xbf16>,
    %c0_52 = arith.constant 0 : index
    %c0_53 = arith.constant 0 : index
    %115 = vector.load %arg8[%c0_52, %c0_53] : memref<256x128xbf16, #tpu.memory_space<vmem>>, vector<256x128xbf16>
    %c0_54 = arith.constant 0 : index
    %c0_55 = arith.constant 0 : index
    %116 = vector.load %arg4[%c0_54, %c0_55] : memref<128x128xbf16, #tpu.memory_space<vmem>>, vector<128x128xbf16>
    %cst_56 = arith.constant dense<0.000000e+00> : vector<256x128xf32>
    %117 = tpu.matmul %115, %116, %cst_56 {dimension_numbers = #tpu.dot_dimension_numbers<[1], [0], [0], [1], [0, 0, 1, 1], [], []>} : vector<256x128xbf16>, vector<128x128xbf16>, vector<256x128xf32> -> vector<256x128xf32>
    %c0_57 = arith.constant 0 : index
    %c0_58 = arith.constant 0 : index
    %118 = vector.load %arg5[%c0_57, %c0_58] : memref<1x128xf32, #tpu.memory_space<vmem>>, vector<1x128xf32>
    %119 = vector.broadcast %118 : vector<1x128xf32> to vector<256x128xf32>
    %120 = arith.addf %117, %119 : vector<256x128xf32>
    %121 = vector.shape_cast %120 : vector<256x128xf32> to vector<2x128x128xf32>
    %c0_59 = arith.constant 0 : index
    %c0_60 = arith.constant 0 : index
    %c0_61 = arith.constant 0 : index
    %122 = vector.load %arg6[%c0_59, %c0_60, %c0_61] : memref<2x128x128xf32, #tpu.memory_space<vmem>>, vector<2x128x128xf32>
    tpu.vector_store %arg6[%c0_59, %c0_60, %c0_61], %121 {strides = array<i32>} : memref<2x128x128xf32, #tpu.memory_space<vmem>>, vector<2x128x128xf32>,
    return
  }
  func.func @transform_0(%arg0: i32) -> (i32, i32, i32) {
    %c0_i32 = arith.constant 0 : i32
    %c0_i32_0 = arith.constant 0 : i32
    %c0_i32_1 = arith.constant 0 : i32
    return %arg0, %c0_i32, %c0_i32_0 : i32, i32, i32
  }
  func.func @transform_1(%arg0: i32) -> (i32, i32) {
    %c0_i32 = arith.constant 0 : i32
    %c0_i32_0 = arith.constant 0 : i32
    %c0_i32_1 = arith.constant 0 : i32
    return %c0_i32, %c0_i32_0 : i32, i32
  }
  func.func @transform_2(%arg0: i32) -> (i32, i32, i32) {
    %c0_i32 = arith.constant 0 : i32
    %c0_i32_0 = arith.constant 0 : i32
    %c0_i32_1 = arith.constant 0 : i32
    %c0_i32_2 = arith.constant 0 : i32
    return %c0_i32, %c0_i32_0, %c0_i32_1 : i32, i32, i32
  }
  func.func @transform_3(%arg0: i32) -> (i32, i32) {
    %c0_i32 = arith.constant 0 : i32
    %c0_i32_0 = arith.constant 0 : i32
    %c0_i32_1 = arith.constant 0 : i32
    return %c0_i32, %c0_i32_0 : i32, i32
  }
  func.func @transform_4(%arg0: i32) -> (i32, i32) {
    %c0_i32 = arith.constant 0 : i32
    %c0_i32_0 = arith.constant 0 : i32
    %c0_i32_1 = arith.constant 0 : i32
    return %c0_i32, %c0_i32_0 : i32, i32
  }
  func.func @transform_5(%arg0: i32) -> (i32, i32, i32) {
    %c0_i32 = arith.constant 0 : i32
    %c0_i32_0 = arith.constant 0 : i32
    %c0_i32_1 = arith.constant 0 : i32
    return %arg0, %c0_i32, %c0_i32_0 : i32, i32, i32
  }
}

</mosaic_0001>

<llo_original>
// kernel: tpu_custom_call.1
$region0: #{tpu_custom_call.1}
  #allocation0 [shape = 'u32[]', space=smem, size = 0x4, offset = 0x4, fixed_abs, tag = 'smem constant byte address 0x4 - core index']
  #allocation1 [shape = 'u32[144,128]{1,0:T(1,128)}', space=vmem, size = 0x12000, scoped, tag = 'internal scratch']
  #allocation2 [shape = 'bf16[256,384]{1,0:T(16,128)(2,1)}', space=vmem, size = 0x30000, scoped, tag = 'scratch operand']
  #allocation3 [shape = 'bf16[256,128]{1,0:T(16,128)(2,1)}', space=vmem, size = 0x10000, scoped, tag = 'scratch operand']
  %s0 = inlined_call_operand.vmem [shape: f32[4,128,64], index: 0, kind: input, shape index: {}]
  %s1 = inlined_call_operand.vmem [shape: bf16[64,384], index: 1, kind: input, shape index: {}]
  %s2 = inlined_call_operand.vmem [shape: f32[4,128,128], index: 2, kind: input, shape index: {}]
  %s3 = inlined_call_operand.vmem [shape: bf16[128,128], index: 3, kind: input, shape index: {}]
  %s4 = inlined_call_operand.vmem [shape: f32[1,128], index: 4, kind: input, shape index: {}]
  %s5 = inlined_call_operand.hbm [shape: f32[4,128,128], index: 5, kind: output, shape index: {}]
  %s6 = sld [smem:[#allocation0]]
  $region53: #{tpu_custom_call.1} parent=0
    _
  %s8 = ssub.s32 1, %s6
  %s9 = scalar_select 0, %s8, %s6
  $region1: #{tpu_custom_call.1} parent=0
    #allocation4 [shape = 'u8[262144]{0}', space=vmem, size = 0x40000, scoped, tag = 'output window, operand 0']
    #allocation5 [shape = 's32[2]{0}', space=sflag, size = 0x8, scoped, tag = 'scoped memory for tpu_custom_call.1']
    %10 = vsyncpa [#allocation5], 0
    %s11 = scalar_lea.sflag [#allocation5], 1
    %12 = vsyncpa %s11, 0
    loop: start=0, step=1, limit=4
    $region2: #{tpu_custom_call.1} parent=1 // loop_pre_header
      _
    $region3: #{tpu_custom_call.1} parent=1 // loop_header
      %s14 = sphi 0, %s18
      %p15 = scmp.ge.s32.totalorder %s14, 4
      %s24 = sphi 0, %s26
      %s27 = sphi 0, %s24
      %s28 = sphi 0, %s27
      %s44 = sphi 0, %s28
      %s48 = sphi 0, %s48
      %s50 = sphi 0, %s48
      %s51 = sphi 0, %s50
      %s65 = sphi 0, %s51
      %s69 = sphi 0, %s69
      %s71 = sphi 0, %s69
      %s72 = sphi 0, %s71
      %s86 = sphi 0, %s72
      %s90 = sphi 0, %s90
      %s92 = sphi 0, %s90
      %s93 = sphi 0, %s92
      %s107 = sphi 0, %s93
      %s111 = sphi 0, %s111
      %s113 = sphi 0, %s111
      %s114 = sphi 0, %s113
      %s128 = sphi 0, %s114
      %s134 = sphi 0, %s136
      %s137 = sphi 0, %s134
      %s138 = sphi 0, %s137
      %s154 = sphi 0, %s138
    $region4: #{tpu_custom_call.1} parent=1 // loop_header_branch
      %17 = sbr.rel (%p15) target = $region8
    $region5: #{tpu_custom_call.1} parent=1 // loop_body
      %s19 = ssub.s32 %s14, 1
      %s20 = ssub.s32 %s14, 2
      %s21 = sadd.s32 %s14, 1
      %s22 = ssub.s32 %s14, %s21
      %p23 = scmp.eq.s32.totalorder %s22, 0
      %s25 = sadd.s32 %s24, 1
      %s26 = scalar_select %p23, %s24, %s25
      %p29 = pneg %p23
      %p30 = scmp.eq.s32.totalorder %s14, 1
      %p31 = por %p29, %p30
      %p32 = scmp.ne.s32.totalorder %s24, %s27
      %p33 = scmp.eq.s32.totalorder %s14, 0
      %p34 = por %p32, %p33
      %p35 = scmp.ne.s32.totalorder %s24, %s27
      %p36 = scmp.eq.s32.totalorder %s19, 1
      %p37 = por %p35, %p36
      %p38 = scmp.ne.s32.totalorder %s27, %s28
      %p39 = scmp.eq.s32.totalorder %s19, 0
      %p40 = por %p38, %p39
      %p41 = scmp.ne.s32.totalorder %s27, %s28
      %p42 = scmp.eq.s32.totalorder %s20, 1
      %p43 = por %p41, %p42
      %p45 = scmp.ne.s32.totalorder %s28, %s44
      %p46 = scmp.eq.s32.totalorder %s20, 0
      %p47 = por %p45, %p46
      %s49 = sadd.s32 %s48, 1
      %p52 = scmp.eq.s32.totalorder %s14, 1
      %p53 = scmp.ne.s32.totalorder %s48, %s50
      %p54 = scmp.eq.s32.totalorder %s14, 0
      %p55 = por %p53, %p54
      %p56 = scmp.ne.s32.totalorder %s48, %s50
      %p57 = scmp.eq.s32.totalorder %s19, 1
      %p58 = por %p56, %p57
      %p59 = scmp.ne.s32.totalorder %s50, %s51
      %p60 = scmp.eq.s32.totalorder %s19, 0
      %p61 = por %p59, %p60
      %p62 = scmp.ne.s32.totalorder %s50, %s51
      %p63 = scmp.eq.s32.totalorder %s20, 1
      %p64 = por %p62, %p63
      %p66 = scmp.ne.s32.totalorder %s51, %s65
      %p67 = scmp.eq.s32.totalorder %s20, 0
      %p68 = por %p66, %p67
      %s70 = sadd.s32 %s69, 1
      %p73 = scmp.eq.s32.totalorder %s14, 1
      %p74 = scmp.ne.s32.totalorder %s69, %s71
      %p75 = scmp.eq.s32.totalorder %s14, 0
      %p76 = por %p74, %p75
      %p77 = scmp.ne.s32.totalorder %s69, %s71
      %p78 = scmp.eq.s32.totalorder %s19, 1
      %p79 = por %p77, %p78
      %p80 = scmp.ne.s32.totalorder %s71, %s72
      %p81 = scmp.eq.s32.totalorder %s19, 0
      %p82 = por %p80, %p81
      %p83 = scmp.ne.s32.totalorder %s71, %s72
      %p84 = scmp.eq.s32.totalorder %s20, 1
      %p85 = por %p83, %p84
      %p87 = scmp.ne.s32.totalorder %s72, %s86
      %p88 = scmp.eq.s32.totalorder %s20, 0
      %p89 = por %p87, %p88
      %s91 = sadd.s32 %s90, 1
      %p94 = scmp.eq.s32.totalorder %s14, 1
      %p95 = scmp.ne.s32.totalorder %s90, %s92
      %p96 = scmp.eq.s32.totalorder %s14, 0
      %p97 = por %p95, %p96
      %p98 = scmp.ne.s32.totalorder %s90, %s92
      %p99 = scmp.eq.s32.totalorder %s19, 1
      %p100 = por %p98, %p99
      %p101 = scmp.ne.s32.totalorder %s92, %s93
      %p102 = scmp.eq.s32.totalorder %s19, 0
      %p103 = por %p101, %p102
      %p104 = scmp.ne.s32.totalorder %s92, %s93
      %p105 = scmp.eq.s32.totalorder %s20, 1
      %p106 = por %p104, %p105
      %p108 = scmp.ne.s32.totalorder %s93, %s107
      %p109 = scmp.eq.s32.totalorder %s20, 0
      %p110 = por %p108, %p109
      %s112 = sadd.s32 %s111, 1
      %p115 = scmp.eq.s32.totalorder %s14, 1
      %p116 = scmp.ne.s32.totalorder %s111, %s113
      %p117 = scmp.eq.s32.totalorder %s14, 0
      %p118 = por %p116, %p117
      %p119 = scmp.ne.s32.totalorder %s111, %s113
      %p120 = scmp.eq.s32.totalorder %s19, 1
      %p121 = por %p119, %p120
      %p122 = scmp.ne.s32.totalorder %s113, %s114
      %p123 = scmp.eq.s32.totalorder %s19, 0
      %p124 = por %p122, %p123
      %p125 = scmp.ne.s32.totalorder %s113, %s114
      %p126 = scmp.eq.s32.totalorder %s20, 1
      %p127 = por %p125, %p126
      %p129 = scmp.ne.s32.totalorder %s114, %s128
      %p130 = scmp.eq.s32.totalorder %s20, 0
      %p131 = por %p129, %p130
      %s132 = ssub.s32 %s14, %s21
      %p133 = scmp.eq.s32.totalorder %s132, 0
      %s135 = sadd.s32 %s134, 1
      %s136 = scalar_select %p133, %s134, %s135
      %p139 = pneg %p133
      %p140 = scmp.eq.s32.totalorder %s14, 1
      %p141 = por %p139, %p140
      %p142 = scmp.ne.s32.totalorder %s134, %s137
      %p143 = scmp.eq.s32.totalorder %s14, 0
      %p144 = por %p142, %p143
      %p145 = scmp.ne.s32.totalorder %s134, %s137
      %p146 = scmp.eq.s32.totalorder %s19, 1
      %p147 = por %p145, %p146
      %p148 = scmp.ne.s32.totalorder %s137, %s138
      %p149 = scmp.eq.s32.totalorder %s19, 0
      %p150 = por %p148, %p149
      %p151 = scmp.ne.s32.totalorder %s137, %s138
      %p152 = scmp.eq.s32.totalorder %s20, 1
      %p153 = por %p151, %p152
      %p155 = scmp.ne.s32.totalorder %s138, %s154
      %p156 = scmp.eq.s32.totalorder %s20, 0
      %p157 = por %p155, %p156
      %p158 = scmp.le.s32.totalorder 1, %s14
      %p159 = scmp.lt.s32.totalorder %s14, 3
      %p160 = pnand %p158, %p159
      %p161 = pneg %p160
      // Predicated region
      $region9: #{tpu_custom_call.1} parent=5 // pred_check
        _
      $region10: #{tpu_custom_call.1} parent=5 // pred_check_branch
        %163 = sbr.rel (%p160) target = $region12
      $region11: #{tpu_custom_call.1} parent=5 // pred_region
        %s164 = ssub.s32 %s14, 1
        // Predicated region
        $region13: #{tpu_custom_call.1} parent=11 // pred_check
          %p165 = pneg %p61
        $region14: #{tpu_custom_call.1} parent=11 // pred_check_branch
          %167 = sbr.rel (%p165) target = $region16
        $region15: #{tpu_custom_call.1} parent=11 // pred_region
          _
        $region16: #{tpu_custom_call.1} parent=11 // pred_fallthru
          _
        // Predicated region
        $region17: #{tpu_custom_call.1} parent=11 // pred_check
          %p168 = pneg %p82
        $region18: #{tpu_custom_call.1} parent=11 // pred_check_branch
          %170 = sbr.rel (%p168) target = $region20
        $region19: #{tpu_custom_call.1} parent=11 // pred_region
          _
        $region20: #{tpu_custom_call.1} parent=11 // pred_fallthru
          _
        // Predicated region
        $region21: #{tpu_custom_call.1} parent=11 // pred_check
          %p171 = pneg %p103
        $region22: #{tpu_custom_call.1} parent=11 // pred_check_branch
          %173 = sbr.rel (%p171) target = $region24
        $region23: #{tpu_custom_call.1} parent=11 // pred_region
          _
        $region24: #{tpu_custom_call.1} parent=11 // pred_fallthru
          _
        // Predicated region
        $region25: #{tpu_custom_call.1} parent=11 // pred_check
          %p174 = pneg %p124
        $region26: #{tpu_custom_call.1} parent=11 // pred_check_branch
          %176 = sbr.rel (%p174) target = $region28
        $region27: #{tpu_custom_call.1} parent=11 // pred_region
          _
        $region28: #{tpu_custom_call.1} parent=11 // pred_fallthru
          _
      $region12: #{tpu_custom_call.1} parent=5 // pred_fallthru
        _
      %p177 = scmp.lt.s32.totalorder %s14, 2
      // Predicated region
      $region29: #{tpu_custom_call.1} parent=5 // pred_check
        %p178 = pneg %p177
      $region30: #{tpu_custom_call.1} parent=5 // pred_check_branch
        %180 = sbr.rel (%p178) target = $region32
      $region31: #{tpu_custom_call.1} parent=5 // pred_region
        // Predicated region
        $region33: #{tpu_custom_call.1} parent=31 // pred_check
          %p181 = pneg %p34
        $region34: #{tpu_custom_call.1} parent=31 // pred_check_branch
          %183 = sbr.rel (%p181) target = $region36
        $region35: #{tpu_custom_call.1} parent=31 // pred_region
          %s184 = smul.u32 2, %s14
          %p185 = scmp.lt.s32.totalorder %s184, 3
          %s186 = scalar_select %p185, %s184, 3
          %s187 = smul.addr %s186, 16
          %s188 = smul.addr %s187, 8
          %s189 = scalar_lea.vmem %s0, %s188
          %s190 = smul.u32 2, %s14
        $region36: #{tpu_custom_call.1} parent=31 // pred_fallthru
          _
      $region32: #{tpu_custom_call.1} parent=5 // pred_fallthru
        _
      %p191 = scmp.le.s32.totalorder 1, %s14
      %p192 = scmp.lt.s32.totalorder %s14, 3
      %p193 = pnand %p191, %p192
      %p194 = pneg %p193
      // Predicated region
      $region37: #{tpu_custom_call.1} parent=5 // pred_check
        _
      $region38: #{tpu_custom_call.1} parent=5 // pred_check_branch
        %196 = sbr.rel (%p193) target = $region40
      $region39: #{tpu_custom_call.1} parent=5 // pred_region
        %s197 = ssub.s32 %s14, 1
        %s198 = smul.u32 2, %s19
        %p199 = scmp.lt.s32.totalorder %s198, 3
        %s200 = scalar_select %p199, %s198, 3
        %s201 = smul.addr %s200, 16
        %s202 = smul.addr %s201, 8
        %s203 = scalar_lea.vmem %s0, %s202
        %p204 = pneg %p40
        %p205 = pneg %p37
        %p206 = pneg %p61
        %p207 = pneg %p58
        %p208 = pneg %p82
        %p209 = pneg %p79
        %p210 = pneg %p103
        %p211 = pneg %p100
        %p212 = pneg %p124
        %p213 = pneg %p121
        %p214 = pneg %p150
        %p215 = pneg %p147
        %s216 = sand.u32 %s137, 1
        %s217 = scalar_lea.sflag [#allocation5], %s216
        %s218 = sand.u32 %s137, 1
        %s219 = smul.addr %s218, 256
        %s220 = scalar_lea.vmem [#allocation4], %s219
        %s221 = smul.u32 2, %s19
        %p222 = scmp.lt.s32.totalorder %s221, 3
        %s223 = scalar_select %p222, %s221, 3
        %s224 = smul.addr %s223, 16
        %s225 = smul.addr %s224, 8
        %s226 = scalar_lea.vmem %s0, %s225
        %s227 = smul.u32 2, %s19
        %s228 = smul.u32 2, %s19
        %v230 = vld [vmem:[%s226] sm:$0xff]
        %v231 = vld [vmem:[%s226 + $0x8] sm:$0xff]
        %v232 = vld [vmem:[%s226 + $0x10] sm:$0xff]
        %v233 = vld [vmem:[%s226 + $0x18] sm:$0xff]
        %v234 = vld [vmem:[%s226 + $0x20] sm:$0xff]
        %v235 = vld [vmem:[%s226 + $0x28] sm:$0xff]
        %v236 = vld [vmem:[%s226 + $0x30] sm:$0xff]
        %v237 = vld [vmem:[%s226 + $0x38] sm:$0xff]
        %v238 = vld [vmem:[%s226 + $0x40] sm:$0xff]
        %v239 = vld [vmem:[%s226 + $0x48] sm:$0xff]
        %v240 = vld [vmem:[%s226 + $0x50] sm:$0xff]
        %v241 = vld [vmem:[%s226 + $0x58] sm:$0xff]
        %v242 = vld [vmem:[%s226 + $0x60] sm:$0xff]
        %v243 = vld [vmem:[%s226 + $0x68] sm:$0xff]
        %v244 = vld [vmem:[%s226 + $0x70] sm:$0xff]
        %v245 = vld [vmem:[%s226 + $0x78] sm:$0xff]
        %v246 = vld [vmem:[%s226 + $0x80] sm:$0xff]
        %v247 = vld [vmem:[%s226 + $0x88] sm:$0xff]
        %v248 = vld [vmem:[%s226 + $0x90] sm:$0xff]
        %v249 = vld [vmem:[%s226 + $0x98] sm:$0xff]
        %v250 = vld [vmem:[%s226 + $0xa0] sm:$0xff]
        %v251 = vld [vmem:[%s226 + $0xa8] sm:$0xff]
        %v252 = vld [vmem:[%s226 + $0xb0] sm:$0xff]
        %v253 = vld [vmem:[%s226 + $0xb8] sm:$0xff]
        %v254 = vld [vmem:[%s226 + $0xc0] sm:$0xff]
        %v255 = vld [vmem:[%s226 + $0xc8] sm:$0xff]
        %v256 = vld [vmem:[%s226 + $0xd0] sm:$0xff]
        %v257 = vld [vmem:[%s226 + $0xd8] sm:$0xff]
        %v258 = vld [vmem:[%s226 + $0xe0] sm:$0xff]
        %v259 = vld [vmem:[%s226 + $0xe8] sm:$0xff]
        %v260 = vld [vmem:[%s226 + $0xf0] sm:$0xff]
        %v261 = vld [vmem:[%s226 + $0xf8] sm:$0xff]
        %v262 = vpack.c.bf16 %v231, %v230
        %v263 = vpack.c.bf16 %v233, %v232
        %v264 = vpack.c.bf16 %v235, %v234
        %v265 = vpack.c.bf16 %v237, %v236
        %v266 = vpack.c.bf16 %v239, %v238
        %v267 = vpack.c.bf16 %v241, %v240
        %v268 = vpack.c.bf16 %v243, %v242
        %v269 = vpack.c.bf16 %v245, %v244
        %v270 = vpack.c.bf16 %v247, %v246
        %v271 = vpack.c.bf16 %v249, %v248
        %v272 = vpack.c.bf16 %v251, %v250
        %v273 = vpack.c.bf16 %v253, %v252
        %v274 = vpack.c.bf16 %v255, %v254
        %v275 = vpack.c.bf16 %v257, %v256
        %v276 = vpack.c.bf16 %v259, %v258
        %v277 = vpack.c.bf16 %v261, %v260
        %v278 = vld [vmem:[%s1] sm:$0xff]
        %v279 = vld [vmem:[%s1 + $0x8] sm:$0xf]
        %v280 = vld [vmem:[%s1 + $0xc] sm:$0xff]
        %v281 = vld [vmem:[%s1 + $0x14] sm:$0xf]
        %v282 = vld [vmem:[%s1 + $0x18] sm:$0xff]
        %v283 = vld [vmem:[%s1 + $0x20] sm:$0xf]
        %v284 = vld [vmem:[%s1 + $0x24] sm:$0xff]
        %v285 = vld [vmem:[%s1 + $0x2c] sm:$0xf]
        %v286 = vld [vmem:[%s1 + $0x30] sm:$0xff]
        %v287 = vld [vmem:[%s1 + $0x38] sm:$0xf]
        %v288 = vld [vmem:[%s1 + $0x3c] sm:$0xff]
        %v289 = vld [vmem:[%s1 + $0x44] sm:$0xf]
        %v290 = vld [vmem:[%s1 + $0x48] sm:$0xff]
        %v291 = vld [vmem:[%s1 + $0x50] sm:$0xf]
        %v292 = vld [vmem:[%s1 + $0x54] sm:$0xff]
        %v293 = vld [vmem:[%s1 + $0x5c] sm:$0xf]
        %v310 = vunpack.c.l.b16 %v278
        %v311 = vunpack.c.h.b16 %v278
        %v312 = vunpack.c.l.b16 %v279
        %v313 = vunpack.c.l.b16 %v280
        %v314 = vunpack.c.h.b16 %v280
        %v315 = vunpack.c.l.b16 %v281
        %v316 = vunpack.c.l.b16 %v282
        %v317 = vunpack.c.h.b16 %v282
        %v318 = vunpack.c.l.b16 %v283
        %v319 = vunpack.c.l.b16 %v284
        %v320 = vunpack.c.h.b16 %v284
        %v321 = vunpack.c.l.b16 %v285
        %v322 = vunpack.c.l.b16 %v286
        %v323 = vunpack.c.h.b16 %v286
        %v324 = vunpack.c.l.b16 %v287
        %v325 = vunpack.c.l.b16 %v288
        %v326 = vunpack.c.h.b16 %v288
        %v327 = vunpack.c.l.b16 %v289
        %v328 = vunpack.c.l.b16 %v290
        %v329 = vunpack.c.h.b16 %v290
        %v330 = vunpack.c.l.b16 %v291
        %v331 = vunpack.c.l.b16 %v292
        %v332 = vunpack.c.h.b16 %v292
        %v333 = vunpack.c.l.b16 %v293
        %v334 = vpack.c.b16 %v313, %v310
        %v335 = vpack.c.b16 %v314, %v311
        %v336 = vpack.c.b16 %v315, %v312
        %v337 = vpack.c.b16 %v319, %v316
        %v338 = vpack.c.b16 %v320, %v317
        %v339 = vpack.c.b16 %v321, %v318
        %v340 = vpack.c.b16 %v325, %v322
        %v341 = vpack.c.b16 %v326, %v323
        %v342 = vpack.c.b16 %v327, %v324
        %v343 = vpack.c.b16 %v331, %v328
        %v344 = vpack.c.b16 %v332, %v329
        %v345 = vpack.c.b16 %v333, %v330
        %vm358 = vcmask 523264
        %v360 = vsel %vm358, %v262, 0
        %v363 = vsel %vm358, %v263, 0
        %v366 = vsel %vm358, %v264, 0
        %v369 = vsel %vm358, %v265, 0
        %v372 = vsel %vm358, %v266, 0
        %v375 = vsel %vm358, %v267, 0
        %v378 = vsel %vm358, %v268, 0
        %v381 = vsel %vm358, %v269, 0
        %v384 = vsel %vm358, %v270, 0
        %v387 = vsel %vm358, %v271, 0
        %v390 = vsel %vm358, %v272, 0
        %v393 = vsel %vm358, %v273, 0
        %v396 = vsel %vm358, %v274, 0
        %v399 = vsel %vm358, %v275, 0
        %v402 = vsel %vm358, %v276, 0
        %v405 = vsel %vm358, %v277, 0
        %407 = vmatprep.subr.bf16.mxu0 %v335
        %408 = vmatpush1.bf16.msra.mxu0 %v334
        %409 = vmatprep.subr.bf16.mxu0 %v338
        %410 = vmatpush1.bf16.msra.mxu0 %v337
        %411 = vmatprep.subr.bf16.mxu0 %v341
        %412 = vmatpush1.bf16.msra.mxu0 %v340
        %413 = vmatprep.subr.bf16.mxu0 %v344
        %414 = vmatpush1.bf16.msra.mxu0 %v343
        %415 = vmatprep.subr.bf16.mxu0 0
        %416 = vmatpush1.bf16.msra.mxu0 0
        %417 = vmatprep.subr.bf16.mxu0 0
        %418 = vmatpush1.bf16.msra.mxu0 0
        %419 = vmatprep.subr.bf16.mxu0 0
        %420 = vmatpush1.bf16.msra.mxu0 0
        %421 = vmatprep.subr.bf16.mxu0 0
        %422 = vmatpush1.bf16.msra.mxu0 0
        %423 = vmatprep.subr.bf16.mxu0 0
        %424 = vmatpush1.bf16.msra.mxu0 0
        %425 = vmatprep.subr.bf16.mxu0 0
        %426 = vmatpush1.bf16.msra.mxu0 0
        %427 = vmatprep.subr.bf16.mxu0 0
        %428 = vmatpush1.bf16.msra.mxu0 0
        %429 = vmatprep.subr.bf16.mxu0 0
        %430 = vmatpush1.bf16.msra.mxu0 0
        %431 = vmatprep.subr.bf16.mxu0 0
        %432 = vmatpush1.bf16.msra.mxu0 0
        %433 = vmatprep.subr.bf16.mxu0 0
        %434 = vmatpush1.bf16.msra.mxu0 0
        %435 = vmatprep.subr.bf16.mxu0 0
        %436 = vmatpush1.bf16.msra.mxu0 0
        %437 = vmatprep.subr.bf16.mxu0 0
        %438 = vmatpush1.bf16.msra.mxu0 0
        %439 = vmatprep.mubr.bf16.mxu0 0
        %440 = vmatmul.mubr.bf16.gmra.mrb[0].mxu0 %v360
        %v441 = vpop.f32.mrb[0].mxu0
        %v442 = vadd.f32 0.0, %v441
        %v443 = vpop.f32.mrb[0].mxu0
        %v444 = vadd.f32 0.0, %v443
        %v445 = vpop.f32.mrb[0].mxu0
        %v446 = vadd.f32 0.0, %v445
        %v447 = vpop.f32.mrb[0].mxu0
        %v448 = vadd.f32 0.0, %v447
        %449 = vmatprep.mubr.bf16.mxu0 0
        %450 = vmatmul.mubr.bf16.gmra.mrb[0].mxu0 %v363
        %v451 = vpop.f32.mrb[0].mxu0
        %v452 = vadd.f32 0.0, %v451
        %v453 = vpop.f32.mrb[0].mxu0
        %v454 = vadd.f32 0.0, %v453
        %v455 = vpop.f32.mrb[0].mxu0
        %v456 = vadd.f32 0.0, %v455
        %v457 = vpop.f32.mrb[0].mxu0
        %v458 = vadd.f32 0.0, %v457
        %459 = vmatprep.mubr.bf16.mxu0 0
        %460 = vmatmul.mubr.bf16.gmra.mrb[0].mxu0 %v366
        %v461 = vpop.f32.mrb[0].mxu0
        %v462 = vadd.f32 0.0, %v461
        %v463 = vpop.f32.mrb[0].mxu0
        %v464 = vadd.f32 0.0, %v463
        %v465 = vpop.f32.mrb[0].mxu0
        %v466 = vadd.f32 0.0, %v465
        %v467 = vpop.f32.mrb[0].mxu0
        %v468 = vadd.f32 0.0, %v467
        %469 = vmatprep.mubr.bf16.mxu0 0
        %470 = vmatmul.mubr.bf16.gmra.mrb[0].mxu0 %v369
        %v471 = vpop.f32.mrb[0].mxu0
        %v472 = vadd.f32 0.0, %v471
        %v473 = vpop.f32.mrb[0].mxu0
        %v474 = vadd.f32 0.0, %v473
        %v475 = vpop.f32.mrb[0].mxu0
        %v476 = vadd.f32 0.0, %v475
        %v477 = vpop.f32.mrb[0].mxu0
        %v478 = vadd.f32 0.0, %v477
        %479 = vmatprep.mubr.bf16.mxu0 0
        %480 = vmatmul.mubr.bf16.gmra.mrb[0].mxu0 %v372
        %v481 = vpop.f32.mrb[0].mxu0
        %v482 = vadd.f32 0.0, %v481
        %v483 = vpop.f32.mrb[0].mxu0
        %v484 = vadd.f32 0.0, %v483
        %v485 = vpop.f32.mrb[0].mxu0
        %v486 = vadd.f32 0.0, %v485
        %v487 = vpop.f32.mrb[0].mxu0
        %v488 = vadd.f32 0.0, %v487
        %489 = vmatprep.mubr.bf16.mxu0 0
        %490 = vmatmul.mubr.bf16.gmra.mrb[0].mxu0 %v375
        %v491 = vpop.f32.mrb[0].mxu0
        %v492 = vadd.f32 0.0, %v491
        %v493 = vpop.f32.mrb[0].mxu0
        %v494 = vadd.f32 0.0, %v493
        %v495 = vpop.f32.mrb[0].mxu0
        %v496 = vadd.f32 0.0, %v495
        %v497 = vpop.f32.mrb[0].mxu0
        %v498 = vadd.f32 0.0, %v497
        %499 = vmatprep.mubr.bf16.mxu0 0
        %500 = vmatmul.mubr.bf16.gmra.mrb[0].mxu0 %v378
        %v501 = vpop.f32.mrb[0].mxu0
        %v502 = vadd.f32 0.0, %v501
        %v503 = vpop.f32.mrb[0].mxu0
        %v504 = vadd.f32 0.0, %v503
        %v505 = vpop.f32.mrb[0].mxu0
        %v506 = vadd.f32 0.0, %v505
        %v507 = vpop.f32.mrb[0].mxu0
        %v508 = vadd.f32 0.0, %v507
        %509 = vmatprep.mubr.bf16.mxu0 0
        %510 = vmatmul.mubr.bf16.gmra.mrb[0].mxu0 %v381
        %v511 = vpop.f32.mrb[0].mxu0
        %v512 = vadd.f32 0.0, %v511
        %v513 = vpop.f32.mrb[0].mxu0
        %v514 = vadd.f32 0.0, %v513
        %v515 = vpop.f32.mrb[0].mxu0
        %v516 = vadd.f32 0.0, %v515
        %v517 = vpop.f32.mrb[0].mxu0
        %v518 = vadd.f32 0.0, %v517
        %519 = vmatprep.mubr.bf16.mxu0 0
        %520 = vmatmul.mubr.bf16.gmra.mrb[0].mxu0 %v384
        %v521 = vpop.f32.mrb[0].mxu0
        %v522 = vadd.f32 0.0, %v521
        %v523 = vpop.f32.mrb[0].mxu0
        %v524 = vadd.f32 0.0, %v523
        %v525 = vpop.f32.mrb[0].mxu0
        %v526 = vadd.f32 0.0, %v525
        %v527 = vpop.f32.mrb[0].mxu0
        %v528 = vadd.f32 0.0, %v527
        %529 = vmatprep.mubr.bf16.mxu0 0
        %530 = vmatmul.mubr.bf16.gmra.mrb[0].mxu0 %v387
        %v531 = vpop.f32.mrb[0].mxu0
        %v532 = vadd.f32 0.0, %v531
        %v533 = vpop.f32.mrb[0].mxu0
        %v534 = vadd.f32 0.0, %v533
        %v535 = vpop.f32.mrb[0].mxu0
        %v536 = vadd.f32 0.0, %v535
        %v537 = vpop.f32.mrb[0].mxu0
        %v538 = vadd.f32 0.0, %v537
        %539 = vmatprep.mubr.bf16.mxu0 0
        %540 = vmatmul.mubr.bf16.gmra.mrb[0].mxu0 %v390
        %v541 = vpop.f32.mrb[0].mxu0
        %v542 = vadd.f32 0.0, %v541
        %v543 = vpop.f32.mrb[0].mxu0
        %v544 = vadd.f32 0.0, %v543
        %v545 = vpop.f32.mrb[0].mxu0
        %v546 = vadd.f32 0.0, %v545
        %v547 = vpop.f32.mrb[0].mxu0
        %v548 = vadd.f32 0.0, %v547
        %549 = vmatprep.mubr.bf16.mxu0 0
        %550 = vmatmul.mubr.bf16.gmra.mrb[0].mxu0 %v393
        %v551 = vpop.f32.mrb[0].mxu0
        %v552 = vadd.f32 0.0, %v551
        %v553 = vpop.f32.mrb[0].mxu0
        %v554 = vadd.f32 0.0, %v553
        %v555 = vpop.f32.mrb[0].mxu0
        %v556 = vadd.f32 0.0, %v555
        %v557 = vpop.f32.mrb[0].mxu0
        %v558 = vadd.f32 0.0, %v557
        %559 = vmatprep.mubr.bf16.mxu0 0
        %560 = vmatmul.mubr.bf16.gmra.mrb[0].mxu0 %v396
        %v561 = vpop.f32.mrb[0].mxu0
        %v562 = vadd.f32 0.0, %v561
        %v563 = vpop.f32.mrb[0].mxu0
        %v564 = vadd.f32 0.0, %v563
        %v565 = vpop.f32.mrb[0].mxu0
        %v566 = vadd.f32 0.0, %v565
        %v567 = vpop.f32.mrb[0].mxu0
        %v568 = vadd.f32 0.0, %v567
        %569 = vmatprep.mubr.bf16.mxu0 0
        %570 = vmatmul.mubr.bf16.gmra.mrb[0].mxu0 %v399
        %v571 = vpop.f32.mrb[0].mxu0
        %v572 = vadd.f32 0.0, %v571
        %v573 = vpop.f32.mrb[0].mxu0
        %v574 = vadd.f32 0.0, %v573
        %v575 = vpop.f32.mrb[0].mxu0
        %v576 = vadd.f32 0.0, %v575
        %v577 = vpop.f32.mrb[0].mxu0
        %v578 = vadd.f32 0.0, %v577
        %579 = vmatprep.mubr.bf16.mxu0 0
        %580 = vmatmul.mubr.bf16.gmra.mrb[0].mxu0 %v402
        %v581 = vpop.f32.mrb[0].mxu0
        %v582 = vadd.f32 0.0, %v581
        %v583 = vpop.f32.mrb[0].mxu0
        %v584 = vadd.f32 0.0, %v583
        %v585 = vpop.f32.mrb[0].mxu0
        %v586 = vadd.f32 0.0, %v585
        %v587 = vpop.f32.mrb[0].mxu0
        %v588 = vadd.f32 0.0, %v587
        %589 = vmatprep.mubr.bf16.mxu0 0
        %590 = vmatmul.mubr.bf16.gmra.mrb[0].mxu0 %v405
        %v591 = vpop.f32.mrb[0].mxu0
        %v592 = vadd.f32 0.0, %v591
        %v593 = vpop.f32.mrb[0].mxu0
        %v594 = vadd.f32 0.0, %v593
        %v595 = vpop.f32.mrb[0].mxu0
        %v596 = vadd.f32 0.0, %v595
        %v597 = vpop.f32.mrb[0].mxu0
        %v598 = vadd.f32 0.0, %v597
        %599 = vdwg.mxu0
        %600 = vmatprep.subr.bf16.mxu0 0
        %601 = vmatpush1.bf16.msra.mxu0 %v336
        %602 = vmatprep.subr.bf16.mxu0 0
        %603 = vmatpush1.bf16.msra.mxu0 %v339
        %604 = vmatprep.subr.bf16.mxu0 0
        %605 = vmatpush1.bf16.msra.mxu0 %v342
        %606 = vmatprep.subr.bf16.mxu0 0
        %607 = vmatpush1.bf16.msra.mxu0 %v345
        %608 = vmatprep.subr.bf16.mxu0 0
        %609 = vmatpush1.bf16.msra.mxu0 0
        %610 = vmatprep.subr.bf16.mxu0 0
        %611 = vmatpush1.bf16.msra.mxu0 0
        %612 = vmatprep.subr.bf16.mxu0 0
        %613 = vmatpush1.bf16.msra.mxu0 0
        %614 = vmatprep.subr.bf16.mxu0 0
        %615 = vmatpush1.bf16.msra.mxu0 0
        %616 = vmatprep.subr.bf16.mxu0 0
        %617 = vmatpush1.bf16.msra.mxu0 0
        %618 = vmatprep.subr.bf16.mxu0 0
        %619 = vmatpush1.bf16.msra.mxu0 0
        %620 = vmatprep.subr.bf16.mxu0 0
        %621 = vmatpush1.bf16.msra.mxu0 0
        %622 = vmatprep.subr.bf16.mxu0 0
        %623 = vmatpush1.bf16.msra.mxu0 0
        %624 = vmatprep.subr.bf16.mxu0 0
        %625 = vmatpush1.bf16.msra.mxu0 0
        %626 = vmatprep.subr.bf16.mxu0 0
        %627 = vmatpush1.bf16.msra.mxu0 0
        %628 = vmatprep.subr.bf16.mxu0 0
        %629 = vmatpush1.bf16.msra.mxu0 0
        %630 = vmatprep.subr.bf16.mxu0 0
        %631 = vmatpush1.bf16.msra.mxu0 0
        %632 = vmatprep.mubr.bf16.mxu0 0
        %633 = vmatmul.mubr.bf16.gmra.mrb[0].mxu0 %v360
        %v634 = vpop.f32.mrb[0].mxu0
        %v635 = vadd.f32 0.0, %v634
        %v636 = vpop.f32.mrb[0].mxu0
        %v637 = vpop.f32.mrb[0].mxu0
        %v638 = vadd.f32 0.0, %v637
        %v639 = vpop.f32.mrb[0].mxu0
        %640 = vmatprep.mubr.bf16.mxu0 0
        %641 = vmatmul.mubr.bf16.gmra.mrb[0].mxu0 %v363
        %v642 = vpop.f32.mrb[0].mxu0
        %v643 = vadd.f32 0.0, %v642
        %v644 = vpop.f32.mrb[0].mxu0
        %v645 = vpop.f32.mrb[0].mxu0
        %v646 = vadd.f32 0.0, %v645
        %v647 = vpop.f32.mrb[0].mxu0
        %648 = vmatprep.mubr.bf16.mxu0 0
        %649 = vmatmul.mubr.bf16.gmra.mrb[0].mxu0 %v366
        %v650 = vpop.f32.mrb[0].mxu0
        %v651 = vadd.f32 0.0, %v650
        %v652 = vpop.f32.mrb[0].mxu0
        %v653 = vpop.f32.mrb[0].mxu0
        %v654 = vadd.f32 0.0, %v653
        %v655 = vpop.f32.mrb[0].mxu0
        %656 = vmatprep.mubr.bf16.mxu0 0
        %657 = vmatmul.mubr.bf16.gmra.mrb[0].mxu0 %v369
        %v658 = vpop.f32.mrb[0].mxu0
        %v659 = vadd.f32 0.0, %v658
        %v660 = vpop.f32.mrb[0].mxu0
        %v661 = vpop.f32.mrb[0].mxu0
        %v662 = vadd.f32 0.0, %v661
        %v663 = vpop.f32.mrb[0].mxu0
        %664 = vmatprep.mubr.bf16.mxu0 0
        %665 = vmatmul.mubr.bf16.gmra.mrb[0].mxu0 %v372
        %v666 = vpop.f32.mrb[0].mxu0
        %v667 = vadd.f32 0.0, %v666
        %v668 = vpop.f32.mrb[0].mxu0
        %v669 = vpop.f32.mrb[0].mxu0
        %v670 = vadd.f32 0.0, %v669
        %v671 = vpop.f32.mrb[0].mxu0
        %672 = vmatprep.mubr.bf16.mxu0 0
        %673 = vmatmul.mubr.bf16.gmra.mrb[0].mxu0 %v375
        %v674 = vpop.f32.mrb[0].mxu0
        %v675 = vadd.f32 0.0, %v674
        %v676 = vpop.f32.mrb[0].mxu0
        %v677 = vpop.f32.mrb[0].mxu0
        %v678 = vadd.f32 0.0, %v677
        %v679 = vpop.f32.mrb[0].mxu0
        %680 = vmatprep.mubr.bf16.mxu0 0
        %681 = vmatmul.mubr.bf16.gmra.mrb[0].mxu0 %v378
        %v682 = vpop.f32.mrb[0].mxu0
        %v683 = vadd.f32 0.0, %v682
        %v684 = vpop.f32.mrb[0].mxu0
        %v685 = vpop.f32.mrb[0].mxu0
        %v686 = vadd.f32 0.0, %v685
        %v687 = vpop.f32.mrb[0].mxu0
        %688 = vmatprep.mubr.bf16.mxu0 0
        %689 = vmatmul.mubr.bf16.gmra.mrb[0].mxu0 %v381
        %v690 = vpop.f32.mrb[0].mxu0
        %v691 = vadd.f32 0.0, %v690
        %v692 = vpop.f32.mrb[0].mxu0
        %v693 = vpop.f32.mrb[0].mxu0
        %v694 = vadd.f32 0.0, %v693
        %v695 = vpop.f32.mrb[0].mxu0
        %696 = vmatprep.mubr.bf16.mxu0 0
        %697 = vmatmul.mubr.bf16.gmra.mrb[0].mxu0 %v384
        %v698 = vpop.f32.mrb[0].mxu0
        %v699 = vadd.f32 0.0, %v698
        %v700 = vpop.f32.mrb[0].mxu0
        %v701 = vpop.f32.mrb[0].mxu0
        %v702 = vadd.f32 0.0, %v701
        %v703 = vpop.f32.mrb[0].mxu0
        %704 = vmatprep.mubr.bf16.mxu0 0
        %705 = vmatmul.mubr.bf16.gmra.mrb[0].mxu0 %v387
        %v706 = vpop.f32.mrb[0].mxu0
        %v707 = vadd.f32 0.0, %v706
        %v708 = vpop.f32.mrb[0].mxu0
        %v709 = vpop.f32.mrb[0].mxu0
        %v710 = vadd.f32 0.0, %v709
        %v711 = vpop.f32.mrb[0].mxu0
        %712 = vmatprep.mubr.bf16.mxu0 0
        %713 = vmatmul.mubr.bf16.gmra.mrb[0].mxu0 %v390
        %v714 = vpop.f32.mrb[0].mxu0
        %v715 = vadd.f32 0.0, %v714
        %v716 = vpop.f32.mrb[0].mxu0
        %v717 = vpop.f32.mrb[0].mxu0
        %v718 = vadd.f32 0.0, %v717
        %v719 = vpop.f32.mrb[0].mxu0
        %720 = vmatprep.mubr.bf16.mxu0 0
        %721 = vmatmul.mubr.bf16.gmra.mrb[0].mxu0 %v393
        %v722 = vpop.f32.mrb[0].mxu0
        %v723 = vadd.f32 0.0, %v722
        %v724 = vpop.f32.mrb[0].mxu0
        %v725 = vpop.f32.mrb[0].mxu0
        %v726 = vadd.f32 0.0, %v725
        %v727 = vpop.f32.mrb[0].mxu0
        %728 = vmatprep.mubr.bf16.mxu0 0
        %729 = vmatmul.mubr.bf16.gmra.mrb[0].mxu0 %v396
        %v730 = vpop.f32.mrb[0].mxu0
        %v731 = vadd.f32 0.0, %v730
        %v732 = vpop.f32.mrb[0].mxu0
        %v733 = vpop.f32.mrb[0].mxu0
        %v734 = vadd.f32 0.0, %v733
        %v735 = vpop.f32.mrb[0].mxu0
        %736 = vmatprep.mubr.bf16.mxu0 0
        %737 = vmatmul.mubr.bf16.gmra.mrb[0].mxu0 %v399
        %v738 = vpop.f32.mrb[0].mxu0
        %v739 = vadd.f32 0.0, %v738
        %v740 = vpop.f32.mrb[0].mxu0
        %v741 = vpop.f32.mrb[0].mxu0
        %v742 = vadd.f32 0.0, %v741
        %v743 = vpop.f32.mrb[0].mxu0
        %744 = vmatprep.mubr.bf16.mxu0 0
        %745 = vmatmul.mubr.bf16.gmra.mrb[0].mxu0 %v402
        %v746 = vpop.f32.mrb[0].mxu0
        %v747 = vadd.f32 0.0, %v746
        %v748 = vpop.f32.mrb[0].mxu0
        %v749 = vpop.f32.mrb[0].mxu0
        %v750 = vadd.f32 0.0, %v749
        %v751 = vpop.f32.mrb[0].mxu0
        %752 = vmatprep.mubr.bf16.mxu0 0
        %753 = vmatmul.mubr.bf16.gmra.mrb[0].mxu0 %v405
        %v754 = vpop.f32.mrb[0].mxu0
        %v755 = vadd.f32 0.0, %v754
        %v756 = vpop.f32.mrb[0].mxu0
        %v757 = vpop.f32.mrb[0].mxu0
        %v758 = vadd.f32 0.0, %v757
        %v759 = vpop.f32.mrb[0].mxu0
        %760 = vdwg.mxu0
        %v761 = vpack.c.bf16 %v446, %v442
        %v762 = vpack.c.bf16 %v448, %v444
        %v763 = vpack.c.bf16 %v638, %v635
        %v764 = vpack.c.bf16 %v456, %v452
        %v765 = vpack.c.bf16 %v458, %v454
        %v766 = vpack.c.bf16 %v646, %v643
        %v767 = vpack.c.bf16 %v466, %v462
        %v768 = vpack.c.bf16 %v468, %v464
        %v769 = vpack.c.bf16 %v654, %v651
        %v770 = vpack.c.bf16 %v476, %v472
        %v771 = vpack.c.bf16 %v478, %v474
        %v772 = vpack.c.bf16 %v662, %v659
        %v773 = vpack.c.bf16 %v486, %v482
        %v774 = vpack.c.bf16 %v488, %v484
        %v775 = vpack.c.bf16 %v670, %v667
        %v776 = vpack.c.bf16 %v496, %v492
        %v777 = vpack.c.bf16 %v498, %v494
        %v778 = vpack.c.bf16 %v678, %v675
        %v779 = vpack.c.bf16 %v506, %v502
        %v780 = vpack.c.bf16 %v508, %v504
        %v781 = vpack.c.bf16 %v686, %v683
        %v782 = vpack.c.bf16 %v516, %v512
        %v783 = vpack.c.bf16 %v518, %v514
        %v784 = vpack.c.bf16 %v694, %v691
        %v785 = vpack.c.bf16 %v526, %v522
        %v786 = vpack.c.bf16 %v528, %v524
        %v787 = vpack.c.bf16 %v702, %v699
        %v788 = vpack.c.bf16 %v536, %v532
        %v789 = vpack.c.bf16 %v538, %v534
        %v790 = vpack.c.bf16 %v710, %v707
        %v791 = vpack.c.bf16 %v546, %v542
        %v792 = vpack.c.bf16 %v548, %v544
        %v793 = vpack.c.bf16 %v718, %v715
        %v794 = vpack.c.bf16 %v556, %v552
        %v795 = vpack.c.bf16 %v558, %v554
        %v796 = vpack.c.bf16 %v726, %v723
        %v797 = vpack.c.bf16 %v566, %v562
        %v798 = vpack.c.bf16 %v568, %v564
        %v799 = vpack.c.bf16 %v734, %v731
        %v800 = vpack.c.bf16 %v576, %v572
        %v801 = vpack.c.bf16 %v578, %v574
        %v802 = vpack.c.bf16 %v742, %v739
        %v803 = vpack.c.bf16 %v586, %v582
        %v804 = vpack.c.bf16 %v588, %v584
        %v805 = vpack.c.bf16 %v750, %v747
        %v806 = vpack.c.bf16 %v596, %v592
        %v807 = vpack.c.bf16 %v598, %v594
        %v808 = vpack.c.bf16 %v758, %v755
        %809 = vst [vmem:[#allocation2] sm:$0xff] %v761
        %810 = vst [vmem:[#allocation2 + $0x8] sm:$0xff] %v762
        %811 = vst [vmem:[#allocation2 + $0x10] sm:$0xff] %v763
        %812 = vst [vmem:[#allocation2 + $0x18] sm:$0xff] %v764
        %813 = vst [vmem:[#allocation2 + $0x20] sm:$0xff] %v765
        %814 = vst [vmem:[#allocation2 + $0x28] sm:$0xff] %v766
        %815 = vst [vmem:[#allocation2 + $0x30] sm:$0xff] %v767
        %816 = vst [vmem:[#allocation2 + $0x38] sm:$0xff] %v768
        %817 = vst [vmem:[#allocation2 + $0x40] sm:$0xff] %v769
        %818 = vst [vmem:[#allocation2 + $0x48] sm:$0xff] %v770
        %819 = vst [vmem:[#allocation2 + $0x50] sm:$0xff] %v771
        %820 = vst [vmem:[#allocation2 + $0x58] sm:$0xff] %v772
        %821 = vst [vmem:[#allocation2 + $0x60] sm:$0xff] %v773
        %822 = vst [vmem:[#allocation2 + $0x68] sm:$0xff] %v774
        %823 = vst [vmem:[#allocation2 + $0x70] sm:$0xff] %v775
        %824 = vst [vmem:[#allocation2 + $0x78] sm:$0xff] %v776
        %825 = vst [vmem:[#allocation2 + $0x80] sm:$0xff] %v777
        %826 = vst [vmem:[#allocation2 + $0x88] sm:$0xff] %v778
        %827 = vst [vmem:[#allocation2 + $0x90] sm:$0xff] %v779
        %828 = vst [vmem:[#allocation2 + $0x98] sm:$0xff] %v780
        %829 = vst [vmem:[#allocation2 + $0xa0] sm:$0xff] %v781
        %830 = vst [vmem:[#allocation2 + $0xa8] sm:$0xff] %v782
        %831 = vst [vmem:[#allocation2 + $0xb0] sm:$0xff] %v783
        %832 = vst [vmem:[#allocation2 + $0xb8] sm:$0xff] %v784
        %833 = vst [vmem:[#allocation2 + $0xc0] sm:$0xff] %v785
        %834 = vst [vmem:[#allocation2 + $0xc8] sm:$0xff] %v786
        %835 = vst [vmem:[#allocation2 + $0xd0] sm:$0xff] %v787
        %836 = vst [vmem:[#allocation2 + $0xd8] sm:$0xff] %v788
        %837 = vst [vmem:[#allocation2 + $0xe0] sm:$0xff] %v789
        %838 = vst [vmem:[#allocation2 + $0xe8] sm:$0xff] %v790
        %839 = vst [vmem:[#allocation2 + $0xf0] sm:$0xff] %v791
        %840 = vst [vmem:[#allocation2 + $0xf8] sm:$0xff] %v792
        %841 = vst [vmem:[#allocation2 + $0x100] sm:$0xff] %v793
        %842 = vst [vmem:[#allocation2 + $0x108] sm:$0xff] %v794
        %843 = vst [vmem:[#allocation2 + $0x110] sm:$0xff] %v795
        %844 = vst [vmem:[#allocation2 + $0x118] sm:$0xff] %v796
        %845 = vst [vmem:[#allocation2 + $0x120] sm:$0xff] %v797
        %846 = vst [vmem:[#allocation2 + $0x128] sm:$0xff] %v798
        %847 = vst [vmem:[#allocation2 + $0x130] sm:$0xff] %v799
        %848 = vst [vmem:[#allocation2 + $0x138] sm:$0xff] %v800
        %849 = vst [vmem:[#allocation2 + $0x140] sm:$0xff] %v801
        %850 = vst [vmem:[#allocation2 + $0x148] sm:$0xff] %v802
        %851 = vst [vmem:[#allocation2 + $0x150] sm:$0xff] %v803
        %852 = vst [vmem:[#allocation2 + $0x158] sm:$0xff] %v804
        %853 = vst [vmem:[#allocation2 + $0x160] sm:$0xff] %v805
        %854 = vst [vmem:[#allocation2 + $0x168] sm:$0xff] %v806
        %855 = vst [vmem:[#allocation2 + $0x170] sm:$0xff] %v807
        %856 = vst [vmem:[#allocation2 + $0x178] sm:$0xff] %v808
        %v857 = vld [vmem:[#allocation2] sm:$0xff]
        %v858 = vld [vmem:[#allocation2 + $0x18] sm:$0xff]
        %v859 = vld [vmem:[#allocation2 + $0x30] sm:$0xff]
        %v860 = vld [vmem:[#allocation2 + $0x48] sm:$0xff]
        %v861 = vld [vmem:[#allocation2 + $0x60] sm:$0xff]
        %v862 = vld [vmem:[#allocation2 + $0x78] sm:$0xff]
        %v863 = vld [vmem:[#allocation2 + $0x90] sm:$0xff]
        %v864 = vld [vmem:[#allocation2 + $0xa8] sm:$0xff]
        %v865 = vld [vmem:[#allocation2 + $0xc0] sm:$0xff]
        %v866 = vld [vmem:[#allocation2 + $0xd8] sm:$0xff]
        %v867 = vld [vmem:[#allocation2 + $0xf0] sm:$0xff]
        %v868 = vld [vmem:[#allocation2 + $0x108] sm:$0xff]
        %v869 = vld [vmem:[#allocation2 + $0x120] sm:$0xff]
        %v870 = vld [vmem:[#allocation2 + $0x138] sm:$0xff]
        %v871 = vld [vmem:[#allocation2 + $0x150] sm:$0xff]
        %v872 = vld [vmem:[#allocation2 + $0x168] sm:$0xff]
        %v873 = vld [vmem:[#allocation2 + $0x8] sm:$0xff]
        %v874 = vld [vmem:[#allocation2 + $0x20] sm:$0xff]
        %v875 = vld [vmem:[#allocation2 + $0x38] sm:$0xff]
        %v876 = vld [vmem:[#allocation2 + $0x50] sm:$0xff]
        %v877 = vld [vmem:[#allocation2 + $0x68] sm:$0xff]
        %v878 = vld [vmem:[#allocation2 + $0x80] sm:$0xff]
        %v879 = vld [vmem:[#allocation2 + $0x98] sm:$0xff]
        %v880 = vld [vmem:[#allocation2 + $0xb0] sm:$0xff]
        %v881 = vld [vmem:[#allocation2 + $0xc8] sm:$0xff]
        %v882 = vld [vmem:[#allocation2 + $0xe0] sm:$0xff]
        %v883 = vld [vmem:[#allocation2 + $0xf8] sm:$0xff]
        %v884 = vld [vmem:[#allocation2 + $0x110] sm:$0xff]
        %v885 = vld [vmem:[#allocation2 + $0x128] sm:$0xff]
        %v886 = vld [vmem:[#allocation2 + $0x140] sm:$0xff]
        %v887 = vld [vmem:[#allocation2 + $0x158] sm:$0xff]
        %v888 = vld [vmem:[#allocation2 + $0x170] sm:$0xff]
        %v889 = vld [vmem:[#allocation2 + $0x10] sm:$0xff]
        %v890 = vld [vmem:[#allocation2 + $0x28] sm:$0xff]
        %v891 = vld [vmem:[#allocation2 + $0x40] sm:$0xff]
        %v892 = vld [vmem:[#allocation2 + $0x58] sm:$0xff]
        %v893 = vld [vmem:[#allocation2 + $0x70] sm:$0xff]
        %v894 = vld [vmem:[#allocation2 + $0x88] sm:$0xff]
        %v895 = vld [vmem:[#allocation2 + $0xa0] sm:$0xff]
        %v896 = vld [vmem:[#allocation2 + $0xb8] sm:$0xff]
        %v897 = vld [vmem:[#allocation2 + $0xd0] sm:$0xff]
        %v898 = vld [vmem:[#allocation2 + $0xe8] sm:$0xff]
        %v899 = vld [vmem:[#allocation2 + $0x100] sm:$0xff]
        %v900 = vld [vmem:[#allocation2 + $0x118] sm:$0xff]
        %v901 = vld [vmem:[#allocation2 + $0x130] sm:$0xff]
        %v902 = vld [vmem:[#allocation2 + $0x148] sm:$0xff]
        %v903 = vld [vmem:[#allocation2 + $0x160] sm:$0xff]
        %v904 = vld [vmem:[#allocation2 + $0x178] sm:$0xff]
        %v905 = vld [vmem:[%s2] sm:$0xff]
        %v906 = vld [vmem:[%s2 + $0x8] sm:$0xff]
        %v907 = vld [vmem:[%s2 + $0x10] sm:$0xff]
        %v908 = vld [vmem:[%s2 + $0x18] sm:$0xff]
        %v909 = vld [vmem:[%s2 + $0x20] sm:$0xff]
        %v910 = vld [vmem:[%s2 + $0x28] sm:$0xff]
        %v911 = vld [vmem:[%s2 + $0x30] sm:$0xff]
        %v912 = vld [vmem:[%s2 + $0x38] sm:$0xff]
        %v913 = vld [vmem:[%s2 + $0x40] sm:$0xff]
        %v914 = vld [vmem:[%s2 + $0x48] sm:$0xff]
        %v915 = vld [vmem:[%s2 + $0x50] sm:$0xff]
        %v916 = vld [vmem:[%s2 + $0x58] sm:$0xff]
        %v917 = vld [vmem:[%s2 + $0x60] sm:$0xff]
        %v918 = vld [vmem:[%s2 + $0x68] sm:$0xff]
        %v919 = vld [vmem:[%s2 + $0x70] sm:$0xff]
        %v920 = vld [vmem:[%s2 + $0x78] sm:$0xff]
        %vm921 = vcmask 261120
        %v923 = vsel %vm921, %v857, 0
        %v926 = vsel %vm921, %v858, 0
        %v929 = vsel %vm921, %v859, 0
        %v932 = vsel %vm921, %v860, 0
        %v935 = vsel %vm921, %v861, 0
        %v938 = vsel %vm921, %v862, 0
        %v941 = vsel %vm921, %v863, 0
        %v944 = vsel %vm921, %v864, 0
        %v947 = vsel %vm921, %v873, 0
        %v950 = vsel %vm921, %v874, 0
        %v953 = vsel %vm921, %v875, 0
        %v956 = vsel %vm921, %v876, 0
        %v959 = vsel %vm921, %v877, 0
        %v962 = vsel %vm921, %v878, 0
        %v965 = vsel %vm921, %v879, 0
        %v968 = vsel %vm921, %v880, 0
        %970 = vmatprep.subr.bf16.mxu0 0
        %971 = vmatpush1.bf16.xpose.msra.mxu0 %v947
        %972 = vmatprep.subr.bf16.mxu0 0
        %973 = vmatpush1.bf16.xpose.msra.mxu0 %v950
        %974 = vmatprep.subr.bf16.mxu0 0
        %975 = vmatpush1.bf16.xpose.msra.mxu0 %v953
        %976 = vmatprep.subr.bf16.mxu0 0
        %977 = vmatpush1.bf16.xpose.msra.mxu0 %v956
        %978 = vmatprep.subr.bf16.mxu0 0
        %979 = vmatpush1.bf16.xpose.msra.mxu0 %v959
        %980 = vmatprep.subr.bf16.mxu0 0
        %981 = vmatpush1.bf16.xpose.msra.mxu0 %v962
        %982 = vmatprep.subr.bf16.mxu0 0
        %983 = vmatpush1.bf16.xpose.msra.mxu0 %v965
        %984 = vmatprep.subr.bf16.mxu0 0
        %985 = vmatpush1.bf16.xpose.msra.mxu0 %v968
        %986 = vmatprep.subr.bf16.mxu0 0
        %987 = vmatpush1.bf16.xpose.msra.mxu0 0
        %988 = vmatprep.subr.bf16.mxu0 0
        %989 = vmatpush1.bf16.xpose.msra.mxu0 0
        %990 = vmatprep.subr.bf16.mxu0 0
        %991 = vmatpush1.bf16.xpose.msra.mxu0 0
        %992 = vmatprep.subr.bf16.mxu0 0
        %993 = vmatpush1.bf16.xpose.msra.mxu0 0
        %994 = vmatprep.subr.bf16.mxu0 0
        %995 = vmatpush1.bf16.xpose.msra.mxu0 0
        %996 = vmatprep.subr.bf16.mxu0 0
        %997 = vmatpush1.bf16.xpose.msra.mxu0 0
        %998 = vmatprep.subr.bf16.mxu0 0
        %999 = vmatpush1.bf16.xpose.msra.mxu0 0
        %1000 = vmatprep.subr.bf16.mxu0 0
        %1001 = vmatpush1.bf16.xpose.msra.mxu0 0
        %1002 = vmatprep.mubr.bf16.mxu0 0
        %1003 = vmatmul.mubr.bf16.gmra.mrb[0].mxu0 %v923
        %v1004 = vpop.f32.mrb[0].mxu0
        %v1005 = vadd.f32 %v905, %v1004
        %v1006 = vpop.f32.mrb[0].mxu0
        %v1007 = vpop.f32.mrb[0].mxu0
        %v1008 = vadd.f32 %v906, %v1007
        %v1009 = vpop.f32.mrb[0].mxu0
        %1010 = vmatprep.mubr.bf16.mxu0 0
        %1011 = vmatmul.mubr.bf16.gmra.mrb[0].mxu0 %v926
        %v1012 = vpop.f32.mrb[0].mxu0
        %v1013 = vadd.f32 %v907, %v1012
        %v1014 = vpop.f32.mrb[0].mxu0
        %v1015 = vpop.f32.mrb[0].mxu0
        %v1016 = vadd.f32 %v908, %v1015
        %v1017 = vpop.f32.mrb[0].mxu0
        %1018 = vmatprep.mubr.bf16.mxu0 0
        %1019 = vmatmul.mubr.bf16.gmra.mrb[0].mxu0 %v929
        %v1020 = vpop.f32.mrb[0].mxu0
        %v1021 = vadd.f32 %v909, %v1020
        %v1022 = vpop.f32.mrb[0].mxu0
        %v1023 = vpop.f32.mrb[0].mxu0
        %v1024 = vadd.f32 %v910, %v1023
        %v1025 = vpop.f32.mrb[0].mxu0
        %1026 = vmatprep.mubr.bf16.mxu0 0
        %1027 = vmatmul.mubr.bf16.gmra.mrb[0].mxu0 %v932
        %v1028 = vpop.f32.mrb[0].mxu0
        %v1029 = vadd.f32 %v911, %v1028
        %v1030 = vpop.f32.mrb[0].mxu0
        %v1031 = vpop.f32.mrb[0].mxu0
        %v1032 = vadd.f32 %v912, %v1031
        %v1033 = vpop.f32.mrb[0].mxu0
        %1034 = vmatprep.mubr.bf16.mxu0 0
        %1035 = vmatmul.mubr.bf16.gmra.mrb[0].mxu0 %v935
        %v1036 = vpop.f32.mrb[0].mxu0
        %v1037 = vadd.f32 %v913, %v1036
        %v1038 = vpop.f32.mrb[0].mxu0
        %v1039 = vpop.f32.mrb[0].mxu0
        %v1040 = vadd.f32 %v914, %v1039
        %v1041 = vpop.f32.mrb[0].mxu0
        %1042 = vmatprep.mubr.bf16.mxu0 0
        %1043 = vmatmul.mubr.bf16.gmra.mrb[0].mxu0 %v938
        %v1044 = vpop.f32.mrb[0].mxu0
        %v1045 = vadd.f32 %v915, %v1044
        %v1046 = vpop.f32.mrb[0].mxu0
        %v1047 = vpop.f32.mrb[0].mxu0
        %v1048 = vadd.f32 %v916, %v1047
        %v1049 = vpop.f32.mrb[0].mxu0
        %1050 = vmatprep.mubr.bf16.mxu0 0
        %1051 = vmatmul.mubr.bf16.gmra.mrb[0].mxu0 %v941
        %v1052 = vpop.f32.mrb[0].mxu0
        %v1053 = vadd.f32 %v917, %v1052
        %v1054 = vpop.f32.mrb[0].mxu0
        %v1055 = vpop.f32.mrb[0].mxu0
        %v1056 = vadd.f32 %v918, %v1055
        %v1057 = vpop.f32.mrb[0].mxu0
        %1058 = vmatprep.mubr.bf16.mxu0 0
        %1059 = vmatmul.mubr.bf16.gmra.mrb[0].mxu0 %v944
        %v1060 = vpop.f32.mrb[0].mxu0
        %v1061 = vadd.f32 %v919, %v1060
        %v1062 = vpop.f32.mrb[0].mxu0
        %v1063 = vpop.f32.mrb[0].mxu0
        %v1064 = vadd.f32 %v920, %v1063
        %v1065 = vpop.f32.mrb[0].mxu0
        %1066 = vdwg.mxu0
        %v1068 = vsel %vm921, %v865, 0
        %v1071 = vsel %vm921, %v866, 0
        %v1074 = vsel %vm921, %v867, 0
        %v1077 = vsel %vm921, %v868, 0
        %v1080 = vsel %vm921, %v869, 0
        %v1083 = vsel %vm921, %v870, 0
        %v1086 = vsel %vm921, %v871, 0
        %v1089 = vsel %vm921, %v872, 0
        %v1092 = vsel %vm921, %v881, 0
        %v1095 = vsel %vm921, %v882, 0
        %v1098 = vsel %vm921, %v883, 0
        %v1101 = vsel %vm921, %v884, 0
        %v1104 = vsel %vm921, %v885, 0
        %v1107 = vsel %vm921, %v886, 0
        %v1110 = vsel %vm921, %v887, 0
        %v1113 = vsel %vm921, %v888, 0
        %1115 = vmatprep.subr.bf16.mxu0 0
        %1116 = vmatpush1.bf16.xpose.msra.mxu0 %v1092
        %1117 = vmatprep.subr.bf16.mxu0 0
        %1118 = vmatpush1.bf16.xpose.msra.mxu0 %v1095
        %1119 = vmatprep.subr.bf16.mxu0 0
        %1120 = vmatpush1.bf16.xpose.msra.mxu0 %v1098
        %1121 = vmatprep.subr.bf16.mxu0 0
        %1122 = vmatpush1.bf16.xpose.msra.mxu0 %v1101
        %1123 = vmatprep.subr.bf16.mxu0 0
        %1124 = vmatpush1.bf16.xpose.msra.mxu0 %v1104
        %1125 = vmatprep.subr.bf16.mxu0 0
        %1126 = vmatpush1.bf16.xpose.msra.mxu0 %v1107
        %1127 = vmatprep.subr.bf16.mxu0 0
        %1128 = vmatpush1.bf16.xpose.msra.mxu0 %v1110
        %1129 = vmatprep.subr.bf16.mxu0 0
        %1130 = vmatpush1.bf16.xpose.msra.mxu0 %v1113
        %1131 = vmatprep.subr.bf16.mxu0 0
        %1132 = vmatpush1.bf16.xpose.msra.mxu0 0
        %1133 = vmatprep.subr.bf16.mxu0 0
        %1134 = vmatpush1.bf16.xpose.msra.mxu0 0
        %1135 = vmatprep.subr.bf16.mxu0 0
        %1136 = vmatpush1.bf16.xpose.msra.mxu0 0
        %1137 = vmatprep.subr.bf16.mxu0 0
        %1138 = vmatpush1.bf16.xpose.msra.mxu0 0
        %1139 = vmatprep.subr.bf16.mxu0 0
        %1140 = vmatpush1.bf16.xpose.msra.mxu0 0
        %1141 = vmatprep.subr.bf16.mxu0 0
        %1142 = vmatpush1.bf16.xpose.msra.mxu0 0
        %1143 = vmatprep.subr.bf16.mxu0 0
        %1144 = vmatpush1.bf16.xpose.msra.mxu0 0
        %1145 = vmatprep.subr.bf16.mxu0 0
        %1146 = vmatpush1.bf16.xpose.msra.mxu0 0
        %1147 = vmatprep.mubr.bf16.mxu0 0
        %1148 = vmatmul.mubr.bf16.gmra.mrb[0].mxu0 %v1068
        %v1149 = vpop.f32.mrb[0].mxu0
        %v1150 = vadd.f32 %v905, %v1149
        %v1151 = vpop.f32.mrb[0].mxu0
        %v1152 = vpop.f32.mrb[0].mxu0
        %v1153 = vadd.f32 %v906, %v1152
        %v1154 = vpop.f32.mrb[0].mxu0
        %1155 = vmatprep.mubr.bf16.mxu0 0
        %1156 = vmatmul.mubr.bf16.gmra.mrb[0].mxu0 %v1071
        %v1157 = vpop.f32.mrb[0].mxu0
        %v1158 = vadd.f32 %v907, %v1157
        %v1159 = vpop.f32.mrb[0].mxu0
        %v1160 = vpop.f32.mrb[0].mxu0
        %v1161 = vadd.f32 %v908, %v1160
        %v1162 = vpop.f32.mrb[0].mxu0
        %1163 = vmatprep.mubr.bf16.mxu0 0
        %1164 = vmatmul.mubr.bf16.gmra.mrb[0].mxu0 %v1074
        %v1165 = vpop.f32.mrb[0].mxu0
        %v1166 = vadd.f32 %v909, %v1165
        %v1167 = vpop.f32.mrb[0].mxu0
        %v1168 = vpop.f32.mrb[0].mxu0
        %v1169 = vadd.f32 %v910, %v1168
        %v1170 = vpop.f32.mrb[0].mxu0
        %1171 = vmatprep.mubr.bf16.mxu0 0
        %1172 = vmatmul.mubr.bf16.gmra.mrb[0].mxu0 %v1077
        %v1173 = vpop.f32.mrb[0].mxu0
        %v1174 = vadd.f32 %v911, %v1173
        %v1175 = vpop.f32.mrb[0].mxu0
        %v1176 = vpop.f32.mrb[0].mxu0
        %v1177 = vadd.f32 %v912, %v1176
        %v1178 = vpop.f32.mrb[0].mxu0
        %1179 = vmatprep.mubr.bf16.mxu0 0
        %1180 = vmatmul.mubr.bf16.gmra.mrb[0].mxu0 %v1080
        %v1181 = vpop.f32.mrb[0].mxu0
        %v1182 = vadd.f32 %v913, %v1181
        %v1183 = vpop.f32.mrb[0].mxu0
        %v1184 = vpop.f32.mrb[0].mxu0
        %v1185 = vadd.f32 %v914, %v1184
        %v1186 = vpop.f32.mrb[0].mxu0
        %1187 = vmatprep.mubr.bf16.mxu0 0
        %1188 = vmatmul.mubr.bf16.gmra.mrb[0].mxu0 %v1083
        %v1189 = vpop.f32.mrb[0].mxu0
        %v1190 = vadd.f32 %v915, %v1189
        %v1191 = vpop.f32.mrb[0].mxu0
        %v1192 = vpop.f32.mrb[0].mxu0
        %v1193 = vadd.f32 %v916, %v1192
        %v1194 = vpop.f32.mrb[0].mxu0
        %1195 = vmatprep.mubr.bf16.mxu0 0
        %1196 = vmatmul.mubr.bf16.gmra.mrb[0].mxu0 %v1086
        %v1197 = vpop.f32.mrb[0].mxu0
        %v1198 = vadd.f32 %v917, %v1197
        %v1199 = vpop.f32.mrb[0].mxu0
        %v1200 = vpop.f32.mrb[0].mxu0
        %v1201 = vadd.f32 %v918, %v1200
        %v1202 = vpop.f32.mrb[0].mxu0
        %1203 = vmatprep.mubr.bf16.mxu0 0
        %1204 = vmatmul.mubr.bf16.gmra.mrb[0].mxu0 %v1089
        %v1205 = vpop.f32.mrb[0].mxu0
        %v1206 = vadd.f32 %v919, %v1205
        %v1207 = vpop.f32.mrb[0].mxu0
        %v1208 = vpop.f32.mrb[0].mxu0
        %v1209 = vadd.f32 %v920, %v1208
        %v1210 = vpop.f32.mrb[0].mxu0
        %1211 = vdwg.mxu0
        %1212 = vmax.xlane.f32.xlu0 %v1005
        %v1213 = vpop.xlane.xlu0 %1212
        %1214 = vmax.xlane.f32.xlu0 %v1008
        %v1215 = vpop.xlane.xlu0 %1214
        %1216 = vmax.xlane.f32.xlu0 %v1013
        %v1217 = vpop.xlane.xlu0 %1216
        %1218 = vmax.xlane.f32.xlu0 %v1016
        %v1219 = vpop.xlane.xlu0 %1218
        %1220 = vmax.xlane.f32.xlu0 %v1021
        %v1221 = vpop.xlane.xlu0 %1220
        %1222 = vmax.xlane.f32.xlu0 %v1024
        %v1223 = vpop.xlane.xlu0 %1222
        %1224 = vmax.xlane.f32.xlu0 %v1029
        %v1225 = vpop.xlane.xlu0 %1224
        %1226 = vmax.xlane.f32.xlu0 %v1032
        %v1227 = vpop.xlane.xlu0 %1226
        %1228 = vmax.xlane.f32.xlu0 %v1037
        %v1229 = vpop.xlane.xlu0 %1228
        %1230 = vmax.xlane.f32.xlu0 %v1040
        %v1231 = vpop.xlane.xlu0 %1230
        %1232 = vmax.xlane.f32.xlu0 %v1045
        %v1233 = vpop.xlane.xlu0 %1232
        %1234 = vmax.xlane.f32.xlu0 %v1048
        %v1235 = vpop.xlane.xlu0 %1234
        %1236 = vmax.xlane.f32.xlu0 %v1053
        %v1237 = vpop.xlane.xlu0 %1236
        %1238 = vmax.xlane.f32.xlu0 %v1056
        %v1239 = vpop.xlane.xlu0 %1238
        %1240 = vmax.xlane.f32.xlu0 %v1061
        %v1241 = vpop.xlane.xlu0 %1240
        %1242 = vmax.xlane.f32.xlu0 %v1064
        %v1243 = vpop.xlane.xlu0 %1242
        %1244 = vmax.xlane.f32.xlu0 %v1150
        %v1245 = vpop.xlane.xlu0 %1244
        %1246 = vmax.xlane.f32.xlu0 %v1153
        %v1247 = vpop.xlane.xlu0 %1246
        %1248 = vmax.xlane.f32.xlu0 %v1158
        %v1249 = vpop.xlane.xlu0 %1248
        %1250 = vmax.xlane.f32.xlu0 %v1161
        %v1251 = vpop.xlane.xlu0 %1250
        %1252 = vmax.xlane.f32.xlu0 %v1166
        %v1253 = vpop.xlane.xlu0 %1252
        %1254 = vmax.xlane.f32.xlu0 %v1169
        %v1255 = vpop.xlane.xlu0 %1254
        %1256 = vmax.xlane.f32.xlu0 %v1174
        %v1257 = vpop.xlane.xlu0 %1256
        %1258 = vmax.xlane.f32.xlu0 %v1177
        %v1259 = vpop.xlane.xlu0 %1258
        %1260 = vmax.xlane.f32.xlu0 %v1182
        %v1261 = vpop.xlane.xlu0 %1260
        %1262 = vmax.xlane.f32.xlu0 %v1185
        %v1263 = vpop.xlane.xlu0 %1262
        %1264 = vmax.xlane.f32.xlu0 %v1190
        %v1265 = vpop.xlane.xlu0 %1264
        %1266 = vmax.xlane.f32.xlu0 %v1193
        %v1267 = vpop.xlane.xlu0 %1266
        %1268 = vmax.xlane.f32.xlu0 %v1198
        %v1269 = vpop.xlane.xlu0 %1268
        %1270 = vmax.xlane.f32.xlu0 %v1201
        %v1271 = vpop.xlane.xlu0 %1270
        %1272 = vmax.xlane.f32.xlu0 %v1206
        %v1273 = vpop.xlane.xlu0 %1272
        %1274 = vmax.xlane.f32.xlu0 %v1209
        %v1275 = vpop.xlane.xlu0 %1274
        %v1276 = vsub.f32 %v1005, %v1213
        %v1277 = vsub.f32 %v1008, %v1215
        %v1278 = vsub.f32 %v1013, %v1217
        %v1279 = vsub.f32 %v1016, %v1219
        %v1280 = vsub.f32 %v1021, %v1221
        %v1281 = vsub.f32 %v1024, %v1223
        %v1282 = vsub.f32 %v1029, %v1225
        %v1283 = vsub.f32 %v1032, %v1227
        %v1284 = vsub.f32 %v1037, %v1229
        %v1285 = vsub.f32 %v1040, %v1231
        %v1286 = vsub.f32 %v1045, %v1233
        %v1287 = vsub.f32 %v1048, %v1235
        %v1288 = vsub.f32 %v1053, %v1237
        %v1289 = vsub.f32 %v1056, %v1239
        %v1290 = vsub.f32 %v1061, %v1241
        %v1291 = vsub.f32 %v1064, %v1243
        %v1292 = vsub.f32 %v1150, %v1245
        %v1293 = vsub.f32 %v1153, %v1247
        %v1294 = vsub.f32 %v1158, %v1249
        %v1295 = vsub.f32 %v1161, %v1251
        %v1296 = vsub.f32 %v1166, %v1253
        %v1297 = vsub.f32 %v1169, %v1255
        %v1298 = vsub.f32 %v1174, %v1257
        %v1299 = vsub.f32 %v1177, %v1259
        %v1300 = vsub.f32 %v1182, %v1261
        %v1301 = vsub.f32 %v1185, %v1263
        %v1302 = vsub.f32 %v1190, %v1265
        %v1303 = vsub.f32 %v1193, %v1267
        %v1304 = vsub.f32 %v1198, %v1269
        %v1305 = vsub.f32 %v1201, %v1271
        %v1306 = vsub.f32 %v1206, %v1273
        %v1307 = vsub.f32 %v1209, %v1275
        %v1308 = vmul.f32 %v1276, 1.442695
        %v1309 = vpow.pop %v1308
        %v1310 = vmul.f32 %v1277, 1.442695
        %v1311 = vpow.pop %v1310
        %v1312 = vmul.f32 %v1278, 1.442695
        %v1313 = vpow.pop %v1312
        %v1314 = vmul.f32 %v1279, 1.442695
        %v1315 = vpow.pop %v1314
        %v1316 = vmul.f32 %v1280, 1.442695
        %v1317 = vpow.pop %v1316
        %v1318 = vmul.f32 %v1281, 1.442695
        %v1319 = vpow.pop %v1318
        %v1320 = vmul.f32 %v1282, 1.442695
        %v1321 = vpow.pop %v1320
        %v1322 = vmul.f32 %v1283, 1.442695
        %v1323 = vpow.pop %v1322
        %v1324 = vmul.f32 %v1284, 1.442695
        %v1325 = vpow.pop %v1324
        %v1326 = vmul.f32 %v1285, 1.442695
        %v1327 = vpow.pop %v1326
        %v1328 = vmul.f32 %v1286, 1.442695
        %v1329 = vpow.pop %v1328
        %v1330 = vmul.f32 %v1287, 1.442695
        %v1331 = vpow.pop %v1330
        %v1332 = vmul.f32 %v1288, 1.442695
        %v1333 = vpow.pop %v1332
        %v1334 = vmul.f32 %v1289, 1.442695
        %v1335 = vpow.pop %v1334
        %v1336 = vmul.f32 %v1290, 1.442695
        %v1337 = vpow.pop %v1336
        %v1338 = vmul.f32 %v1291, 1.442695
        %v1339 = vpow.pop %v1338
        %v1340 = vmul.f32 %v1292, 1.442695
        %v1341 = vpow.pop %v1340
        %v1342 = vmul.f32 %v1293, 1.442695
        %v1343 = vpow.pop %v1342
        %v1344 = vmul.f32 %v1294, 1.442695
        %v1345 = vpow.pop %v1344
        %v1346 = vmul.f32 %v1295, 1.442695
        %v1347 = vpow.pop %v1346
        %v1348 = vmul.f32 %v1296, 1.442695
        %v1349 = vpow.pop %v1348
        %v1350 = vmul.f32 %v1297, 1.442695
        %v1351 = vpow.pop %v1350
        %v1352 = vmul.f32 %v1298, 1.442695
        %v1353 = vpow.pop %v1352
        %v1354 = vmul.f32 %v1299, 1.442695
        %v1355 = vpow.pop %v1354
        %v1356 = vmul.f32 %v1300, 1.442695
        %v1357 = vpow.pop %v1356
        %v1358 = vmul.f32 %v1301, 1.442695
        %v1359 = vpow.pop %v1358
        %v1360 = vmul.f32 %v1302, 1.442695
        %v1361 = vpow.pop %v1360
        %v1362 = vmul.f32 %v1303, 1.442695
        %v1363 = vpow.pop %v1362
        %v1364 = vmul.f32 %v1304, 1.442695
        %v1365 = vpow.pop %v1364
        %v1366 = vmul.f32 %v1305, 1.442695
        %v1367 = vpow.pop %v1366
        %v1368 = vmul.f32 %v1306, 1.442695
        %v1369 = vpow.pop %v1368
        %v1370 = vmul.f32 %v1307, 1.442695
        %v1371 = vpow.pop %v1370
        %1372 = vadd.xlane.f32.xlu0 %v1309
        %v1373 = vpop.xlane.xlu0 %1372
        %1374 = vadd.xlane.f32.xlu0 %v1311
        %v1375 = vpop.xlane.xlu0 %1374
        %1376 = vadd.xlane.f32.xlu0 %v1313
        %v1377 = vpop.xlane.xlu0 %1376
        %1378 = vadd.xlane.f32.xlu0 %v1315
        %v1379 = vpop.xlane.xlu0 %1378
        %1380 = vadd.xlane.f32.xlu0 %v1317
        %v1381 = vpop.xlane.xlu0 %1380
        %1382 = vadd.xlane.f32.xlu0 %v1319
        %v1383 = vpop.xlane.xlu0 %1382
        %1384 = vadd.xlane.f32.xlu0 %v1321
        %v1385 = vpop.xlane.xlu0 %1384
        %1386 = vadd.xlane.f32.xlu0 %v1323
        %v1387 = vpop.xlane.xlu0 %1386
        %1388 = vadd.xlane.f32.xlu0 %v1325
        %v1389 = vpop.xlane.xlu0 %1388
        %1390 = vadd.xlane.f32.xlu0 %v1327
        %v1391 = vpop.xlane.xlu0 %1390
        %1392 = vadd.xlane.f32.xlu0 %v1329
        %v1393 = vpop.xlane.xlu0 %1392
        %1394 = vadd.xlane.f32.xlu0 %v1331
        %v1395 = vpop.xlane.xlu0 %1394
        %1396 = vadd.xlane.f32.xlu0 %v1333
        %v1397 = vpop.xlane.xlu0 %1396
        %1398 = vadd.xlane.f32.xlu0 %v1335
        %v1399 = vpop.xlane.xlu0 %1398
        %1400 = vadd.xlane.f32.xlu0 %v1337
        %v1401 = vpop.xlane.xlu0 %1400
        %1402 = vadd.xlane.f32.xlu0 %v1339
        %v1403 = vpop.xlane.xlu0 %1402
        %1404 = vadd.xlane.f32.xlu0 %v1341
        %v1405 = vpop.xlane.xlu0 %1404
        %1406 = vadd.xlane.f32.xlu0 %v1343
        %v1407 = vpop.xlane.xlu0 %1406
        %1408 = vadd.xlane.f32.xlu0 %v1345
        %v1409 = vpop.xlane.xlu0 %1408
        %1410 = vadd.xlane.f32.xlu0 %v1347
        %v1411 = vpop.xlane.xlu0 %1410
        %1412 = vadd.xlane.f32.xlu0 %v1349
        %v1413 = vpop.xlane.xlu0 %1412
        %1414 = vadd.xlane.f32.xlu0 %v1351
        %v1415 = vpop.xlane.xlu0 %1414
        %1416 = vadd.xlane.f32.xlu0 %v1353
        %v1417 = vpop.xlane.xlu0 %1416
        %1418 = vadd.xlane.f32.xlu0 %v1355
        %v1419 = vpop.xlane.xlu0 %1418
        %1420 = vadd.xlane.f32.xlu0 %v1357
        %v1421 = vpop.xlane.xlu0 %1420
        %1422 = vadd.xlane.f32.xlu0 %v1359
        %v1423 = vpop.xlane.xlu0 %1422
        %1424 = vadd.xlane.f32.xlu0 %v1361
        %v1425 = vpop.xlane.xlu0 %1424
        %1426 = vadd.xlane.f32.xlu0 %v1363
        %v1427 = vpop.xlane.xlu0 %1426
        %1428 = vadd.xlane.f32.xlu0 %v1365
        %v1429 = vpop.xlane.xlu0 %1428
        %1430 = vadd.xlane.f32.xlu0 %v1367
        %v1431 = vpop.xlane.xlu0 %1430
        %1432 = vadd.xlane.f32.xlu0 %v1369
        %v1433 = vpop.xlane.xlu0 %1432
        %1434 = vadd.xlane.f32.xlu0 %v1371
        %v1435 = vpop.xlane.xlu0 %1434
        %v1436 = vrcp.pop %v1373
        %v1437 = vrcp.pop %v1375
        %v1438 = vrcp.pop %v1377
        %v1439 = vrcp.pop %v1379
        %v1440 = vrcp.pop %v1381
        %v1441 = vrcp.pop %v1383
        %v1442 = vrcp.pop %v1385
        %v1443 = vrcp.pop %v1387
        %v1444 = vrcp.pop %v1389
        %v1445 = vrcp.pop %v1391
        %v1446 = vrcp.pop %v1393
        %v1447 = vrcp.pop %v1395
        %v1448 = vrcp.pop %v1397
        %v1449 = vrcp.pop %v1399
        %v1450 = vrcp.pop %v1401
        %v1451 = vrcp.pop %v1403
        %v1452 = vrcp.pop %v1405
        %v1453 = vrcp.pop %v1407
        %v1454 = vrcp.pop %v1409
        %v1455 = vrcp.pop %v1411
        %v1456 = vrcp.pop %v1413
        %v1457 = vrcp.pop %v1415
        %v1458 = vrcp.pop %v1417
        %v1459 = vrcp.pop %v1419
        %v1460 = vrcp.pop %v1421
        %v1461 = vrcp.pop %v1423
        %v1462 = vrcp.pop %v1425
        %v1463 = vrcp.pop %v1427
        %v1464 = vrcp.pop %v1429
        %v1465 = vrcp.pop %v1431
        %v1466 = vrcp.pop %v1433
        %v1467 = vrcp.pop %v1435
        %v1468 = vmul.f32 %v1309, %v1436
        %v1469 = vmul.f32 %v1311, %v1437
        %v1470 = vmul.f32 %v1313, %v1438
        %v1471 = vmul.f32 %v1315, %v1439
        %v1472 = vmul.f32 %v1317, %v1440
        %v1473 = vmul.f32 %v1319, %v1441
        %v1474 = vmul.f32 %v1321, %v1442
        %v1475 = vmul.f32 %v1323, %v1443
        %v1476 = vmul.f32 %v1325, %v1444
        %v1477 = vmul.f32 %v1327, %v1445
        %v1478 = vmul.f32 %v1329, %v1446
        %v1479 = vmul.f32 %v1331, %v1447
        %v1480 = vmul.f32 %v1333, %v1448
        %v1481 = vmul.f32 %v1335, %v1449
        %v1482 = vmul.f32 %v1337, %v1450
        %v1483 = vmul.f32 %v1339, %v1451
        %v1484 = vmul.f32 %v1341, %v1452
        %v1485 = vmul.f32 %v1343, %v1453
        %v1486 = vmul.f32 %v1345, %v1454
        %v1487 = vmul.f32 %v1347, %v1455
        %v1488 = vmul.f32 %v1349, %v1456
        %v1489 = vmul.f32 %v1351, %v1457
        %v1490 = vmul.f32 %v1353, %v1458
        %v1491 = vmul.f32 %v1355, %v1459
        %v1492 = vmul.f32 %v1357, %v1460
        %v1493 = vmul.f32 %v1359, %v1461
        %v1494 = vmul.f32 %v1361, %v1462
        %v1495 = vmul.f32 %v1363, %v1463
        %v1496 = vmul.f32 %v1365, %v1464
        %v1497 = vmul.f32 %v1367, %v1465
        %v1498 = vmul.f32 %v1369, %v1466
        %v1499 = vmul.f32 %v1371, %v1467
        %v1500 = vpack.c.bf16 %v1469, %v1468
        %v1501 = vpack.c.bf16 %v1471, %v1470
        %v1502 = vpack.c.bf16 %v1473, %v1472
        %v1503 = vpack.c.bf16 %v1475, %v1474
        %v1504 = vpack.c.bf16 %v1477, %v1476
        %v1505 = vpack.c.bf16 %v1479, %v1478
        %v1506 = vpack.c.bf16 %v1481, %v1480
        %v1507 = vpack.c.bf16 %v1483, %v1482
        %v1508 = vpack.c.bf16 %v1485, %v1484
        %v1509 = vpack.c.bf16 %v1487, %v1486
        %v1510 = vpack.c.bf16 %v1489, %v1488
        %v1511 = vpack.c.bf16 %v1491, %v1490
        %v1512 = vpack.c.bf16 %v1493, %v1492
        %v1513 = vpack.c.bf16 %v1495, %v1494
        %v1514 = vpack.c.bf16 %v1497, %v1496
        %v1515 = vpack.c.bf16 %v1499, %v1498
        %1516 = vmatprep.subr.bf16.mxu0 0
        %1517 = vmatpush1.bf16.msra.mxu0 %v889
        %1518 = vmatprep.subr.bf16.mxu0 0
        %1519 = vmatpush1.bf16.msra.mxu0 %v890
        %1520 = vmatprep.subr.bf16.mxu0 0
        %1521 = vmatpush1.bf16.msra.mxu0 %v891
        %1522 = vmatprep.subr.bf16.mxu0 0
        %1523 = vmatpush1.bf16.msra.mxu0 %v892
        %1524 = vmatprep.subr.bf16.mxu0 0
        %1525 = vmatpush1.bf16.msra.mxu0 %v893
        %1526 = vmatprep.subr.bf16.mxu0 0
        %1527 = vmatpush1.bf16.msra.mxu0 %v894
        %1528 = vmatprep.subr.bf16.mxu0 0
        %1529 = vmatpush1.bf16.msra.mxu0 %v895
        %1530 = vmatprep.subr.bf16.mxu0 0
        %1531 = vmatpush1.bf16.msra.mxu0 %v896
        %1532 = vmatprep.subr.bf16.mxu0 0
        %1533 = vmatpush1.bf16.msra.mxu0 0
        %1534 = vmatprep.subr.bf16.mxu0 0
        %1535 = vmatpush1.bf16.msra.mxu0 0
        %1536 = vmatprep.subr.bf16.mxu0 0
        %1537 = vmatpush1.bf16.msra.mxu0 0
        %1538 = vmatprep.subr.bf16.mxu0 0
        %1539 = vmatpush1.bf16.msra.mxu0 0
        %1540 = vmatprep.subr.bf16.mxu0 0
        %1541 = vmatpush1.bf16.msra.mxu0 0
        %1542 = vmatprep.subr.bf16.mxu0 0
        %1543 = vmatpush1.bf16.msra.mxu0 0
        %1544 = vmatprep.subr.bf16.mxu0 0
        %1545 = vmatpush1.bf16.msra.mxu0 0
        %1546 = vmatprep.subr.bf16.mxu0 0
        %1547 = vmatpush1.bf16.msra.mxu0 0
        %1548 = vmatprep.mubr.bf16.mxu0 0
        %1549 = vmatmul.mubr.bf16.gmra.mrb[0].mxu0 %v1500
        %v1550 = vpop.f32.mrb[0].mxu0
        %v1551 = vadd.f32 0.0, %v1550
        %v1552 = vpop.f32.mrb[0].mxu0
        %v1553 = vpop.f32.mrb[0].mxu0
        %v1554 = vadd.f32 0.0, %v1553
        %v1555 = vpop.f32.mrb[0].mxu0
        %1556 = vmatprep.mubr.bf16.mxu0 0
        %1557 = vmatmul.mubr.bf16.gmra.mrb[0].mxu0 %v1501
        %v1558 = vpop.f32.mrb[0].mxu0
        %v1559 = vadd.f32 0.0, %v1558
        %v1560 = vpop.f32.mrb[0].mxu0
        %v1561 = vpop.f32.mrb[0].mxu0
        %v1562 = vadd.f32 0.0, %v1561
        %v1563 = vpop.f32.mrb[0].mxu0
        %1564 = vmatprep.mubr.bf16.mxu0 0
        %1565 = vmatmul.mubr.bf16.gmra.mrb[0].mxu0 %v1502
        %v1566 = vpop.f32.mrb[0].mxu0
        %v1567 = vadd.f32 0.0, %v1566
        %v1568 = vpop.f32.mrb[0].mxu0
        %v1569 = vpop.f32.mrb[0].mxu0
        %v1570 = vadd.f32 0.0, %v1569
        %v1571 = vpop.f32.mrb[0].mxu0
        %1572 = vmatprep.mubr.bf16.mxu0 0
        %1573 = vmatmul.mubr.bf16.gmra.mrb[0].mxu0 %v1503
        %v1574 = vpop.f32.mrb[0].mxu0
        %v1575 = vadd.f32 0.0, %v1574
        %v1576 = vpop.f32.mrb[0].mxu0
        %v1577 = vpop.f32.mrb[0].mxu0
        %v1578 = vadd.f32 0.0, %v1577
        %v1579 = vpop.f32.mrb[0].mxu0
        %1580 = vmatprep.mubr.bf16.mxu0 0
        %1581 = vmatmul.mubr.bf16.gmra.mrb[0].mxu0 %v1504
        %v1582 = vpop.f32.mrb[0].mxu0
        %v1583 = vadd.f32 0.0, %v1582
        %v1584 = vpop.f32.mrb[0].mxu0
        %v1585 = vpop.f32.mrb[0].mxu0
        %v1586 = vadd.f32 0.0, %v1585
        %v1587 = vpop.f32.mrb[0].mxu0
        %1588 = vmatprep.mubr.bf16.mxu0 0
        %1589 = vmatmul.mubr.bf16.gmra.mrb[0].mxu0 %v1505
        %v1590 = vpop.f32.mrb[0].mxu0
        %v1591 = vadd.f32 0.0, %v1590
        %v1592 = vpop.f32.mrb[0].mxu0
        %v1593 = vpop.f32.mrb[0].mxu0
        %v1594 = vadd.f32 0.0, %v1593
        %v1595 = vpop.f32.mrb[0].mxu0
        %1596 = vmatprep.mubr.bf16.mxu0 0
        %1597 = vmatmul.mubr.bf16.gmra.mrb[0].mxu0 %v1506
        %v1598 = vpop.f32.mrb[0].mxu0
        %v1599 = vadd.f32 0.0, %v1598
        %v1600 = vpop.f32.mrb[0].mxu0
        %v1601 = vpop.f32.mrb[0].mxu0
        %v1602 = vadd.f32 0.0, %v1601
        %v1603 = vpop.f32.mrb[0].mxu0
        %1604 = vmatprep.mubr.bf16.mxu0 0
        %1605 = vmatmul.mubr.bf16.gmra.mrb[0].mxu0 %v1507
        %v1606 = vpop.f32.mrb[0].mxu0
        %v1607 = vadd.f32 0.0, %v1606
        %v1608 = vpop.f32.mrb[0].mxu0
        %v1609 = vpop.f32.mrb[0].mxu0
        %v1610 = vadd.f32 0.0, %v1609
        %v1611 = vpop.f32.mrb[0].mxu0
        %1612 = vdwg.mxu0
        %1613 = vmatprep.subr.bf16.mxu0 0
        %1614 = vmatpush1.bf16.msra.mxu0 %v897
        %1615 = vmatprep.subr.bf16.mxu0 0
        %1616 = vmatpush1.bf16.msra.mxu0 %v898
        %1617 = vmatprep.subr.bf16.mxu0 0
        %1618 = vmatpush1.bf16.msra.mxu0 %v899
        %1619 = vmatprep.subr.bf16.mxu0 0
        %1620 = vmatpush1.bf16.msra.mxu0 %v900
        %1621 = vmatprep.subr.bf16.mxu0 0
        %1622 = vmatpush1.bf16.msra.mxu0 %v901
        %1623 = vmatprep.subr.bf16.mxu0 0
        %1624 = vmatpush1.bf16.msra.mxu0 %v902
        %1625 = vmatprep.subr.bf16.mxu0 0
        %1626 = vmatpush1.bf16.msra.mxu0 %v903
        %1627 = vmatprep.subr.bf16.mxu0 0
        %1628 = vmatpush1.bf16.msra.mxu0 %v904
        %1629 = vmatprep.subr.bf16.mxu0 0
        %1630 = vmatpush1.bf16.msra.mxu0 0
        %1631 = vmatprep.subr.bf16.mxu0 0
        %1632 = vmatpush1.bf16.msra.mxu0 0
        %1633 = vmatprep.subr.bf16.mxu0 0
        %1634 = vmatpush1.bf16.msra.mxu0 0
        %1635 = vmatprep.subr.bf16.mxu0 0
        %1636 = vmatpush1.bf16.msra.mxu0 0
        %1637 = vmatprep.subr.bf16.mxu0 0
        %1638 = vmatpush1.bf16.msra.mxu0 0
        %1639 = vmatprep.subr.bf16.mxu0 0
        %1640 = vmatpush1.bf16.msra.mxu0 0
        %1641 = vmatprep.subr.bf16.mxu0 0
        %1642 = vmatpush1.bf16.msra.mxu0 0
        %1643 = vmatprep.subr.bf16.mxu0 0
        %1644 = vmatpush1.bf16.msra.mxu0 0
        %1645 = vmatprep.mubr.bf16.mxu0 0
        %1646 = vmatmul.mubr.bf16.gmra.mrb[0].mxu0 %v1508
        %v1647 = vpop.f32.mrb[0].mxu0
        %v1648 = vadd.f32 0.0, %v1647
        %v1649 = vpop.f32.mrb[0].mxu0
        %v1650 = vpop.f32.mrb[0].mxu0
        %v1651 = vadd.f32 0.0, %v1650
        %v1652 = vpop.f32.mrb[0].mxu0
        %1653 = vmatprep.mubr.bf16.mxu0 0
        %1654 = vmatmul.mubr.bf16.gmra.mrb[0].mxu0 %v1509
        %v1655 = vpop.f32.mrb[0].mxu0
        %v1656 = vadd.f32 0.0, %v1655
        %v1657 = vpop.f32.mrb[0].mxu0
        %v1658 = vpop.f32.mrb[0].mxu0
        %v1659 = vadd.f32 0.0, %v1658
        %v1660 = vpop.f32.mrb[0].mxu0
        %1661 = vmatprep.mubr.bf16.mxu0 0
        %1662 = vmatmul.mubr.bf16.gmra.mrb[0].mxu0 %v1510
        %v1663 = vpop.f32.mrb[0].mxu0
        %v1664 = vadd.f32 0.0, %v1663
        %v1665 = vpop.f32.mrb[0].mxu0
        %v1666 = vpop.f32.mrb[0].mxu0
        %v1667 = vadd.f32 0.0, %v1666
        %v1668 = vpop.f32.mrb[0].mxu0
        %1669 = vmatprep.mubr.bf16.mxu0 0
        %1670 = vmatmul.mubr.bf16.gmra.mrb[0].mxu0 %v1511
        %v1671 = vpop.f32.mrb[0].mxu0
        %v1672 = vadd.f32 0.0, %v1671
        %v1673 = vpop.f32.mrb[0].mxu0
        %v1674 = vpop.f32.mrb[0].mxu0
        %v1675 = vadd.f32 0.0, %v1674
        %v1676 = vpop.f32.mrb[0].mxu0
        %1677 = vmatprep.mubr.bf16.mxu0 0
        %1678 = vmatmul.mubr.bf16.gmra.mrb[0].mxu0 %v1512
        %v1679 = vpop.f32.mrb[0].mxu0
        %v1680 = vadd.f32 0.0, %v1679
        %v1681 = vpop.f32.mrb[0].mxu0
        %v1682 = vpop.f32.mrb[0].mxu0
        %v1683 = vadd.f32 0.0, %v1682
        %v1684 = vpop.f32.mrb[0].mxu0
        %1685 = vmatprep.mubr.bf16.mxu0 0
        %1686 = vmatmul.mubr.bf16.gmra.mrb[0].mxu0 %v1513
        %v1687 = vpop.f32.mrb[0].mxu0
        %v1688 = vadd.f32 0.0, %v1687
        %v1689 = vpop.f32.mrb[0].mxu0
        %v1690 = vpop.f32.mrb[0].mxu0
        %v1691 = vadd.f32 0.0, %v1690
        %v1692 = vpop.f32.mrb[0].mxu0
        %1693 = vmatprep.mubr.bf16.mxu0 0
        %1694 = vmatmul.mubr.bf16.gmra.mrb[0].mxu0 %v1514
        %v1695 = vpop.f32.mrb[0].mxu0
        %v1696 = vadd.f32 0.0, %v1695
        %v1697 = vpop.f32.mrb[0].mxu0
        %v1698 = vpop.f32.mrb[0].mxu0
        %v1699 = vadd.f32 0.0, %v1698
        %v1700 = vpop.f32.mrb[0].mxu0
        %1701 = vmatprep.mubr.bf16.mxu0 0
        %1702 = vmatmul.mubr.bf16.gmra.mrb[0].mxu0 %v1515
        %v1703 = vpop.f32.mrb[0].mxu0
        %v1704 = vadd.f32 0.0, %v1703
        %v1705 = vpop.f32.mrb[0].mxu0
        %v1706 = vpop.f32.mrb[0].mxu0
        %v1707 = vadd.f32 0.0, %v1706
        %v1708 = vpop.f32.mrb[0].mxu0
        %1709 = vdwg.mxu0
        %v1710 = vpack.c.bf16 %v1554, %v1551
        %v1711 = vpack.c.bf16 %v1562, %v1559
        %v1712 = vpack.c.bf16 %v1570, %v1567
        %v1713 = vpack.c.bf16 %v1578, %v1575
        %v1714 = vpack.c.bf16 %v1586, %v1583
        %v1715 = vpack.c.bf16 %v1594, %v1591
        %v1716 = vpack.c.bf16 %v1602, %v1599
        %v1717 = vpack.c.bf16 %v1610, %v1607
        %v1718 = vpack.c.bf16 %v1651, %v1648
        %v1719 = vpack.c.bf16 %v1659, %v1656
        %v1720 = vpack.c.bf16 %v1667, %v1664
        %v1721 = vpack.c.bf16 %v1675, %v1672
        %v1722 = vpack.c.bf16 %v1683, %v1680
        %v1723 = vpack.c.bf16 %v1691, %v1688
        %v1724 = vpack.c.bf16 %v1699, %v1696
        %v1725 = vpack.c.bf16 %v1707, %v1704
        %1726 = vst.msk [vmem:[#allocation3] sm:$0xff] %vm921, %v1710
        %1727 = vst.msk [vmem:[#allocation3 + $0x8] sm:$0xff] %vm921, %v1711
        %1728 = vst.msk [vmem:[#allocation3 + $0x10] sm:$0xff] %vm921, %v1712
        %1729 = vst.msk [vmem:[#allocation3 + $0x18] sm:$0xff] %vm921, %v1713
        %1730 = vst.msk [vmem:[#allocation3 + $0x20] sm:$0xff] %vm921, %v1714
        %1731 = vst.msk [vmem:[#allocation3 + $0x28] sm:$0xff] %vm921, %v1715
        %1732 = vst.msk [vmem:[#allocation3 + $0x30] sm:$0xff] %vm921, %v1716
        %1733 = vst.msk [vmem:[#allocation3 + $0x38] sm:$0xff] %vm921, %v1717
        %1734 = vst.msk [vmem:[#allocation3 + $0x40] sm:$0xff] %vm921, %v1718
        %1735 = vst.msk [vmem:[#allocation3 + $0x48] sm:$0xff] %vm921, %v1719
        %1736 = vst.msk [vmem:[#allocation3 + $0x50] sm:$0xff] %vm921, %v1720
        %1737 = vst.msk [vmem:[#allocation3 + $0x58] sm:$0xff] %vm921, %v1721
        %1738 = vst.msk [vmem:[#allocation3 + $0x60] sm:$0xff] %vm921, %v1722
        %1739 = vst.msk [vmem:[#allocation3 + $0x68] sm:$0xff] %vm921, %v1723
        %1740 = vst.msk [vmem:[#allocation3 + $0x70] sm:$0xff] %vm921, %v1724
        %1741 = vst.msk [vmem:[#allocation3 + $0x78] sm:$0xff] %vm921, %v1725
        %v1742 = vld [vmem:[#allocation2] sm:$0xff]
        %v1743 = vld [vmem:[#allocation2 + $0x18] sm:$0xff]
        %v1744 = vld [vmem:[#allocation2 + $0x30] sm:$0xff]
        %v1745 = vld [vmem:[#allocation2 + $0x48] sm:$0xff]
        %v1746 = vld [vmem:[#allocation2 + $0x60] sm:$0xff]
        %v1747 = vld [vmem:[#allocation2 + $0x78] sm:$0xff]
        %v1748 = vld [vmem:[#allocation2 + $0x90] sm:$0xff]
        %v1749 = vld [vmem:[#allocation2 + $0xa8] sm:$0xff]
        %v1750 = vld [vmem:[#allocation2 + $0xc0] sm:$0xff]
        %v1751 = vld [vmem:[#allocation2 + $0xd8] sm:$0xff]
        %v1752 = vld [vmem:[#allocation2 + $0xf0] sm:$0xff]
        %v1753 = vld [vmem:[#allocation2 + $0x108] sm:$0xff]
        %v1754 = vld [vmem:[#allocation2 + $0x120] sm:$0xff]
        %v1755 = vld [vmem:[#allocation2 + $0x138] sm:$0xff]
        %v1756 = vld [vmem:[#allocation2 + $0x150] sm:$0xff]
        %v1757 = vld [vmem:[#allocation2 + $0x168] sm:$0xff]
        %v1758 = vld [vmem:[#allocation2 + $0x8] sm:$0xff]
        %v1759 = vld [vmem:[#allocation2 + $0x20] sm:$0xff]
        %v1760 = vld [vmem:[#allocation2 + $0x38] sm:$0xff]
        %v1761 = vld [vmem:[#allocation2 + $0x50] sm:$0xff]
        %v1762 = vld [vmem:[#allocation2 + $0x68] sm:$0xff]
        %v1763 = vld [vmem:[#allocation2 + $0x80] sm:$0xff]
        %v1764 = vld [vmem:[#allocation2 + $0x98] sm:$0xff]
        %v1765 = vld [vmem:[#allocation2 + $0xb0] sm:$0xff]
        %v1766 = vld [vmem:[#allocation2 + $0xc8] sm:$0xff]
        %v1767 = vld [vmem:[#allocation2 + $0xe0] sm:$0xff]
        %v1768 = vld [vmem:[#allocation2 + $0xf8] sm:$0xff]
        %v1769 = vld [vmem:[#allocation2 + $0x110] sm:$0xff]
        %v1770 = vld [vmem:[#allocation2 + $0x128] sm:$0xff]
        %v1771 = vld [vmem:[#allocation2 + $0x140] sm:$0xff]
        %v1772 = vld [vmem:[#allocation2 + $0x158] sm:$0xff]
        %v1773 = vld [vmem:[#allocation2 + $0x170] sm:$0xff]
        %v1774 = vld [vmem:[#allocation2 + $0x10] sm:$0xff]
        %v1775 = vld [vmem:[#allocation2 + $0x28] sm:$0xff]
        %v1776 = vld [vmem:[#allocation2 + $0x40] sm:$0xff]
        %v1777 = vld [vmem:[#allocation2 + $0x58] sm:$0xff]
        %v1778 = vld [vmem:[#allocation2 + $0x70] sm:$0xff]
        %v1779 = vld [vmem:[#allocation2 + $0x88] sm:$0xff]
        %v1780 = vld [vmem:[#allocation2 + $0xa0] sm:$0xff]
        %v1781 = vld [vmem:[#allocation2 + $0xb8] sm:$0xff]
        %v1782 = vld [vmem:[#allocation2 + $0xd0] sm:$0xff]
        %v1783 = vld [vmem:[#allocation2 + $0xe8] sm:$0xff]
        %v1784 = vld [vmem:[#allocation2 + $0x100] sm:$0xff]
        %v1785 = vld [vmem:[#allocation2 + $0x118] sm:$0xff]
        %v1786 = vld [vmem:[#allocation2 + $0x130] sm:$0xff]
        %v1787 = vld [vmem:[#allocation2 + $0x148] sm:$0xff]
        %v1788 = vld [vmem:[#allocation2 + $0x160] sm:$0xff]
        %v1789 = vld [vmem:[#allocation2 + $0x178] sm:$0xff]
        %s1790 = scalar_lea.vmem %s2, 128
        %v1791 = vld [vmem:[%s1790] sm:$0xff]
        %v1792 = vld [vmem:[%s1790 + $0x8] sm:$0xff]
        %v1793 = vld [vmem:[%s1790 + $0x10] sm:$0xff]
        %v1794 = vld [vmem:[%s1790 + $0x18] sm:$0xff]
        %v1795 = vld [vmem:[%s1790 + $0x20] sm:$0xff]
        %v1796 = vld [vmem:[%s1790 + $0x28] sm:$0xff]
        %v1797 = vld [vmem:[%s1790 + $0x30] sm:$0xff]
        %v1798 = vld [vmem:[%s1790 + $0x38] sm:$0xff]
        %v1799 = vld [vmem:[%s1790 + $0x40] sm:$0xff]
        %v1800 = vld [vmem:[%s1790 + $0x48] sm:$0xff]
        %v1801 = vld [vmem:[%s1790 + $0x50] sm:$0xff]
        %v1802 = vld [vmem:[%s1790 + $0x58] sm:$0xff]
        %v1803 = vld [vmem:[%s1790 + $0x60] sm:$0xff]
        %v1804 = vld [vmem:[%s1790 + $0x68] sm:$0xff]
        %v1805 = vld [vmem:[%s1790 + $0x70] sm:$0xff]
        %v1806 = vld [vmem:[%s1790 + $0x78] sm:$0xff]
        %1815 = vrot.lane.b32.xlu0 %v1742, 96
        %v1816 = vpop.permute.xlu0 %1815
        %1817 = vrot.lane.b32.xlu0 %v1743, 96
        %v1818 = vpop.permute.xlu0 %1817
        %1819 = vrot.lane.b32.xlu0 %v1744, 96
        %v1820 = vpop.permute.xlu0 %1819
        %1821 = vrot.lane.b32.xlu0 %v1745, 96
        %v1822 = vpop.permute.xlu0 %1821
        %1823 = vrot.lane.b32.xlu0 %v1746, 96
        %v1824 = vpop.permute.xlu0 %1823
        %1825 = vrot.lane.b32.xlu0 %v1747, 96
        %v1826 = vpop.permute.xlu0 %1825
        %1827 = vrot.lane.b32.xlu0 %v1748, 96
        %v1828 = vpop.permute.xlu0 %1827
        %1829 = vrot.lane.b32.xlu0 %v1749, 96
        %v1830 = vpop.permute.xlu0 %1829
        %1839 = vrot.lane.b32.xlu0 %v1758, 96
        %v1840 = vpop.permute.xlu0 %1839
        %1841 = vrot.lane.b32.xlu0 %v1759, 96
        %v1842 = vpop.permute.xlu0 %1841
        %1843 = vrot.lane.b32.xlu0 %v1760, 96
        %v1844 = vpop.permute.xlu0 %1843
        %1845 = vrot.lane.b32.xlu0 %v1761, 96
        %v1846 = vpop.permute.xlu0 %1845
        %1847 = vrot.lane.b32.xlu0 %v1762, 96
        %v1848 = vpop.permute.xlu0 %1847
        %1849 = vrot.lane.b32.xlu0 %v1763, 96
        %v1850 = vpop.permute.xlu0 %1849
        %1851 = vrot.lane.b32.xlu0 %v1764, 96
        %v1852 = vpop.permute.xlu0 %1851
        %1853 = vrot.lane.b32.xlu0 %v1765, 96
        %v1854 = vpop.permute.xlu0 %1853
        %v1856 = vsel %vm921, %v1816, 0
        %v1859 = vsel %vm921, %v1818, 0
        %v1862 = vsel %vm921, %v1820, 0
        %v1865 = vsel %vm921, %v1822, 0
        %v1868 = vsel %vm921, %v1824, 0
        %v1871 = vsel %vm921, %v1826, 0
        %v1874 = vsel %vm921, %v1828, 0
        %v1877 = vsel %vm921, %v1830, 0
        %v1880 = vsel %vm921, %v1840, 0
        %v1883 = vsel %vm921, %v1842, 0
        %v1886 = vsel %vm921, %v1844, 0
        %v1889 = vsel %vm921, %v1846, 0
        %v1892 = vsel %vm921, %v1848, 0
        %v1895 = vsel %vm921, %v1850, 0
        %v1898 = vsel %vm921, %v1852, 0
        %v1901 = vsel %vm921, %v1854, 0
        %1903 = vmatprep.subr.bf16.mxu0 0
        %1904 = vmatpush1.bf16.xpose.msra.mxu0 %v1880
        %1905 = vmatprep.subr.bf16.mxu0 0
        %1906 = vmatpush1.bf16.xpose.msra.mxu0 %v1883
        %1907 = vmatprep.subr.bf16.mxu0 0
        %1908 = vmatpush1.bf16.xpose.msra.mxu0 %v1886
        %1909 = vmatprep.subr.bf16.mxu0 0
        %1910 = vmatpush1.bf16.xpose.msra.mxu0 %v1889
        %1911 = vmatprep.subr.bf16.mxu0 0
        %1912 = vmatpush1.bf16.xpose.msra.mxu0 %v1892
        %1913 = vmatprep.subr.bf16.mxu0 0
        %1914 = vmatpush1.bf16.xpose.msra.mxu0 %v1895
        %1915 = vmatprep.subr.bf16.mxu0 0
        %1916 = vmatpush1.bf16.xpose.msra.mxu0 %v1898
        %1917 = vmatprep.subr.bf16.mxu0 0
        %1918 = vmatpush1.bf16.xpose.msra.mxu0 %v1901
        %1919 = vmatprep.subr.bf16.mxu0 0
        %1920 = vmatpush1.bf16.xpose.msra.mxu0 0
        %1921 = vmatprep.subr.bf16.mxu0 0
        %1922 = vmatpush1.bf16.xpose.msra.mxu0 0
        %1923 = vmatprep.subr.bf16.mxu0 0
        %1924 = vmatpush1.bf16.xpose.msra.mxu0 0
        %1925 = vmatprep.subr.bf16.mxu0 0
        %1926 = vmatpush1.bf16.xpose.msra.mxu0 0
        %1927 = vmatprep.subr.bf16.mxu0 0
        %1928 = vmatpush1.bf16.xpose.msra.mxu0 0
        %1929 = vmatprep.subr.bf16.mxu0 0
        %1930 = vmatpush1.bf16.xpose.msra.mxu0 0
        %1931 = vmatprep.subr.bf16.mxu0 0
        %1932 = vmatpush1.bf16.xpose.msra.mxu0 0
        %1933 = vmatprep.subr.bf16.mxu0 0
        %1934 = vmatpush1.bf16.xpose.msra.mxu0 0
        %1935 = vmatprep.mubr.bf16.mxu0 0
        %1936 = vmatmul.mubr.bf16.gmra.mrb[0].mxu0 %v1856
        %v1937 = vpop.f32.mrb[0].mxu0
        %v1938 = vadd.f32 %v1791, %v1937
        %v1939 = vpop.f32.mrb[0].mxu0
        %v1940 = vpop.f32.mrb[0].mxu0
        %v1941 = vadd.f32 %v1792, %v1940
        %v1942 = vpop.f32.mrb[0].mxu0
        %1943 = vmatprep.mubr.bf16.mxu0 0
        %1944 = vmatmul.mubr.bf16.gmra.mrb[0].mxu0 %v1859
        %v1945 = vpop.f32.mrb[0].mxu0
        %v1946 = vadd.f32 %v1793, %v1945
        %v1947 = vpop.f32.mrb[0].mxu0
        %v1948 = vpop.f32.mrb[0].mxu0
        %v1949 = vadd.f32 %v1794, %v1948
        %v1950 = vpop.f32.mrb[0].mxu0
        %1951 = vmatprep.mubr.bf16.mxu0 0
        %1952 = vmatmul.mubr.bf16.gmra.mrb[0].mxu0 %v1862
        %v1953 = vpop.f32.mrb[0].mxu0
        %v1954 = vadd.f32 %v1795, %v1953
        %v1955 = vpop.f32.mrb[0].mxu0
        %v1956 = vpop.f32.mrb[0].mxu0
        %v1957 = vadd.f32 %v1796, %v1956
        %v1958 = vpop.f32.mrb[0].mxu0
        %1959 = vmatprep.mubr.bf16.mxu0 0
        %1960 = vmatmul.mubr.bf16.gmra.mrb[0].mxu0 %v1865
        %v1961 = vpop.f32.mrb[0].mxu0
        %v1962 = vadd.f32 %v1797, %v1961
        %v1963 = vpop.f32.mrb[0].mxu0
        %v1964 = vpop.f32.mrb[0].mxu0
        %v1965 = vadd.f32 %v1798, %v1964
        %v1966 = vpop.f32.mrb[0].mxu0
        %1967 = vmatprep.mubr.bf16.mxu0 0
        %1968 = vmatmul.mubr.bf16.gmra.mrb[0].mxu0 %v1868
        %v1969 = vpop.f32.mrb[0].mxu0
        %v1970 = vadd.f32 %v1799, %v1969
        %v1971 = vpop.f32.mrb[0].mxu0
        %v1972 = vpop.f32.mrb[0].mxu0
        %v1973 = vadd.f32 %v1800, %v1972
        %v1974 = vpop.f32.mrb[0].mxu0
        %1975 = vmatprep.mubr.bf16.mxu0 0
        %1976 = vmatmul.mubr.bf16.gmra.mrb[0].mxu0 %v1871
        %v1977 = vpop.f32.mrb[0].mxu0
        %v1978 = vadd.f32 %v1801, %v1977
        %v1979 = vpop.f32.mrb[0].mxu0
        %v1980 = vpop.f32.mrb[0].mxu0
        %v1981 = vadd.f32 %v1802, %v1980
        %v1982 = vpop.f32.mrb[0].mxu0
        %1983 = vmatprep.mubr.bf16.mxu0 0
        %1984 = vmatmul.mubr.bf16.gmra.mrb[0].mxu0 %v1874
        %v1985 = vpop.f32.mrb[0].mxu0
        %v1986 = vadd.f32 %v1803, %v1985
        %v1987 = vpop.f32.mrb[0].mxu0
        %v1988 = vpop.f32.mrb[0].mxu0
        %v1989 = vadd.f32 %v1804, %v1988
        %v1990 = vpop.f32.mrb[0].mxu0
        %1991 = vmatprep.mubr.bf16.mxu0 0
        %1992 = vmatmul.mubr.bf16.gmra.mrb[0].mxu0 %v1877
        %v1993 = vpop.f32.mrb[0].mxu0
        %v1994 = vadd.f32 %v1805, %v1993
        %v1995 = vpop.f32.mrb[0].mxu0
        %v1996 = vpop.f32.mrb[0].mxu0
        %v1997 = vadd.f32 %v1806, %v1996
        %v1998 = vpop.f32.mrb[0].mxu0
        %1999 = vdwg.mxu0
        %2008 = vrot.lane.b32.xlu0 %v1750, 96
        %v2009 = vpop.permute.xlu0 %2008
        %2010 = vrot.lane.b32.xlu0 %v1751, 96
        %v2011 = vpop.permute.xlu0 %2010
        %2012 = vrot.lane.b32.xlu0 %v1752, 96
        %v2013 = vpop.permute.xlu0 %2012
        %2014 = vrot.lane.b32.xlu0 %v1753, 96
        %v2015 = vpop.permute.xlu0 %2014
        %2016 = vrot.lane.b32.xlu0 %v1754, 96
        %v2017 = vpop.permute.xlu0 %2016
        %2018 = vrot.lane.b32.xlu0 %v1755, 96
        %v2019 = vpop.permute.xlu0 %2018
        %2020 = vrot.lane.b32.xlu0 %v1756, 96
        %v2021 = vpop.permute.xlu0 %2020
        %2022 = vrot.lane.b32.xlu0 %v1757, 96
        %v2023 = vpop.permute.xlu0 %2022
        %2032 = vrot.lane.b32.xlu0 %v1766, 96
        %v2033 = vpop.permute.xlu0 %2032
        %2034 = vrot.lane.b32.xlu0 %v1767, 96
        %v2035 = vpop.permute.xlu0 %2034
        %2036 = vrot.lane.b32.xlu0 %v1768, 96
        %v2037 = vpop.permute.xlu0 %2036
        %2038 = vrot.lane.b32.xlu0 %v1769, 96
        %v2039 = vpop.permute.xlu0 %2038
        %2040 = vrot.lane.b32.xlu0 %v1770, 96
        %v2041 = vpop.permute.xlu0 %2040
        %2042 = vrot.lane.b32.xlu0 %v1771, 96
        %v2043 = vpop.permute.xlu0 %2042
        %2044 = vrot.lane.b32.xlu0 %v1772, 96
        %v2045 = vpop.permute.xlu0 %2044
        %2046 = vrot.lane.b32.xlu0 %v1773, 96
        %v2047 = vpop.permute.xlu0 %2046
        %v2049 = vsel %vm921, %v2009, 0
        %v2052 = vsel %vm921, %v2011, 0
        %v2055 = vsel %vm921, %v2013, 0
        %v2058 = vsel %vm921, %v2015, 0
        %v2061 = vsel %vm921, %v2017, 0
        %v2064 = vsel %vm921, %v2019, 0
        %v2067 = vsel %vm921, %v2021, 0
        %v2070 = vsel %vm921, %v2023, 0
        %v2073 = vsel %vm921, %v2033, 0
        %v2076 = vsel %vm921, %v2035, 0
        %v2079 = vsel %vm921, %v2037, 0
        %v2082 = vsel %vm921, %v2039, 0
        %v2085 = vsel %vm921, %v2041, 0
        %v2088 = vsel %vm921, %v2043, 0
        %v2091 = vsel %vm921, %v2045, 0
        %v2094 = vsel %vm921, %v2047, 0
        %2096 = vmatprep.subr.bf16.mxu0 0
        %2097 = vmatpush1.bf16.xpose.msra.mxu0 %v2073
        %2098 = vmatprep.subr.bf16.mxu0 0
        %2099 = vmatpush1.bf16.xpose.msra.mxu0 %v2076
        %2100 = vmatprep.subr.bf16.mxu0 0
        %2101 = vmatpush1.bf16.xpose.msra.mxu0 %v2079
        %2102 = vmatprep.subr.bf16.mxu0 0
        %2103 = vmatpush1.bf16.xpose.msra.mxu0 %v2082
        %2104 = vmatprep.subr.bf16.mxu0 0
        %2105 = vmatpush1.bf16.xpose.msra.mxu0 %v2085
        %2106 = vmatprep.subr.bf16.mxu0 0
        %2107 = vmatpush1.bf16.xpose.msra.mxu0 %v2088
        %2108 = vmatprep.subr.bf16.mxu0 0
        %2109 = vmatpush1.bf16.xpose.msra.mxu0 %v2091
        %2110 = vmatprep.subr.bf16.mxu0 0
        %2111 = vmatpush1.bf16.xpose.msra.mxu0 %v2094
        %2112 = vmatprep.subr.bf16.mxu0 0
        %2113 = vmatpush1.bf16.xpose.msra.mxu0 0
        %2114 = vmatprep.subr.bf16.mxu0 0
        %2115 = vmatpush1.bf16.xpose.msra.mxu0 0
        %2116 = vmatprep.subr.bf16.mxu0 0
        %2117 = vmatpush1.bf16.xpose.msra.mxu0 0
        %2118 = vmatprep.subr.bf16.mxu0 0
        %2119 = vmatpush1.bf16.xpose.msra.mxu0 0
        %2120 = vmatprep.subr.bf16.mxu0 0
        %2121 = vmatpush1.bf16.xpose.msra.mxu0 0
        %2122 = vmatprep.subr.bf16.mxu0 0
        %2123 = vmatpush1.bf16.xpose.msra.mxu0 0
        %2124 = vmatprep.subr.bf16.mxu0 0
        %2125 = vmatpush1.bf16.xpose.msra.mxu0 0
        %2126 = vmatprep.subr.bf16.mxu0 0
        %2127 = vmatpush1.bf16.xpose.msra.mxu0 0
        %2128 = vmatprep.mubr.bf16.mxu0 0
        %2129 = vmatmul.mubr.bf16.gmra.mrb[0].mxu0 %v2049
        %v2130 = vpop.f32.mrb[0].mxu0
        %v2131 = vadd.f32 %v1791, %v2130
        %v2132 = vpop.f32.mrb[0].mxu0
        %v2133 = vpop.f32.mrb[0].mxu0
        %v2134 = vadd.f32 %v1792, %v2133
        %v2135 = vpop.f32.mrb[0].mxu0
        %2136 = vmatprep.mubr.bf16.mxu0 0
        %2137 = vmatmul.mubr.bf16.gmra.mrb[0].mxu0 %v2052
        %v2138 = vpop.f32.mrb[0].mxu0
        %v2139 = vadd.f32 %v1793, %v2138
        %v2140 = vpop.f32.mrb[0].mxu0
        %v2141 = vpop.f32.mrb[0].mxu0
        %v2142 = vadd.f32 %v1794, %v2141
        %v2143 = vpop.f32.mrb[0].mxu0
        %2144 = vmatprep.mubr.bf16.mxu0 0
        %2145 = vmatmul.mubr.bf16.gmra.mrb[0].mxu0 %v2055
        %v2146 = vpop.f32.mrb[0].mxu0
        %v2147 = vadd.f32 %v1795, %v2146
        %v2148 = vpop.f32.mrb[0].mxu0
        %v2149 = vpop.f32.mrb[0].mxu0
        %v2150 = vadd.f32 %v1796, %v2149
        %v2151 = vpop.f32.mrb[0].mxu0
        %2152 = vmatprep.mubr.bf16.mxu0 0
        %2153 = vmatmul.mubr.bf16.gmra.mrb[0].mxu0 %v2058
        %v2154 = vpop.f32.mrb[0].mxu0
        %v2155 = vadd.f32 %v1797, %v2154
        %v2156 = vpop.f32.mrb[0].mxu0
        %v2157 = vpop.f32.mrb[0].mxu0
        %v2158 = vadd.f32 %v1798, %v2157
        %v2159 = vpop.f32.mrb[0].mxu0
        %2160 = vmatprep.mubr.bf16.mxu0 0
        %2161 = vmatmul.mubr.bf16.gmra.mrb[0].mxu0 %v2061
        %v2162 = vpop.f32.mrb[0].mxu0
        %v2163 = vadd.f32 %v1799, %v2162
        %v2164 = vpop.f32.mrb[0].mxu0
        %v2165 = vpop.f32.mrb[0].mxu0
        %v2166 = vadd.f32 %v1800, %v2165
        %v2167 = vpop.f32.mrb[0].mxu0
        %2168 = vmatprep.mubr.bf16.mxu0 0
        %2169 = vmatmul.mubr.bf16.gmra.mrb[0].mxu0 %v2064
        %v2170 = vpop.f32.mrb[0].mxu0
        %v2171 = vadd.f32 %v1801, %v2170
        %v2172 = vpop.f32.mrb[0].mxu0
        %v2173 = vpop.f32.mrb[0].mxu0
        %v2174 = vadd.f32 %v1802, %v2173
        %v2175 = vpop.f32.mrb[0].mxu0
        %2176 = vmatprep.mubr.bf16.mxu0 0
        %2177 = vmatmul.mubr.bf16.gmra.mrb[0].mxu0 %v2067
        %v2178 = vpop.f32.mrb[0].mxu0
        %v2179 = vadd.f32 %v1803, %v2178
        %v2180 = vpop.f32.mrb[0].mxu0
        %v2181 = vpop.f32.mrb[0].mxu0
        %v2182 = vadd.f32 %v1804, %v2181
        %v2183 = vpop.f32.mrb[0].mxu0
        %2184 = vmatprep.mubr.bf16.mxu0 0
        %2185 = vmatmul.mubr.bf16.gmra.mrb[0].mxu0 %v2070
        %v2186 = vpop.f32.mrb[0].mxu0
        %v2187 = vadd.f32 %v1805, %v2186
        %v2188 = vpop.f32.mrb[0].mxu0
        %v2189 = vpop.f32.mrb[0].mxu0
        %v2190 = vadd.f32 %v1806, %v2189
        %v2191 = vpop.f32.mrb[0].mxu0
        %2192 = vdwg.mxu0
        %2193 = vmax.xlane.f32.xlu0 %v1938
        %v2194 = vpop.xlane.xlu0 %2193
        %2195 = vmax.xlane.f32.xlu0 %v1941
        %v2196 = vpop.xlane.xlu0 %2195
        %2197 = vmax.xlane.f32.xlu0 %v1946
        %v2198 = vpop.xlane.xlu0 %2197
        %2199 = vmax.xlane.f32.xlu0 %v1949
        %v2200 = vpop.xlane.xlu0 %2199
        %2201 = vmax.xlane.f32.xlu0 %v1954
        %v2202 = vpop.xlane.xlu0 %2201
        %2203 = vmax.xlane.f32.xlu0 %v1957
        %v2204 = vpop.xlane.xlu0 %2203
        %2205 = vmax.xlane.f32.xlu0 %v1962
        %v2206 = vpop.xlane.xlu0 %2205
        %2207 = vmax.xlane.f32.xlu0 %v1965
        %v2208 = vpop.xlane.xlu0 %2207
        %2209 = vmax.xlane.f32.xlu0 %v1970
        %v2210 = vpop.xlane.xlu0 %2209
        %2211 = vmax.xlane.f32.xlu0 %v1973
        %v2212 = vpop.xlane.xlu0 %2211
        %2213 = vmax.xlane.f32.xlu0 %v1978
        %v2214 = vpop.xlane.xlu0 %2213
        %2215 = vmax.xlane.f32.xlu0 %v1981
        %v2216 = vpop.xlane.xlu0 %2215
        %2217 = vmax.xlane.f32.xlu0 %v1986
        %v2218 = vpop.xlane.xlu0 %2217
        %2219 = vmax.xlane.f32.xlu0 %v1989
        %v2220 = vpop.xlane.xlu0 %2219
        %2221 = vmax.xlane.f32.xlu0 %v1994
        %v2222 = vpop.xlane.xlu0 %2221
        %2223 = vmax.xlane.f32.xlu0 %v1997
        %v2224 = vpop.xlane.xlu0 %2223
        %2225 = vmax.xlane.f32.xlu0 %v2131
        %v2226 = vpop.xlane.xlu0 %2225
        %2227 = vmax.xlane.f32.xlu0 %v2134
        %v2228 = vpop.xlane.xlu0 %2227
        %2229 = vmax.xlane.f32.xlu0 %v2139
        %v2230 = vpop.xlane.xlu0 %2229
        %2231 = vmax.xlane.f32.xlu0 %v2142
        %v2232 = vpop.xlane.xlu0 %2231
        %2233 = vmax.xlane.f32.xlu0 %v2147
        %v2234 = vpop.xlane.xlu0 %2233
        %2235 = vmax.xlane.f32.xlu0 %v2150
        %v2236 = vpop.xlane.xlu0 %2235
        %2237 = vmax.xlane.f32.xlu0 %v2155
        %v2238 = vpop.xlane.xlu0 %2237
        %2239 = vmax.xlane.f32.xlu0 %v2158
        %v2240 = vpop.xlane.xlu0 %2239
        %2241 = vmax.xlane.f32.xlu0 %v2163
        %v2242 = vpop.xlane.xlu0 %2241
        %2243 = vmax.xlane.f32.xlu0 %v2166
        %v2244 = vpop.xlane.xlu0 %2243
        %2245 = vmax.xlane.f32.xlu0 %v2171
        %v2246 = vpop.xlane.xlu0 %2245
        %2247 = vmax.xlane.f32.xlu0 %v2174
        %v2248 = vpop.xlane.xlu0 %2247
        %2249 = vmax.xlane.f32.xlu0 %v2179
        %v2250 = vpop.xlane.xlu0 %2249
        %2251 = vmax.xlane.f32.xlu0 %v2182
        %v2252 = vpop.xlane.xlu0 %2251
        %2253 = vmax.xlane.f32.xlu0 %v2187
        %v2254 = vpop.xlane.xlu0 %2253
        %2255 = vmax.xlane.f32.xlu0 %v2190
        %v2256 = vpop.xlane.xlu0 %2255
        %v2257 = vsub.f32 %v1938, %v2194
        %v2258 = vsub.f32 %v1941, %v2196
        %v2259 = vsub.f32 %v1946, %v2198
        %v2260 = vsub.f32 %v1949, %v2200
        %v2261 = vsub.f32 %v1954, %v2202
        %v2262 = vsub.f32 %v1957, %v2204
        %v2263 = vsub.f32 %v1962, %v2206
        %v2264 = vsub.f32 %v1965, %v2208
        %v2265 = vsub.f32 %v1970, %v2210
        %v2266 = vsub.f32 %v1973, %v2212
        %v2267 = vsub.f32 %v1978, %v2214
        %v2268 = vsub.f32 %v1981, %v2216
        %v2269 = vsub.f32 %v1986, %v2218
        %v2270 = vsub.f32 %v1989, %v2220
        %v2271 = vsub.f32 %v1994, %v2222
        %v2272 = vsub.f32 %v1997, %v2224
        %v2273 = vsub.f32 %v2131, %v2226
        %v2274 = vsub.f32 %v2134, %v2228
        %v2275 = vsub.f32 %v2139, %v2230
        %v2276 = vsub.f32 %v2142, %v2232
        %v2277 = vsub.f32 %v2147, %v2234
        %v2278 = vsub.f32 %v2150, %v2236
        %v2279 = vsub.f32 %v2155, %v2238
        %v2280 = vsub.f32 %v2158, %v2240
        %v2281 = vsub.f32 %v2163, %v2242
        %v2282 = vsub.f32 %v2166, %v2244
        %v2283 = vsub.f32 %v2171, %v2246
        %v2284 = vsub.f32 %v2174, %v2248
        %v2285 = vsub.f32 %v2179, %v2250
        %v2286 = vsub.f32 %v2182, %v2252
        %v2287 = vsub.f32 %v2187, %v2254
        %v2288 = vsub.f32 %v2190, %v2256
        %v2289 = vmul.f32 %v2257, 1.442695
        %v2290 = vpow.pop %v2289
        %v2291 = vmul.f32 %v2258, 1.442695
        %v2292 = vpow.pop %v2291
        %v2293 = vmul.f32 %v2259, 1.442695
        %v2294 = vpow.pop %v2293
        %v2295 = vmul.f32 %v2260, 1.442695
        %v2296 = vpow.pop %v2295
        %v2297 = vmul.f32 %v2261, 1.442695
        %v2298 = vpow.pop %v2297
        %v2299 = vmul.f32 %v2262, 1.442695
        %v2300 = vpow.pop %v2299
        %v2301 = vmul.f32 %v2263, 1.442695
        %v2302 = vpow.pop %v2301
        %v2303 = vmul.f32 %v2264, 1.442695
        %v2304 = vpow.pop %v2303
        %v2305 = vmul.f32 %v2265, 1.442695
        %v2306 = vpow.pop %v2305
        %v2307 = vmul.f32 %v2266, 1.442695
        %v2308 = vpow.pop %v2307
        %v2309 = vmul.f32 %v2267, 1.442695
        %v2310 = vpow.pop %v2309
        %v2311 = vmul.f32 %v2268, 1.442695
        %v2312 = vpow.pop %v2311
        %v2313 = vmul.f32 %v2269, 1.442695
        %v2314 = vpow.pop %v2313
        %v2315 = vmul.f32 %v2270, 1.442695
        %v2316 = vpow.pop %v2315
        %v2317 = vmul.f32 %v2271, 1.442695
        %v2318 = vpow.pop %v2317
        %v2319 = vmul.f32 %v2272, 1.442695
        %v2320 = vpow.pop %v2319
        %v2321 = vmul.f32 %v2273, 1.442695
        %v2322 = vpow.pop %v2321
        %v2323 = vmul.f32 %v2274, 1.442695
        %v2324 = vpow.pop %v2323
        %v2325 = vmul.f32 %v2275, 1.442695
        %v2326 = vpow.pop %v2325
        %v2327 = vmul.f32 %v2276, 1.442695
        %v2328 = vpow.pop %v2327
        %v2329 = vmul.f32 %v2277, 1.442695
        %v2330 = vpow.pop %v2329
        %v2331 = vmul.f32 %v2278, 1.442695
        %v2332 = vpow.pop %v2331
        %v2333 = vmul.f32 %v2279, 1.442695
        %v2334 = vpow.pop %v2333
        %v2335 = vmul.f32 %v2280, 1.442695
        %v2336 = vpow.pop %v2335
        %v2337 = vmul.f32 %v2281, 1.442695
        %v2338 = vpow.pop %v2337
        %v2339 = vmul.f32 %v2282, 1.442695
        %v2340 = vpow.pop %v2339
        %v2341 = vmul.f32 %v2283, 1.442695
        %v2342 = vpow.pop %v2341
        %v2343 = vmul.f32 %v2284, 1.442695
        %v2344 = vpow.pop %v2343
        %v2345 = vmul.f32 %v2285, 1.442695
        %v2346 = vpow.pop %v2345
        %v2347 = vmul.f32 %v2286, 1.442695
        %v2348 = vpow.pop %v2347
        %v2349 = vmul.f32 %v2287, 1.442695
        %v2350 = vpow.pop %v2349
        %v2351 = vmul.f32 %v2288, 1.442695
        %v2352 = vpow.pop %v2351
        %2353 = vadd.xlane.f32.xlu0 %v2290
        %v2354 = vpop.xlane.xlu0 %2353
        %2355 = vadd.xlane.f32.xlu0 %v2292
        %v2356 = vpop.xlane.xlu0 %2355
        %2357 = vadd.xlane.f32.xlu0 %v2294
        %v2358 = vpop.xlane.xlu0 %2357
        %2359 = vadd.xlane.f32.xlu0 %v2296
        %v2360 = vpop.xlane.xlu0 %2359
        %2361 = vadd.xlane.f32.xlu0 %v2298
        %v2362 = vpop.xlane.xlu0 %2361
        %2363 = vadd.xlane.f32.xlu0 %v2300
        %v2364 = vpop.xlane.xlu0 %2363
        %2365 = vadd.xlane.f32.xlu0 %v2302
        %v2366 = vpop.xlane.xlu0 %2365
        %2367 = vadd.xlane.f32.xlu0 %v2304
        %v2368 = vpop.xlane.xlu0 %2367
        %2369 = vadd.xlane.f32.xlu0 %v2306
        %v2370 = vpop.xlane.xlu0 %2369
        %2371 = vadd.xlane.f32.xlu0 %v2308
        %v2372 = vpop.xlane.xlu0 %2371
        %2373 = vadd.xlane.f32.xlu0 %v2310
        %v2374 = vpop.xlane.xlu0 %2373
        %2375 = vadd.xlane.f32.xlu0 %v2312
        %v2376 = vpop.xlane.xlu0 %2375
        %2377 = vadd.xlane.f32.xlu0 %v2314
        %v2378 = vpop.xlane.xlu0 %2377
        %2379 = vadd.xlane.f32.xlu0 %v2316
        %v2380 = vpop.xlane.xlu0 %2379
        %2381 = vadd.xlane.f32.xlu0 %v2318
        %v2382 = vpop.xlane.xlu0 %2381
        %2383 = vadd.xlane.f32.xlu0 %v2320
        %v2384 = vpop.xlane.xlu0 %2383
        %2385 = vadd.xlane.f32.xlu0 %v2322
        %v2386 = vpop.xlane.xlu0 %2385
        %2387 = vadd.xlane.f32.xlu0 %v2324
        %v2388 = vpop.xlane.xlu0 %2387
        %2389 = vadd.xlane.f32.xlu0 %v2326
        %v2390 = vpop.xlane.xlu0 %2389
        %2391 = vadd.xlane.f32.xlu0 %v2328
        %v2392 = vpop.xlane.xlu0 %2391
        %2393 = vadd.xlane.f32.xlu0 %v2330
        %v2394 = vpop.xlane.xlu0 %2393
        %2395 = vadd.xlane.f32.xlu0 %v2332
        %v2396 = vpop.xlane.xlu0 %2395
        %2397 = vadd.xlane.f32.xlu0 %v2334
        %v2398 = vpop.xlane.xlu0 %2397
        %2399 = vadd.xlane.f32.xlu0 %v2336
        %v2400 = vpop.xlane.xlu0 %2399
        %2401 = vadd.xlane.f32.xlu0 %v2338
        %v2402 = vpop.xlane.xlu0 %2401
        %2403 = vadd.xlane.f32.xlu0 %v2340
        %v2404 = vpop.xlane.xlu0 %2403
        %2405 = vadd.xlane.f32.xlu0 %v2342
        %v2406 = vpop.xlane.xlu0 %2405
        %2407 = vadd.xlane.f32.xlu0 %v2344
        %v2408 = vpop.xlane.xlu0 %2407
        %2409 = vadd.xlane.f32.xlu0 %v2346
        %v2410 = vpop.xlane.xlu0 %2409
        %2411 = vadd.xlane.f32.xlu0 %v2348
        %v2412 = vpop.xlane.xlu0 %2411
        %2413 = vadd.xlane.f32.xlu0 %v2350
        %v2414 = vpop.xlane.xlu0 %2413
        %2415 = vadd.xlane.f32.xlu0 %v2352
        %v2416 = vpop.xlane.xlu0 %2415
        %v2417 = vrcp.pop %v2354
        %v2418 = vrcp.pop %v2356
        %v2419 = vrcp.pop %v2358
        %v2420 = vrcp.pop %v2360
        %v2421 = vrcp.pop %v2362
        %v2422 = vrcp.pop %v2364
        %v2423 = vrcp.pop %v2366
        %v2424 = vrcp.pop %v2368
        %v2425 = vrcp.pop %v2370
        %v2426 = vrcp.pop %v2372
        %v2427 = vrcp.pop %v2374
        %v2428 = vrcp.pop %v2376
        %v2429 = vrcp.pop %v2378
        %v2430 = vrcp.pop %v2380
        %v2431 = vrcp.pop %v2382
        %v2432 = vrcp.pop %v2384
        %v2433 = vrcp.pop %v2386
        %v2434 = vrcp.pop %v2388
        %v2435 = vrcp.pop %v2390
        %v2436 = vrcp.pop %v2392
        %v2437 = vrcp.pop %v2394
        %v2438 = vrcp.pop %v2396
        %v2439 = vrcp.pop %v2398
        %v2440 = vrcp.pop %v2400
        %v2441 = vrcp.pop %v2402
        %v2442 = vrcp.pop %v2404
        %v2443 = vrcp.pop %v2406
        %v2444 = vrcp.pop %v2408
        %v2445 = vrcp.pop %v2410
        %v2446 = vrcp.pop %v2412
        %v2447 = vrcp.pop %v2414
        %v2448 = vrcp.pop %v2416
        %v2449 = vmul.f32 %v2290, %v2417
        %v2450 = vmul.f32 %v2292, %v2418
        %v2451 = vmul.f32 %v2294, %v2419
        %v2452 = vmul.f32 %v2296, %v2420
        %v2453 = vmul.f32 %v2298, %v2421
        %v2454 = vmul.f32 %v2300, %v2422
        %v2455 = vmul.f32 %v2302, %v2423
        %v2456 = vmul.f32 %v2304, %v2424
        %v2457 = vmul.f32 %v2306, %v2425
        %v2458 = vmul.f32 %v2308, %v2426
        %v2459 = vmul.f32 %v2310, %v2427
        %v2460 = vmul.f32 %v2312, %v2428
        %v2461 = vmul.f32 %v2314, %v2429
        %v2462 = vmul.f32 %v2316, %v2430
        %v2463 = vmul.f32 %v2318, %v2431
        %v2464 = vmul.f32 %v2320, %v2432
        %v2465 = vmul.f32 %v2322, %v2433
        %v2466 = vmul.f32 %v2324, %v2434
        %v2467 = vmul.f32 %v2326, %v2435
        %v2468 = vmul.f32 %v2328, %v2436
        %v2469 = vmul.f32 %v2330, %v2437
        %v2470 = vmul.f32 %v2332, %v2438
        %v2471 = vmul.f32 %v2334, %v2439
        %v2472 = vmul.f32 %v2336, %v2440
        %v2473 = vmul.f32 %v2338, %v2441
        %v2474 = vmul.f32 %v2340, %v2442
        %v2475 = vmul.f32 %v2342, %v2443
        %v2476 = vmul.f32 %v2344, %v2444
        %v2477 = vmul.f32 %v2346, %v2445
        %v2478 = vmul.f32 %v2348, %v2446
        %v2479 = vmul.f32 %v2350, %v2447
        %v2480 = vmul.f32 %v2352, %v2448
        %v2481 = vpack.c.bf16 %v2450, %v2449
        %v2482 = vpack.c.bf16 %v2452, %v2451
        %v2483 = vpack.c.bf16 %v2454, %v2453
        %v2484 = vpack.c.bf16 %v2456, %v2455
        %v2485 = vpack.c.bf16 %v2458, %v2457
        %v2486 = vpack.c.bf16 %v2460, %v2459
        %v2487 = vpack.c.bf16 %v2462, %v2461
        %v2488 = vpack.c.bf16 %v2464, %v2463
        %v2489 = vpack.c.bf16 %v2466, %v2465
        %v2490 = vpack.c.bf16 %v2468, %v2467
        %v2491 = vpack.c.bf16 %v2470, %v2469
        %v2492 = vpack.c.bf16 %v2472, %v2471
        %v2493 = vpack.c.bf16 %v2474, %v2473
        %v2494 = vpack.c.bf16 %v2476, %v2475
        %v2495 = vpack.c.bf16 %v2478, %v2477
        %v2496 = vpack.c.bf16 %v2480, %v2479
        %2505 = vrot.lane.b32.xlu0 %v1774, 96
        %v2506 = vpop.permute.xlu0 %2505
        %2507 = vrot.lane.b32.xlu0 %v1775, 96
        %v2508 = vpop.permute.xlu0 %2507
        %2509 = vrot.lane.b32.xlu0 %v1776, 96
        %v2510 = vpop.permute.xlu0 %2509
        %2511 = vrot.lane.b32.xlu0 %v1777, 96
        %v2512 = vpop.permute.xlu0 %2511
        %2513 = vrot.lane.b32.xlu0 %v1778, 96
        %v2514 = vpop.permute.xlu0 %2513
        %2515 = vrot.lane.b32.xlu0 %v1779, 96
        %v2516 = vpop.permute.xlu0 %2515
        %2517 = vrot.lane.b32.xlu0 %v1780, 96
        %v2518 = vpop.permute.xlu0 %2517
        %2519 = vrot.lane.b32.xlu0 %v1781, 96
        %v2520 = vpop.permute.xlu0 %2519
        %2529 = vmatprep.subr.bf16.mxu0 0
        %2530 = vmatpush1.bf16.msra.mxu0 %v2506
        %2531 = vmatprep.subr.bf16.mxu0 0
        %2532 = vmatpush1.bf16.msra.mxu0 %v2508
        %2533 = vmatprep.subr.bf16.mxu0 0
        %2534 = vmatpush1.bf16.msra.mxu0 %v2510
        %2535 = vmatprep.subr.bf16.mxu0 0
        %2536 = vmatpush1.bf16.msra.mxu0 %v2512
        %2537 = vmatprep.subr.bf16.mxu0 0
        %2538 = vmatpush1.bf16.msra.mxu0 %v2514
        %2539 = vmatprep.subr.bf16.mxu0 0
        %2540 = vmatpush1.bf16.msra.mxu0 %v2516
        %2541 = vmatprep.subr.bf16.mxu0 0
        %2542 = vmatpush1.bf16.msra.mxu0 %v2518
        %2543 = vmatprep.subr.bf16.mxu0 0
        %2544 = vmatpush1.bf16.msra.mxu0 %v2520
        %2545 = vmatprep.subr.bf16.mxu0 0
        %2546 = vmatpush1.bf16.msra.mxu0 0
        %2547 = vmatprep.subr.bf16.mxu0 0
        %2548 = vmatpush1.bf16.msra.mxu0 0
        %2549 = vmatprep.subr.bf16.mxu0 0
        %2550 = vmatpush1.bf16.msra.mxu0 0
        %2551 = vmatprep.subr.bf16.mxu0 0
        %2552 = vmatpush1.bf16.msra.mxu0 0
        %2553 = vmatprep.subr.bf16.mxu0 0
        %2554 = vmatpush1.bf16.msra.mxu0 0
        %2555 = vmatprep.subr.bf16.mxu0 0
        %2556 = vmatpush1.bf16.msra.mxu0 0
        %2557 = vmatprep.subr.bf16.mxu0 0
        %2558 = vmatpush1.bf16.msra.mxu0 0
        %2559 = vmatprep.subr.bf16.mxu0 0
        %2560 = vmatpush1.bf16.msra.mxu0 0
        %2561 = vmatprep.mubr.bf16.mxu0 0
        %2562 = vmatmul.mubr.bf16.gmra.mrb[0].mxu0 %v2481
        %v2563 = vpop.f32.mrb[0].mxu0
        %v2564 = vadd.f32 0.0, %v2563
        %v2565 = vpop.f32.mrb[0].mxu0
        %v2566 = vpop.f32.mrb[0].mxu0
        %v2567 = vadd.f32 0.0, %v2566
        %v2568 = vpop.f32.mrb[0].mxu0
        %2569 = vmatprep.mubr.bf16.mxu0 0
        %2570 = vmatmul.mubr.bf16.gmra.mrb[0].mxu0 %v2482
        %v2571 = vpop.f32.mrb[0].mxu0
        %v2572 = vadd.f32 0.0, %v2571
        %v2573 = vpop.f32.mrb[0].mxu0
        %v2574 = vpop.f32.mrb[0].mxu0
        %v2575 = vadd.f32 0.0, %v2574
        %v2576 = vpop.f32.mrb[0].mxu0
        %2577 = vmatprep.mubr.bf16.mxu0 0
        %2578 = vmatmul.mubr.bf16.gmra.mrb[0].mxu0 %v2483
        %v2579 = vpop.f32.mrb[0].mxu0
        %v2580 = vadd.f32 0.0, %v2579
        %v2581 = vpop.f32.mrb[0].mxu0
        %v2582 = vpop.f32.mrb[0].mxu0
        %v2583 = vadd.f32 0.0, %v2582
        %v2584 = vpop.f32.mrb[0].mxu0
        %2585 = vmatprep.mubr.bf16.mxu0 0
        %2586 = vmatmul.mubr.bf16.gmra.mrb[0].mxu0 %v2484
        %v2587 = vpop.f32.mrb[0].mxu0
        %v2588 = vadd.f32 0.0, %v2587
        %v2589 = vpop.f32.mrb[0].mxu0
        %v2590 = vpop.f32.mrb[0].mxu0
        %v2591 = vadd.f32 0.0, %v2590
        %v2592 = vpop.f32.mrb[0].mxu0
        %2593 = vmatprep.mubr.bf16.mxu0 0
        %2594 = vmatmul.mubr.bf16.gmra.mrb[0].mxu0 %v2485
        %v2595 = vpop.f32.mrb[0].mxu0
        %v2596 = vadd.f32 0.0, %v2595
        %v2597 = vpop.f32.mrb[0].mxu0
        %v2598 = vpop.f32.mrb[0].mxu0
        %v2599 = vadd.f32 0.0, %v2598
        %v2600 = vpop.f32.mrb[0].mxu0
        %2601 = vmatprep.mubr.bf16.mxu0 0
        %2602 = vmatmul.mubr.bf16.gmra.mrb[0].mxu0 %v2486
        %v2603 = vpop.f32.mrb[0].mxu0
        %v2604 = vadd.f32 0.0, %v2603
        %v2605 = vpop.f32.mrb[0].mxu0
        %v2606 = vpop.f32.mrb[0].mxu0
        %v2607 = vadd.f32 0.0, %v2606
        %v2608 = vpop.f32.mrb[0].mxu0
        %2609 = vmatprep.mubr.bf16.mxu0 0
        %2610 = vmatmul.mubr.bf16.gmra.mrb[0].mxu0 %v2487
        %v2611 = vpop.f32.mrb[0].mxu0
        %v2612 = vadd.f32 0.0, %v2611
        %v2613 = vpop.f32.mrb[0].mxu0
        %v2614 = vpop.f32.mrb[0].mxu0
        %v2615 = vadd.f32 0.0, %v2614
        %v2616 = vpop.f32.mrb[0].mxu0
        %2617 = vmatprep.mubr.bf16.mxu0 0
        %2618 = vmatmul.mubr.bf16.gmra.mrb[0].mxu0 %v2488
        %v2619 = vpop.f32.mrb[0].mxu0
        %v2620 = vadd.f32 0.0, %v2619
        %v2621 = vpop.f32.mrb[0].mxu0
        %v2622 = vpop.f32.mrb[0].mxu0
        %v2623 = vadd.f32 0.0, %v2622
        %v2624 = vpop.f32.mrb[0].mxu0
        %2625 = vdwg.mxu0
        %2634 = vrot.lane.b32.xlu0 %v1782, 96
        %v2635 = vpop.permute.xlu0 %2634
        %2636 = vrot.lane.b32.xlu0 %v1783, 96
        %v2637 = vpop.permute.xlu0 %2636
        %2638 = vrot.lane.b32.xlu0 %v1784, 96
        %v2639 = vpop.permute.xlu0 %2638
        %2640 = vrot.lane.b32.xlu0 %v1785, 96
        %v2641 = vpop.permute.xlu0 %2640
        %2642 = vrot.lane.b32.xlu0 %v1786, 96
        %v2643 = vpop.permute.xlu0 %2642
        %2644 = vrot.lane.b32.xlu0 %v1787, 96
        %v2645 = vpop.permute.xlu0 %2644
        %2646 = vrot.lane.b32.xlu0 %v1788, 96
        %v2647 = vpop.permute.xlu0 %2646
        %2648 = vrot.lane.b32.xlu0 %v1789, 96
        %v2649 = vpop.permute.xlu0 %2648
        %2658 = vmatprep.subr.bf16.mxu0 0
        %2659 = vmatpush1.bf16.msra.mxu0 %v2635
        %2660 = vmatprep.subr.bf16.mxu0 0
        %2661 = vmatpush1.bf16.msra.mxu0 %v2637
        %2662 = vmatprep.subr.bf16.mxu0 0
        %2663 = vmatpush1.bf16.msra.mxu0 %v2639
        %2664 = vmatprep.subr.bf16.mxu0 0
        %2665 = vmatpush1.bf16.msra.mxu0 %v2641
        %2666 = vmatprep.subr.bf16.mxu0 0
        %2667 = vmatpush1.bf16.msra.mxu0 %v2643
        %2668 = vmatprep.subr.bf16.mxu0 0
        %2669 = vmatpush1.bf16.msra.mxu0 %v2645
        %2670 = vmatprep.subr.bf16.mxu0 0
        %2671 = vmatpush1.bf16.msra.mxu0 %v2647
        %2672 = vmatprep.subr.bf16.mxu0 0
        %2673 = vmatpush1.bf16.msra.mxu0 %v2649
        %2674 = vmatprep.subr.bf16.mxu0 0
        %2675 = vmatpush1.bf16.msra.mxu0 0
        %2676 = vmatprep.subr.bf16.mxu0 0
        %2677 = vmatpush1.bf16.msra.mxu0 0
        %2678 = vmatprep.subr.bf16.mxu0 0
        %2679 = vmatpush1.bf16.msra.mxu0 0
        %2680 = vmatprep.subr.bf16.mxu0 0
        %2681 = vmatpush1.bf16.msra.mxu0 0
        %2682 = vmatprep.subr.bf16.mxu0 0
        %2683 = vmatpush1.bf16.msra.mxu0 0
        %2684 = vmatprep.subr.bf16.mxu0 0
        %2685 = vmatpush1.bf16.msra.mxu0 0
        %2686 = vmatprep.subr.bf16.mxu0 0
        %2687 = vmatpush1.bf16.msra.mxu0 0
        %2688 = vmatprep.subr.bf16.mxu0 0
        %2689 = vmatpush1.bf16.msra.mxu0 0
        %2690 = vmatprep.mubr.bf16.mxu0 0
        %2691 = vmatmul.mubr.bf16.gmra.mrb[0].mxu0 %v2489
        %v2692 = vpop.f32.mrb[0].mxu0
        %v2693 = vadd.f32 0.0, %v2692
        %v2694 = vpop.f32.mrb[0].mxu0
        %v2695 = vpop.f32.mrb[0].mxu0
        %v2696 = vadd.f32 0.0, %v2695
        %v2697 = vpop.f32.mrb[0].mxu0
        %2698 = vmatprep.mubr.bf16.mxu0 0
        %2699 = vmatmul.mubr.bf16.gmra.mrb[0].mxu0 %v2490
        %v2700 = vpop.f32.mrb[0].mxu0
        %v2701 = vadd.f32 0.0, %v2700
        %v2702 = vpop.f32.mrb[0].mxu0
        %v2703 = vpop.f32.mrb[0].mxu0
        %v2704 = vadd.f32 0.0, %v2703
        %v2705 = vpop.f32.mrb[0].mxu0
        %2706 = vmatprep.mubr.bf16.mxu0 0
        %2707 = vmatmul.mubr.bf16.gmra.mrb[0].mxu0 %v2491
        %v2708 = vpop.f32.mrb[0].mxu0
        %v2709 = vadd.f32 0.0, %v2708
        %v2710 = vpop.f32.mrb[0].mxu0
        %v2711 = vpop.f32.mrb[0].mxu0
        %v2712 = vadd.f32 0.0, %v2711
        %v2713 = vpop.f32.mrb[0].mxu0
        %2714 = vmatprep.mubr.bf16.mxu0 0
        %2715 = vmatmul.mubr.bf16.gmra.mrb[0].mxu0 %v2492
        %v2716 = vpop.f32.mrb[0].mxu0
        %v2717 = vadd.f32 0.0, %v2716
        %v2718 = vpop.f32.mrb[0].mxu0
        %v2719 = vpop.f32.mrb[0].mxu0
        %v2720 = vadd.f32 0.0, %v2719
        %v2721 = vpop.f32.mrb[0].mxu0
        %2722 = vmatprep.mubr.bf16.mxu0 0
        %2723 = vmatmul.mubr.bf16.gmra.mrb[0].mxu0 %v2493
        %v2724 = vpop.f32.mrb[0].mxu0
        %v2725 = vadd.f32 0.0, %v2724
        %v2726 = vpop.f32.mrb[0].mxu0
        %v2727 = vpop.f32.mrb[0].mxu0
        %v2728 = vadd.f32 0.0, %v2727
        %v2729 = vpop.f32.mrb[0].mxu0
        %2730 = vmatprep.mubr.bf16.mxu0 0
        %2731 = vmatmul.mubr.bf16.gmra.mrb[0].mxu0 %v2494
        %v2732 = vpop.f32.mrb[0].mxu0
        %v2733 = vadd.f32 0.0, %v2732
        %v2734 = vpop.f32.mrb[0].mxu0
        %v2735 = vpop.f32.mrb[0].mxu0
        %v2736 = vadd.f32 0.0, %v2735
        %v2737 = vpop.f32.mrb[0].mxu0
        %2738 = vmatprep.mubr.bf16.mxu0 0
        %2739 = vmatmul.mubr.bf16.gmra.mrb[0].mxu0 %v2495
        %v2740 = vpop.f32.mrb[0].mxu0
        %v2741 = vadd.f32 0.0, %v2740
        %v2742 = vpop.f32.mrb[0].mxu0
        %v2743 = vpop.f32.mrb[0].mxu0
        %v2744 = vadd.f32 0.0, %v2743
        %v2745 = vpop.f32.mrb[0].mxu0
        %2746 = vmatprep.mubr.bf16.mxu0 0
        %2747 = vmatmul.mubr.bf16.gmra.mrb[0].mxu0 %v2496
        %v2748 = vpop.f32.mrb[0].mxu0
        %v2749 = vadd.f32 0.0, %v2748
        %v2750 = vpop.f32.mrb[0].mxu0
        %v2751 = vpop.f32.mrb[0].mxu0
        %v2752 = vadd.f32 0.0, %v2751
        %v2753 = vpop.f32.mrb[0].mxu0
        %2754 = vdwg.mxu0
        %v2755 = vpack.c.bf16 %v2567, %v2564
        %v2756 = vpack.c.bf16 %v2575, %v2572
        %v2757 = vpack.c.bf16 %v2583, %v2580
        %v2758 = vpack.c.bf16 %v2591, %v2588
        %v2759 = vpack.c.bf16 %v2599, %v2596
        %v2760 = vpack.c.bf16 %v2607, %v2604
        %v2761 = vpack.c.bf16 %v2615, %v2612
        %v2762 = vpack.c.bf16 %v2623, %v2620
        %v2763 = vpack.c.bf16 %v2696, %v2693
        %v2764 = vpack.c.bf16 %v2704, %v2701
        %v2765 = vpack.c.bf16 %v2712, %v2709
        %v2766 = vpack.c.bf16 %v2720, %v2717
        %v2767 = vpack.c.bf16 %v2728, %v2725
        %v2768 = vpack.c.bf16 %v2736, %v2733
        %v2769 = vpack.c.bf16 %v2744, %v2741
        %v2770 = vpack.c.bf16 %v2752, %v2749
        %2787 = vrot.lane.b32.xlu0 %v2755, 32
        %v2788 = vpop.permute.xlu0 %2787
        %2789 = vrot.lane.b32.xlu0 %v2756, 32
        %v2790 = vpop.permute.xlu0 %2789
        %2791 = vrot.lane.b32.xlu0 %v2757, 32
        %v2792 = vpop.permute.xlu0 %2791
        %2793 = vrot.lane.b32.xlu0 %v2758, 32
        %v2794 = vpop.permute.xlu0 %2793
        %2795 = vrot.lane.b32.xlu0 %v2759, 32
        %v2796 = vpop.permute.xlu0 %2795
        %2797 = vrot.lane.b32.xlu0 %v2760, 32
        %v2798 = vpop.permute.xlu0 %2797
        %2799 = vrot.lane.b32.xlu0 %v2761, 32
        %v2800 = vpop.permute.xlu0 %2799
        %2801 = vrot.lane.b32.xlu0 %v2762, 32
        %v2802 = vpop.permute.xlu0 %2801
        %2803 = vrot.lane.b32.xlu0 %v2763, 32
        %v2804 = vpop.permute.xlu0 %2803
        %2805 = vrot.lane.b32.xlu0 %v2764, 32
        %v2806 = vpop.permute.xlu0 %2805
        %2807 = vrot.lane.b32.xlu0 %v2765, 32
        %v2808 = vpop.permute.xlu0 %2807
        %2809 = vrot.lane.b32.xlu0 %v2766, 32
        %v2810 = vpop.permute.xlu0 %2809
        %2811 = vrot.lane.b32.xlu0 %v2767, 32
        %v2812 = vpop.permute.xlu0 %2811
        %2813 = vrot.lane.b32.xlu0 %v2768, 32
        %v2814 = vpop.permute.xlu0 %2813
        %2815 = vrot.lane.b32.xlu0 %v2769, 32
        %v2816 = vpop.permute.xlu0 %2815
        %2817 = vrot.lane.b32.xlu0 %v2770, 32
        %v2818 = vpop.permute.xlu0 %2817
        %vm2835 = vcmask 523520
        %2836 = vst.msk [vmem:[#allocation3] sm:$0xff] %vm2835, %v2788
        %2837 = vst.msk [vmem:[#allocation3 + $0x8] sm:$0xff] %vm2835, %v2790
        %2838 = vst.msk [vmem:[#allocation3 + $0x10] sm:$0xff] %vm2835, %v2792
        %2839 = vst.msk [vmem:[#allocation3 + $0x18] sm:$0xff] %vm2835, %v2794
        %2840 = vst.msk [vmem:[#allocation3 + $0x20] sm:$0xff] %vm2835, %v2796
        %2841 = vst.msk [vmem:[#allocation3 + $0x28] sm:$0xff] %vm2835, %v2798
        %2842 = vst.msk [vmem:[#allocation3 + $0x30] sm:$0xff] %vm2835, %v2800
        %2843 = vst.msk [vmem:[#allocation3 + $0x38] sm:$0xff] %vm2835, %v2802
        %2844 = vst.msk [vmem:[#allocation3 + $0x40] sm:$0xff] %vm2835, %v2804
        %2845 = vst.msk [vmem:[#allocation3 + $0x48] sm:$0xff] %vm2835, %v2806
        %2846 = vst.msk [vmem:[#allocation3 + $0x50] sm:$0xff] %vm2835, %v2808
        %2847 = vst.msk [vmem:[#allocation3 + $0x58] sm:$0xff] %vm2835, %v2810
        %2848 = vst.msk [vmem:[#allocation3 + $0x60] sm:$0xff] %vm2835, %v2812
        %2849 = vst.msk [vmem:[#allocation3 + $0x68] sm:$0xff] %vm2835, %v2814
        %2850 = vst.msk [vmem:[#allocation3 + $0x70] sm:$0xff] %vm2835, %v2816
        %2851 = vst.msk [vmem:[#allocation3 + $0x78] sm:$0xff] %vm2835, %v2818
        %v2852 = vld [vmem:[#allocation2] sm:$0xff]
        %v2853 = vld [vmem:[#allocation2 + $0x18] sm:$0xff]
        %v2854 = vld [vmem:[#allocation2 + $0x30] sm:$0xff]
        %v2855 = vld [vmem:[#allocation2 + $0x48] sm:$0xff]
        %v2856 = vld [vmem:[#allocation2 + $0x60] sm:$0xff]
        %v2857 = vld [vmem:[#allocation2 + $0x78] sm:$0xff]
        %v2858 = vld [vmem:[#allocation2 + $0x90] sm:$0xff]
        %v2859 = vld [vmem:[#allocation2 + $0xa8] sm:$0xff]
        %v2860 = vld [vmem:[#allocation2 + $0xc0] sm:$0xff]
        %v2861 = vld [vmem:[#allocation2 + $0xd8] sm:$0xff]
        %v2862 = vld [vmem:[#allocation2 + $0xf0] sm:$0xff]
        %v2863 = vld [vmem:[#allocation2 + $0x108] sm:$0xff]
        %v2864 = vld [vmem:[#allocation2 + $0x120] sm:$0xff]
        %v2865 = vld [vmem:[#allocation2 + $0x138] sm:$0xff]
        %v2866 = vld [vmem:[#allocation2 + $0x150] sm:$0xff]
        %v2867 = vld [vmem:[#allocation2 + $0x168] sm:$0xff]
        %v2868 = vld [vmem:[#allocation2 + $0x8] sm:$0xff]
        %v2869 = vld [vmem:[#allocation2 + $0x20] sm:$0xff]
        %v2870 = vld [vmem:[#allocation2 + $0x38] sm:$0xff]
        %v2871 = vld [vmem:[#allocation2 + $0x50] sm:$0xff]
        %v2872 = vld [vmem:[#allocation2 + $0x68] sm:$0xff]
        %v2873 = vld [vmem:[#allocation2 + $0x80] sm:$0xff]
        %v2874 = vld [vmem:[#allocation2 + $0x98] sm:$0xff]
        %v2875 = vld [vmem:[#allocation2 + $0xb0] sm:$0xff]
        %v2876 = vld [vmem:[#allocation2 + $0xc8] sm:$0xff]
        %v2877 = vld [vmem:[#allocation2 + $0xe0] sm:$0xff]
        %v2878 = vld [vmem:[#allocation2 + $0xf8] sm:$0xff]
        %v2879 = vld [vmem:[#allocation2 + $0x110] sm:$0xff]
        %v2880 = vld [vmem:[#allocation2 + $0x128] sm:$0xff]
        %v2881 = vld [vmem:[#allocation2 + $0x140] sm:$0xff]
        %v2882 = vld [vmem:[#allocation2 + $0x158] sm:$0xff]
        %v2883 = vld [vmem:[#allocation2 + $0x170] sm:$0xff]
        %v2884 = vld [vmem:[#allocation2 + $0x10] sm:$0xff]
        %v2885 = vld [vmem:[#allocation2 + $0x28] sm:$0xff]
        %v2886 = vld [vmem:[#allocation2 + $0x40] sm:$0xff]
        %v2887 = vld [vmem:[#allocation2 + $0x58] sm:$0xff]
        %v2888 = vld [vmem:[#allocation2 + $0x70] sm:$0xff]
        %v2889 = vld [vmem:[#allocation2 + $0x88] sm:$0xff]
        %v2890 = vld [vmem:[#allocation2 + $0xa0] sm:$0xff]
        %v2891 = vld [vmem:[#allocation2 + $0xb8] sm:$0xff]
        %v2892 = vld [vmem:[#allocation2 + $0xd0] sm:$0xff]
        %v2893 = vld [vmem:[#allocation2 + $0xe8] sm:$0xff]
        %v2894 = vld [vmem:[#allocation2 + $0x100] sm:$0xff]
        %v2895 = vld [vmem:[#allocation2 + $0x118] sm:$0xff]
        %v2896 = vld [vmem:[#allocation2 + $0x130] sm:$0xff]
        %v2897 = vld [vmem:[#allocation2 + $0x148] sm:$0xff]
        %v2898 = vld [vmem:[#allocation2 + $0x160] sm:$0xff]
        %v2899 = vld [vmem:[#allocation2 + $0x178] sm:$0xff]
        %s2900 = scalar_lea.vmem %s2, 256
        %v2901 = vld [vmem:[%s2900] sm:$0xff]
        %v2902 = vld [vmem:[%s2900 + $0x8] sm:$0xff]
        %v2903 = vld [vmem:[%s2900 + $0x10] sm:$0xff]
        %v2904 = vld [vmem:[%s2900 + $0x18] sm:$0xff]
        %v2905 = vld [vmem:[%s2900 + $0x20] sm:$0xff]
        %v2906 = vld [vmem:[%s2900 + $0x28] sm:$0xff]
        %v2907 = vld [vmem:[%s2900 + $0x30] sm:$0xff]
        %v2908 = vld [vmem:[%s2900 + $0x38] sm:$0xff]
        %v2909 = vld [vmem:[%s2900 + $0x40] sm:$0xff]
        %v2910 = vld [vmem:[%s2900 + $0x48] sm:$0xff]
        %v2911 = vld [vmem:[%s2900 + $0x50] sm:$0xff]
        %v2912 = vld [vmem:[%s2900 + $0x58] sm:$0xff]
        %v2913 = vld [vmem:[%s2900 + $0x60] sm:$0xff]
        %v2914 = vld [vmem:[%s2900 + $0x68] sm:$0xff]
        %v2915 = vld [vmem:[%s2900 + $0x70] sm:$0xff]
        %v2916 = vld [vmem:[%s2900 + $0x78] sm:$0xff]
        %2925 = vrot.lane.b32.xlu0 %v2852, 64
        %v2926 = vpop.permute.xlu0 %2925
        %2927 = vrot.lane.b32.xlu0 %v2853, 64
        %v2928 = vpop.permute.xlu0 %2927
        %2929 = vrot.lane.b32.xlu0 %v2854, 64
        %v2930 = vpop.permute.xlu0 %2929
        %2931 = vrot.lane.b32.xlu0 %v2855, 64
        %v2932 = vpop.permute.xlu0 %2931
        %2933 = vrot.lane.b32.xlu0 %v2856, 64
        %v2934 = vpop.permute.xlu0 %2933
        %2935 = vrot.lane.b32.xlu0 %v2857, 64
        %v2936 = vpop.permute.xlu0 %2935
        %2937 = vrot.lane.b32.xlu0 %v2858, 64
        %v2938 = vpop.permute.xlu0 %2937
        %2939 = vrot.lane.b32.xlu0 %v2859, 64
        %v2940 = vpop.permute.xlu0 %2939
        %2949 = vrot.lane.b32.xlu0 %v2868, 64
        %v2950 = vpop.permute.xlu0 %2949
        %2951 = vrot.lane.b32.xlu0 %v2869, 64
        %v2952 = vpop.permute.xlu0 %2951
        %2953 = vrot.lane.b32.xlu0 %v2870, 64
        %v2954 = vpop.permute.xlu0 %2953
        %2955 = vrot.lane.b32.xlu0 %v2871, 64
        %v2956 = vpop.permute.xlu0 %2955
        %2957 = vrot.lane.b32.xlu0 %v2872, 64
        %v2958 = vpop.permute.xlu0 %2957
        %2959 = vrot.lane.b32.xlu0 %v2873, 64
        %v2960 = vpop.permute.xlu0 %2959
        %2961 = vrot.lane.b32.xlu0 %v2874, 64
        %v2962 = vpop.permute.xlu0 %2961
        %2963 = vrot.lane.b32.xlu0 %v2875, 64
        %v2964 = vpop.permute.xlu0 %2963
        %v2966 = vsel %vm921, %v2926, 0
        %v2969 = vsel %vm921, %v2928, 0
        %v2972 = vsel %vm921, %v2930, 0
        %v2975 = vsel %vm921, %v2932, 0
        %v2978 = vsel %vm921, %v2934, 0
        %v2981 = vsel %vm921, %v2936, 0
        %v2984 = vsel %vm921, %v2938, 0
        %v2987 = vsel %vm921, %v2940, 0
        %v2990 = vsel %vm921, %v2950, 0
        %v2993 = vsel %vm921, %v2952, 0
        %v2996 = vsel %vm921, %v2954, 0
        %v2999 = vsel %vm921, %v2956, 0
        %v3002 = vsel %vm921, %v2958, 0
        %v3005 = vsel %vm921, %v2960, 0
        %v3008 = vsel %vm921, %v2962, 0
        %v3011 = vsel %vm921, %v2964, 0
        %3013 = vmatprep.subr.bf16.mxu0 0
        %3014 = vmatpush1.bf16.xpose.msra.mxu0 %v2990
        %3015 = vmatprep.subr.bf16.mxu0 0
        %3016 = vmatpush1.bf16.xpose.msra.mxu0 %v2993
        %3017 = vmatprep.subr.bf16.mxu0 0
        %3018 = vmatpush1.bf16.xpose.msra.mxu0 %v2996
        %3019 = vmatprep.subr.bf16.mxu0 0
        %3020 = vmatpush1.bf16.xpose.msra.mxu0 %v2999
        %3021 = vmatprep.subr.bf16.mxu0 0
        %3022 = vmatpush1.bf16.xpose.msra.mxu0 %v3002
        %3023 = vmatprep.subr.bf16.mxu0 0
        %3024 = vmatpush1.bf16.xpose.msra.mxu0 %v3005
        %3025 = vmatprep.subr.bf16.mxu0 0
        %3026 = vmatpush1.bf16.xpose.msra.mxu0 %v3008
        %3027 = vmatprep.subr.bf16.mxu0 0
        %3028 = vmatpush1.bf16.xpose.msra.mxu0 %v3011
        %3029 = vmatprep.subr.bf16.mxu0 0
        %3030 = vmatpush1.bf16.xpose.msra.mxu0 0
        %3031 = vmatprep.subr.bf16.mxu0 0
        %3032 = vmatpush1.bf16.xpose.msra.mxu0 0
        %3033 = vmatprep.subr.bf16.mxu0 0
        %3034 = vmatpush1.bf16.xpose.msra.mxu0 0
        %3035 = vmatprep.subr.bf16.mxu0 0
        %3036 = vmatpush1.bf16.xpose.msra.mxu0 0
        %3037 = vmatprep.subr.bf16.mxu0 0
        %3038 = vmatpush1.bf16.xpose.msra.mxu0 0
        %3039 = vmatprep.subr.bf16.mxu0 0
        %3040 = vmatpush1.bf16.xpose.msra.mxu0 0
        %3041 = vmatprep.subr.bf16.mxu0 0
        %3042 = vmatpush1.bf16.xpose.msra.mxu0 0
        %3043 = vmatprep.subr.bf16.mxu0 0
        %3044 = vmatpush1.bf16.xpose.msra.mxu0 0
        %3045 = vmatprep.mubr.bf16.mxu0 0
        %3046 = vmatmul.mubr.bf16.gmra.mrb[0].mxu0 %v2966
        %v3047 = vpop.f32.mrb[0].mxu0
        %v3048 = vadd.f32 %v2901, %v3047
        %v3049 = vpop.f32.mrb[0].mxu0
        %v3050 = vpop.f32.mrb[0].mxu0
        %v3051 = vadd.f32 %v2902, %v3050
        %v3052 = vpop.f32.mrb[0].mxu0
        %3053 = vmatprep.mubr.bf16.mxu0 0
        %3054 = vmatmul.mubr.bf16.gmra.mrb[0].mxu0 %v2969
        %v3055 = vpop.f32.mrb[0].mxu0
        %v3056 = vadd.f32 %v2903, %v3055
        %v3057 = vpop.f32.mrb[0].mxu0
        %v3058 = vpop.f32.mrb[0].mxu0
        %v3059 = vadd.f32 %v2904, %v3058
        %v3060 = vpop.f32.mrb[0].mxu0
        %3061 = vmatprep.mubr.bf16.mxu0 0
        %3062 = vmatmul.mubr.bf16.gmra.mrb[0].mxu0 %v2972
        %v3063 = vpop.f32.mrb[0].mxu0
        %v3064 = vadd.f32 %v2905, %v3063
        %v3065 = vpop.f32.mrb[0].mxu0
        %v3066 = vpop.f32.mrb[0].mxu0
        %v3067 = vadd.f32 %v2906, %v3066
        %v3068 = vpop.f32.mrb[0].mxu0
        %3069 = vmatprep.mubr.bf16.mxu0 0
        %3070 = vmatmul.mubr.bf16.gmra.mrb[0].mxu0 %v2975
        %v3071 = vpop.f32.mrb[0].mxu0
        %v3072 = vadd.f32 %v2907, %v3071
        %v3073 = vpop.f32.mrb[0].mxu0
        %v3074 = vpop.f32.mrb[0].mxu0
        %v3075 = vadd.f32 %v2908, %v3074
        %v3076 = vpop.f32.mrb[0].mxu0
        %3077 = vmatprep.mubr.bf16.mxu0 0
        %3078 = vmatmul.mubr.bf16.gmra.mrb[0].mxu0 %v2978
        %v3079 = vpop.f32.mrb[0].mxu0
        %v3080 = vadd.f32 %v2909, %v3079
        %v3081 = vpop.f32.mrb[0].mxu0
        %v3082 = vpop.f32.mrb[0].mxu0
        %v3083 = vadd.f32 %v2910, %v3082
        %v3084 = vpop.f32.mrb[0].mxu0
        %3085 = vmatprep.mubr.bf16.mxu0 0
        %3086 = vmatmul.mubr.bf16.gmra.mrb[0].mxu0 %v2981
        %v3087 = vpop.f32.mrb[0].mxu0
        %v3088 = vadd.f32 %v2911, %v3087
        %v3089 = vpop.f32.mrb[0].mxu0
        %v3090 = vpop.f32.mrb[0].mxu0
        %v3091 = vadd.f32 %v2912, %v3090
        %v3092 = vpop.f32.mrb[0].mxu0
        %3093 = vmatprep.mubr.bf16.mxu0 0
        %3094 = vmatmul.mubr.bf16.gmra.mrb[0].mxu0 %v2984
        %v3095 = vpop.f32.mrb[0].mxu0
        %v3096 = vadd.f32 %v2913, %v3095
        %v3097 = vpop.f32.mrb[0].mxu0
        %v3098 = vpop.f32.mrb[0].mxu0
        %v3099 = vadd.f32 %v2914, %v3098
        %v3100 = vpop.f32.mrb[0].mxu0
        %3101 = vmatprep.mubr.bf16.mxu0 0
        %3102 = vmatmul.mubr.bf16.gmra.mrb[0].mxu0 %v2987
        %v3103 = vpop.f32.mrb[0].mxu0
        %v3104 = vadd.f32 %v2915, %v3103
        %v3105 = vpop.f32.mrb[0].mxu0
        %v3106 = vpop.f32.mrb[0].mxu0
        %v3107 = vadd.f32 %v2916, %v3106
        %v3108 = vpop.f32.mrb[0].mxu0
        %3109 = vdwg.mxu0
        %3118 = vrot.lane.b32.xlu0 %v2860, 64
        %v3119 = vpop.permute.xlu0 %3118
        %3120 = vrot.lane.b32.xlu0 %v2861, 64
        %v3121 = vpop.permute.xlu0 %3120
        %3122 = vrot.lane.b32.xlu0 %v2862, 64
        %v3123 = vpop.permute.xlu0 %3122
        %3124 = vrot.lane.b32.xlu0 %v2863, 64
        %v3125 = vpop.permute.xlu0 %3124
        %3126 = vrot.lane.b32.xlu0 %v2864, 64
        %v3127 = vpop.permute.xlu0 %3126
        %3128 = vrot.lane.b32.xlu0 %v2865, 64
        %v3129 = vpop.permute.xlu0 %3128
        %3130 = vrot.lane.b32.xlu0 %v2866, 64
        %v3131 = vpop.permute.xlu0 %3130
        %3132 = vrot.lane.b32.xlu0 %v2867, 64
        %v3133 = vpop.permute.xlu0 %3132
        %3142 = vrot.lane.b32.xlu0 %v2876, 64
        %v3143 = vpop.permute.xlu0 %3142
        %3144 = vrot.lane.b32.xlu0 %v2877, 64
        %v3145 = vpop.permute.xlu0 %3144
        %3146 = vrot.lane.b32.xlu0 %v2878, 64
        %v3147 = vpop.permute.xlu0 %3146
        %3148 = vrot.lane.b32.xlu0 %v2879, 64
        %v3149 = vpop.permute.xlu0 %3148
        %3150 = vrot.lane.b32.xlu0 %v2880, 64
        %v3151 = vpop.permute.xlu0 %3150
        %3152 = vrot.lane.b32.xlu0 %v2881, 64
        %v3153 = vpop.permute.xlu0 %3152
        %3154 = vrot.lane.b32.xlu0 %v2882, 64
        %v3155 = vpop.permute.xlu0 %3154
        %3156 = vrot.lane.b32.xlu0 %v2883, 64
        %v3157 = vpop.permute.xlu0 %3156
        %v3159 = vsel %vm921, %v3119, 0
        %v3162 = vsel %vm921, %v3121, 0
        %v3165 = vsel %vm921, %v3123, 0
        %v3168 = vsel %vm921, %v3125, 0
        %v3171 = vsel %vm921, %v3127, 0
        %v3174 = vsel %vm921, %v3129, 0
        %v3177 = vsel %vm921, %v3131, 0
        %v3180 = vsel %vm921, %v3133, 0
        %v3183 = vsel %vm921, %v3143, 0
        %v3186 = vsel %vm921, %v3145, 0
        %v3189 = vsel %vm921, %v3147, 0
        %v3192 = vsel %vm921, %v3149, 0
        %v3195 = vsel %vm921, %v3151, 0
        %v3198 = vsel %vm921, %v3153, 0
        %v3201 = vsel %vm921, %v3155, 0
        %v3204 = vsel %vm921, %v3157, 0
        %3206 = vmatprep.subr.bf16.mxu0 0
        %3207 = vmatpush1.bf16.xpose.msra.mxu0 %v3183
        %3208 = vmatprep.subr.bf16.mxu0 0
        %3209 = vmatpush1.bf16.xpose.msra.mxu0 %v3186
        %3210 = vmatprep.subr.bf16.mxu0 0
        %3211 = vmatpush1.bf16.xpose.msra.mxu0 %v3189
        %3212 = vmatprep.subr.bf16.mxu0 0
        %3213 = vmatpush1.bf16.xpose.msra.mxu0 %v3192
        %3214 = vmatprep.subr.bf16.mxu0 0
        %3215 = vmatpush1.bf16.xpose.msra.mxu0 %v3195
        %3216 = vmatprep.subr.bf16.mxu0 0
        %3217 = vmatpush1.bf16.xpose.msra.mxu0 %v3198
        %3218 = vmatprep.subr.bf16.mxu0 0
        %3219 = vmatpush1.bf16.xpose.msra.mxu0 %v3201
        %3220 = vmatprep.subr.bf16.mxu0 0
        %3221 = vmatpush1.bf16.xpose.msra.mxu0 %v3204
        %3222 = vmatprep.subr.bf16.mxu0 0
        %3223 = vmatpush1.bf16.xpose.msra.mxu0 0
        %3224 = vmatprep.subr.bf16.mxu0 0
        %3225 = vmatpush1.bf16.xpose.msra.mxu0 0
        %3226 = vmatprep.subr.bf16.mxu0 0
        %3227 = vmatpush1.bf16.xpose.msra.mxu0 0
        %3228 = vmatprep.subr.bf16.mxu0 0
        %3229 = vmatpush1.bf16.xpose.msra.mxu0 0
        %3230 = vmatprep.subr.bf16.mxu0 0
        %3231 = vmatpush1.bf16.xpose.msra.mxu0 0
        %3232 = vmatprep.subr.bf16.mxu0 0
        %3233 = vmatpush1.bf16.xpose.msra.mxu0 0
        %3234 = vmatprep.subr.bf16.mxu0 0
        %3235 = vmatpush1.bf16.xpose.msra.mxu0 0
        %3236 = vmatprep.subr.bf16.mxu0 0
        %3237 = vmatpush1.bf16.xpose.msra.mxu0 0
        %3238 = vmatprep.mubr.bf16.mxu0 0
        %3239 = vmatmul.mubr.bf16.gmra.mrb[0].mxu0 %v3159
        %v3240 = vpop.f32.mrb[0].mxu0
        %v3241 = vadd.f32 %v2901, %v3240
        %v3242 = vpop.f32.mrb[0].mxu0
        %v3243 = vpop.f32.mrb[0].mxu0
        %v3244 = vadd.f32 %v2902, %v3243
        %v3245 = vpop.f32.mrb[0].mxu0
        %3246 = vmatprep.mubr.bf16.mxu0 0
        %3247 = vmatmul.mubr.bf16.gmra.mrb[0].mxu0 %v3162
        %v3248 = vpop.f32.mrb[0].mxu0
        %v3249 = vadd.f32 %v2903, %v3248
        %v3250 = vpop.f32.mrb[0].mxu0
        %v3251 = vpop.f32.mrb[0].mxu0
        %v3252 = vadd.f32 %v2904, %v3251
        %v3253 = vpop.f32.mrb[0].mxu0
        %3254 = vmatprep.mubr.bf16.mxu0 0
        %3255 = vmatmul.mubr.bf16.gmra.mrb[0].mxu0 %v3165
        %v3256 = vpop.f32.mrb[0].mxu0
        %v3257 = vadd.f32 %v2905, %v3256
        %v3258 = vpop.f32.mrb[0].mxu0
        %v3259 = vpop.f32.mrb[0].mxu0
        %v3260 = vadd.f32 %v2906, %v3259
        %v3261 = vpop.f32.mrb[0].mxu0
        %3262 = vmatprep.mubr.bf16.mxu0 0
        %3263 = vmatmul.mubr.bf16.gmra.mrb[0].mxu0 %v3168
        %v3264 = vpop.f32.mrb[0].mxu0
        %v3265 = vadd.f32 %v2907, %v3264
        %v3266 = vpop.f32.mrb[0].mxu0
        %v3267 = vpop.f32.mrb[0].mxu0
        %v3268 = vadd.f32 %v2908, %v3267
        %v3269 = vpop.f32.mrb[0].mxu0
        %3270 = vmatprep.mubr.bf16.mxu0 0
        %3271 = vmatmul.mubr.bf16.gmra.mrb[0].mxu0 %v3171
        %v3272 = vpop.f32.mrb[0].mxu0
        %v3273 = vadd.f32 %v2909, %v3272
        %v3274 = vpop.f32.mrb[0].mxu0
        %v3275 = vpop.f32.mrb[0].mxu0
        %v3276 = vadd.f32 %v2910, %v3275
        %v3277 = vpop.f32.mrb[0].mxu0
        %3278 = vmatprep.mubr.bf16.mxu0 0
        %3279 = vmatmul.mubr.bf16.gmra.mrb[0].mxu0 %v3174
        %v3280 = vpop.f32.mrb[0].mxu0
        %v3281 = vadd.f32 %v2911, %v3280
        %v3282 = vpop.f32.mrb[0].mxu0
        %v3283 = vpop.f32.mrb[0].mxu0
        %v3284 = vadd.f32 %v2912, %v3283
        %v3285 = vpop.f32.mrb[0].mxu0
        %3286 = vmatprep.mubr.bf16.mxu0 0
        %3287 = vmatmul.mubr.bf16.gmra.mrb[0].mxu0 %v3177
        %v3288 = vpop.f32.mrb[0].mxu0
        %v3289 = vadd.f32 %v2913, %v3288
        %v3290 = vpop.f32.mrb[0].mxu0
        %v3291 = vpop.f32.mrb[0].mxu0
        %v3292 = vadd.f32 %v2914, %v3291
        %v3293 = vpop.f32.mrb[0].mxu0
        %3294 = vmatprep.mubr.bf16.mxu0 0
        %3295 = vmatmul.mubr.bf16.gmra.mrb[0].mxu0 %v3180
        %v3296 = vpop.f32.mrb[0].mxu0
        %v3297 = vadd.f32 %v2915, %v3296
        %v3298 = vpop.f32.mrb[0].mxu0
        %v3299 = vpop.f32.mrb[0].mxu0
        %v3300 = vadd.f32 %v2916, %v3299
        %v3301 = vpop.f32.mrb[0].mxu0
        %3302 = vdwg.mxu0
        %3303 = vmax.xlane.f32.xlu0 %v3048
        %v3304 = vpop.xlane.xlu0 %3303
        %3305 = vmax.xlane.f32.xlu0 %v3051
        %v3306 = vpop.xlane.xlu0 %3305
        %3307 = vmax.xlane.f32.xlu0 %v3056
        %v3308 = vpop.xlane.xlu0 %3307
        %3309 = vmax.xlane.f32.xlu0 %v3059
        %v3310 = vpop.xlane.xlu0 %3309
        %3311 = vmax.xlane.f32.xlu0 %v3064
        %v3312 = vpop.xlane.xlu0 %3311
        %3313 = vmax.xlane.f32.xlu0 %v3067
        %v3314 = vpop.xlane.xlu0 %3313
        %3315 = vmax.xlane.f32.xlu0 %v3072
        %v3316 = vpop.xlane.xlu0 %3315
        %3317 = vmax.xlane.f32.xlu0 %v3075
        %v3318 = vpop.xlane.xlu0 %3317
        %3319 = vmax.xlane.f32.xlu0 %v3080
        %v3320 = vpop.xlane.xlu0 %3319
        %3321 = vmax.xlane.f32.xlu0 %v3083
        %v3322 = vpop.xlane.xlu0 %3321
        %3323 = vmax.xlane.f32.xlu0 %v3088
        %v3324 = vpop.xlane.xlu0 %3323
        %3325 = vmax.xlane.f32.xlu0 %v3091
        %v3326 = vpop.xlane.xlu0 %3325
        %3327 = vmax.xlane.f32.xlu0 %v3096
        %v3328 = vpop.xlane.xlu0 %3327
        %3329 = vmax.xlane.f32.xlu0 %v3099
        %v3330 = vpop.xlane.xlu0 %3329
        %3331 = vmax.xlane.f32.xlu0 %v3104
        %v3332 = vpop.xlane.xlu0 %3331
        %3333 = vmax.xlane.f32.xlu0 %v3107
        %v3334 = vpop.xlane.xlu0 %3333
        %3335 = vmax.xlane.f32.xlu0 %v3241
        %v3336 = vpop.xlane.xlu0 %3335
        %3337 = vmax.xlane.f32.xlu0 %v3244
        %v3338 = vpop.xlane.xlu0 %3337
        %3339 = vmax.xlane.f32.xlu0 %v3249
        %v3340 = vpop.xlane.xlu0 %3339
        %3341 = vmax.xlane.f32.xlu0 %v3252
        %v3342 = vpop.xlane.xlu0 %3341
        %3343 = vmax.xlane.f32.xlu0 %v3257
        %v3344 = vpop.xlane.xlu0 %3343
        %3345 = vmax.xlane.f32.xlu0 %v3260
        %v3346 = vpop.xlane.xlu0 %3345
        %3347 = vmax.xlane.f32.xlu0 %v3265
        %v3348 = vpop.xlane.xlu0 %3347
        %3349 = vmax.xlane.f32.xlu0 %v3268
        %v3350 = vpop.xlane.xlu0 %3349
        %3351 = vmax.xlane.f32.xlu0 %v3273
        %v3352 = vpop.xlane.xlu0 %3351
        %3353 = vmax.xlane.f32.xlu0 %v3276
        %v3354 = vpop.xlane.xlu0 %3353
        %3355 = vmax.xlane.f32.xlu0 %v3281
        %v3356 = vpop.xlane.xlu0 %3355
        %3357 = vmax.xlane.f32.xlu0 %v3284
        %v3358 = vpop.xlane.xlu0 %3357
        %3359 = vmax.xlane.f32.xlu0 %v3289
        %v3360 = vpop.xlane.xlu0 %3359
        %3361 = vmax.xlane.f32.xlu0 %v3292
        %v3362 = vpop.xlane.xlu0 %3361
        %3363 = vmax.xlane.f32.xlu0 %v3297
        %v3364 = vpop.xlane.xlu0 %3363
        %3365 = vmax.xlane.f32.xlu0 %v3300
        %v3366 = vpop.xlane.xlu0 %3365
        %v3367 = vsub.f32 %v3048, %v3304
        %v3368 = vsub.f32 %v3051, %v3306
        %v3369 = vsub.f32 %v3056, %v3308
        %v3370 = vsub.f32 %v3059, %v3310
        %v3371 = vsub.f32 %v3064, %v3312
        %v3372 = vsub.f32 %v3067, %v3314
        %v3373 = vsub.f32 %v3072, %v3316
        %v3374 = vsub.f32 %v3075, %v3318
        %v3375 = vsub.f32 %v3080, %v3320
        %v3376 = vsub.f32 %v3083, %v3322
        %v3377 = vsub.f32 %v3088, %v3324
        %v3378 = vsub.f32 %v3091, %v3326
        %v3379 = vsub.f32 %v3096, %v3328
        %v3380 = vsub.f32 %v3099, %v3330
        %v3381 = vsub.f32 %v3104, %v3332
        %v3382 = vsub.f32 %v3107, %v3334
        %v3383 = vsub.f32 %v3241, %v3336
        %v3384 = vsub.f32 %v3244, %v3338
        %v3385 = vsub.f32 %v3249, %v3340
        %v3386 = vsub.f32 %v3252, %v3342
        %v3387 = vsub.f32 %v3257, %v3344
        %v3388 = vsub.f32 %v3260, %v3346
        %v3389 = vsub.f32 %v3265, %v3348
        %v3390 = vsub.f32 %v3268, %v3350
        %v3391 = vsub.f32 %v3273, %v3352
        %v3392 = vsub.f32 %v3276, %v3354
        %v3393 = vsub.f32 %v3281, %v3356
        %v3394 = vsub.f32 %v3284, %v3358
        %v3395 = vsub.f32 %v3289, %v3360
        %v3396 = vsub.f32 %v3292, %v3362
        %v3397 = vsub.f32 %v3297, %v3364
        %v3398 = vsub.f32 %v3300, %v3366
        %v3399 = vmul.f32 %v3367, 1.442695
        %v3400 = vpow.pop %v3399
        %v3401 = vmul.f32 %v3368, 1.442695
        %v3402 = vpow.pop %v3401
        %v3403 = vmul.f32 %v3369, 1.442695
        %v3404 = vpow.pop %v3403
        %v3405 = vmul.f32 %v3370, 1.442695
        %v3406 = vpow.pop %v3405
        %v3407 = vmul.f32 %v3371, 1.442695
        %v3408 = vpow.pop %v3407
        %v3409 = vmul.f32 %v3372, 1.442695
        %v3410 = vpow.pop %v3409
        %v3411 = vmul.f32 %v3373, 1.442695
        %v3412 = vpow.pop %v3411
        %v3413 = vmul.f32 %v3374, 1.442695
        %v3414 = vpow.pop %v3413
        %v3415 = vmul.f32 %v3375, 1.442695
        %v3416 = vpow.pop %v3415
        %v3417 = vmul.f32 %v3376, 1.442695
        %v3418 = vpow.pop %v3417
        %v3419 = vmul.f32 %v3377, 1.442695
        %v3420 = vpow.pop %v3419
        %v3421 = vmul.f32 %v3378, 1.442695
        %v3422 = vpow.pop %v3421
        %v3423 = vmul.f32 %v3379, 1.442695
        %v3424 = vpow.pop %v3423
        %v3425 = vmul.f32 %v3380, 1.442695
        %v3426 = vpow.pop %v3425
        %v3427 = vmul.f32 %v3381, 1.442695
        %v3428 = vpow.pop %v3427
        %v3429 = vmul.f32 %v3382, 1.442695
        %v3430 = vpow.pop %v3429
        %v3431 = vmul.f32 %v3383, 1.442695
        %v3432 = vpow.pop %v3431
        %v3433 = vmul.f32 %v3384, 1.442695
        %v3434 = vpow.pop %v3433
        %v3435 = vmul.f32 %v3385, 1.442695
        %v3436 = vpow.pop %v3435
        %v3437 = vmul.f32 %v3386, 1.442695
        %v3438 = vpow.pop %v3437
        %v3439 = vmul.f32 %v3387, 1.442695
        %v3440 = vpow.pop %v3439
        %v3441 = vmul.f32 %v3388, 1.442695
        %v3442 = vpow.pop %v3441
        %v3443 = vmul.f32 %v3389, 1.442695
        %v3444 = vpow.pop %v3443
        %v3445 = vmul.f32 %v3390, 1.442695
        %v3446 = vpow.pop %v3445
        %v3447 = vmul.f32 %v3391, 1.442695
        %v3448 = vpow.pop %v3447
        %v3449 = vmul.f32 %v3392, 1.442695
        %v3450 = vpow.pop %v3449
        %v3451 = vmul.f32 %v3393, 1.442695
        %v3452 = vpow.pop %v3451
        %v3453 = vmul.f32 %v3394, 1.442695
        %v3454 = vpow.pop %v3453
        %v3455 = vmul.f32 %v3395, 1.442695
        %v3456 = vpow.pop %v3455
        %v3457 = vmul.f32 %v3396, 1.442695
        %v3458 = vpow.pop %v3457
        %v3459 = vmul.f32 %v3397, 1.442695
        %v3460 = vpow.pop %v3459
        %v3461 = vmul.f32 %v3398, 1.442695
        %v3462 = vpow.pop %v3461
        %3463 = vadd.xlane.f32.xlu0 %v3400
        %v3464 = vpop.xlane.xlu0 %3463
        %3465 = vadd.xlane.f32.xlu0 %v3402
        %v3466 = vpop.xlane.xlu0 %3465
        %3467 = vadd.xlane.f32.xlu0 %v3404
        %v3468 = vpop.xlane.xlu0 %3467
        %3469 = vadd.xlane.f32.xlu0 %v3406
        %v3470 = vpop.xlane.xlu0 %3469
        %3471 = vadd.xlane.f32.xlu0 %v3408
        %v3472 = vpop.xlane.xlu0 %3471
        %3473 = vadd.xlane.f32.xlu0 %v3410
        %v3474 = vpop.xlane.xlu0 %3473
        %3475 = vadd.xlane.f32.xlu0 %v3412
        %v3476 = vpop.xlane.xlu0 %3475
        %3477 = vadd.xlane.f32.xlu0 %v3414
        %v3478 = vpop.xlane.xlu0 %3477
        %3479 = vadd.xlane.f32.xlu0 %v3416
        %v3480 = vpop.xlane.xlu0 %3479
        %3481 = vadd.xlane.f32.xlu0 %v3418
        %v3482 = vpop.xlane.xlu0 %3481
        %3483 = vadd.xlane.f32.xlu0 %v3420
        %v3484 = vpop.xlane.xlu0 %3483
        %3485 = vadd.xlane.f32.xlu0 %v3422
        %v3486 = vpop.xlane.xlu0 %3485
        %3487 = vadd.xlane.f32.xlu0 %v3424
        %v3488 = vpop.xlane.xlu0 %3487
        %3489 = vadd.xlane.f32.xlu0 %v3426
        %v3490 = vpop.xlane.xlu0 %3489
        %3491 = vadd.xlane.f32.xlu0 %v3428
        %v3492 = vpop.xlane.xlu0 %3491
        %3493 = vadd.xlane.f32.xlu0 %v3430
        %v3494 = vpop.xlane.xlu0 %3493
        %3495 = vadd.xlane.f32.xlu0 %v3432
        %v3496 = vpop.xlane.xlu0 %3495
        %3497 = vadd.xlane.f32.xlu0 %v3434
        %v3498 = vpop.xlane.xlu0 %3497
        %3499 = vadd.xlane.f32.xlu0 %v3436
        %v3500 = vpop.xlane.xlu0 %3499
        %3501 = vadd.xlane.f32.xlu0 %v3438
        %v3502 = vpop.xlane.xlu0 %3501
        %3503 = vadd.xlane.f32.xlu0 %v3440
        %v3504 = vpop.xlane.xlu0 %3503
        %3505 = vadd.xlane.f32.xlu0 %v3442
        %v3506 = vpop.xlane.xlu0 %3505
        %3507 = vadd.xlane.f32.xlu0 %v3444
        %v3508 = vpop.xlane.xlu0 %3507
        %3509 = vadd.xlane.f32.xlu0 %v3446
        %v3510 = vpop.xlane.xlu0 %3509
        %3511 = vadd.xlane.f32.xlu0 %v3448
        %v3512 = vpop.xlane.xlu0 %3511
        %3513 = vadd.xlane.f32.xlu0 %v3450
        %v3514 = vpop.xlane.xlu0 %3513
        %3515 = vadd.xlane.f32.xlu0 %v3452
        %v3516 = vpop.xlane.xlu0 %3515
        %3517 = vadd.xlane.f32.xlu0 %v3454
        %v3518 = vpop.xlane.xlu0 %3517
        %3519 = vadd.xlane.f32.xlu0 %v3456
        %v3520 = vpop.xlane.xlu0 %3519
        %3521 = vadd.xlane.f32.xlu0 %v3458
        %v3522 = vpop.xlane.xlu0 %3521
        %3523 = vadd.xlane.f32.xlu0 %v3460
        %v3524 = vpop.xlane.xlu0 %3523
        %3525 = vadd.xlane.f32.xlu0 %v3462
        %v3526 = vpop.xlane.xlu0 %3525
        %v3527 = vrcp.pop %v3464
        %v3528 = vrcp.pop %v3466
        %v3529 = vrcp.pop %v3468
        %v3530 = vrcp.pop %v3470
        %v3531 = vrcp.pop %v3472
        %v3532 = vrcp.pop %v3474
        %v3533 = vrcp.pop %v3476
        %v3534 = vrcp.pop %v3478
        %v3535 = vrcp.pop %v3480
        %v3536 = vrcp.pop %v3482
        %v3537 = vrcp.pop %v3484
        %v3538 = vrcp.pop %v3486
        %v3539 = vrcp.pop %v3488
        %v3540 = vrcp.pop %v3490
        %v3541 = vrcp.pop %v3492
        %v3542 = vrcp.pop %v3494
        %v3543 = vrcp.pop %v3496
        %v3544 = vrcp.pop %v3498
        %v3545 = vrcp.pop %v3500
        %v3546 = vrcp.pop %v3502
        %v3547 = vrcp.pop %v3504
        %v3548 = vrcp.pop %v3506
        %v3549 = vrcp.pop %v3508
        %v3550 = vrcp.pop %v3510
        %v3551 = vrcp.pop %v3512
        %v3552 = vrcp.pop %v3514
        %v3553 = vrcp.pop %v3516
        %v3554 = vrcp.pop %v3518
        %v3555 = vrcp.pop %v3520
        %v3556 = vrcp.pop %v3522
        %v3557 = vrcp.pop %v3524
        %v3558 = vrcp.pop %v3526
        %v3559 = vmul.f32 %v3400, %v3527
        %v3560 = vmul.f32 %v3402, %v3528
        %v3561 = vmul.f32 %v3404, %v3529
        %v3562 = vmul.f32 %v3406, %v3530
        %v3563 = vmul.f32 %v3408, %v3531
        %v3564 = vmul.f32 %v3410, %v3532
        %v3565 = vmul.f32 %v3412, %v3533
        %v3566 = vmul.f32 %v3414, %v3534
        %v3567 = vmul.f32 %v3416, %v3535
        %v3568 = vmul.f32 %v3418, %v3536
        %v3569 = vmul.f32 %v3420, %v3537
        %v3570 = vmul.f32 %v3422, %v3538
        %v3571 = vmul.f32 %v3424, %v3539
        %v3572 = vmul.f32 %v3426, %v3540
        %v3573 = vmul.f32 %v3428, %v3541
        %v3574 = vmul.f32 %v3430, %v3542
        %v3575 = vmul.f32 %v3432, %v3543
        %v3576 = vmul.f32 %v3434, %v3544
        %v3577 = vmul.f32 %v3436, %v3545
        %v3578 = vmul.f32 %v3438, %v3546
        %v3579 = vmul.f32 %v3440, %v3547
        %v3580 = vmul.f32 %v3442, %v3548
        %v3581 = vmul.f32 %v3444, %v3549
        %v3582 = vmul.f32 %v3446, %v3550
        %v3583 = vmul.f32 %v3448, %v3551
        %v3584 = vmul.f32 %v3450, %v3552
        %v3585 = vmul.f32 %v3452, %v3553
        %v3586 = vmul.f32 %v3454, %v3554
        %v3587 = vmul.f32 %v3456, %v3555
        %v3588 = vmul.f32 %v3458, %v3556
        %v3589 = vmul.f32 %v3460, %v3557
        %v3590 = vmul.f32 %v3462, %v3558
        %v3591 = vpack.c.bf16 %v3560, %v3559
        %v3592 = vpack.c.bf16 %v3562, %v3561
        %v3593 = vpack.c.bf16 %v3564, %v3563
        %v3594 = vpack.c.bf16 %v3566, %v3565
        %v3595 = vpack.c.bf16 %v3568, %v3567
        %v3596 = vpack.c.bf16 %v3570, %v3569
        %v3597 = vpack.c.bf16 %v3572, %v3571
        %v3598 = vpack.c.bf16 %v3574, %v3573
        %v3599 = vpack.c.bf16 %v3576, %v3575
        %v3600 = vpack.c.bf16 %v3578, %v3577
        %v3601 = vpack.c.bf16 %v3580, %v3579
        %v3602 = vpack.c.bf16 %v3582, %v3581
        %v3603 = vpack.c.bf16 %v3584, %v3583
        %v3604 = vpack.c.bf16 %v3586, %v3585
        %v3605 = vpack.c.bf16 %v3588, %v3587
        %v3606 = vpack.c.bf16 %v3590, %v3589
        %3615 = vrot.lane.b32.xlu0 %v2884, 64
        %v3616 = vpop.permute.xlu0 %3615
        %3617 = vrot.lane.b32.xlu0 %v2885, 64
        %v3618 = vpop.permute.xlu0 %3617
        %3619 = vrot.lane.b32.xlu0 %v2886, 64
        %v3620 = vpop.permute.xlu0 %3619
        %3621 = vrot.lane.b32.xlu0 %v2887, 64
        %v3622 = vpop.permute.xlu0 %3621
        %3623 = vrot.lane.b32.xlu0 %v2888, 64
        %v3624 = vpop.permute.xlu0 %3623
        %3625 = vrot.lane.b32.xlu0 %v2889, 64
        %v3626 = vpop.permute.xlu0 %3625
        %3627 = vrot.lane.b32.xlu0 %v2890, 64
        %v3628 = vpop.permute.xlu0 %3627
        %3629 = vrot.lane.b32.xlu0 %v2891, 64
        %v3630 = vpop.permute.xlu0 %3629
        %3639 = vmatprep.subr.bf16.mxu0 0
        %3640 = vmatpush1.bf16.msra.mxu0 %v3616
        %3641 = vmatprep.subr.bf16.mxu0 0
        %3642 = vmatpush1.bf16.msra.mxu0 %v3618
        %3643 = vmatprep.subr.bf16.mxu0 0
        %3644 = vmatpush1.bf16.msra.mxu0 %v3620
        %3645 = vmatprep.subr.bf16.mxu0 0
        %3646 = vmatpush1.bf16.msra.mxu0 %v3622
        %3647 = vmatprep.subr.bf16.mxu0 0
        %3648 = vmatpush1.bf16.msra.mxu0 %v3624
        %3649 = vmatprep.subr.bf16.mxu0 0
        %3650 = vmatpush1.bf16.msra.mxu0 %v3626
        %3651 = vmatprep.subr.bf16.mxu0 0
        %3652 = vmatpush1.bf16.msra.mxu0 %v3628
        %3653 = vmatprep.subr.bf16.mxu0 0
        %3654 = vmatpush1.bf16.msra.mxu0 %v3630
        %3655 = vmatprep.subr.bf16.mxu0 0
        %3656 = vmatpush1.bf16.msra.mxu0 0
        %3657 = vmatprep.subr.bf16.mxu0 0
        %3658 = vmatpush1.bf16.msra.mxu0 0
        %3659 = vmatprep.subr.bf16.mxu0 0
        %3660 = vmatpush1.bf16.msra.mxu0 0
        %3661 = vmatprep.subr.bf16.mxu0 0
        %3662 = vmatpush1.bf16.msra.mxu0 0
        %3663 = vmatprep.subr.bf16.mxu0 0
        %3664 = vmatpush1.bf16.msra.mxu0 0
        %3665 = vmatprep.subr.bf16.mxu0 0
        %3666 = vmatpush1.bf16.msra.mxu0 0
        %3667 = vmatprep.subr.bf16.mxu0 0
        %3668 = vmatpush1.bf16.msra.mxu0 0
        %3669 = vmatprep.subr.bf16.mxu0 0
        %3670 = vmatpush1.bf16.msra.mxu0 0
        %3671 = vmatprep.mubr.bf16.mxu0 0
        %3672 = vmatmul.mubr.bf16.gmra.mrb[0].mxu0 %v3591
        %v3673 = vpop.f32.mrb[0].mxu0
        %v3674 = vadd.f32 0.0, %v3673
        %v3675 = vpop.f32.mrb[0].mxu0
        %v3676 = vpop.f32.mrb[0].mxu0
        %v3677 = vadd.f32 0.0, %v3676
        %v3678 = vpop.f32.mrb[0].mxu0
        %3679 = vmatprep.mubr.bf16.mxu0 0
        %3680 = vmatmul.mubr.bf16.gmra.mrb[0].mxu0 %v3592
        %v3681 = vpop.f32.mrb[0].mxu0
        %v3682 = vadd.f32 0.0, %v3681
        %v3683 = vpop.f32.mrb[0].mxu0
        %v3684 = vpop.f32.mrb[0].mxu0
        %v3685 = vadd.f32 0.0, %v3684
        %v3686 = vpop.f32.mrb[0].mxu0
        %3687 = vmatprep.mubr.bf16.mxu0 0
        %3688 = vmatmul.mubr.bf16.gmra.mrb[0].mxu0 %v3593
        %v3689 = vpop.f32.mrb[0].mxu0
        %v3690 = vadd.f32 0.0, %v3689
        %v3691 = vpop.f32.mrb[0].mxu0
        %v3692 = vpop.f32.mrb[0].mxu0
        %v3693 = vadd.f32 0.0, %v3692
        %v3694 = vpop.f32.mrb[0].mxu0
        %3695 = vmatprep.mubr.bf16.mxu0 0
        %3696 = vmatmul.mubr.bf16.gmra.mrb[0].mxu0 %v3594
        %v3697 = vpop.f32.mrb[0].mxu0
        %v3698 = vadd.f32 0.0, %v3697
        %v3699 = vpop.f32.mrb[0].mxu0
        %v3700 = vpop.f32.mrb[0].mxu0
        %v3701 = vadd.f32 0.0, %v3700
        %v3702 = vpop.f32.mrb[0].mxu0
        %3703 = vmatprep.mubr.bf16.mxu0 0
        %3704 = vmatmul.mubr.bf16.gmra.mrb[0].mxu0 %v3595
        %v3705 = vpop.f32.mrb[0].mxu0
        %v3706 = vadd.f32 0.0, %v3705
        %v3707 = vpop.f32.mrb[0].mxu0
        %v3708 = vpop.f32.mrb[0].mxu0
        %v3709 = vadd.f32 0.0, %v3708
        %v3710 = vpop.f32.mrb[0].mxu0
        %3711 = vmatprep.mubr.bf16.mxu0 0
        %3712 = vmatmul.mubr.bf16.gmra.mrb[0].mxu0 %v3596
        %v3713 = vpop.f32.mrb[0].mxu0
        %v3714 = vadd.f32 0.0, %v3713
        %v3715 = vpop.f32.mrb[0].mxu0
        %v3716 = vpop.f32.mrb[0].mxu0
        %v3717 = vadd.f32 0.0, %v3716
        %v3718 = vpop.f32.mrb[0].mxu0
        %3719 = vmatprep.mubr.bf16.mxu0 0
        %3720 = vmatmul.mubr.bf16.gmra.mrb[0].mxu0 %v3597
        %v3721 = vpop.f32.mrb[0].mxu0
        %v3722 = vadd.f32 0.0, %v3721
        %v3723 = vpop.f32.mrb[0].mxu0
        %v3724 = vpop.f32.mrb[0].mxu0
        %v3725 = vadd.f32 0.0, %v3724
        %v3726 = vpop.f32.mrb[0].mxu0
        %3727 = vmatprep.mubr.bf16.mxu0 0
        %3728 = vmatmul.mubr.bf16.gmra.mrb[0].mxu0 %v3598
        %v3729 = vpop.f32.mrb[0].mxu0
        %v3730 = vadd.f32 0.0, %v3729
        %v3731 = vpop.f32.mrb[0].mxu0
        %v3732 = vpop.f32.mrb[0].mxu0
        %v3733 = vadd.f32 0.0, %v3732
        %v3734 = vpop.f32.mrb[0].mxu0
        %3735 = vdwg.mxu0
        %3744 = vrot.lane.b32.xlu0 %v2892, 64
        %v3745 = vpop.permute.xlu0 %3744
        %3746 = vrot.lane.b32.xlu0 %v2893, 64
        %v3747 = vpop.permute.xlu0 %3746
        %3748 = vrot.lane.b32.xlu0 %v2894, 64
        %v3749 = vpop.permute.xlu0 %3748
        %3750 = vrot.lane.b32.xlu0 %v2895, 64
        %v3751 = vpop.permute.xlu0 %3750
        %3752 = vrot.lane.b32.xlu0 %v2896, 64
        %v3753 = vpop.permute.xlu0 %3752
        %3754 = vrot.lane.b32.xlu0 %v2897, 64
        %v3755 = vpop.permute.xlu0 %3754
        %3756 = vrot.lane.b32.xlu0 %v2898, 64
        %v3757 = vpop.permute.xlu0 %3756
        %3758 = vrot.lane.b32.xlu0 %v2899, 64
        %v3759 = vpop.permute.xlu0 %3758
        %3768 = vmatprep.subr.bf16.mxu0 0
        %3769 = vmatpush1.bf16.msra.mxu0 %v3745
        %3770 = vmatprep.subr.bf16.mxu0 0
        %3771 = vmatpush1.bf16.msra.mxu0 %v3747
        %3772 = vmatprep.subr.bf16.mxu0 0
        %3773 = vmatpush1.bf16.msra.mxu0 %v3749
        %3774 = vmatprep.subr.bf16.mxu0 0
        %3775 = vmatpush1.bf16.msra.mxu0 %v3751
        %3776 = vmatprep.subr.bf16.mxu0 0
        %3777 = vmatpush1.bf16.msra.mxu0 %v3753
        %3778 = vmatprep.subr.bf16.mxu0 0
        %3779 = vmatpush1.bf16.msra.mxu0 %v3755
        %3780 = vmatprep.subr.bf16.mxu0 0
        %3781 = vmatpush1.bf16.msra.mxu0 %v3757
        %3782 = vmatprep.subr.bf16.mxu0 0
        %3783 = vmatpush1.bf16.msra.mxu0 %v3759
        %3784 = vmatprep.subr.bf16.mxu0 0
        %3785 = vmatpush1.bf16.msra.mxu0 0
        %3786 = vmatprep.subr.bf16.mxu0 0
        %3787 = vmatpush1.bf16.msra.mxu0 0
        %3788 = vmatprep.subr.bf16.mxu0 0
        %3789 = vmatpush1.bf16.msra.mxu0 0
        %3790 = vmatprep.subr.bf16.mxu0 0
        %3791 = vmatpush1.bf16.msra.mxu0 0
        %3792 = vmatprep.subr.bf16.mxu0 0
        %3793 = vmatpush1.bf16.msra.mxu0 0
        %3794 = vmatprep.subr.bf16.mxu0 0
        %3795 = vmatpush1.bf16.msra.mxu0 0
        %3796 = vmatprep.subr.bf16.mxu0 0
        %3797 = vmatpush1.bf16.msra.mxu0 0
        %3798 = vmatprep.subr.bf16.mxu0 0
        %3799 = vmatpush1.bf16.msra.mxu0 0
        %3800 = vmatprep.mubr.bf16.mxu0 0
        %3801 = vmatmul.mubr.bf16.gmra.mrb[0].mxu0 %v3599
        %v3802 = vpop.f32.mrb[0].mxu0
        %v3803 = vadd.f32 0.0, %v3802
        %v3804 = vpop.f32.mrb[0].mxu0
        %v3805 = vpop.f32.mrb[0].mxu0
        %v3806 = vadd.f32 0.0, %v3805
        %v3807 = vpop.f32.mrb[0].mxu0
        %3808 = vmatprep.mubr.bf16.mxu0 0
        %3809 = vmatmul.mubr.bf16.gmra.mrb[0].mxu0 %v3600
        %v3810 = vpop.f32.mrb[0].mxu0
        %v3811 = vadd.f32 0.0, %v3810
        %v3812 = vpop.f32.mrb[0].mxu0
        %v3813 = vpop.f32.mrb[0].mxu0
        %v3814 = vadd.f32 0.0, %v3813
        %v3815 = vpop.f32.mrb[0].mxu0
        %3816 = vmatprep.mubr.bf16.mxu0 0
        %3817 = vmatmul.mubr.bf16.gmra.mrb[0].mxu0 %v3601
        %v3818 = vpop.f32.mrb[0].mxu0
        %v3819 = vadd.f32 0.0, %v3818
        %v3820 = vpop.f32.mrb[0].mxu0
        %v3821 = vpop.f32.mrb[0].mxu0
        %v3822 = vadd.f32 0.0, %v3821
        %v3823 = vpop.f32.mrb[0].mxu0
        %3824 = vmatprep.mubr.bf16.mxu0 0
        %3825 = vmatmul.mubr.bf16.gmra.mrb[0].mxu0 %v3602
        %v3826 = vpop.f32.mrb[0].mxu0
        %v3827 = vadd.f32 0.0, %v3826
        %v3828 = vpop.f32.mrb[0].mxu0
        %v3829 = vpop.f32.mrb[0].mxu0
        %v3830 = vadd.f32 0.0, %v3829
        %v3831 = vpop.f32.mrb[0].mxu0
        %3832 = vmatprep.mubr.bf16.mxu0 0
        %3833 = vmatmul.mubr.bf16.gmra.mrb[0].mxu0 %v3603
        %v3834 = vpop.f32.mrb[0].mxu0
        %v3835 = vadd.f32 0.0, %v3834
        %v3836 = vpop.f32.mrb[0].mxu0
        %v3837 = vpop.f32.mrb[0].mxu0
        %v3838 = vadd.f32 0.0, %v3837
        %v3839 = vpop.f32.mrb[0].mxu0
        %3840 = vmatprep.mubr.bf16.mxu0 0
        %3841 = vmatmul.mubr.bf16.gmra.mrb[0].mxu0 %v3604
        %v3842 = vpop.f32.mrb[0].mxu0
        %v3843 = vadd.f32 0.0, %v3842
        %v3844 = vpop.f32.mrb[0].mxu0
        %v3845 = vpop.f32.mrb[0].mxu0
        %v3846 = vadd.f32 0.0, %v3845
        %v3847 = vpop.f32.mrb[0].mxu0
        %3848 = vmatprep.mubr.bf16.mxu0 0
        %3849 = vmatmul.mubr.bf16.gmra.mrb[0].mxu0 %v3605
        %v3850 = vpop.f32.mrb[0].mxu0
        %v3851 = vadd.f32 0.0, %v3850
        %v3852 = vpop.f32.mrb[0].mxu0
        %v3853 = vpop.f32.mrb[0].mxu0
        %v3854 = vadd.f32 0.0, %v3853
        %v3855 = vpop.f32.mrb[0].mxu0
        %3856 = vmatprep.mubr.bf16.mxu0 0
        %3857 = vmatmul.mubr.bf16.gmra.mrb[0].mxu0 %v3606
        %v3858 = vpop.f32.mrb[0].mxu0
        %v3859 = vadd.f32 0.0, %v3858
        %v3860 = vpop.f32.mrb[0].mxu0
        %v3861 = vpop.f32.mrb[0].mxu0
        %v3862 = vadd.f32 0.0, %v3861
        %v3863 = vpop.f32.mrb[0].mxu0
        %3864 = vdwg.mxu0
        %v3865 = vpack.c.bf16 %v3677, %v3674
        %v3866 = vpack.c.bf16 %v3685, %v3682
        %v3867 = vpack.c.bf16 %v3693, %v3690
        %v3868 = vpack.c.bf16 %v3701, %v3698
        %v3869 = vpack.c.bf16 %v3709, %v3706
        %v3870 = vpack.c.bf16 %v3717, %v3714
        %v3871 = vpack.c.bf16 %v3725, %v3722
        %v3872 = vpack.c.bf16 %v3733, %v3730
        %v3873 = vpack.c.bf16 %v3806, %v3803
        %v3874 = vpack.c.bf16 %v3814, %v3811
        %v3875 = vpack.c.bf16 %v3822, %v3819
        %v3876 = vpack.c.bf16 %v3830, %v3827
        %v3877 = vpack.c.bf16 %v3838, %v3835
        %v3878 = vpack.c.bf16 %v3846, %v3843
        %v3879 = vpack.c.bf16 %v3854, %v3851
        %v3880 = vpack.c.bf16 %v3862, %v3859
        %3897 = vrot.lane.b32.xlu0 %v3865, 64
        %v3898 = vpop.permute.xlu0 %3897
        %3899 = vrot.lane.b32.xlu0 %v3866, 64
        %v3900 = vpop.permute.xlu0 %3899
        %3901 = vrot.lane.b32.xlu0 %v3867, 64
        %v3902 = vpop.permute.xlu0 %3901
        %3903 = vrot.lane.b32.xlu0 %v3868, 64
        %v3904 = vpop.permute.xlu0 %3903
        %3905 = vrot.lane.b32.xlu0 %v3869, 64
        %v3906 = vpop.permute.xlu0 %3905
        %3907 = vrot.lane.b32.xlu0 %v3870, 64
        %v3908 = vpop.permute.xlu0 %3907
        %3909 = vrot.lane.b32.xlu0 %v3871, 64
        %v3910 = vpop.permute.xlu0 %3909
        %3911 = vrot.lane.b32.xlu0 %v3872, 64
        %v3912 = vpop.permute.xlu0 %3911
        %3913 = vrot.lane.b32.xlu0 %v3873, 64
        %v3914 = vpop.permute.xlu0 %3913
        %3915 = vrot.lane.b32.xlu0 %v3874, 64
        %v3916 = vpop.permute.xlu0 %3915
        %3917 = vrot.lane.b32.xlu0 %v3875, 64
        %v3918 = vpop.permute.xlu0 %3917
        %3919 = vrot.lane.b32.xlu0 %v3876, 64
        %v3920 = vpop.permute.xlu0 %3919
        %3921 = vrot.lane.b32.xlu0 %v3877, 64
        %v3922 = vpop.permute.xlu0 %3921
        %3923 = vrot.lane.b32.xlu0 %v3878, 64
        %v3924 = vpop.permute.xlu0 %3923
        %3925 = vrot.lane.b32.xlu0 %v3879, 64
        %v3926 = vpop.permute.xlu0 %3925
        %3927 = vrot.lane.b32.xlu0 %v3880, 64
        %v3928 = vpop.permute.xlu0 %3927
        %vm3945 = vcmask 785920
        %3946 = vst.msk [vmem:[#allocation3] sm:$0xff] %vm3945, %v3898
        %3947 = vst.msk [vmem:[#allocation3 + $0x8] sm:$0xff] %vm3945, %v3900
        %3948 = vst.msk [vmem:[#allocation3 + $0x10] sm:$0xff] %vm3945, %v3902
        %3949 = vst.msk [vmem:[#allocation3 + $0x18] sm:$0xff] %vm3945, %v3904
        %3950 = vst.msk [vmem:[#allocation3 + $0x20] sm:$0xff] %vm3945, %v3906
        %3951 = vst.msk [vmem:[#allocation3 + $0x28] sm:$0xff] %vm3945, %v3908
        %3952 = vst.msk [vmem:[#allocation3 + $0x30] sm:$0xff] %vm3945, %v3910
        %3953 = vst.msk [vmem:[#allocation3 + $0x38] sm:$0xff] %vm3945, %v3912
        %3954 = vst.msk [vmem:[#allocation3 + $0x40] sm:$0xff] %vm3945, %v3914
        %3955 = vst.msk [vmem:[#allocation3 + $0x48] sm:$0xff] %vm3945, %v3916
        %3956 = vst.msk [vmem:[#allocation3 + $0x50] sm:$0xff] %vm3945, %v3918
        %3957 = vst.msk [vmem:[#allocation3 + $0x58] sm:$0xff] %vm3945, %v3920
        %3958 = vst.msk [vmem:[#allocation3 + $0x60] sm:$0xff] %vm3945, %v3922
        %3959 = vst.msk [vmem:[#allocation3 + $0x68] sm:$0xff] %vm3945, %v3924
        %3960 = vst.msk [vmem:[#allocation3 + $0x70] sm:$0xff] %vm3945, %v3926
        %3961 = vst.msk [vmem:[#allocation3 + $0x78] sm:$0xff] %vm3945, %v3928
        %v3962 = vld [vmem:[#allocation2] sm:$0xff]
        %v3963 = vld [vmem:[#allocation2 + $0x18] sm:$0xff]
        %v3964 = vld [vmem:[#allocation2 + $0x30] sm:$0xff]
        %v3965 = vld [vmem:[#allocation2 + $0x48] sm:$0xff]
        %v3966 = vld [vmem:[#allocation2 + $0x60] sm:$0xff]
        %v3967 = vld [vmem:[#allocation2 + $0x78] sm:$0xff]
        %v3968 = vld [vmem:[#allocation2 + $0x90] sm:$0xff]
        %v3969 = vld [vmem:[#allocation2 + $0xa8] sm:$0xff]
        %v3970 = vld [vmem:[#allocation2 + $0xc0] sm:$0xff]
        %v3971 = vld [vmem:[#allocation2 + $0xd8] sm:$0xff]
        %v3972 = vld [vmem:[#allocation2 + $0xf0] sm:$0xff]
        %v3973 = vld [vmem:[#allocation2 + $0x108] sm:$0xff]
        %v3974 = vld [vmem:[#allocation2 + $0x120] sm:$0xff]
        %v3975 = vld [vmem:[#allocation2 + $0x138] sm:$0xff]
        %v3976 = vld [vmem:[#allocation2 + $0x150] sm:$0xff]
        %v3977 = vld [vmem:[#allocation2 + $0x168] sm:$0xff]
        %v3978 = vld [vmem:[#allocation2 + $0x8] sm:$0xff]
        %v3979 = vld [vmem:[#allocation2 + $0x20] sm:$0xff]
        %v3980 = vld [vmem:[#allocation2 + $0x38] sm:$0xff]
        %v3981 = vld [vmem:[#allocation2 + $0x50] sm:$0xff]
        %v3982 = vld [vmem:[#allocation2 + $0x68] sm:$0xff]
        %v3983 = vld [vmem:[#allocation2 + $0x80] sm:$0xff]
        %v3984 = vld [vmem:[#allocation2 + $0x98] sm:$0xff]
        %v3985 = vld [vmem:[#allocation2 + $0xb0] sm:$0xff]
        %v3986 = vld [vmem:[#allocation2 + $0xc8] sm:$0xff]
        %v3987 = vld [vmem:[#allocation2 + $0xe0] sm:$0xff]
        %v3988 = vld [vmem:[#allocation2 + $0xf8] sm:$0xff]
        %v3989 = vld [vmem:[#allocation2 + $0x110] sm:$0xff]
        %v3990 = vld [vmem:[#allocation2 + $0x128] sm:$0xff]
        %v3991 = vld [vmem:[#allocation2 + $0x140] sm:$0xff]
        %v3992 = vld [vmem:[#allocation2 + $0x158] sm:$0xff]
        %v3993 = vld [vmem:[#allocation2 + $0x170] sm:$0xff]
        %v3994 = vld [vmem:[#allocation2 + $0x10] sm:$0xff]
        %v3995 = vld [vmem:[#allocation2 + $0x28] sm:$0xff]
        %v3996 = vld [vmem:[#allocation2 + $0x40] sm:$0xff]
        %v3997 = vld [vmem:[#allocation2 + $0x58] sm:$0xff]
        %v3998 = vld [vmem:[#allocation2 + $0x70] sm:$0xff]
        %v3999 = vld [vmem:[#allocation2 + $0x88] sm:$0xff]
        %v4000 = vld [vmem:[#allocation2 + $0xa0] sm:$0xff]
        %v4001 = vld [vmem:[#allocation2 + $0xb8] sm:$0xff]
        %v4002 = vld [vmem:[#allocation2 + $0xd0] sm:$0xff]
        %v4003 = vld [vmem:[#allocation2 + $0xe8] sm:$0xff]
        %v4004 = vld [vmem:[#allocation2 + $0x100] sm:$0xff]
        %v4005 = vld [vmem:[#allocation2 + $0x118] sm:$0xff]
        %v4006 = vld [vmem:[#allocation2 + $0x130] sm:$0xff]
        %v4007 = vld [vmem:[#allocation2 + $0x148] sm:$0xff]
        %v4008 = vld [vmem:[#allocation2 + $0x160] sm:$0xff]
        %v4009 = vld [vmem:[#allocation2 + $0x178] sm:$0xff]
        %s4010 = scalar_lea.vmem %s2, 384
        %v4011 = vld [vmem:[%s4010] sm:$0xff]
        %v4012 = vld [vmem:[%s4010 + $0x8] sm:$0xff]
        %v4013 = vld [vmem:[%s4010 + $0x10] sm:$0xff]
        %v4014 = vld [vmem:[%s4010 + $0x18] sm:$0xff]
        %v4015 = vld [vmem:[%s4010 + $0x20] sm:$0xff]
        %v4016 = vld [vmem:[%s4010 + $0x28] sm:$0xff]
        %v4017 = vld [vmem:[%s4010 + $0x30] sm:$0xff]
        %v4018 = vld [vmem:[%s4010 + $0x38] sm:$0xff]
        %v4019 = vld [vmem:[%s4010 + $0x40] sm:$0xff]
        %v4020 = vld [vmem:[%s4010 + $0x48] sm:$0xff]
        %v4021 = vld [vmem:[%s4010 + $0x50] sm:$0xff]
        %v4022 = vld [vmem:[%s4010 + $0x58] sm:$0xff]
        %v4023 = vld [vmem:[%s4010 + $0x60] sm:$0xff]
        %v4024 = vld [vmem:[%s4010 + $0x68] sm:$0xff]
        %v4025 = vld [vmem:[%s4010 + $0x70] sm:$0xff]
        %v4026 = vld [vmem:[%s4010 + $0x78] sm:$0xff]
        %4035 = vrot.lane.b32.xlu0 %v3962, 32
        %v4036 = vpop.permute.xlu0 %4035
        %4037 = vrot.lane.b32.xlu0 %v3963, 32
        %v4038 = vpop.permute.xlu0 %4037
        %4039 = vrot.lane.b32.xlu0 %v3964, 32
        %v4040 = vpop.permute.xlu0 %4039
        %4041 = vrot.lane.b32.xlu0 %v3965, 32
        %v4042 = vpop.permute.xlu0 %4041
        %4043 = vrot.lane.b32.xlu0 %v3966, 32
        %v4044 = vpop.permute.xlu0 %4043
        %4045 = vrot.lane.b32.xlu0 %v3967, 32
        %v4046 = vpop.permute.xlu0 %4045
        %4047 = vrot.lane.b32.xlu0 %v3968, 32
        %v4048 = vpop.permute.xlu0 %4047
        %4049 = vrot.lane.b32.xlu0 %v3969, 32
        %v4050 = vpop.permute.xlu0 %4049
        %4059 = vrot.lane.b32.xlu0 %v3978, 32
        %v4060 = vpop.permute.xlu0 %4059
        %4061 = vrot.lane.b32.xlu0 %v3979, 32
        %v4062 = vpop.permute.xlu0 %4061
        %4063 = vrot.lane.b32.xlu0 %v3980, 32
        %v4064 = vpop.permute.xlu0 %4063
        %4065 = vrot.lane.b32.xlu0 %v3981, 32
        %v4066 = vpop.permute.xlu0 %4065
        %4067 = vrot.lane.b32.xlu0 %v3982, 32
        %v4068 = vpop.permute.xlu0 %4067
        %4069 = vrot.lane.b32.xlu0 %v3983, 32
        %v4070 = vpop.permute.xlu0 %4069
        %4071 = vrot.lane.b32.xlu0 %v3984, 32
        %v4072 = vpop.permute.xlu0 %4071
        %4073 = vrot.lane.b32.xlu0 %v3985, 32
        %v4074 = vpop.permute.xlu0 %4073
        %v4076 = vsel %vm921, %v4036, 0
        %v4079 = vsel %vm921, %v4038, 0
        %v4082 = vsel %vm921, %v4040, 0
        %v4085 = vsel %vm921, %v4042, 0
        %v4088 = vsel %vm921, %v4044, 0
        %v4091 = vsel %vm921, %v4046, 0
        %v4094 = vsel %vm921, %v4048, 0
        %v4097 = vsel %vm921, %v4050, 0
        %v4100 = vsel %vm921, %v4060, 0
        %v4103 = vsel %vm921, %v4062, 0
        %v4106 = vsel %vm921, %v4064, 0
        %v4109 = vsel %vm921, %v4066, 0
        %v4112 = vsel %vm921, %v4068, 0
        %v4115 = vsel %vm921, %v4070, 0
        %v4118 = vsel %vm921, %v4072, 0
        %v4121 = vsel %vm921, %v4074, 0
        %4123 = vmatprep.subr.bf16.mxu0 0
        %4124 = vmatpush1.bf16.xpose.msra.mxu0 %v4100
        %4125 = vmatprep.subr.bf16.mxu0 0
        %4126 = vmatpush1.bf16.xpose.msra.mxu0 %v4103
        %4127 = vmatprep.subr.bf16.mxu0 0
        %4128 = vmatpush1.bf16.xpose.msra.mxu0 %v4106
        %4129 = vmatprep.subr.bf16.mxu0 0
        %4130 = vmatpush1.bf16.xpose.msra.mxu0 %v4109
        %4131 = vmatprep.subr.bf16.mxu0 0
        %4132 = vmatpush1.bf16.xpose.msra.mxu0 %v4112
        %4133 = vmatprep.subr.bf16.mxu0 0
        %4134 = vmatpush1.bf16.xpose.msra.mxu0 %v4115
        %4135 = vmatprep.subr.bf16.mxu0 0
        %4136 = vmatpush1.bf16.xpose.msra.mxu0 %v4118
        %4137 = vmatprep.subr.bf16.mxu0 0
        %4138 = vmatpush1.bf16.xpose.msra.mxu0 %v4121
        %4139 = vmatprep.subr.bf16.mxu0 0
        %4140 = vmatpush1.bf16.xpose.msra.mxu0 0
        %4141 = vmatprep.subr.bf16.mxu0 0
        %4142 = vmatpush1.bf16.xpose.msra.mxu0 0
        %4143 = vmatprep.subr.bf16.mxu0 0
        %4144 = vmatpush1.bf16.xpose.msra.mxu0 0
        %4145 = vmatprep.subr.bf16.mxu0 0
        %4146 = vmatpush1.bf16.xpose.msra.mxu0 0
        %4147 = vmatprep.subr.bf16.mxu0 0
        %4148 = vmatpush1.bf16.xpose.msra.mxu0 0
        %4149 = vmatprep.subr.bf16.mxu0 0
        %4150 = vmatpush1.bf16.xpose.msra.mxu0 0
        %4151 = vmatprep.subr.bf16.mxu0 0
        %4152 = vmatpush1.bf16.xpose.msra.mxu0 0
        %4153 = vmatprep.subr.bf16.mxu0 0
        %4154 = vmatpush1.bf16.xpose.msra.mxu0 0
        %4155 = vmatprep.mubr.bf16.mxu0 0
        %4156 = vmatmul.mubr.bf16.gmra.mrb[0].mxu0 %v4076
        %v4157 = vpop.f32.mrb[0].mxu0
        %v4158 = vadd.f32 %v4011, %v4157
        %v4159 = vpop.f32.mrb[0].mxu0
        %v4160 = vpop.f32.mrb[0].mxu0
        %v4161 = vadd.f32 %v4012, %v4160
        %v4162 = vpop.f32.mrb[0].mxu0
        %4163 = vmatprep.mubr.bf16.mxu0 0
        %4164 = vmatmul.mubr.bf16.gmra.mrb[0].mxu0 %v4079
        %v4165 = vpop.f32.mrb[0].mxu0
        %v4166 = vadd.f32 %v4013, %v4165
        %v4167 = vpop.f32.mrb[0].mxu0
        %v4168 = vpop.f32.mrb[0].mxu0
        %v4169 = vadd.f32 %v4014, %v4168
        %v4170 = vpop.f32.mrb[0].mxu0
        %4171 = vmatprep.mubr.bf16.mxu0 0
        %4172 = vmatmul.mubr.bf16.gmra.mrb[0].mxu0 %v4082
        %v4173 = vpop.f32.mrb[0].mxu0
        %v4174 = vadd.f32 %v4015, %v4173
        %v4175 = vpop.f32.mrb[0].mxu0
        %v4176 = vpop.f32.mrb[0].mxu0
        %v4177 = vadd.f32 %v4016, %v4176
        %v4178 = vpop.f32.mrb[0].mxu0
        %4179 = vmatprep.mubr.bf16.mxu0 0
        %4180 = vmatmul.mubr.bf16.gmra.mrb[0].mxu0 %v4085
        %v4181 = vpop.f32.mrb[0].mxu0
        %v4182 = vadd.f32 %v4017, %v4181
        %v4183 = vpop.f32.mrb[0].mxu0
        %v4184 = vpop.f32.mrb[0].mxu0
        %v4185 = vadd.f32 %v4018, %v4184
        %v4186 = vpop.f32.mrb[0].mxu0
        %4187 = vmatprep.mubr.bf16.mxu0 0
        %4188 = vmatmul.mubr.bf16.gmra.mrb[0].mxu0 %v4088
        %v4189 = vpop.f32.mrb[0].mxu0
        %v4190 = vadd.f32 %v4019, %v4189
        %v4191 = vpop.f32.mrb[0].mxu0
        %v4192 = vpop.f32.mrb[0].mxu0
        %v4193 = vadd.f32 %v4020, %v4192
        %v4194 = vpop.f32.mrb[0].mxu0
        %4195 = vmatprep.mubr.bf16.mxu0 0
        %4196 = vmatmul.mubr.bf16.gmra.mrb[0].mxu0 %v4091
        %v4197 = vpop.f32.mrb[0].mxu0
        %v4198 = vadd.f32 %v4021, %v4197
        %v4199 = vpop.f32.mrb[0].mxu0
        %v4200 = vpop.f32.mrb[0].mxu0
        %v4201 = vadd.f32 %v4022, %v4200
        %v4202 = vpop.f32.mrb[0].mxu0
        %4203 = vmatprep.mubr.bf16.mxu0 0
        %4204 = vmatmul.mubr.bf16.gmra.mrb[0].mxu0 %v4094
        %v4205 = vpop.f32.mrb[0].mxu0
        %v4206 = vadd.f32 %v4023, %v4205
        %v4207 = vpop.f32.mrb[0].mxu0
        %v4208 = vpop.f32.mrb[0].mxu0
        %v4209 = vadd.f32 %v4024, %v4208
        %v4210 = vpop.f32.mrb[0].mxu0
        %4211 = vmatprep.mubr.bf16.mxu0 0
        %4212 = vmatmul.mubr.bf16.gmra.mrb[0].mxu0 %v4097
        %v4213 = vpop.f32.mrb[0].mxu0
        %v4214 = vadd.f32 %v4025, %v4213
        %v4215 = vpop.f32.mrb[0].mxu0
        %v4216 = vpop.f32.mrb[0].mxu0
        %v4217 = vadd.f32 %v4026, %v4216
        %v4218 = vpop.f32.mrb[0].mxu0
        %4219 = vdwg.mxu0
        %4228 = vrot.lane.b32.xlu0 %v3970, 32
        %v4229 = vpop.permute.xlu0 %4228
        %4230 = vrot.lane.b32.xlu0 %v3971, 32
        %v4231 = vpop.permute.xlu0 %4230
        %4232 = vrot.lane.b32.xlu0 %v3972, 32
        %v4233 = vpop.permute.xlu0 %4232
        %4234 = vrot.lane.b32.xlu0 %v3973, 32
        %v4235 = vpop.permute.xlu0 %4234
        %4236 = vrot.lane.b32.xlu0 %v3974, 32
        %v4237 = vpop.permute.xlu0 %4236
        %4238 = vrot.lane.b32.xlu0 %v3975, 32
        %v4239 = vpop.permute.xlu0 %4238
        %4240 = vrot.lane.b32.xlu0 %v3976, 32
        %v4241 = vpop.permute.xlu0 %4240
        %4242 = vrot.lane.b32.xlu0 %v3977, 32
        %v4243 = vpop.permute.xlu0 %4242
        %4252 = vrot.lane.b32.xlu0 %v3986, 32
        %v4253 = vpop.permute.xlu0 %4252
        %4254 = vrot.lane.b32.xlu0 %v3987, 32
        %v4255 = vpop.permute.xlu0 %4254
        %4256 = vrot.lane.b32.xlu0 %v3988, 32
        %v4257 = vpop.permute.xlu0 %4256
        %4258 = vrot.lane.b32.xlu0 %v3989, 32
        %v4259 = vpop.permute.xlu0 %4258
        %4260 = vrot.lane.b32.xlu0 %v3990, 32
        %v4261 = vpop.permute.xlu0 %4260
        %4262 = vrot.lane.b32.xlu0 %v3991, 32
        %v4263 = vpop.permute.xlu0 %4262
        %4264 = vrot.lane.b32.xlu0 %v3992, 32
        %v4265 = vpop.permute.xlu0 %4264
        %4266 = vrot.lane.b32.xlu0 %v3993, 32
        %v4267 = vpop.permute.xlu0 %4266
        %v4269 = vsel %vm921, %v4229, 0
        %v4272 = vsel %vm921, %v4231, 0
        %v4275 = vsel %vm921, %v4233, 0
        %v4278 = vsel %vm921, %v4235, 0
        %v4281 = vsel %vm921, %v4237, 0
        %v4284 = vsel %vm921, %v4239, 0
        %v4287 = vsel %vm921, %v4241, 0
        %v4290 = vsel %vm921, %v4243, 0
        %v4293 = vsel %vm921, %v4253, 0
        %v4296 = vsel %vm921, %v4255, 0
        %v4299 = vsel %vm921, %v4257, 0
        %v4302 = vsel %vm921, %v4259, 0
        %v4305 = vsel %vm921, %v4261, 0
        %v4308 = vsel %vm921, %v4263, 0
        %v4311 = vsel %vm921, %v4265, 0
        %v4314 = vsel %vm921, %v4267, 0
        %4316 = vmatprep.subr.bf16.mxu0 0
        %4317 = vmatpush1.bf16.xpose.msra.mxu0 %v4293
        %4318 = vmatprep.subr.bf16.mxu0 0
        %4319 = vmatpush1.bf16.xpose.msra.mxu0 %v4296
        %4320 = vmatprep.subr.bf16.mxu0 0
        %4321 = vmatpush1.bf16.xpose.msra.mxu0 %v4299
        %4322 = vmatprep.subr.bf16.mxu0 0
        %4323 = vmatpush1.bf16.xpose.msra.mxu0 %v4302
        %4324 = vmatprep.subr.bf16.mxu0 0
        %4325 = vmatpush1.bf16.xpose.msra.mxu0 %v4305
        %4326 = vmatprep.subr.bf16.mxu0 0
        %4327 = vmatpush1.bf16.xpose.msra.mxu0 %v4308
        %4328 = vmatprep.subr.bf16.mxu0 0
        %4329 = vmatpush1.bf16.xpose.msra.mxu0 %v4311
        %4330 = vmatprep.subr.bf16.mxu0 0
        %4331 = vmatpush1.bf16.xpose.msra.mxu0 %v4314
        %4332 = vmatprep.subr.bf16.mxu0 0
        %4333 = vmatpush1.bf16.xpose.msra.mxu0 0
        %4334 = vmatprep.subr.bf16.mxu0 0
        %4335 = vmatpush1.bf16.xpose.msra.mxu0 0
        %4336 = vmatprep.subr.bf16.mxu0 0
        %4337 = vmatpush1.bf16.xpose.msra.mxu0 0
        %4338 = vmatprep.subr.bf16.mxu0 0
        %4339 = vmatpush1.bf16.xpose.msra.mxu0 0
        %4340 = vmatprep.subr.bf16.mxu0 0
        %4341 = vmatpush1.bf16.xpose.msra.mxu0 0
        %4342 = vmatprep.subr.bf16.mxu0 0
        %4343 = vmatpush1.bf16.xpose.msra.mxu0 0
        %4344 = vmatprep.subr.bf16.mxu0 0
        %4345 = vmatpush1.bf16.xpose.msra.mxu0 0
        %4346 = vmatprep.subr.bf16.mxu0 0
        %4347 = vmatpush1.bf16.xpose.msra.mxu0 0
        %4348 = vmatprep.mubr.bf16.mxu0 0
        %4349 = vmatmul.mubr.bf16.gmra.mrb[0].mxu0 %v4269
        %v4350 = vpop.f32.mrb[0].mxu0
        %v4351 = vadd.f32 %v4011, %v4350
        %v4352 = vpop.f32.mrb[0].mxu0
        %v4353 = vpop.f32.mrb[0].mxu0
        %v4354 = vadd.f32 %v4012, %v4353
        %v4355 = vpop.f32.mrb[0].mxu0
        %4356 = vmatprep.mubr.bf16.mxu0 0
        %4357 = vmatmul.mubr.bf16.gmra.mrb[0].mxu0 %v4272
        %v4358 = vpop.f32.mrb[0].mxu0
        %v4359 = vadd.f32 %v4013, %v4358
        %v4360 = vpop.f32.mrb[0].mxu0
        %v4361 = vpop.f32.mrb[0].mxu0
        %v4362 = vadd.f32 %v4014, %v4361
        %v4363 = vpop.f32.mrb[0].mxu0
        %4364 = vmatprep.mubr.bf16.mxu0 0
        %4365 = vmatmul.mubr.bf16.gmra.mrb[0].mxu0 %v4275
        %v4366 = vpop.f32.mrb[0].mxu0
        %v4367 = vadd.f32 %v4015, %v4366
        %v4368 = vpop.f32.mrb[0].mxu0
        %v4369 = vpop.f32.mrb[0].mxu0
        %v4370 = vadd.f32 %v4016, %v4369
        %v4371 = vpop.f32.mrb[0].mxu0
        %4372 = vmatprep.mubr.bf16.mxu0 0
        %4373 = vmatmul.mubr.bf16.gmra.mrb[0].mxu0 %v4278
        %v4374 = vpop.f32.mrb[0].mxu0
        %v4375 = vadd.f32 %v4017, %v4374
        %v4376 = vpop.f32.mrb[0].mxu0
        %v4377 = vpop.f32.mrb[0].mxu0
        %v4378 = vadd.f32 %v4018, %v4377
        %v4379 = vpop.f32.mrb[0].mxu0
        %4380 = vmatprep.mubr.bf16.mxu0 0
        %4381 = vmatmul.mubr.bf16.gmra.mrb[0].mxu0 %v4281
        %v4382 = vpop.f32.mrb[0].mxu0
        %v4383 = vadd.f32 %v4019, %v4382
        %v4384 = vpop.f32.mrb[0].mxu0
        %v4385 = vpop.f32.mrb[0].mxu0
        %v4386 = vadd.f32 %v4020, %v4385
        %v4387 = vpop.f32.mrb[0].mxu0
        %4388 = vmatprep.mubr.bf16.mxu0 0
        %4389 = vmatmul.mubr.bf16.gmra.mrb[0].mxu0 %v4284
        %v4390 = vpop.f32.mrb[0].mxu0
        %v4391 = vadd.f32 %v4021, %v4390
        %v4392 = vpop.f32.mrb[0].mxu0
        %v4393 = vpop.f32.mrb[0].mxu0
        %v4394 = vadd.f32 %v4022, %v4393
        %v4395 = vpop.f32.mrb[0].mxu0
        %4396 = vmatprep.mubr.bf16.mxu0 0
        %4397 = vmatmul.mubr.bf16.gmra.mrb[0].mxu0 %v4287
        %v4398 = vpop.f32.mrb[0].mxu0
        %v4399 = vadd.f32 %v4023, %v4398
        %v4400 = vpop.f32.mrb[0].mxu0
        %v4401 = vpop.f32.mrb[0].mxu0
        %v4402 = vadd.f32 %v4024, %v4401
        %v4403 = vpop.f32.mrb[0].mxu0
        %4404 = vmatprep.mubr.bf16.mxu0 0
        %4405 = vmatmul.mubr.bf16.gmra.mrb[0].mxu0 %v4290
        %v4406 = vpop.f32.mrb[0].mxu0
        %v4407 = vadd.f32 %v4025, %v4406
        %v4408 = vpop.f32.mrb[0].mxu0
        %v4409 = vpop.f32.mrb[0].mxu0
        %v4410 = vadd.f32 %v4026, %v4409
        %v4411 = vpop.f32.mrb[0].mxu0
        %4412 = vdwg.mxu0
        %4413 = vmax.xlane.f32.xlu0 %v4158
        %v4414 = vpop.xlane.xlu0 %4413
        %4415 = vmax.xlane.f32.xlu0 %v4161
        %v4416 = vpop.xlane.xlu0 %4415
        %4417 = vmax.xlane.f32.xlu0 %v4166
        %v4418 = vpop.xlane.xlu0 %4417
        %4419 = vmax.xlane.f32.xlu0 %v4169
        %v4420 = vpop.xlane.xlu0 %4419
        %4421 = vmax.xlane.f32.xlu0 %v4174
        %v4422 = vpop.xlane.xlu0 %4421
        %4423 = vmax.xlane.f32.xlu0 %v4177
        %v4424 = vpop.xlane.xlu0 %4423
        %4425 = vmax.xlane.f32.xlu0 %v4182
        %v4426 = vpop.xlane.xlu0 %4425
        %4427 = vmax.xlane.f32.xlu0 %v4185
        %v4428 = vpop.xlane.xlu0 %4427
        %4429 = vmax.xlane.f32.xlu0 %v4190
        %v4430 = vpop.xlane.xlu0 %4429
        %4431 = vmax.xlane.f32.xlu0 %v4193
        %v4432 = vpop.xlane.xlu0 %4431
        %4433 = vmax.xlane.f32.xlu0 %v4198
        %v4434 = vpop.xlane.xlu0 %4433
        %4435 = vmax.xlane.f32.xlu0 %v4201
        %v4436 = vpop.xlane.xlu0 %4435
        %4437 = vmax.xlane.f32.xlu0 %v4206
        %v4438 = vpop.xlane.xlu0 %4437
        %4439 = vmax.xlane.f32.xlu0 %v4209
        %v4440 = vpop.xlane.xlu0 %4439
        %4441 = vmax.xlane.f32.xlu0 %v4214
        %v4442 = vpop.xlane.xlu0 %4441
        %4443 = vmax.xlane.f32.xlu0 %v4217
        %v4444 = vpop.xlane.xlu0 %4443
        %4445 = vmax.xlane.f32.xlu0 %v4351
        %v4446 = vpop.xlane.xlu0 %4445
        %4447 = vmax.xlane.f32.xlu0 %v4354
        %v4448 = vpop.xlane.xlu0 %4447
        %4449 = vmax.xlane.f32.xlu0 %v4359
        %v4450 = vpop.xlane.xlu0 %4449
        %4451 = vmax.xlane.f32.xlu0 %v4362
        %v4452 = vpop.xlane.xlu0 %4451
        %4453 = vmax.xlane.f32.xlu0 %v4367
        %v4454 = vpop.xlane.xlu0 %4453
        %4455 = vmax.xlane.f32.xlu0 %v4370
        %v4456 = vpop.xlane.xlu0 %4455
        %4457 = vmax.xlane.f32.xlu0 %v4375
        %v4458 = vpop.xlane.xlu0 %4457
        %4459 = vmax.xlane.f32.xlu0 %v4378
        %v4460 = vpop.xlane.xlu0 %4459
        %4461 = vmax.xlane.f32.xlu0 %v4383
        %v4462 = vpop.xlane.xlu0 %4461
        %4463 = vmax.xlane.f32.xlu0 %v4386
        %v4464 = vpop.xlane.xlu0 %4463
        %4465 = vmax.xlane.f32.xlu0 %v4391
        %v4466 = vpop.xlane.xlu0 %4465
        %4467 = vmax.xlane.f32.xlu0 %v4394
        %v4468 = vpop.xlane.xlu0 %4467
        %4469 = vmax.xlane.f32.xlu0 %v4399
        %v4470 = vpop.xlane.xlu0 %4469
        %4471 = vmax.xlane.f32.xlu0 %v4402
        %v4472 = vpop.xlane.xlu0 %4471
        %4473 = vmax.xlane.f32.xlu0 %v4407
        %v4474 = vpop.xlane.xlu0 %4473
        %4475 = vmax.xlane.f32.xlu0 %v4410
        %v4476 = vpop.xlane.xlu0 %4475
        %v4477 = vsub.f32 %v4158, %v4414
        %v4478 = vsub.f32 %v4161, %v4416
        %v4479 = vsub.f32 %v4166, %v4418
        %v4480 = vsub.f32 %v4169, %v4420
        %v4481 = vsub.f32 %v4174, %v4422
        %v4482 = vsub.f32 %v4177, %v4424
        %v4483 = vsub.f32 %v4182, %v4426
        %v4484 = vsub.f32 %v4185, %v4428
        %v4485 = vsub.f32 %v4190, %v4430
        %v4486 = vsub.f32 %v4193, %v4432
        %v4487 = vsub.f32 %v4198, %v4434
        %v4488 = vsub.f32 %v4201, %v4436
        %v4489 = vsub.f32 %v4206, %v4438
        %v4490 = vsub.f32 %v4209, %v4440
        %v4491 = vsub.f32 %v4214, %v4442
        %v4492 = vsub.f32 %v4217, %v4444
        %v4493 = vsub.f32 %v4351, %v4446
        %v4494 = vsub.f32 %v4354, %v4448
        %v4495 = vsub.f32 %v4359, %v4450
        %v4496 = vsub.f32 %v4362, %v4452
        %v4497 = vsub.f32 %v4367, %v4454
        %v4498 = vsub.f32 %v4370, %v4456
        %v4499 = vsub.f32 %v4375, %v4458
        %v4500 = vsub.f32 %v4378, %v4460
        %v4501 = vsub.f32 %v4383, %v4462
        %v4502 = vsub.f32 %v4386, %v4464
        %v4503 = vsub.f32 %v4391, %v4466
        %v4504 = vsub.f32 %v4394, %v4468
        %v4505 = vsub.f32 %v4399, %v4470
        %v4506 = vsub.f32 %v4402, %v4472
        %v4507 = vsub.f32 %v4407, %v4474
        %v4508 = vsub.f32 %v4410, %v4476
        %v4509 = vmul.f32 %v4477, 1.442695
        %v4510 = vpow.pop %v4509
        %v4511 = vmul.f32 %v4478, 1.442695
        %v4512 = vpow.pop %v4511
        %v4513 = vmul.f32 %v4479, 1.442695
        %v4514 = vpow.pop %v4513
        %v4515 = vmul.f32 %v4480, 1.442695
        %v4516 = vpow.pop %v4515
        %v4517 = vmul.f32 %v4481, 1.442695
        %v4518 = vpow.pop %v4517
        %v4519 = vmul.f32 %v4482, 1.442695
        %v4520 = vpow.pop %v4519
        %v4521 = vmul.f32 %v4483, 1.442695
        %v4522 = vpow.pop %v4521
        %v4523 = vmul.f32 %v4484, 1.442695
        %v4524 = vpow.pop %v4523
        %v4525 = vmul.f32 %v4485, 1.442695
        %v4526 = vpow.pop %v4525
        %v4527 = vmul.f32 %v4486, 1.442695
        %v4528 = vpow.pop %v4527
        %v4529 = vmul.f32 %v4487, 1.442695
        %v4530 = vpow.pop %v4529
        %v4531 = vmul.f32 %v4488, 1.442695
        %v4532 = vpow.pop %v4531
        %v4533 = vmul.f32 %v4489, 1.442695
        %v4534 = vpow.pop %v4533
        %v4535 = vmul.f32 %v4490, 1.442695
        %v4536 = vpow.pop %v4535
        %v4537 = vmul.f32 %v4491, 1.442695
        %v4538 = vpow.pop %v4537
        %v4539 = vmul.f32 %v4492, 1.442695
        %v4540 = vpow.pop %v4539
        %v4541 = vmul.f32 %v4493, 1.442695
        %v4542 = vpow.pop %v4541
        %v4543 = vmul.f32 %v4494, 1.442695
        %v4544 = vpow.pop %v4543
        %v4545 = vmul.f32 %v4495, 1.442695
        %v4546 = vpow.pop %v4545
        %v4547 = vmul.f32 %v4496, 1.442695
        %v4548 = vpow.pop %v4547
        %v4549 = vmul.f32 %v4497, 1.442695
        %v4550 = vpow.pop %v4549
        %v4551 = vmul.f32 %v4498, 1.442695
        %v4552 = vpow.pop %v4551
        %v4553 = vmul.f32 %v4499, 1.442695
        %v4554 = vpow.pop %v4553
        %v4555 = vmul.f32 %v4500, 1.442695
        %v4556 = vpow.pop %v4555
        %v4557 = vmul.f32 %v4501, 1.442695
        %v4558 = vpow.pop %v4557
        %v4559 = vmul.f32 %v4502, 1.442695
        %v4560 = vpow.pop %v4559
        %v4561 = vmul.f32 %v4503, 1.442695
        %v4562 = vpow.pop %v4561
        %v4563 = vmul.f32 %v4504, 1.442695
        %v4564 = vpow.pop %v4563
        %v4565 = vmul.f32 %v4505, 1.442695
        %v4566 = vpow.pop %v4565
        %v4567 = vmul.f32 %v4506, 1.442695
        %v4568 = vpow.pop %v4567
        %v4569 = vmul.f32 %v4507, 1.442695
        %v4570 = vpow.pop %v4569
        %v4571 = vmul.f32 %v4508, 1.442695
        %v4572 = vpow.pop %v4571
        %4573 = vadd.xlane.f32.xlu0 %v4510
        %v4574 = vpop.xlane.xlu0 %4573
        %4575 = vadd.xlane.f32.xlu0 %v4512
        %v4576 = vpop.xlane.xlu0 %4575
        %4577 = vadd.xlane.f32.xlu0 %v4514
        %v4578 = vpop.xlane.xlu0 %4577
        %4579 = vadd.xlane.f32.xlu0 %v4516
        %v4580 = vpop.xlane.xlu0 %4579
        %4581 = vadd.xlane.f32.xlu0 %v4518
        %v4582 = vpop.xlane.xlu0 %4581
        %4583 = vadd.xlane.f32.xlu0 %v4520
        %v4584 = vpop.xlane.xlu0 %4583
        %4585 = vadd.xlane.f32.xlu0 %v4522
        %v4586 = vpop.xlane.xlu0 %4585
        %4587 = vadd.xlane.f32.xlu0 %v4524
        %v4588 = vpop.xlane.xlu0 %4587
        %4589 = vadd.xlane.f32.xlu0 %v4526
        %v4590 = vpop.xlane.xlu0 %4589
        %4591 = vadd.xlane.f32.xlu0 %v4528
        %v4592 = vpop.xlane.xlu0 %4591
        %4593 = vadd.xlane.f32.xlu0 %v4530
        %v4594 = vpop.xlane.xlu0 %4593
        %4595 = vadd.xlane.f32.xlu0 %v4532
        %v4596 = vpop.xlane.xlu0 %4595
        %4597 = vadd.xlane.f32.xlu0 %v4534
        %v4598 = vpop.xlane.xlu0 %4597
        %4599 = vadd.xlane.f32.xlu0 %v4536
        %v4600 = vpop.xlane.xlu0 %4599
        %4601 = vadd.xlane.f32.xlu0 %v4538
        %v4602 = vpop.xlane.xlu0 %4601
        %4603 = vadd.xlane.f32.xlu0 %v4540
        %v4604 = vpop.xlane.xlu0 %4603
        %4605 = vadd.xlane.f32.xlu0 %v4542
        %v4606 = vpop.xlane.xlu0 %4605
        %4607 = vadd.xlane.f32.xlu0 %v4544
        %v4608 = vpop.xlane.xlu0 %4607
        %4609 = vadd.xlane.f32.xlu0 %v4546
        %v4610 = vpop.xlane.xlu0 %4609
        %4611 = vadd.xlane.f32.xlu0 %v4548
        %v4612 = vpop.xlane.xlu0 %4611
        %4613 = vadd.xlane.f32.xlu0 %v4550
        %v4614 = vpop.xlane.xlu0 %4613
        %4615 = vadd.xlane.f32.xlu0 %v4552
        %v4616 = vpop.xlane.xlu0 %4615
        %4617 = vadd.xlane.f32.xlu0 %v4554
        %v4618 = vpop.xlane.xlu0 %4617
        %4619 = vadd.xlane.f32.xlu0 %v4556
        %v4620 = vpop.xlane.xlu0 %4619
        %4621 = vadd.xlane.f32.xlu0 %v4558
        %v4622 = vpop.xlane.xlu0 %4621
        %4623 = vadd.xlane.f32.xlu0 %v4560
        %v4624 = vpop.xlane.xlu0 %4623
        %4625 = vadd.xlane.f32.xlu0 %v4562
        %v4626 = vpop.xlane.xlu0 %4625
        %4627 = vadd.xlane.f32.xlu0 %v4564
        %v4628 = vpop.xlane.xlu0 %4627
        %4629 = vadd.xlane.f32.xlu0 %v4566
        %v4630 = vpop.xlane.xlu0 %4629
        %4631 = vadd.xlane.f32.xlu0 %v4568
        %v4632 = vpop.xlane.xlu0 %4631
        %4633 = vadd.xlane.f32.xlu0 %v4570
        %v4634 = vpop.xlane.xlu0 %4633
        %4635 = vadd.xlane.f32.xlu0 %v4572
        %v4636 = vpop.xlane.xlu0 %4635
        %v4637 = vrcp.pop %v4574
        %v4638 = vrcp.pop %v4576
        %v4639 = vrcp.pop %v4578
        %v4640 = vrcp.pop %v4580
        %v4641 = vrcp.pop %v4582
        %v4642 = vrcp.pop %v4584
        %v4643 = vrcp.pop %v4586
        %v4644 = vrcp.pop %v4588
        %v4645 = vrcp.pop %v4590
        %v4646 = vrcp.pop %v4592
        %v4647 = vrcp.pop %v4594
        %v4648 = vrcp.pop %v4596
        %v4649 = vrcp.pop %v4598
        %v4650 = vrcp.pop %v4600
        %v4651 = vrcp.pop %v4602
        %v4652 = vrcp.pop %v4604
        %v4653 = vrcp.pop %v4606
        %v4654 = vrcp.pop %v4608
        %v4655 = vrcp.pop %v4610
        %v4656 = vrcp.pop %v4612
        %v4657 = vrcp.pop %v4614
        %v4658 = vrcp.pop %v4616
        %v4659 = vrcp.pop %v4618
        %v4660 = vrcp.pop %v4620
        %v4661 = vrcp.pop %v4622
        %v4662 = vrcp.pop %v4624
        %v4663 = vrcp.pop %v4626
        %v4664 = vrcp.pop %v4628
        %v4665 = vrcp.pop %v4630
        %v4666 = vrcp.pop %v4632
        %v4667 = vrcp.pop %v4634
        %v4668 = vrcp.pop %v4636
        %v4669 = vmul.f32 %v4510, %v4637
        %v4670 = vmul.f32 %v4512, %v4638
        %v4671 = vmul.f32 %v4514, %v4639
        %v4672 = vmul.f32 %v4516, %v4640
        %v4673 = vmul.f32 %v4518, %v4641
        %v4674 = vmul.f32 %v4520, %v4642
        %v4675 = vmul.f32 %v4522, %v4643
        %v4676 = vmul.f32 %v4524, %v4644
        %v4677 = vmul.f32 %v4526, %v4645
        %v4678 = vmul.f32 %v4528, %v4646
        %v4679 = vmul.f32 %v4530, %v4647
        %v4680 = vmul.f32 %v4532, %v4648
        %v4681 = vmul.f32 %v4534, %v4649
        %v4682 = vmul.f32 %v4536, %v4650
        %v4683 = vmul.f32 %v4538, %v4651
        %v4684 = vmul.f32 %v4540, %v4652
        %v4685 = vmul.f32 %v4542, %v4653
        %v4686 = vmul.f32 %v4544, %v4654
        %v4687 = vmul.f32 %v4546, %v4655
        %v4688 = vmul.f32 %v4548, %v4656
        %v4689 = vmul.f32 %v4550, %v4657
        %v4690 = vmul.f32 %v4552, %v4658
        %v4691 = vmul.f32 %v4554, %v4659
        %v4692 = vmul.f32 %v4556, %v4660
        %v4693 = vmul.f32 %v4558, %v4661
        %v4694 = vmul.f32 %v4560, %v4662
        %v4695 = vmul.f32 %v4562, %v4663
        %v4696 = vmul.f32 %v4564, %v4664
        %v4697 = vmul.f32 %v4566, %v4665
        %v4698 = vmul.f32 %v4568, %v4666
        %v4699 = vmul.f32 %v4570, %v4667
        %v4700 = vmul.f32 %v4572, %v4668
        %v4701 = vpack.c.bf16 %v4670, %v4669
        %v4702 = vpack.c.bf16 %v4672, %v4671
        %v4703 = vpack.c.bf16 %v4674, %v4673
        %v4704 = vpack.c.bf16 %v4676, %v4675
        %v4705 = vpack.c.bf16 %v4678, %v4677
        %v4706 = vpack.c.bf16 %v4680, %v4679
        %v4707 = vpack.c.bf16 %v4682, %v4681
        %v4708 = vpack.c.bf16 %v4684, %v4683
        %v4709 = vpack.c.bf16 %v4686, %v4685
        %v4710 = vpack.c.bf16 %v4688, %v4687
        %v4711 = vpack.c.bf16 %v4690, %v4689
        %v4712 = vpack.c.bf16 %v4692, %v4691
        %v4713 = vpack.c.bf16 %v4694, %v4693
        %v4714 = vpack.c.bf16 %v4696, %v4695
        %v4715 = vpack.c.bf16 %v4698, %v4697
        %v4716 = vpack.c.bf16 %v4700, %v4699
        %4725 = vrot.lane.b32.xlu0 %v3994, 32
        %v4726 = vpop.permute.xlu0 %4725
        %4727 = vrot.lane.b32.xlu0 %v3995, 32
        %v4728 = vpop.permute.xlu0 %4727
        %4729 = vrot.lane.b32.xlu0 %v3996, 32
        %v4730 = vpop.permute.xlu0 %4729
        %4731 = vrot.lane.b32.xlu0 %v3997, 32
        %v4732 = vpop.permute.xlu0 %4731
        %4733 = vrot.lane.b32.xlu0 %v3998, 32
        %v4734 = vpop.permute.xlu0 %4733
        %4735 = vrot.lane.b32.xlu0 %v3999, 32
        %v4736 = vpop.permute.xlu0 %4735
        %4737 = vrot.lane.b32.xlu0 %v4000, 32
        %v4738 = vpop.permute.xlu0 %4737
        %4739 = vrot.lane.b32.xlu0 %v4001, 32
        %v4740 = vpop.permute.xlu0 %4739
        %4749 = vmatprep.subr.bf16.mxu0 0
        %4750 = vmatpush1.bf16.msra.mxu0 %v4726
        %4751 = vmatprep.subr.bf16.mxu0 0
        %4752 = vmatpush1.bf16.msra.mxu0 %v4728
        %4753 = vmatprep.subr.bf16.mxu0 0
        %4754 = vmatpush1.bf16.msra.mxu0 %v4730
        %4755 = vmatprep.subr.bf16.mxu0 0
        %4756 = vmatpush1.bf16.msra.mxu0 %v4732
        %4757 = vmatprep.subr.bf16.mxu0 0
        %4758 = vmatpush1.bf16.msra.mxu0 %v4734
        %4759 = vmatprep.subr.bf16.mxu0 0
        %4760 = vmatpush1.bf16.msra.mxu0 %v4736
        %4761 = vmatprep.subr.bf16.mxu0 0
        %4762 = vmatpush1.bf16.msra.mxu0 %v4738
        %4763 = vmatprep.subr.bf16.mxu0 0
        %4764 = vmatpush1.bf16.msra.mxu0 %v4740
        %4765 = vmatprep.subr.bf16.mxu0 0
        %4766 = vmatpush1.bf16.msra.mxu0 0
        %4767 = vmatprep.subr.bf16.mxu0 0
        %4768 = vmatpush1.bf16.msra.mxu0 0
        %4769 = vmatprep.subr.bf16.mxu0 0
        %4770 = vmatpush1.bf16.msra.mxu0 0
        %4771 = vmatprep.subr.bf16.mxu0 0
        %4772 = vmatpush1.bf16.msra.mxu0 0
        %4773 = vmatprep.subr.bf16.mxu0 0
        %4774 = vmatpush1.bf16.msra.mxu0 0
        %4775 = vmatprep.subr.bf16.mxu0 0
        %4776 = vmatpush1.bf16.msra.mxu0 0
        %4777 = vmatprep.subr.bf16.mxu0 0
        %4778 = vmatpush1.bf16.msra.mxu0 0
        %4779 = vmatprep.subr.bf16.mxu0 0
        %4780 = vmatpush1.bf16.msra.mxu0 0
        %4781 = vmatprep.mubr.bf16.mxu0 0
        %4782 = vmatmul.mubr.bf16.gmra.mrb[0].mxu0 %v4701
        %v4783 = vpop.f32.mrb[0].mxu0
        %v4784 = vadd.f32 0.0, %v4783
        %v4785 = vpop.f32.mrb[0].mxu0
        %v4786 = vpop.f32.mrb[0].mxu0
        %v4787 = vadd.f32 0.0, %v4786
        %v4788 = vpop.f32.mrb[0].mxu0
        %4789 = vmatprep.mubr.bf16.mxu0 0
        %4790 = vmatmul.mubr.bf16.gmra.mrb[0].mxu0 %v4702
        %v4791 = vpop.f32.mrb[0].mxu0
        %v4792 = vadd.f32 0.0, %v4791
        %v4793 = vpop.f32.mrb[0].mxu0
        %v4794 = vpop.f32.mrb[0].mxu0
        %v4795 = vadd.f32 0.0, %v4794
        %v4796 = vpop.f32.mrb[0].mxu0
        %4797 = vmatprep.mubr.bf16.mxu0 0
        %4798 = vmatmul.mubr.bf16.gmra.mrb[0].mxu0 %v4703
        %v4799 = vpop.f32.mrb[0].mxu0
        %v4800 = vadd.f32 0.0, %v4799
        %v4801 = vpop.f32.mrb[0].mxu0
        %v4802 = vpop.f32.mrb[0].mxu0
        %v4803 = vadd.f32 0.0, %v4802
        %v4804 = vpop.f32.mrb[0].mxu0
        %4805 = vmatprep.mubr.bf16.mxu0 0
        %4806 = vmatmul.mubr.bf16.gmra.mrb[0].mxu0 %v4704
        %v4807 = vpop.f32.mrb[0].mxu0
        %v4808 = vadd.f32 0.0, %v4807
        %v4809 = vpop.f32.mrb[0].mxu0
        %v4810 = vpop.f32.mrb[0].mxu0
        %v4811 = vadd.f32 0.0, %v4810
        %v4812 = vpop.f32.mrb[0].mxu0
        %4813 = vmatprep.mubr.bf16.mxu0 0
        %4814 = vmatmul.mubr.bf16.gmra.mrb[0].mxu0 %v4705
        %v4815 = vpop.f32.mrb[0].mxu0
        %v4816 = vadd.f32 0.0, %v4815
        %v4817 = vpop.f32.mrb[0].mxu0
        %v4818 = vpop.f32.mrb[0].mxu0
        %v4819 = vadd.f32 0.0, %v4818
        %v4820 = vpop.f32.mrb[0].mxu0
        %4821 = vmatprep.mubr.bf16.mxu0 0
        %4822 = vmatmul.mubr.bf16.gmra.mrb[0].mxu0 %v4706
        %v4823 = vpop.f32.mrb[0].mxu0
        %v4824 = vadd.f32 0.0, %v4823
        %v4825 = vpop.f32.mrb[0].mxu0
        %v4826 = vpop.f32.mrb[0].mxu0
        %v4827 = vadd.f32 0.0, %v4826
        %v4828 = vpop.f32.mrb[0].mxu0
        %4829 = vmatprep.mubr.bf16.mxu0 0
        %4830 = vmatmul.mubr.bf16.gmra.mrb[0].mxu0 %v4707
        %v4831 = vpop.f32.mrb[0].mxu0
        %v4832 = vadd.f32 0.0, %v4831
        %v4833 = vpop.f32.mrb[0].mxu0
        %v4834 = vpop.f32.mrb[0].mxu0
        %v4835 = vadd.f32 0.0, %v4834
        %v4836 = vpop.f32.mrb[0].mxu0
        %4837 = vmatprep.mubr.bf16.mxu0 0
        %4838 = vmatmul.mubr.bf16.gmra.mrb[0].mxu0 %v4708
        %v4839 = vpop.f32.mrb[0].mxu0
        %v4840 = vadd.f32 0.0, %v4839
        %v4841 = vpop.f32.mrb[0].mxu0
        %v4842 = vpop.f32.mrb[0].mxu0
        %v4843 = vadd.f32 0.0, %v4842
        %v4844 = vpop.f32.mrb[0].mxu0
        %4845 = vdwg.mxu0
        %4854 = vrot.lane.b32.xlu0 %v4002, 32
        %v4855 = vpop.permute.xlu0 %4854
        %4856 = vrot.lane.b32.xlu0 %v4003, 32
        %v4857 = vpop.permute.xlu0 %4856
        %4858 = vrot.lane.b32.xlu0 %v4004, 32
        %v4859 = vpop.permute.xlu0 %4858
        %4860 = vrot.lane.b32.xlu0 %v4005, 32
        %v4861 = vpop.permute.xlu0 %4860
        %4862 = vrot.lane.b32.xlu0 %v4006, 32
        %v4863 = vpop.permute.xlu0 %4862
        %4864 = vrot.lane.b32.xlu0 %v4007, 32
        %v4865 = vpop.permute.xlu0 %4864
        %4866 = vrot.lane.b32.xlu0 %v4008, 32
        %v4867 = vpop.permute.xlu0 %4866
        %4868 = vrot.lane.b32.xlu0 %v4009, 32
        %v4869 = vpop.permute.xlu0 %4868
        %4878 = vmatprep.subr.bf16.mxu0 0
        %4879 = vmatpush1.bf16.msra.mxu0 %v4855
        %4880 = vmatprep.subr.bf16.mxu0 0
        %4881 = vmatpush1.bf16.msra.mxu0 %v4857
        %4882 = vmatprep.subr.bf16.mxu0 0
        %4883 = vmatpush1.bf16.msra.mxu0 %v4859
        %4884 = vmatprep.subr.bf16.mxu0 0
        %4885 = vmatpush1.bf16.msra.mxu0 %v4861
        %4886 = vmatprep.subr.bf16.mxu0 0
        %4887 = vmatpush1.bf16.msra.mxu0 %v4863
        %4888 = vmatprep.subr.bf16.mxu0 0
        %4889 = vmatpush1.bf16.msra.mxu0 %v4865
        %4890 = vmatprep.subr.bf16.mxu0 0
        %4891 = vmatpush1.bf16.msra.mxu0 %v4867
        %4892 = vmatprep.subr.bf16.mxu0 0
        %4893 = vmatpush1.bf16.msra.mxu0 %v4869
        %4894 = vmatprep.subr.bf16.mxu0 0
        %4895 = vmatpush1.bf16.msra.mxu0 0
        %4896 = vmatprep.subr.bf16.mxu0 0
        %4897 = vmatpush1.bf16.msra.mxu0 0
        %4898 = vmatprep.subr.bf16.mxu0 0
        %4899 = vmatpush1.bf16.msra.mxu0 0
        %4900 = vmatprep.subr.bf16.mxu0 0
        %4901 = vmatpush1.bf16.msra.mxu0 0
        %4902 = vmatprep.subr.bf16.mxu0 0
        %4903 = vmatpush1.bf16.msra.mxu0 0
        %4904 = vmatprep.subr.bf16.mxu0 0
        %4905 = vmatpush1.bf16.msra.mxu0 0
        %4906 = vmatprep.subr.bf16.mxu0 0
        %4907 = vmatpush1.bf16.msra.mxu0 0
        %4908 = vmatprep.subr.bf16.mxu0 0
        %4909 = vmatpush1.bf16.msra.mxu0 0
        %4910 = vmatprep.mubr.bf16.mxu0 0
        %4911 = vmatmul.mubr.bf16.gmra.mrb[0].mxu0 %v4709
        %v4912 = vpop.f32.mrb[0].mxu0
        %v4913 = vadd.f32 0.0, %v4912
        %v4914 = vpop.f32.mrb[0].mxu0
        %v4915 = vpop.f32.mrb[0].mxu0
        %v4916 = vadd.f32 0.0, %v4915
        %v4917 = vpop.f32.mrb[0].mxu0
        %4918 = vmatprep.mubr.bf16.mxu0 0
        %4919 = vmatmul.mubr.bf16.gmra.mrb[0].mxu0 %v4710
        %v4920 = vpop.f32.mrb[0].mxu0
        %v4921 = vadd.f32 0.0, %v4920
        %v4922 = vpop.f32.mrb[0].mxu0
        %v4923 = vpop.f32.mrb[0].mxu0
        %v4924 = vadd.f32 0.0, %v4923
        %v4925 = vpop.f32.mrb[0].mxu0
        %4926 = vmatprep.mubr.bf16.mxu0 0
        %4927 = vmatmul.mubr.bf16.gmra.mrb[0].mxu0 %v4711
        %v4928 = vpop.f32.mrb[0].mxu0
        %v4929 = vadd.f32 0.0, %v4928
        %v4930 = vpop.f32.mrb[0].mxu0
        %v4931 = vpop.f32.mrb[0].mxu0
        %v4932 = vadd.f32 0.0, %v4931
        %v4933 = vpop.f32.mrb[0].mxu0
        %4934 = vmatprep.mubr.bf16.mxu0 0
        %4935 = vmatmul.mubr.bf16.gmra.mrb[0].mxu0 %v4712
        %v4936 = vpop.f32.mrb[0].mxu0
        %v4937 = vadd.f32 0.0, %v4936
        %v4938 = vpop.f32.mrb[0].mxu0
        %v4939 = vpop.f32.mrb[0].mxu0
        %v4940 = vadd.f32 0.0, %v4939
        %v4941 = vpop.f32.mrb[0].mxu0
        %4942 = vmatprep.mubr.bf16.mxu0 0
        %4943 = vmatmul.mubr.bf16.gmra.mrb[0].mxu0 %v4713
        %v4944 = vpop.f32.mrb[0].mxu0
        %v4945 = vadd.f32 0.0, %v4944
        %v4946 = vpop.f32.mrb[0].mxu0
        %v4947 = vpop.f32.mrb[0].mxu0
        %v4948 = vadd.f32 0.0, %v4947
        %v4949 = vpop.f32.mrb[0].mxu0
        %4950 = vmatprep.mubr.bf16.mxu0 0
        %4951 = vmatmul.mubr.bf16.gmra.mrb[0].mxu0 %v4714
        %v4952 = vpop.f32.mrb[0].mxu0
        %v4953 = vadd.f32 0.0, %v4952
        %v4954 = vpop.f32.mrb[0].mxu0
        %v4955 = vpop.f32.mrb[0].mxu0
        %v4956 = vadd.f32 0.0, %v4955
        %v4957 = vpop.f32.mrb[0].mxu0
        %4958 = vmatprep.mubr.bf16.mxu0 0
        %4959 = vmatmul.mubr.bf16.gmra.mrb[0].mxu0 %v4715
        %v4960 = vpop.f32.mrb[0].mxu0
        %v4961 = vadd.f32 0.0, %v4960
        %v4962 = vpop.f32.mrb[0].mxu0
        %v4963 = vpop.f32.mrb[0].mxu0
        %v4964 = vadd.f32 0.0, %v4963
        %v4965 = vpop.f32.mrb[0].mxu0
        %4966 = vmatprep.mubr.bf16.mxu0 0
        %4967 = vmatmul.mubr.bf16.gmra.mrb[0].mxu0 %v4716
        %v4968 = vpop.f32.mrb[0].mxu0
        %v4969 = vadd.f32 0.0, %v4968
        %v4970 = vpop.f32.mrb[0].mxu0
        %v4971 = vpop.f32.mrb[0].mxu0
        %v4972 = vadd.f32 0.0, %v4971
        %v4973 = vpop.f32.mrb[0].mxu0
        %4974 = vdwg.mxu0
        %v4975 = vpack.c.bf16 %v4787, %v4784
        %v4976 = vpack.c.bf16 %v4795, %v4792
        %v4977 = vpack.c.bf16 %v4803, %v4800
        %v4978 = vpack.c.bf16 %v4811, %v4808
        %v4979 = vpack.c.bf16 %v4819, %v4816
        %v4980 = vpack.c.bf16 %v4827, %v4824
        %v4981 = vpack.c.bf16 %v4835, %v4832
        %v4982 = vpack.c.bf16 %v4843, %v4840
        %v4983 = vpack.c.bf16 %v4916, %v4913
        %v4984 = vpack.c.bf16 %v4924, %v4921
        %v4985 = vpack.c.bf16 %v4932, %v4929
        %v4986 = vpack.c.bf16 %v4940, %v4937
        %v4987 = vpack.c.bf16 %v4948, %v4945
        %v4988 = vpack.c.bf16 %v4956, %v4953
        %v4989 = vpack.c.bf16 %v4964, %v4961
        %v4990 = vpack.c.bf16 %v4972, %v4969
        %5007 = vrot.lane.b32.xlu0 %v4975, 96
        %v5008 = vpop.permute.xlu0 %5007
        %5009 = vrot.lane.b32.xlu0 %v4976, 96
        %v5010 = vpop.permute.xlu0 %5009
        %5011 = vrot.lane.b32.xlu0 %v4977, 96
        %v5012 = vpop.permute.xlu0 %5011
        %5013 = vrot.lane.b32.xlu0 %v4978, 96
        %v5014 = vpop.permute.xlu0 %5013
        %5015 = vrot.lane.b32.xlu0 %v4979, 96
        %v5016 = vpop.permute.xlu0 %5015
        %5017 = vrot.lane.b32.xlu0 %v4980, 96
        %v5018 = vpop.permute.xlu0 %5017
        %5019 = vrot.lane.b32.xlu0 %v4981, 96
        %v5020 = vpop.permute.xlu0 %5019
        %5021 = vrot.lane.b32.xlu0 %v4982, 96
        %v5022 = vpop.permute.xlu0 %5021
        %5023 = vrot.lane.b32.xlu0 %v4983, 96
        %v5024 = vpop.permute.xlu0 %5023
        %5025 = vrot.lane.b32.xlu0 %v4984, 96
        %v5026 = vpop.permute.xlu0 %5025
        %5027 = vrot.lane.b32.xlu0 %v4985, 96
        %v5028 = vpop.permute.xlu0 %5027
        %5029 = vrot.lane.b32.xlu0 %v4986, 96
        %v5030 = vpop.permute.xlu0 %5029
        %5031 = vrot.lane.b32.xlu0 %v4987, 96
        %v5032 = vpop.permute.xlu0 %5031
        %5033 = vrot.lane.b32.xlu0 %v4988, 96
        %v5034 = vpop.permute.xlu0 %5033
        %5035 = vrot.lane.b32.xlu0 %v4989, 96
        %v5036 = vpop.permute.xlu0 %5035
        %5037 = vrot.lane.b32.xlu0 %v4990, 96
        %v5038 = vpop.permute.xlu0 %5037
        %vm5055 = vcmask 1048320
        %5056 = vst.msk [vmem:[#allocation3] sm:$0xff] %vm5055, %v5008
        %5057 = vst.msk [vmem:[#allocation3 + $0x8] sm:$0xff] %vm5055, %v5010
        %5058 = vst.msk [vmem:[#allocation3 + $0x10] sm:$0xff] %vm5055, %v5012
        %5059 = vst.msk [vmem:[#allocation3 + $0x18] sm:$0xff] %vm5055, %v5014
        %5060 = vst.msk [vmem:[#allocation3 + $0x20] sm:$0xff] %vm5055, %v5016
        %5061 = vst.msk [vmem:[#allocation3 + $0x28] sm:$0xff] %vm5055, %v5018
        %5062 = vst.msk [vmem:[#allocation3 + $0x30] sm:$0xff] %vm5055, %v5020
        %5063 = vst.msk [vmem:[#allocation3 + $0x38] sm:$0xff] %vm5055, %v5022
        %5064 = vst.msk [vmem:[#allocation3 + $0x40] sm:$0xff] %vm5055, %v5024
        %5065 = vst.msk [vmem:[#allocation3 + $0x48] sm:$0xff] %vm5055, %v5026
        %5066 = vst.msk [vmem:[#allocation3 + $0x50] sm:$0xff] %vm5055, %v5028
        %5067 = vst.msk [vmem:[#allocation3 + $0x58] sm:$0xff] %vm5055, %v5030
        %5068 = vst.msk [vmem:[#allocation3 + $0x60] sm:$0xff] %vm5055, %v5032
        %5069 = vst.msk [vmem:[#allocation3 + $0x68] sm:$0xff] %vm5055, %v5034
        %5070 = vst.msk [vmem:[#allocation3 + $0x70] sm:$0xff] %vm5055, %v5036
        %5071 = vst.msk [vmem:[#allocation3 + $0x78] sm:$0xff] %vm5055, %v5038
        %v5072 = vld [vmem:[#allocation3] sm:$0xff]
        %v5073 = vld [vmem:[#allocation3 + $0x8] sm:$0xff]
        %v5074 = vld [vmem:[#allocation3 + $0x10] sm:$0xff]
        %v5075 = vld [vmem:[#allocation3 + $0x18] sm:$0xff]
        %v5076 = vld [vmem:[#allocation3 + $0x20] sm:$0xff]
        %v5077 = vld [vmem:[#allocation3 + $0x28] sm:$0xff]
        %v5078 = vld [vmem:[#allocation3 + $0x30] sm:$0xff]
        %v5079 = vld [vmem:[#allocation3 + $0x38] sm:$0xff]
        %v5080 = vld [vmem:[#allocation3 + $0x40] sm:$0xff]
        %v5081 = vld [vmem:[#allocation3 + $0x48] sm:$0xff]
        %v5082 = vld [vmem:[#allocation3 + $0x50] sm:$0xff]
        %v5083 = vld [vmem:[#allocation3 + $0x58] sm:$0xff]
        %v5084 = vld [vmem:[#allocation3 + $0x60] sm:$0xff]
        %v5085 = vld [vmem:[#allocation3 + $0x68] sm:$0xff]
        %v5086 = vld [vmem:[#allocation3 + $0x70] sm:$0xff]
        %v5087 = vld [vmem:[#allocation3 + $0x78] sm:$0xff]
        %v5088 = vld [vmem:[%s3] sm:$0xf]
        %v5089 = vld [vmem:[%s3 + $0x4] sm:$0xf]
        %v5090 = vld [vmem:[%s3 + $0x8] sm:$0xf]
        %v5091 = vld [vmem:[%s3 + $0xc] sm:$0xf]
        %v5092 = vld [vmem:[%s3 + $0x10] sm:$0xf]
        %v5093 = vld [vmem:[%s3 + $0x14] sm:$0xf]
        %v5094 = vld [vmem:[%s3 + $0x18] sm:$0xf]
        %v5095 = vld [vmem:[%s3 + $0x1c] sm:$0xf]
        %v5096 = vld [vmem:[%s3 + $0x20] sm:$0xf]
        %v5097 = vld [vmem:[%s3 + $0x24] sm:$0xf]
        %v5098 = vld [vmem:[%s3 + $0x28] sm:$0xf]
        %v5099 = vld [vmem:[%s3 + $0x2c] sm:$0xf]
        %v5100 = vld [vmem:[%s3 + $0x30] sm:$0xf]
        %v5101 = vld [vmem:[%s3 + $0x34] sm:$0xf]
        %v5102 = vld [vmem:[%s3 + $0x38] sm:$0xf]
        %v5103 = vld [vmem:[%s3 + $0x3c] sm:$0xf]
        %v5104 = vld [vmem:[%s4] sm:$0x1]
        %v5106 = vlaneseq
        %v5107 = vshrl.u32 %v5106, 7
        %v5108 = vsub.s32 0, %v5107
        %v5109 = vrot.slane %v5104, %v5108
        %v5127 = vunpack.c.l.b16 %v5088
        %v5128 = vunpack.c.l.b16 %v5089
        %v5129 = vunpack.c.l.b16 %v5090
        %v5130 = vunpack.c.l.b16 %v5091
        %v5131 = vunpack.c.l.b16 %v5092
        %v5132 = vunpack.c.l.b16 %v5093
        %v5133 = vunpack.c.l.b16 %v5094
        %v5134 = vunpack.c.l.b16 %v5095
        %v5135 = vunpack.c.l.b16 %v5096
        %v5136 = vunpack.c.l.b16 %v5097
        %v5137 = vunpack.c.l.b16 %v5098
        %v5138 = vunpack.c.l.b16 %v5099
        %v5139 = vunpack.c.l.b16 %v5100
        %v5140 = vunpack.c.l.b16 %v5101
        %v5141 = vunpack.c.l.b16 %v5102
        %v5142 = vunpack.c.l.b16 %v5103
        %v5143 = vpack.c.b16 %v5128, %v5127
        %v5144 = vpack.c.b16 %v5130, %v5129
        %v5145 = vpack.c.b16 %v5132, %v5131
        %v5146 = vpack.c.b16 %v5134, %v5133
        %v5147 = vpack.c.b16 %v5136, %v5135
        %v5148 = vpack.c.b16 %v5138, %v5137
        %v5149 = vpack.c.b16 %v5140, %v5139
        %v5150 = vpack.c.b16 %v5142, %v5141
        %5159 = vmatprep.subr.bf16.mxu0 0
        %5160 = vmatpush1.bf16.msra.mxu0 %v5143
        %5161 = vmatprep.subr.bf16.mxu0 0
        %5162 = vmatpush1.bf16.msra.mxu0 %v5144
        %5163 = vmatprep.subr.bf16.mxu0 0
        %5164 = vmatpush1.bf16.msra.mxu0 %v5145
        %5165 = vmatprep.subr.bf16.mxu0 0
        %5166 = vmatpush1.bf16.msra.mxu0 %v5146
        %5167 = vmatprep.subr.bf16.mxu0 0
        %5168 = vmatpush1.bf16.msra.mxu0 %v5147
        %5169 = vmatprep.subr.bf16.mxu0 0
        %5170 = vmatpush1.bf16.msra.mxu0 %v5148
        %5171 = vmatprep.subr.bf16.mxu0 0
        %5172 = vmatpush1.bf16.msra.mxu0 %v5149
        %5173 = vmatprep.subr.bf16.mxu0 0
        %5174 = vmatpush1.bf16.msra.mxu0 %v5150
        %5175 = vmatprep.subr.bf16.mxu0 0
        %5176 = vmatpush1.bf16.msra.mxu0 0
        %5177 = vmatprep.subr.bf16.mxu0 0
        %5178 = vmatpush1.bf16.msra.mxu0 0
        %5179 = vmatprep.subr.bf16.mxu0 0
        %5180 = vmatpush1.bf16.msra.mxu0 0
        %5181 = vmatprep.subr.bf16.mxu0 0
        %5182 = vmatpush1.bf16.msra.mxu0 0
        %5183 = vmatprep.subr.bf16.mxu0 0
        %5184 = vmatpush1.bf16.msra.mxu0 0
        %5185 = vmatprep.subr.bf16.mxu0 0
        %5186 = vmatpush1.bf16.msra.mxu0 0
        %5187 = vmatprep.subr.bf16.mxu0 0
        %5188 = vmatpush1.bf16.msra.mxu0 0
        %5189 = vmatprep.subr.bf16.mxu0 0
        %5190 = vmatpush1.bf16.msra.mxu0 0
        %5191 = vmatprep.mubr.bf16.mxu0 0
        %5192 = vmatmul.mubr.bf16.gmra.mrb[0].mxu0 %v5072
        %v5193 = vpop.f32.mrb[0].mxu0
        %v5194 = vadd.f32 %v5109, %v5193
        %v5195 = vpop.f32.mrb[0].mxu0
        %v5196 = vpop.f32.mrb[0].mxu0
        %v5197 = vadd.f32 %v5109, %v5196
        %v5198 = vpop.f32.mrb[0].mxu0
        %5199 = vmatprep.mubr.bf16.mxu0 0
        %5200 = vmatmul.mubr.bf16.gmra.mrb[0].mxu0 %v5073
        %v5201 = vpop.f32.mrb[0].mxu0
        %v5202 = vadd.f32 %v5109, %v5201
        %v5203 = vpop.f32.mrb[0].mxu0
        %v5204 = vpop.f32.mrb[0].mxu0
        %v5205 = vadd.f32 %v5109, %v5204
        %v5206 = vpop.f32.mrb[0].mxu0
        %5207 = vmatprep.mubr.bf16.mxu0 0
        %5208 = vmatmul.mubr.bf16.gmra.mrb[0].mxu0 %v5074
        %v5209 = vpop.f32.mrb[0].mxu0
        %v5210 = vadd.f32 %v5109, %v5209
        %v5211 = vpop.f32.mrb[0].mxu0
        %v5212 = vpop.f32.mrb[0].mxu0
        %v5213 = vadd.f32 %v5109, %v5212
        %v5214 = vpop.f32.mrb[0].mxu0
        %5215 = vmatprep.mubr.bf16.mxu0 0
        %5216 = vmatmul.mubr.bf16.gmra.mrb[0].mxu0 %v5075
        %v5217 = vpop.f32.mrb[0].mxu0
        %v5218 = vadd.f32 %v5109, %v5217
        %v5219 = vpop.f32.mrb[0].mxu0
        %v5220 = vpop.f32.mrb[0].mxu0
        %v5221 = vadd.f32 %v5109, %v5220
        %v5222 = vpop.f32.mrb[0].mxu0
        %5223 = vmatprep.mubr.bf16.mxu0 0
        %5224 = vmatmul.mubr.bf16.gmra.mrb[0].mxu0 %v5076
        %v5225 = vpop.f32.mrb[0].mxu0
        %v5226 = vadd.f32 %v5109, %v5225
        %v5227 = vpop.f32.mrb[0].mxu0
        %v5228 = vpop.f32.mrb[0].mxu0
        %v5229 = vadd.f32 %v5109, %v5228
        %v5230 = vpop.f32.mrb[0].mxu0
        %5231 = vmatprep.mubr.bf16.mxu0 0
        %5232 = vmatmul.mubr.bf16.gmra.mrb[0].mxu0 %v5077
        %v5233 = vpop.f32.mrb[0].mxu0
        %v5234 = vadd.f32 %v5109, %v5233
        %v5235 = vpop.f32.mrb[0].mxu0
        %v5236 = vpop.f32.mrb[0].mxu0
        %v5237 = vadd.f32 %v5109, %v5236
        %v5238 = vpop.f32.mrb[0].mxu0
        %5239 = vmatprep.mubr.bf16.mxu0 0
        %5240 = vmatmul.mubr.bf16.gmra.mrb[0].mxu0 %v5078
        %v5241 = vpop.f32.mrb[0].mxu0
        %v5242 = vadd.f32 %v5109, %v5241
        %v5243 = vpop.f32.mrb[0].mxu0
        %v5244 = vpop.f32.mrb[0].mxu0
        %v5245 = vadd.f32 %v5109, %v5244
        %v5246 = vpop.f32.mrb[0].mxu0
        %5247 = vmatprep.mubr.bf16.mxu0 0
        %5248 = vmatmul.mubr.bf16.gmra.mrb[0].mxu0 %v5079
        %v5249 = vpop.f32.mrb[0].mxu0
        %v5250 = vadd.f32 %v5109, %v5249
        %v5251 = vpop.f32.mrb[0].mxu0
        %v5252 = vpop.f32.mrb[0].mxu0
        %v5253 = vadd.f32 %v5109, %v5252
        %v5254 = vpop.f32.mrb[0].mxu0
        %5255 = vmatprep.mubr.bf16.mxu0 0
        %5256 = vmatmul.mubr.bf16.gmra.mrb[0].mxu0 %v5080
        %v5257 = vpop.f32.mrb[0].mxu0
        %v5258 = vadd.f32 %v5109, %v5257
        %v5259 = vpop.f32.mrb[0].mxu0
        %v5260 = vpop.f32.mrb[0].mxu0
        %v5261 = vadd.f32 %v5109, %v5260
        %v5262 = vpop.f32.mrb[0].mxu0
        %5263 = vmatprep.mubr.bf16.mxu0 0
        %5264 = vmatmul.mubr.bf16.gmra.mrb[0].mxu0 %v5081
        %v5265 = vpop.f32.mrb[0].mxu0
        %v5266 = vadd.f32 %v5109, %v5265
        %v5267 = vpop.f32.mrb[0].mxu0
        %v5268 = vpop.f32.mrb[0].mxu0
        %v5269 = vadd.f32 %v5109, %v5268
        %v5270 = vpop.f32.mrb[0].mxu0
        %5271 = vmatprep.mubr.bf16.mxu0 0
        %5272 = vmatmul.mubr.bf16.gmra.mrb[0].mxu0 %v5082
        %v5273 = vpop.f32.mrb[0].mxu0
        %v5274 = vadd.f32 %v5109, %v5273
        %v5275 = vpop.f32.mrb[0].mxu0
        %v5276 = vpop.f32.mrb[0].mxu0
        %v5277 = vadd.f32 %v5109, %v5276
        %v5278 = vpop.f32.mrb[0].mxu0
        %5279 = vmatprep.mubr.bf16.mxu0 0
        %5280 = vmatmul.mubr.bf16.gmra.mrb[0].mxu0 %v5083
        %v5281 = vpop.f32.mrb[0].mxu0
        %v5282 = vadd.f32 %v5109, %v5281
        %v5283 = vpop.f32.mrb[0].mxu0
        %v5284 = vpop.f32.mrb[0].mxu0
        %v5285 = vadd.f32 %v5109, %v5284
        %v5286 = vpop.f32.mrb[0].mxu0
        %5287 = vmatprep.mubr.bf16.mxu0 0
        %5288 = vmatmul.mubr.bf16.gmra.mrb[0].mxu0 %v5084
        %v5289 = vpop.f32.mrb[0].mxu0
        %v5290 = vadd.f32 %v5109, %v5289
        %v5291 = vpop.f32.mrb[0].mxu0
        %v5292 = vpop.f32.mrb[0].mxu0
        %v5293 = vadd.f32 %v5109, %v5292
        %v5294 = vpop.f32.mrb[0].mxu0
        %5295 = vmatprep.mubr.bf16.mxu0 0
        %5296 = vmatmul.mubr.bf16.gmra.mrb[0].mxu0 %v5085
        %v5297 = vpop.f32.mrb[0].mxu0
        %v5298 = vadd.f32 %v5109, %v5297
        %v5299 = vpop.f32.mrb[0].mxu0
        %v5300 = vpop.f32.mrb[0].mxu0
        %v5301 = vadd.f32 %v5109, %v5300
        %v5302 = vpop.f32.mrb[0].mxu0
        %5303 = vmatprep.mubr.bf16.mxu0 0
        %5304 = vmatmul.mubr.bf16.gmra.mrb[0].mxu0 %v5086
        %v5305 = vpop.f32.mrb[0].mxu0
        %v5306 = vadd.f32 %v5109, %v5305
        %v5307 = vpop.f32.mrb[0].mxu0
        %v5308 = vpop.f32.mrb[0].mxu0
        %v5309 = vadd.f32 %v5109, %v5308
        %v5310 = vpop.f32.mrb[0].mxu0
        %5311 = vmatprep.mubr.bf16.mxu0 0
        %5312 = vmatmul.mubr.bf16.gmra.mrb[0].mxu0 %v5087
        %v5313 = vpop.f32.mrb[0].mxu0
        %v5314 = vadd.f32 %v5109, %v5313
        %v5315 = vpop.f32.mrb[0].mxu0
        %v5316 = vpop.f32.mrb[0].mxu0
        %v5317 = vadd.f32 %v5109, %v5316
        %v5318 = vpop.f32.mrb[0].mxu0
        %5319 = vdwg.mxu0
        %5320 = vst [vmem:[%s220] sm:$0xff] %v5194
        %5321 = vst [vmem:[%s220 + $0x8] sm:$0xff] %v5197
        %5322 = vst [vmem:[%s220 + $0x10] sm:$0xff] %v5202
        %5323 = vst [vmem:[%s220 + $0x18] sm:$0xff] %v5205
        %5324 = vst [vmem:[%s220 + $0x20] sm:$0xff] %v5210
        %5325 = vst [vmem:[%s220 + $0x28] sm:$0xff] %v5213
        %5326 = vst [vmem:[%s220 + $0x30] sm:$0xff] %v5218
        %5327 = vst [vmem:[%s220 + $0x38] sm:$0xff] %v5221
        %5328 = vst [vmem:[%s220 + $0x40] sm:$0xff] %v5226
        %5329 = vst [vmem:[%s220 + $0x48] sm:$0xff] %v5229
        %5330 = vst [vmem:[%s220 + $0x50] sm:$0xff] %v5234
        %5331 = vst [vmem:[%s220 + $0x58] sm:$0xff] %v5237
        %5332 = vst [vmem:[%s220 + $0x60] sm:$0xff] %v5242
        %5333 = vst [vmem:[%s220 + $0x68] sm:$0xff] %v5245
        %5334 = vst [vmem:[%s220 + $0x70] sm:$0xff] %v5250
        %5335 = vst [vmem:[%s220 + $0x78] sm:$0xff] %v5253
        %5336 = vst [vmem:[%s220 + $0x80] sm:$0xff] %v5258
        %5337 = vst [vmem:[%s220 + $0x88] sm:$0xff] %v5261
        %5338 = vst [vmem:[%s220 + $0x90] sm:$0xff] %v5266
        %5339 = vst [vmem:[%s220 + $0x98] sm:$0xff] %v5269
        %5340 = vst [vmem:[%s220 + $0xa0] sm:$0xff] %v5274
        %5341 = vst [vmem:[%s220 + $0xa8] sm:$0xff] %v5277
        %5342 = vst [vmem:[%s220 + $0xb0] sm:$0xff] %v5282
        %5343 = vst [vmem:[%s220 + $0xb8] sm:$0xff] %v5285
        %5344 = vst [vmem:[%s220 + $0xc0] sm:$0xff] %v5290
        %5345 = vst [vmem:[%s220 + $0xc8] sm:$0xff] %v5293
        %5346 = vst [vmem:[%s220 + $0xd0] sm:$0xff] %v5298
        %5347 = vst [vmem:[%s220 + $0xd8] sm:$0xff] %v5301
        %5348 = vst [vmem:[%s220 + $0xe0] sm:$0xff] %v5306
        %5349 = vst [vmem:[%s220 + $0xe8] sm:$0xff] %v5309
        %5350 = vst [vmem:[%s220 + $0xf0] sm:$0xff] %v5314
        %5351 = vst [vmem:[%s220 + $0xf8] sm:$0xff] %v5317
        %s5352 = sand.u32 %s137, 1
        %s5353 = scalar_lea.sflag [#allocation5], %s5352
        %s5354 = sand.u32 %s137, 1
        %s5355 = smul.addr %s5354, 256
        %s5356 = scalar_lea.vmem [#allocation4], %s5355
        // Predicated region
        $region41: #{tpu_custom_call.1} parent=39 // pred_check
          %p5357 = pneg %p147
        $region42: #{tpu_custom_call.1} parent=39 // pred_check_branch
          %5359 = sbr.rel (%p5357) target = $region44
        $region43: #{tpu_custom_call.1} parent=39 // pred_region
          %s5360 = smul.u32 2, %s19
          %s5362 = ssub.s32 4096, 4096
          %5363 = vsyncadd %s5353, %s5362
          %s5364 = smul.addr %s5360, 16
          %s5365 = smul.addr %s5364, 128
          %s5366 = scalar_lea.hbm %s5, %s5365
          %s5367 = sshll.u32 %s5356, 4
          %s5368 = int_to_ptr.vmem [resolvable:$true] %s5367
          %5373 = dma.vmem_to_hbm [thread:$0]  %s5368, 4096, %s5366, %s5353, 128, 128, 8
        $region44: #{tpu_custom_call.1} parent=39 // pred_fallthru
          _
      $region40: #{tpu_custom_call.1} parent=5 // pred_fallthru
        _
      %p5374 = scmp.le.s32.totalorder 2, %s14
      // Predicated region
      $region45: #{tpu_custom_call.1} parent=5 // pred_check
        %p5375 = pneg %p5374
      $region46: #{tpu_custom_call.1} parent=5 // pred_check_branch
        %5377 = sbr.rel (%p5375) target = $region48
      $region47: #{tpu_custom_call.1} parent=5 // pred_region
        %s5378 = ssub.s32 %s14, 2
        // Predicated region
        $region49: #{tpu_custom_call.1} parent=47 // pred_check
          %p5379 = pneg %p153
        $region50: #{tpu_custom_call.1} parent=47 // pred_check_branch
          %5381 = sbr.rel (%p5379) target = $region52
        $region51: #{tpu_custom_call.1} parent=47 // pred_region
          %s5382 = sand.u32 %s138, 1
          %s5383 = scalar_lea.sflag [#allocation5], %s5382
          %s5384 = sand.u32 %s138, 1
          %s5385 = smul.addr %s5384, 256
          %s5386 = scalar_lea.vmem [#allocation4], %s5385
          %5387 = dma.done %s5383, 4096
        $region52: #{tpu_custom_call.1} parent=47 // pred_fallthru
          _
      $region48: #{tpu_custom_call.1} parent=5 // pred_fallthru
        _
    $region6: #{tpu_custom_call.1} parent=1 // loop_footer
      %s18 = sadd.s32 1, %s14
    $region7: #{tpu_custom_call.1} parent=1 // loop_footer_branch
      %13 = sbr.rel target = $region3
    $region8: #{tpu_custom_call.1} parent=1 // loop_exit
      _
    %5388 = vsyncpa [#allocation5], 1
    %s5389 = scalar_lea.sflag [#allocation5], 1
    %5390 = vsyncpa %s5389, 1

// kernel: tpu_custom_call.1
$region0: #{tpu_custom_call.1}
  #allocation0 [shape = 'u32[]', space=smem, size = 0x4, offset = 0x4, fixed_abs, tag = 'smem constant byte address 0x4 - core index']
  #allocation1 [shape = 'u32[144,128]{1,0:T(1,128)}', space=vmem, size = 0x12000, scoped, tag = 'internal scratch']
  #allocation2 [shape = 'bf16[256,384]{1,0:T(16,128)(2,1)}', space=vmem, size = 0x30000, scoped, tag = 'scratch operand']
  #allocation3 [shape = 'bf16[256,128]{1,0:T(16,128)(2,1)}', space=vmem, size = 0x10000, scoped, tag = 'scratch operand']
  %s0 = inlined_call_operand.vmem [shape: f32[4,128,64], index: 0, kind: input, shape index: {}]
  %s1 = inlined_call_operand.vmem [shape: bf16[64,384], index: 1, kind: input, shape index: {}]
  %s2 = inlined_call_operand.vmem [shape: f32[4,128,128], index: 2, kind: input, shape index: {}]
  %s3 = inlined_call_operand.vmem [shape: bf16[128,128], index: 3, kind: input, shape index: {}]
  %s4 = inlined_call_operand.vmem [shape: f32[1,128], index: 4, kind: input, shape index: {}]
  %s5 = inlined_call_operand.hbm [shape: f32[4,128,128], index: 5, kind: output, shape index: {}]
  %s6 = sld [smem:[#allocation0]]
  $region53: #{tpu_custom_call.1} parent=0
    _
  %s8 = ssub.s32 1, %s6
  %s9 = scalar_select 0, %s8, %s6
  $region1: #{tpu_custom_call.1} parent=0
    #allocation4 [shape = 'u8[262144]{0}', space=vmem, size = 0x40000, scoped, tag = 'output window, operand 0']
    #allocation5 [shape = 's32[2]{0}', space=sflag, size = 0x8, scoped, tag = 'scoped memory for tpu_custom_call.1']
    %10 = vsyncpa [#allocation5], 0
    %s11 = scalar_lea.sflag [#allocation5], 1
    %12 = vsyncpa %s11, 0
    loop: start=0, step=1, limit=4
    $region2: #{tpu_custom_call.1} parent=1 // loop_pre_header
      _
    $region3: #{tpu_custom_call.1} parent=1 // loop_header
      %s14 = sphi 0, %s18
      %p15 = scmp.ge.s32.totalorder %s14, 4
      %s24 = sphi 0, %s26
      %s27 = sphi 0, %s24
      %s28 = sphi 0, %s27
      %s44 = sphi 0, %s28
      %s48 = sphi 0, %s48
      %s50 = sphi 0, %s48
      %s51 = sphi 0, %s50
      %s65 = sphi 0, %s51
      %s69 = sphi 0, %s69
      %s71 = sphi 0, %s69
      %s72 = sphi 0, %s71
      %s86 = sphi 0, %s72
      %s90 = sphi 0, %s90
      %s92 = sphi 0, %s90
      %s93 = sphi 0, %s92
      %s107 = sphi 0, %s93
      %s111 = sphi 0, %s111
      %s113 = sphi 0, %s111
      %s114 = sphi 0, %s113
      %s128 = sphi 0, %s114
      %s134 = sphi 0, %s136
      %s137 = sphi 0, %s134
      %s138 = sphi 0, %s137
      %s154 = sphi 0, %s138
    $region4: #{tpu_custom_call.1} parent=1 // loop_header_branch
      %17 = sbr.rel (%p15) target = $region8
    $region5: #{tpu_custom_call.1} parent=1 // loop_body
      %s19 = ssub.s32 %s14, 1
      %s20 = ssub.s32 %s14, 2
      %s21 = sadd.s32 %s14, 1
      %s22 = ssub.s32 %s14, %s21
      %p23 = scmp.eq.s32.totalorder %s22, 0
      %s25 = sadd.s32 %s24, 1
      %s26 = scalar_select %p23, %s24, %s25
      %p29 = pneg %p23
      %p30 = scmp.eq.s32.totalorder %s14, 1
      %p31 = por %p29, %p30
      %p32 = scmp.ne.s32.totalorder %s24, %s27
      %p33 = scmp.eq.s32.totalorder %s14, 0
      %p34 = por %p32, %p33
      %p35 = scmp.ne.s32.totalorder %s24, %s27
      %p36 = scmp.eq.s32.totalorder %s19, 1
      %p37 = por %p35, %p36
      %p38 = scmp.ne.s32.totalorder %s27, %s28
      %p39 = scmp.eq.s32.totalorder %s19, 0
      %p40 = por %p38, %p39
      %p41 = scmp.ne.s32.totalorder %s27, %s28
      %p42 = scmp.eq.s32.totalorder %s20, 1
      %p43 = por %p41, %p42
      %p45 = scmp.ne.s32.totalorder %s28, %s44
      %p46 = scmp.eq.s32.totalorder %s20, 0
      %p47 = por %p45, %p46
      %s49 = sadd.s32 %s48, 1
      %p52 = scmp.eq.s32.totalorder %s14, 1
      %p53 = scmp.ne.s32.totalorder %s48, %s50
      %p54 = scmp.eq.s32.totalorder %s14, 0
      %p55 = por %p53, %p54
      %p56 = scmp.ne.s32.totalorder %s48, %s50
      %p57 = scmp.eq.s32.totalorder %s19, 1
      %p58 = por %p56, %p57
      %p59 = scmp.ne.s32.totalorder %s50, %s51
      %p60 = scmp.eq.s32.totalorder %s19, 0
      %p61 = por %p59, %p60
      %p62 = scmp.ne.s32.totalorder %s50, %s51
      %p63 = scmp.eq.s32.totalorder %s20, 1
      %p64 = por %p62, %p63
      %p66 = scmp.ne.s32.totalorder %s51, %s65
      %p67 = scmp.eq.s32.totalorder %s20, 0
      %p68 = por %p66, %p67
      %s70 = sadd.s32 %s69, 1
      %p73 = scmp.eq.s32.totalorder %s14, 1
      %p74 = scmp.ne.s32.totalorder %s69, %s71
      %p75 = scmp.eq.s32.totalorder %s14, 0
      %p76 = por %p74, %p75
      %p77 = scmp.ne.s32.totalorder %s69, %s71
      %p78 = scmp.eq.s32.totalorder %s19, 1
      %p79 = por %p77, %p78
      %p80 = scmp.ne.s32.totalorder %s71, %s72
      %p81 = scmp.eq.s32.totalorder %s19, 0
      %p82 = por %p80, %p81
      %p83 = scmp.ne.s32.totalorder %s71, %s72
      %p84 = scmp.eq.s32.totalorder %s20, 1
      %p85 = por %p83, %p84
      %p87 = scmp.ne.s32.totalorder %s72, %s86
      %p88 = scmp.eq.s32.totalorder %s20, 0
      %p89 = por %p87, %p88
      %s91 = sadd.s32 %s90, 1
      %p94 = scmp.eq.s32.totalorder %s14, 1
      %p95 = scmp.ne.s32.totalorder %s90, %s92
      %p96 = scmp.eq.s32.totalorder %s14, 0
      %p97 = por %p95, %p96
      %p98 = scmp.ne.s32.totalorder %s90, %s92
      %p99 = scmp.eq.s32.totalorder %s19, 1
      %p100 = por %p98, %p99
      %p101 = scmp.ne.s32.totalorder %s92, %s93
      %p102 = scmp.eq.s32.totalorder %s19, 0
      %p103 = por %p101, %p102
      %p104 = scmp.ne.s32.totalorder %s92, %s93
      %p105 = scmp.eq.s32.totalorder %s20, 1
      %p106 = por %p104, %p105
      %p108 = scmp.ne.s32.totalorder %s93, %s107
      %p109 = scmp.eq.s32.totalorder %s20, 0
      %p110 = por %p108, %p109
      %s112 = sadd.s32 %s111, 1
      %p115 = scmp.eq.s32.totalorder %s14, 1
      %p116 = scmp.ne.s32.totalorder %s111, %s113
      %p117 = scmp.eq.s32.totalorder %s14, 0
      %p118 = por %p116, %p117
      %p119 = scmp.ne.s32.totalorder %s111, %s113
      %p120 = scmp.eq.s32.totalorder %s19, 1
      %p121 = por %p119, %p120
      %p122 = scmp.ne.s32.totalorder %s113, %s114
      %p123 = scmp.eq.s32.totalorder %s19, 0
      %p124 = por %p122, %p123
      %p125 = scmp.ne.s32.totalorder %s113, %s114
      %p126 = scmp.eq.s32.totalorder %s20, 1
      %p127 = por %p125, %p126
      %p129 = scmp.ne.s32.totalorder %s114, %s128
      %p130 = scmp.eq.s32.totalorder %s20, 0
      %p131 = por %p129, %p130
      %s132 = ssub.s32 %s14, %s21
      %p133 = scmp.eq.s32.totalorder %s132, 0
      %s135 = sadd.s32 %s134, 1
      %s136 = scalar_select %p133, %s134, %s135
      %p139 = pneg %p133
      %p140 = scmp.eq.s32.totalorder %s14, 1
      %p141 = por %p139, %p140
      %p142 = scmp.ne.s32.totalorder %s134, %s137
      %p143 = scmp.eq.s32.totalorder %s14, 0
      %p144 = por %p142, %p143
      %p145 = scmp.ne.s32.totalorder %s134, %s137
      %p146 = scmp.eq.s32.totalorder %s19, 1
      %p147 = por %p145, %p146
      %p148 = scmp.ne.s32.totalorder %s137, %s138
      %p149 = scmp.eq.s32.totalorder %s19, 0
      %p150 = por %p148, %p149
      %p151 = scmp.ne.s32.totalorder %s137, %s138
      %p152 = scmp.eq.s32.totalorder %s20, 1
      %p153 = por %p151, %p152
      %p155 = scmp.ne.s32.totalorder %s138, %s154
      %p156 = scmp.eq.s32.totalorder %s20, 0
      %p157 = por %p155, %p156
      %p158 = scmp.le.s32.totalorder 1, %s14
      %p159 = scmp.lt.s32.totalorder %s14, 3
      %p160 = pnand %p158, %p159
      %p161 = pneg %p160
      // Predicated region
      $region9: #{tpu_custom_call.1} parent=5 // pred_check
        _
      $region10: #{tpu_custom_call.1} parent=5 // pred_check_branch
        %163 = sbr.rel (%p160) target = $region12
      $region11: #{tpu_custom_call.1} parent=5 // pred_region
        %s164 = ssub.s32 %s14, 1
        // Predicated region
        $region13: #{tpu_custom_call.1} parent=11 // pred_check
          %p165 = pneg %p61
        $region14: #{tpu_custom_call.1} parent=11 // pred_check_branch
          %167 = sbr.rel (%p165) target = $region16
        $region15: #{tpu_custom_call.1} parent=11 // pred_region
          _
        $region16: #{tpu_custom_call.1} parent=11 // pred_fallthru
          _
        // Predicated region
        $region17: #{tpu_custom_call.1} parent=11 // pred_check
          %p168 = pneg %p82
        $region18: #{tpu_custom_call.1} parent=11 // pred_check_branch
          %170 = sbr.rel (%p168) target = $region20
        $region19: #{tpu_custom_call.1} parent=11 // pred_region
          _
        $region20: #{tpu_custom_call.1} parent=11 // pred_fallthru
          _
        // Predicated region
        $region21: #{tpu_custom_call.1} parent=11 // pred_check
          %p171 = pneg %p103
        $region22: #{tpu_custom_call.1} parent=11 // pred_check_branch
          %173 = sbr.rel (%p171) target = $region24
        $region23: #{tpu_custom_call.1} parent=11 // pred_region
          _
        $region24: #{tpu_custom_call.1} parent=11 // pred_fallthru
          _
        // Predicated region
        $region25: #{tpu_custom_call.1} parent=11 // pred_check
          %p174 = pneg %p124
        $region26: #{tpu_custom_call.1} parent=11 // pred_check_branch
          %176 = sbr.rel (%p174) target = $region28
        $region27: #{tpu_custom_call.1} parent=11 // pred_region
          _
        $region28: #{tpu_custom_call.1} parent=11 // pred_fallthru
          _
      $region12: #{tpu_custom_call.1} parent=5 // pred_fallthru
        _
      %p177 = scmp.lt.s32.totalorder %s14, 2
      // Predicated region
      $region29: #{tpu_custom_call.1} parent=5 // pred_check
        %p178 = pneg %p177
      $region30: #{tpu_custom_call.1} parent=5 // pred_check_branch
        %180 = sbr.rel (%p178) target = $region32
      $region31: #{tpu_custom_call.1} parent=5 // pred_region
        // Predicated region
        $region33: #{tpu_custom_call.1} parent=31 // pred_check
          %p181 = pneg %p34
        $region34: #{tpu_custom_call.1} parent=31 // pred_check_branch
          %183 = sbr.rel (%p181) target = $region36
        $region35: #{tpu_custom_call.1} parent=31 // pred_region
          %s184 = smul.u32 2, %s14
          %p185 = scmp.lt.s32.totalorder %s184, 3
          %s186 = scalar_select %p185, %s184, 3
          %s187 = smul.addr %s186, 16
          %s188 = smul.addr %s187, 8
          %s189 = scalar_lea.vmem %s0, %s188
          %s190 = smul.u32 2, %s14
        $region36: #{tpu_custom_call.1} parent=31 // pred_fallthru
          _
      $region32: #{tpu_custom_call.1} parent=5 // pred_fallthru
        _
      %p191 = scmp.le.s32.totalorder 1, %s14
      %p192 = scmp.lt.s32.totalorder %s14, 3
      %p193 = pnand %p191, %p192
      %p194 = pneg %p193
      // Predicated region
      $region37: #{tpu_custom_call.1} parent=5 // pred_check
        _
      $region38: #{tpu_custom_call.1} parent=5 // pred_check_branch
        %196 = sbr.rel (%p193) target = $region40
      $region39: #{tpu_custom_call.1} parent=5 // pred_region
        %s197 = ssub.s32 %s14, 1
        %s198 = smul.u32 2, %s19
        %p199 = scmp.lt.s32.totalorder %s198, 3
        %s200 = scalar_select %p199, %s198, 3
        %s201 = smul.addr %s200, 16
        %s202 = smul.addr %s201, 8
        %s203 = scalar_lea.vmem %s0, %s202
        %p204 = pneg %p40
        %p205 = pneg %p37
        %p206 = pneg %p61
        %p207 = pneg %p58
        %p208 = pneg %p82
        %p209 = pneg %p79
        %p210 = pneg %p103
        %p211 = pneg %p100
        %p212 = pneg %p124
        %p213 = pneg %p121
        %p214 = pneg %p150
        %p215 = pneg %p147
        %s216 = sand.u32 %s137, 1
        %s217 = scalar_lea.sflag [#allocation5], %s216
        %s218 = sand.u32 %s137, 1
        %s219 = smul.addr %s218, 256
        %s220 = scalar_lea.vmem [#allocation4], %s219
        %s221 = smul.u32 2, %s19
        %p222 = scmp.lt.s32.totalorder %s221, 3
        %s223 = scalar_select %p222, %s221, 3
        %s224 = smul.addr %s223, 16
        %s225 = smul.addr %s224, 8
        %s226 = scalar_lea.vmem %s0, %s225
        %s227 = smul.u32 2, %s19
        %s228 = smul.u32 2, %s19
        %v230 = vld [vmem:[%s226] sm:$0xff]
        %v231 = vld [vmem:[%s226 + $0x8] sm:$0xff]
        %v232 = vld [vmem:[%s226 + $0x10] sm:$0xff]
        %v233 = vld [vmem:[%s226 + $0x18] sm:$0xff]
        %v234 = vld [vmem:[%s226 + $0x20] sm:$0xff]
        %v235 = vld [vmem:[%s226 + $0x28] sm:$0xff]
        %v236 = vld [vmem:[%s226 + $0x30] sm:$0xff]
        %v237 = vld [vmem:[%s226 + $0x38] sm:$0xff]
        %v238 = vld [vmem:[%s226 + $0x40] sm:$0xff]
        %v239 = vld [vmem:[%s226 + $0x48] sm:$0xff]
        %v240 = vld [vmem:[%s226 + $0x50] sm:$0xff]
        %v241 = vld [vmem:[%s226 + $0x58] sm:$0xff]
        %v242 = vld [vmem:[%s226 + $0x60] sm:$0xff]
        %v243 = vld [vmem:[%s226 + $0x68] sm:$0xff]
        %v244 = vld [vmem:[%s226 + $0x70] sm:$0xff]
        %v245 = vld [vmem:[%s226 + $0x78] sm:$0xff]
        %v246 = vld [vmem:[%s226 + $0x80] sm:$0xff]
        %v247 = vld [vmem:[%s226 + $0x88] sm:$0xff]
        %v248 = vld [vmem:[%s226 + $0x90] sm:$0xff]
        %v249 = vld [vmem:[%s226 + $0x98] sm:$0xff]
        %v250 = vld [vmem:[%s226 + $0xa0] sm:$0xff]
        %v251 = vld [vmem:[%s226 + $0xa8] sm:$0xff]
        %v252 = vld [vmem:[%s226 + $0xb0] sm:$0xff]
        %v253 = vld [vmem:[%s226 + $0xb8] sm:$0xff]
        %v254 = vld [vmem:[%s226 + $0xc0] sm:$0xff]
        %v255 = vld [vmem:[%s226 + $0xc8] sm:$0xff]
        %v256 = vld [vmem:[%s226 + $0xd0] sm:$0xff]
        %v257 = vld [vmem:[%s226 + $0xd8] sm:$0xff]
        %v258 = vld [vmem:[%s226 + $0xe0] sm:$0xff]
        %v259 = vld [vmem:[%s226 + $0xe8] sm:$0xff]
        %v260 = vld [vmem:[%s226 + $0xf0] sm:$0xff]
        %v261 = vld [vmem:[%s226 + $0xf8] sm:$0xff]
        %v262 = vpack.c.bf16 %v231, %v230
        %v263 = vpack.c.bf16 %v233, %v232
        %v264 = vpack.c.bf16 %v235, %v234
        %v265 = vpack.c.bf16 %v237, %v236
        %v266 = vpack.c.bf16 %v239, %v238
        %v267 = vpack.c.bf16 %v241, %v240
        %v268 = vpack.c.bf16 %v243, %v242
        %v269 = vpack.c.bf16 %v245, %v244
        %v270 = vpack.c.bf16 %v247, %v246
        %v271 = vpack.c.bf16 %v249, %v248
        %v272 = vpack.c.bf16 %v251, %v250
        %v273 = vpack.c.bf16 %v253, %v252
        %v274 = vpack.c.bf16 %v255, %v254
        %v275 = vpack.c.bf16 %v257, %v256
        %v276 = vpack.c.bf16 %v259, %v258
        %v277 = vpack.c.bf16 %v261, %v260
        %v278 = vld [vmem:[%s1] sm:$0xff]
        %v279 = vld [vmem:[%s1 + $0x8] sm:$0xf]
        %v280 = vld [vmem:[%s1 + $0xc] sm:$0xff]
        %v281 = vld [vmem:[%s1 + $0x14] sm:$0xf]
        %v282 = vld [vmem:[%s1 + $0x18] sm:$0xff]
        %v283 = vld [vmem:[%s1 + $0x20] sm:$0xf]
        %v284 = vld [vmem:[%s1 + $0x24] sm:$0xff]
        %v285 = vld [vmem:[%s1 + $0x2c] sm:$0xf]
        %v286 = vld [vmem:[%s1 + $0x30] sm:$0xff]
        %v287 = vld [vmem:[%s1 + $0x38] sm:$0xf]
        %v288 = vld [vmem:[%s1 + $0x3c] sm:$0xff]
        %v289 = vld [vmem:[%s1 + $0x44] sm:$0xf]
        %v290 = vld [vmem:[%s1 + $0x48] sm:$0xff]
        %v291 = vld [vmem:[%s1 + $0x50] sm:$0xf]
        %v292 = vld [vmem:[%s1 + $0x54] sm:$0xff]
        %v293 = vld [vmem:[%s1 + $0x5c] sm:$0xf]
        %v310 = vunpack.c.l.b16 %v278
        %v311 = vunpack.c.h.b16 %v278
        %v312 = vunpack.c.l.b16 %v279
        %v313 = vunpack.c.l.b16 %v280
        %v314 = vunpack.c.h.b16 %v280
        %v315 = vunpack.c.l.b16 %v281
        %v316 = vunpack.c.l.b16 %v282
        %v317 = vunpack.c.h.b16 %v282
        %v318 = vunpack.c.l.b16 %v283
        %v319 = vunpack.c.l.b16 %v284
        %v320 = vunpack.c.h.b16 %v284
        %v321 = vunpack.c.l.b16 %v285
        %v322 = vunpack.c.l.b16 %v286
        %v323 = vunpack.c.h.b16 %v286
        %v324 = vunpack.c.l.b16 %v287
        %v325 = vunpack.c.l.b16 %v288
        %v326 = vunpack.c.h.b16 %v288
        %v327 = vunpack.c.l.b16 %v289
        %v328 = vunpack.c.l.b16 %v290
        %v329 = vunpack.c.h.b16 %v290
        %v330 = vunpack.c.l.b16 %v291
        %v331 = vunpack.c.l.b16 %v292
        %v332 = vunpack.c.h.b16 %v292
        %v333 = vunpack.c.l.b16 %v293
        %v334 = vpack.c.b16 %v313, %v310
        %v335 = vpack.c.b16 %v314, %v311
        %v336 = vpack.c.b16 %v315, %v312
        %v337 = vpack.c.b16 %v319, %v316
        %v338 = vpack.c.b16 %v320, %v317
        %v339 = vpack.c.b16 %v321, %v318
        %v340 = vpack.c.b16 %v325, %v322
        %v341 = vpack.c.b16 %v326, %v323
        %v342 = vpack.c.b16 %v327, %v324
        %v343 = vpack.c.b16 %v331, %v328
        %v344 = vpack.c.b16 %v332, %v329
        %v345 = vpack.c.b16 %v333, %v330
        %vm358 = vcmask 523264
        %v360 = vsel %vm358, %v262, 0
        %v363 = vsel %vm358, %v263, 0
        %v366 = vsel %vm358, %v264, 0
        %v369 = vsel %vm358, %v265, 0
        %v372 = vsel %vm358, %v266, 0
        %v375 = vsel %vm358, %v267, 0
        %v378 = vsel %vm358, %v268, 0
        %v381 = vsel %vm358, %v269, 0
        %v384 = vsel %vm358, %v270, 0
        %v387 = vsel %vm358, %v271, 0
        %v390 = vsel %vm358, %v272, 0
        %v393 = vsel %vm358, %v273, 0
        %v396 = vsel %vm358, %v274, 0
        %v399 = vsel %vm358, %v275, 0
        %v402 = vsel %vm358, %v276, 0
        %v405 = vsel %vm358, %v277, 0
        %407 = vmatprep.subr.bf16.mxu0 %v335
        %408 = vmatpush1.bf16.msra.mxu0 %v334
        %409 = vmatprep.subr.bf16.mxu0 %v338
        %410 = vmatpush1.bf16.msra.mxu0 %v337
        %411 = vmatprep.subr.bf16.mxu0 %v341
        %412 = vmatpush1.bf16.msra.mxu0 %v340
        %413 = vmatprep.subr.bf16.mxu0 %v344
        %414 = vmatpush1.bf16.msra.mxu0 %v343
        %415 = vmatprep.subr.bf16.mxu0 0
        %416 = vmatpush1.bf16.msra.mxu0 0
        %417 = vmatprep.subr.bf16.mxu0 0
        %418 = vmatpush1.bf16.msra.mxu0 0
        %419 = vmatprep.subr.bf16.mxu0 0
        %420 = vmatpush1.bf16.msra.mxu0 0
        %421 = vmatprep.subr.bf16.mxu0 0
        %422 = vmatpush1.bf16.msra.mxu0 0
        %423 = vmatprep.subr.bf16.mxu0 0
        %424 = vmatpush1.bf16.msra.mxu0 0
        %425 = vmatprep.subr.bf16.mxu0 0
        %426 = vmatpush1.bf16.msra.mxu0 0
        %427 = vmatprep.subr.bf16.mxu0 0
        %428 = vmatpush1.bf16.msra.mxu0 0
        %429 = vmatprep.subr.bf16.mxu0 0
        %430 = vmatpush1.bf16.msra.mxu0 0
        %431 = vmatprep.subr.bf16.mxu0 0
        %432 = vmatpush1.bf16.msra.mxu0 0
        %433 = vmatprep.subr.bf16.mxu0 0
        %434 = vmatpush1.bf16.msra.mxu0 0
        %435 = vmatprep.subr.bf16.mxu0 0
        %436 = vmatpush1.bf16.msra.mxu0 0
        %437 = vmatprep.subr.bf16.mxu0 0
        %438 = vmatpush1.bf16.msra.mxu0 0
        %439 = vmatprep.mubr.bf16.mxu0 0
        %440 = vmatmul.mubr.bf16.gmra.mrb[0].mxu0 %v360
        %v441 = vpop.f32.mrb[0].mxu0
        %v442 = vadd.f32 0.0, %v441
        %v443 = vpop.f32.mrb[0].mxu0
        %v444 = vadd.f32 0.0, %v443
        %v445 = vpop.f32.mrb[0].mxu0
        %v446 = vadd.f32 0.0, %v445
        %v447 = vpop.f32.mrb[0].mxu0
        %v448 = vadd.f32 0.0, %v447
        %449 = vmatprep.mubr.bf16.mxu0 0
        %450 = vmatmul.mubr.bf16.gmra.mrb[0].mxu0 %v363
        %v451 = vpop.f32.mrb[0].mxu0
        %v452 = vadd.f32 0.0, %v451
        %v453 = vpop.f32.mrb[0].mxu0
        %v454 = vadd.f32 0.0, %v453
        %v455 = vpop.f32.mrb[0].mxu0
        %v456 = vadd.f32 0.0, %v455
        %v457 = vpop.f32.mrb[0].mxu0
        %v458 = vadd.f32 0.0, %v457
        %459 = vmatprep.mubr.bf16.mxu0 0
        %460 = vmatmul.mubr.bf16.gmra.mrb[0].mxu0 %v366
        %v461 = vpop.f32.mrb[0].mxu0
        %v462 = vadd.f32 0.0, %v461
        %v463 = vpop.f32.mrb[0].mxu0
        %v464 = vadd.f32 0.0, %v463
        %v465 = vpop.f32.mrb[0].mxu0
        %v466 = vadd.f32 0.0, %v465
        %v467 = vpop.f32.mrb[0].mxu0
        %v468 = vadd.f32 0.0, %v467
        %469 = vmatprep.mubr.bf16.mxu0 0
        %470 = vmatmul.mubr.bf16.gmra.mrb[0].mxu0 %v369
        %v471 = vpop.f32.mrb[0].mxu0
        %v472 = vadd.f32 0.0, %v471
        %v473 = vpop.f32.mrb[0].mxu0
        %v474 = vadd.f32 0.0, %v473
        %v475 = vpop.f32.mrb[0].mxu0
        %v476 = vadd.f32 0.0, %v475
        %v477 = vpop.f32.mrb[0].mxu0
        %v478 = vadd.f32 0.0, %v477
        %479 = vmatprep.mubr.bf16.mxu0 0
        %480 = vmatmul.mubr.bf16.gmra.mrb[0].mxu0 %v372
        %v481 = vpop.f32.mrb[0].mxu0
        %v482 = vadd.f32 0.0, %v481
        %v483 = vpop.f32.mrb[0].mxu0
        %v484 = vadd.f32 0.0, %v483
        %v485 = vpop.f32.mrb[0].mxu0
        %v486 = vadd.f32 0.0, %v485
        %v487 = vpop.f32.mrb[0].mxu0
        %v488 = vadd.f32 0.0, %v487
        %489 = vmatprep.mubr.bf16.mxu0 0
        %490 = vmatmul.mubr.bf16.gmra.mrb[0].mxu0 %v375
        %v491 = vpop.f32.mrb[0].mxu0
        %v492 = vadd.f32 0.0, %v491
        %v493 = vpop.f32.mrb[0].mxu0
        %v494 = vadd.f32 0.0, %v493
        %v495 = vpop.f32.mrb[0].mxu0
        %v496 = vadd.f32 0.0, %v495
        %v497 = vpop.f32.mrb[0].mxu0
        %v498 = vadd.f32 0.0, %v497
        %499 = vmatprep.mubr.bf16.mxu0 0
        %500 = vmatmul.mubr.bf16.gmra.mrb[0].mxu0 %v378
        %v501 = vpop.f32.mrb[0].mxu0
        %v502 = vadd.f32 0.0, %v501
        %v503 = vpop.f32.mrb[0].mxu0
        %v504 = vadd.f32 0.0, %v503
        %v505 = vpop.f32.mrb[0].mxu0
        %v506 = vadd.f32 0.0, %v505
        %v507 = vpop.f32.mrb[0].mxu0
        %v508 = vadd.f32 0.0, %v507
        %509 = vmatprep.mubr.bf16.mxu0 0
        %510 = vmatmul.mubr.bf16.gmra.mrb[0].mxu0 %v381
        %v511 = vpop.f32.mrb[0].mxu0
        %v512 = vadd.f32 0.0, %v511
        %v513 = vpop.f32.mrb[0].mxu0
        %v514 = vadd.f32 0.0, %v513
        %v515 = vpop.f32.mrb[0].mxu0
        %v516 = vadd.f32 0.0, %v515
        %v517 = vpop.f32.mrb[0].mxu0
        %v518 = vadd.f32 0.0, %v517
        %519 = vmatprep.mubr.bf16.mxu0 0
        %520 = vmatmul.mubr.bf16.gmra.mrb[0].mxu0 %v384
        %v521 = vpop.f32.mrb[0].mxu0
        %v522 = vadd.f32 0.0, %v521
        %v523 = vpop.f32.mrb[0].mxu0
        %v524 = vadd.f32 0.0, %v523
        %v525 = vpop.f32.mrb[0].mxu0
        %v526 = vadd.f32 0.0, %v525
        %v527 = vpop.f32.mrb[0].mxu0
        %v528 = vadd.f32 0.0, %v527
        %529 = vmatprep.mubr.bf16.mxu0 0
        %530 = vmatmul.mubr.bf16.gmra.mrb[0].mxu0 %v387
        %v531 = vpop.f32.mrb[0].mxu0
        %v532 = vadd.f32 0.0, %v531
        %v533 = vpop.f32.mrb[0].mxu0
        %v534 = vadd.f32 0.0, %v533
        %v535 = vpop.f32.mrb[0].mxu0
        %v536 = vadd.f32 0.0, %v535
        %v537 = vpop.f32.mrb[0].mxu0
        %v538 = vadd.f32 0.0, %v537
        %539 = vmatprep.mubr.bf16.mxu0 0
        %540 = vmatmul.mubr.bf16.gmra.mrb[0].mxu0 %v390
        %v541 = vpop.f32.mrb[0].mxu0
        %v542 = vadd.f32 0.0, %v541
        %v543 = vpop.f32.mrb[0].mxu0
        %v544 = vadd.f32 0.0, %v543
        %v545 = vpop.f32.mrb[0].mxu0
        %v546 = vadd.f32 0.0, %v545
        %v547 = vpop.f32.mrb[0].mxu0
        %v548 = vadd.f32 0.0, %v547
        %549 = vmatprep.mubr.bf16.mxu0 0
        %550 = vmatmul.mubr.bf16.gmra.mrb[0].mxu0 %v393
        %v551 = vpop.f32.mrb[0].mxu0
        %v552 = vadd.f32 0.0, %v551
        %v553 = vpop.f32.mrb[0].mxu0
        %v554 = vadd.f32 0.0, %v553
        %v555 = vpop.f32.mrb[0].mxu0
        %v556 = vadd.f32 0.0, %v555
        %v557 = vpop.f32.mrb[0].mxu0
        %v558 = vadd.f32 0.0, %v557
        %559 = vmatprep.mubr.bf16.mxu0 0
        %560 = vmatmul.mubr.bf16.gmra.mrb[0].mxu0 %v396
        %v561 = vpop.f32.mrb[0].mxu0
        %v562 = vadd.f32 0.0, %v561
        %v563 = vpop.f32.mrb[0].mxu0
        %v564 = vadd.f32 0.0, %v563
        %v565 = vpop.f32.mrb[0].mxu0
        %v566 = vadd.f32 0.0, %v565
        %v567 = vpop.f32.mrb[0].mxu0
        %v568 = vadd.f32 0.0, %v567
        %569 = vmatprep.mubr.bf16.mxu0 0
        %570 = vmatmul.mubr.bf16.gmra.mrb[0].mxu0 %v399
        %v571 = vpop.f32.mrb[0].mxu0
        %v572 = vadd.f32 0.0, %v571
        %v573 = vpop.f32.mrb[0].mxu0
        %v574 = vadd.f32 0.0, %v573
        %v575 = vpop.f32.mrb[0].mxu0
        %v576 = vadd.f32 0.0, %v575
        %v577 = vpop.f32.mrb[0].mxu0
        %v578 = vadd.f32 0.0, %v577
        %579 = vmatprep.mubr.bf16.mxu0 0
        %580 = vmatmul.mubr.bf16.gmra.mrb[0].mxu0 %v402
        %v581 = vpop.f32.mrb[0].mxu0
        %v582 = vadd.f32 0.0, %v581
        %v583 = vpop.f32.mrb[0].mxu0
        %v584 = vadd.f32 0.0, %v583
        %v585 = vpop.f32.mrb[0].mxu0
        %v586 = vadd.f32 0.0, %v585
        %v587 = vpop.f32.mrb[0].mxu0
        %v588 = vadd.f32 0.0, %v587
        %589 = vmatprep.mubr.bf16.mxu0 0
        %590 = vmatmul.mubr.bf16.gmra.mrb[0].mxu0 %v405
        %v591 = vpop.f32.mrb[0].mxu0
        %v592 = vadd.f32 0.0, %v591
        %v593 = vpop.f32.mrb[0].mxu0
        %v594 = vadd.f32 0.0, %v593
        %v595 = vpop.f32.mrb[0].mxu0
        %v596 = vadd.f32 0.0, %v595
        %v597 = vpop.f32.mrb[0].mxu0
        %v598 = vadd.f32 0.0, %v597
        %599 = vdwg.mxu0
        %600 = vmatprep.subr.bf16.mxu0 0
        %601 = vmatpush1.bf16.msra.mxu0 %v336
        %602 = vmatprep.subr.bf16.mxu0 0
        %603 = vmatpush1.bf16.msra.mxu0 %v339
        %604 = vmatprep.subr.bf16.mxu0 0
        %605 = vmatpush1.bf16.msra.mxu0 %v342
        %606 = vmatprep.subr.bf16.mxu0 0
        %607 = vmatpush1.bf16.msra.mxu0 %v345
        %608 = vmatprep.subr.bf16.mxu0 0
        %609 = vmatpush1.bf16.msra.mxu0 0
        %610 = vmatprep.subr.bf16.mxu0 0
        %611 = vmatpush1.bf16.msra.mxu0 0
        %612 = vmatprep.subr.bf16.mxu0 0
        %613 = vmatpush1.bf16.msra.mxu0 0
        %614 = vmatprep.subr.bf16.mxu0 0
        %615 = vmatpush1.bf16.msra.mxu0 0
        %616 = vmatprep.subr.bf16.mxu0 0
        %617 = vmatpush1.bf16.msra.mxu0 0
        %618 = vmatprep.subr.bf16.mxu0 0
        %619 = vmatpush1.bf16.msra.mxu0 0
        %620 = vmatprep.subr.bf16.mxu0 0
        %621 = vmatpush1.bf16.msra.mxu0 0
        %622 = vmatprep.subr.bf16.mxu0 0
        %623 = vmatpush1.bf16.msra.mxu0 0
        %624 = vmatprep.subr.bf16.mxu0 0
        %625 = vmatpush1.bf16.msra.mxu0 0
        %626 = vmatprep.subr.bf16.mxu0 0
        %627 = vmatpush1.bf16.msra.mxu0 0
        %628 = vmatprep.subr.bf16.mxu0 0
        %629 = vmatpush1.bf16.msra.mxu0 0
        %630 = vmatprep.subr.bf16.mxu0 0
        %631 = vmatpush1.bf16.msra.mxu0 0
        %632 = vmatprep.mubr.bf16.mxu0 0
        %633 = vmatmul.mubr.bf16.gmra.mrb[0].mxu0 %v360
        %v634 = vpop.f32.mrb[0].mxu0
        %v635 = vadd.f32 0.0, %v634
        %v636 = vpop.f32.mrb[0].mxu0
        %v637 = vpop.f32.mrb[0].mxu0
        %v638 = vadd.f32 0.0, %v637
        %v639 = vpop.f32.mrb[0].mxu0
        %640 = vmatprep.mubr.bf16.mxu0 0
        %641 = vmatmul.mubr.bf16.gmra.mrb[0].mxu0 %v363
        %v642 = vpop.f32.mrb[0].mxu0
        %v643 = vadd.f32 0.0, %v642
        %v644 = vpop.f32.mrb[0].mxu0
        %v645 = vpop.f32.mrb[0].mxu0
        %v646 = vadd.f32 0.0, %v645
        %v647 = vpop.f32.mrb[0].mxu0
        %648 = vmatprep.mubr.bf16.mxu0 0
        %649 = vmatmul.mubr.bf16.gmra.mrb[0].mxu0 %v366
        %v650 = vpop.f32.mrb[0].mxu0
        %v651 = vadd.f32 0.0, %v650
        %v652 = vpop.f32.mrb[0].mxu0
        %v653 = vpop.f32.mrb[0].mxu0
        %v654 = vadd.f32 0.0, %v653
        %v655 = vpop.f32.mrb[0].mxu0
        %656 = vmatprep.mubr.bf16.mxu0 0
        %657 = vmatmul.mubr.bf16.gmra.mrb[0].mxu0 %v369
        %v658 = vpop.f32.mrb[0].mxu0
        %v659 = vadd.f32 0.0, %v658
        %v660 = vpop.f32.mrb[0].mxu0
        %v661 = vpop.f32.mrb[0].mxu0
        %v662 = vadd.f32 0.0, %v661
        %v663 = vpop.f32.mrb[0].mxu0
        %664 = vmatprep.mubr.bf16.mxu0 0
        %665 = vmatmul.mubr.bf16.gmra.mrb[0].mxu0 %v372
        %v666 = vpop.f32.mrb[0].mxu0
        %v667 = vadd.f32 0.0, %v666
        %v668 = vpop.f32.mrb[0].mxu0
        %v669 = vpop.f32.mrb[0].mxu0
        %v670 = vadd.f32 0.0, %v669
        %v671 = vpop.f32.mrb[0].mxu0
        %672 = vmatprep.mubr.bf16.mxu0 0
        %673 = vmatmul.mubr.bf16.gmra.mrb[0].mxu0 %v375
        %v674 = vpop.f32.mrb[0].mxu0
        %v675 = vadd.f32 0.0, %v674
        %v676 = vpop.f32.mrb[0].mxu0
        %v677 = vpop.f32.mrb[0].mxu0
        %v678 = vadd.f32 0.0, %v677
        %v679 = vpop.f32.mrb[0].mxu0
        %680 = vmatprep.mubr.bf16.mxu0 0
        %681 = vmatmul.mubr.bf16.gmra.mrb[0].mxu0 %v378
        %v682 = vpop.f32.mrb[0].mxu0
        %v683 = vadd.f32 0.0, %v682
        %v684 = vpop.f32.mrb[0].mxu0
        %v685 = vpop.f32.mrb[0].mxu0
        %v686 = vadd.f32 0.0, %v685
        %v687 = vpop.f32.mrb[0].mxu0
        %688 = vmatprep.mubr.bf16.mxu0 0
        %689 = vmatmul.mubr.bf16.gmra.mrb[0].mxu0 %v381
        %v690 = vpop.f32.mrb[0].mxu0
        %v691 = vadd.f32 0.0, %v690
        %v692 = vpop.f32.mrb[0].mxu0
        %v693 = vpop.f32.mrb[0].mxu0
        %v694 = vadd.f32 0.0, %v693
        %v695 = vpop.f32.mrb[0].mxu0
        %696 = vmatprep.mubr.bf16.mxu0 0
        %697 = vmatmul.mubr.bf16.gmra.mrb[0].mxu0 %v384
        %v698 = vpop.f32.mrb[0].mxu0
        %v699 = vadd.f32 0.0, %v698
        %v700 = vpop.f32.mrb[0].mxu0
        %v701 = vpop.f32.mrb[0].mxu0
        %v702 = vadd.f32 0.0, %v701
        %v703 = vpop.f32.mrb[0].mxu0
        %704 = vmatprep.mubr.bf16.mxu0 0
        %705 = vmatmul.mubr.bf16.gmra.mrb[0].mxu0 %v387
        %v706 = vpop.f32.mrb[0].mxu0
        %v707 = vadd.f32 0.0, %v706
        %v708 = vpop.f32.mrb[0].mxu0
        %v709 = vpop.f32.mrb[0].mxu0
        %v710 = vadd.f32 0.0, %v709
        %v711 = vpop.f32.mrb[0].mxu0
        %712 = vmatprep.mubr.bf16.mxu0 0
        %713 = vmatmul.mubr.bf16.gmra.mrb[0].mxu0 %v390
        %v714 = vpop.f32.mrb[0].mxu0
        %v715 = vadd.f32 0.0, %v714
        %v716 = vpop.f32.mrb[0].mxu0
        %v717 = vpop.f32.mrb[0].mxu0
        %v718 = vadd.f32 0.0, %v717
        %v719 = vpop.f32.mrb[0].mxu0
        %720 = vmatprep.mubr.bf16.mxu0 0
        %721 = vmatmul.mubr.bf16.gmra.mrb[0].mxu0 %v393
        %v722 = vpop.f32.mrb[0].mxu0
        %v723 = vadd.f32 0.0, %v722
        %v724 = vpop.f32.mrb[0].mxu0
        %v725 = vpop.f32.mrb[0].mxu0
        %v726 = vadd.f32 0.0, %v725
        %v727 = vpop.f32.mrb[0].mxu0
        %728 = vmatprep.mubr.bf16.mxu0 0
        %729 = vmatmul.mubr.bf16.gmra.mrb[0].mxu0 %v396
        %v730 = vpop.f32.mrb[0].mxu0
        %v731 = vadd.f32 0.0, %v730
        %v732 = vpop.f32.mrb[0].mxu0
        %v733 = vpop.f32.mrb[0].mxu0
        %v734 = vadd.f32 0.0, %v733
        %v735 = vpop.f32.mrb[0].mxu0
        %736 = vmatprep.mubr.bf16.mxu0 0
        %737 = vmatmul.mubr.bf16.gmra.mrb[0].mxu0 %v399
        %v738 = vpop.f32.mrb[0].mxu0
        %v739 = vadd.f32 0.0, %v738
        %v740 = vpop.f32.mrb[0].mxu0
        %v741 = vpop.f32.mrb[0].mxu0
        %v742 = vadd.f32 0.0, %v741
        %v743 = vpop.f32.mrb[0].mxu0
        %744 = vmatprep.mubr.bf16.mxu0 0
        %745 = vmatmul.mubr.bf16.gmra.mrb[0].mxu0 %v402
        %v746 = vpop.f32.mrb[0].mxu0
        %v747 = vadd.f32 0.0, %v746
        %v748 = vpop.f32.mrb[0].mxu0
        %v749 = vpop.f32.mrb[0].mxu0
        %v750 = vadd.f32 0.0, %v749
        %v751 = vpop.f32.mrb[0].mxu0
        %752 = vmatprep.mubr.bf16.mxu0 0
        %753 = vmatmul.mubr.bf16.gmra.mrb[0].mxu0 %v405
        %v754 = vpop.f32.mrb[0].mxu0
        %v755 = vadd.f32 0.0, %v754
        %v756 = vpop.f32.mrb[0].mxu0
        %v757 = vpop.f32.mrb[0].mxu0
        %v758 = vadd.f32 0.0, %v757
        %v759 = vpop.f32.mrb[0].mxu0
        %760 = vdwg.mxu0
        %v761 = vpack.c.bf16 %v446, %v442
        %v762 = vpack.c.bf16 %v448, %v444
        %v763 = vpack.c.bf16 %v638, %v635
        %v764 = vpack.c.bf16 %v456, %v452
        %v765 = vpack.c.bf16 %v458, %v454
        %v766 = vpack.c.bf16 %v646, %v643
        %v767 = vpack.c.bf16 %v466, %v462
        %v768 = vpack.c.bf16 %v468, %v464
        %v769 = vpack.c.bf16 %v654, %v651
        %v770 = vpack.c.bf16 %v476, %v472
        %v771 = vpack.c.bf16 %v478, %v474
        %v772 = vpack.c.bf16 %v662, %v659
        %v773 = vpack.c.bf16 %v486, %v482
        %v774 = vpack.c.bf16 %v488, %v484
        %v775 = vpack.c.bf16 %v670, %v667
        %v776 = vpack.c.bf16 %v496, %v492
        %v777 = vpack.c.bf16 %v498, %v494
        %v778 = vpack.c.bf16 %v678, %v675
        %v779 = vpack.c.bf16 %v506, %v502
        %v780 = vpack.c.bf16 %v508, %v504
        %v781 = vpack.c.bf16 %v686, %v683
        %v782 = vpack.c.bf16 %v516, %v512
        %v783 = vpack.c.bf16 %v518, %v514
        %v784 = vpack.c.bf16 %v694, %v691
        %v785 = vpack.c.bf16 %v526, %v522
        %v786 = vpack.c.bf16 %v528, %v524
        %v787 = vpack.c.bf16 %v702, %v699
        %v788 = vpack.c.bf16 %v536, %v532
        %v789 = vpack.c.bf16 %v538, %v534
        %v790 = vpack.c.bf16 %v710, %v707
        %v791 = vpack.c.bf16 %v546, %v542
        %v792 = vpack.c.bf16 %v548, %v544
        %v793 = vpack.c.bf16 %v718, %v715
        %v794 = vpack.c.bf16 %v556, %v552
        %v795 = vpack.c.bf16 %v558, %v554
        %v796 = vpack.c.bf16 %v726, %v723
        %v797 = vpack.c.bf16 %v566, %v562
        %v798 = vpack.c.bf16 %v568, %v564
        %v799 = vpack.c.bf16 %v734, %v731
        %v800 = vpack.c.bf16 %v576, %v572
        %v801 = vpack.c.bf16 %v578, %v574
        %v802 = vpack.c.bf16 %v742, %v739
        %v803 = vpack.c.bf16 %v586, %v582
        %v804 = vpack.c.bf16 %v588, %v584
        %v805 = vpack.c.bf16 %v750, %v747
        %v806 = vpack.c.bf16 %v596, %v592
        %v807 = vpack.c.bf16 %v598, %v594
        %v808 = vpack.c.bf16 %v758, %v755
        %809 = vst [vmem:[#allocation2] sm:$0xff] %v761
        %810 = vst [vmem:[#allocation2 + $0x8] sm:$0xff] %v762
        %811 = vst [vmem:[#allocation2 + $0x10] sm:$0xff] %v763
        %812 = vst [vmem:[#allocation2 + $0x18] sm:$0xff] %v764
        %813 = vst [vmem:[#allocation2 + $0x20] sm:$0xff] %v765
        %814 = vst [vmem:[#allocation2 + $0x28] sm:$0xff] %v766
        %815 = vst [vmem:[#allocation2 + $0x30] sm:$0xff] %v767
        %816 = vst [vmem:[#allocation2 + $0x38] sm:$0xff] %v768
        %817 = vst [vmem:[#allocation2 + $0x40] sm:$0xff] %v769
        %818 = vst [vmem:[#allocation2 + $0x48] sm:$0xff] %v770
        %819 = vst [vmem:[#allocation2 + $0x50] sm:$0xff] %v771
        %820 = vst [vmem:[#allocation2 + $0x58] sm:$0xff] %v772
        %821 = vst [vmem:[#allocation2 + $0x60] sm:$0xff] %v773
        %822 = vst [vmem:[#allocation2 + $0x68] sm:$0xff] %v774
        %823 = vst [vmem:[#allocation2 + $0x70] sm:$0xff] %v775
        %824 = vst [vmem:[#allocation2 + $0x78] sm:$0xff] %v776
        %825 = vst [vmem:[#allocation2 + $0x80] sm:$0xff] %v777
        %826 = vst [vmem:[#allocation2 + $0x88] sm:$0xff] %v778
        %827 = vst [vmem:[#allocation2 + $0x90] sm:$0xff] %v779
        %828 = vst [vmem:[#allocation2 + $0x98] sm:$0xff] %v780
        %829 = vst [vmem:[#allocation2 + $0xa0] sm:$0xff] %v781
        %830 = vst [vmem:[#allocation2 + $0xa8] sm:$0xff] %v782
        %831 = vst [vmem:[#allocation2 + $0xb0] sm:$0xff] %v783
        %832 = vst [vmem:[#allocation2 + $0xb8] sm:$0xff] %v784
        %833 = vst [vmem:[#allocation2 + $0xc0] sm:$0xff] %v785
        %834 = vst [vmem:[#allocation2 + $0xc8] sm:$0xff] %v786
        %835 = vst [vmem:[#allocation2 + $0xd0] sm:$0xff] %v787
        %836 = vst [vmem:[#allocation2 + $0xd8] sm:$0xff] %v788
        %837 = vst [vmem:[#allocation2 + $0xe0] sm:$0xff] %v789
        %838 = vst [vmem:[#allocation2 + $0xe8] sm:$0xff] %v790
        %839 = vst [vmem:[#allocation2 + $0xf0] sm:$0xff] %v791
        %840 = vst [vmem:[#allocation2 + $0xf8] sm:$0xff] %v792
        %841 = vst [vmem:[#allocation2 + $0x100] sm:$0xff] %v793
        %842 = vst [vmem:[#allocation2 + $0x108] sm:$0xff] %v794
        %843 = vst [vmem:[#allocation2 + $0x110] sm:$0xff] %v795
        %844 = vst [vmem:[#allocation2 + $0x118] sm:$0xff] %v796
        %845 = vst [vmem:[#allocation2 + $0x120] sm:$0xff] %v797
        %846 = vst [vmem:[#allocation2 + $0x128] sm:$0xff] %v798
        %847 = vst [vmem:[#allocation2 + $0x130] sm:$0xff] %v799
        %848 = vst [vmem:[#allocation2 + $0x138] sm:$0xff] %v800
        %849 = vst [vmem:[#allocation2 + $0x140] sm:$0xff] %v801
        %850 = vst [vmem:[#allocation2 + $0x148] sm:$0xff] %v802
        %851 = vst [vmem:[#allocation2 + $0x150] sm:$0xff] %v803
        %852 = vst [vmem:[#allocation2 + $0x158] sm:$0xff] %v804
        %853 = vst [vmem:[#allocation2 + $0x160] sm:$0xff] %v805
        %854 = vst [vmem:[#allocation2 + $0x168] sm:$0xff] %v806
        %855 = vst [vmem:[#allocation2 + $0x170] sm:$0xff] %v807
        %856 = vst [vmem:[#allocation2 + $0x178] sm:$0xff] %v808
        %v857 = vld [vmem:[#allocation2] sm:$0xff]
        %v858 = vld [vmem:[#allocation2 + $0x18] sm:$0xff]
        %v859 = vld [vmem:[#allocation2 + $0x30] sm:$0xff]
        %v860 = vld [vmem:[#allocation2 + $0x48] sm:$0xff]
        %v861 = vld [vmem:[#allocation2 + $0x60] sm:$0xff]
        %v862 = vld [vmem:[#allocation2 + $0x78] sm:$0xff]
        %v863 = vld [vmem:[#allocation2 + $0x90] sm:$0xff]
        %v864 = vld [vmem:[#allocation2 + $0xa8] sm:$0xff]
        %v865 = vld [vmem:[#allocation2 + $0xc0] sm:$0xff]
        %v866 = vld [vmem:[#allocation2 + $0xd8] sm:$0xff]
        %v867 = vld [vmem:[#allocation2 + $0xf0] sm:$0xff]
        %v868 = vld [vmem:[#allocation2 + $0x108] sm:$0xff]
        %v869 = vld [vmem:[#allocation2 + $0x120] sm:$0xff]
        %v870 = vld [vmem:[#allocation2 + $0x138] sm:$0xff]
        %v871 = vld [vmem:[#allocation2 + $0x150] sm:$0xff]
        %v872 = vld [vmem:[#allocation2 + $0x168] sm:$0xff]
        %v873 = vld [vmem:[#allocation2 + $0x8] sm:$0xff]
        %v874 = vld [vmem:[#allocation2 + $0x20] sm:$0xff]
        %v875 = vld [vmem:[#allocation2 + $0x38] sm:$0xff]
        %v876 = vld [vmem:[#allocation2 + $0x50] sm:$0xff]
        %v877 = vld [vmem:[#allocation2 + $0x68] sm:$0xff]
        %v878 = vld [vmem:[#allocation2 + $0x80] sm:$0xff]
        %v879 = vld [vmem:[#allocation2 + $0x98] sm:$0xff]
        %v880 = vld [vmem:[#allocation2 + $0xb0] sm:$0xff]
        %v881 = vld [vmem:[#allocation2 + $0xc8] sm:$0xff]
        %v882 = vld [vmem:[#allocation2 + $0xe0] sm:$0xff]
        %v883 = vld [vmem:[#allocation2 + $0xf8] sm:$0xff]
        %v884 = vld [vmem:[#allocation2 + $0x110] sm:$0xff]
        %v885 = vld [vmem:[#allocation2 + $0x128] sm:$0xff]
        %v886 = vld [vmem:[#allocation2 + $0x140] sm:$0xff]
        %v887 = vld [vmem:[#allocation2 + $0x158] sm:$0xff]
        %v888 = vld [vmem:[#allocation2 + $0x170] sm:$0xff]
        %v889 = vld [vmem:[#allocation2 + $0x10] sm:$0xff]
        %v890 = vld [vmem:[#allocation2 + $0x28] sm:$0xff]
        %v891 = vld [vmem:[#allocation2 + $0x40] sm:$0xff]
        %v892 = vld [vmem:[#allocation2 + $0x58] sm:$0xff]
        %v893 = vld [vmem:[#allocation2 + $0x70] sm:$0xff]
        %v894 = vld [vmem:[#allocation2 + $0x88] sm:$0xff]
        %v895 = vld [vmem:[#allocation2 + $0xa0] sm:$0xff]
        %v896 = vld [vmem:[#allocation2 + $0xb8] sm:$0xff]
        %v897 = vld [vmem:[#allocation2 + $0xd0] sm:$0xff]
        %v898 = vld [vmem:[#allocation2 + $0xe8] sm:$0xff]
        %v899 = vld [vmem:[#allocation2 + $0x100] sm:$0xff]
        %v900 = vld [vmem:[#allocation2 + $0x118] sm:$0xff]
        %v901 = vld [vmem:[#allocation2 + $0x130] sm:$0xff]
        %v902 = vld [vmem:[#allocation2 + $0x148] sm:$0xff]
        %v903 = vld [vmem:[#allocation2 + $0x160] sm:$0xff]
        %v904 = vld [vmem:[#allocation2 + $0x178] sm:$0xff]
        %v905 = vld [vmem:[%s2] sm:$0xff]
        %v906 = vld [vmem:[%s2 + $0x8] sm:$0xff]
        %v907 = vld [vmem:[%s2 + $0x10] sm:$0xff]
        %v908 = vld [vmem:[%s2 + $0x18] sm:$0xff]
        %v909 = vld [vmem:[%s2 + $0x20] sm:$0xff]
        %v910 = vld [vmem:[%s2 + $0x28] sm:$0xff]
        %v911 = vld [vmem:[%s2 + $0x30] sm:$0xff]
        %v912 = vld [vmem:[%s2 + $0x38] sm:$0xff]
        %v913 = vld [vmem:[%s2 + $0x40] sm:$0xff]
        %v914 = vld [vmem:[%s2 + $0x48] sm:$0xff]
        %v915 = vld [vmem:[%s2 + $0x50] sm:$0xff]
        %v916 = vld [vmem:[%s2 + $0x58] sm:$0xff]
        %v917 = vld [vmem:[%s2 + $0x60] sm:$0xff]
        %v918 = vld [vmem:[%s2 + $0x68] sm:$0xff]
        %v919 = vld [vmem:[%s2 + $0x70] sm:$0xff]
        %v920 = vld [vmem:[%s2 + $0x78] sm:$0xff]
        %vm921 = vcmask 261120
        %v923 = vsel %vm921, %v857, 0
        %v926 = vsel %vm921, %v858, 0
        %v929 = vsel %vm921, %v859, 0
        %v932 = vsel %vm921, %v860, 0
        %v935 = vsel %vm921, %v861, 0
        %v938 = vsel %vm921, %v862, 0
        %v941 = vsel %vm921, %v863, 0
        %v944 = vsel %vm921, %v864, 0
        %v947 = vsel %vm921, %v873, 0
        %v950 = vsel %vm921, %v874, 0
        %v953 = vsel %vm921, %v875, 0
        %v956 = vsel %vm921, %v876, 0
        %v959 = vsel %vm921, %v877, 0
        %v962 = vsel %vm921, %v878, 0
        %v965 = vsel %vm921, %v879, 0
        %v968 = vsel %vm921, %v880, 0
        %970 = vmatprep.subr.bf16.mxu0 0
        %971 = vmatpush1.bf16.xpose.msra.mxu0 %v947
        %972 = vmatprep.subr.bf16.mxu0 0
        %973 = vmatpush1.bf16.xpose.msra.mxu0 %v950
        %974 = vmatprep.subr.bf16.mxu0 0
        %975 = vmatpush1.bf16.xpose.msra.mxu0 %v953
        %976 = vmatprep.subr.bf16.mxu0 0
        %977 = vmatpush1.bf16.xpose.msra.mxu0 %v956
        %978 = vmatprep.subr.bf16.mxu0 0
        %979 = vmatpush1.bf16.xpose.msra.mxu0 %v959
        %980 = vmatprep.subr.bf16.mxu0 0
        %981 = vmatpush1.bf16.xpose.msra.mxu0 %v962
        %982 = vmatprep.subr.bf16.mxu0 0
        %983 = vmatpush1.bf16.xpose.msra.mxu0 %v965
        %984 = vmatprep.subr.bf16.mxu0 0
        %985 = vmatpush1.bf16.xpose.msra.mxu0 %v968
        %986 = vmatprep.subr.bf16.mxu0 0
        %987 = vmatpush1.bf16.xpose.msra.mxu0 0
        %988 = vmatprep.subr.bf16.mxu0 0
        %989 = vmatpush1.bf16.xpose.msra.mxu0 0
        %990 = vmatprep.subr.bf16.mxu0 0
        %991 = vmatpush1.bf16.xpose.msra.mxu0 0
        %992 = vmatprep.subr.bf16.mxu0 0
        %993 = vmatpush1.bf16.xpose.msra.mxu0 0
        %994 = vmatprep.subr.bf16.mxu0 0
        %995 = vmatpush1.bf16.xpose.msra.mxu0 0
        %996 = vmatprep.subr.bf16.mxu0 0
        %997 = vmatpush1.bf16.xpose.msra.mxu0 0
        %998 = vmatprep.subr.bf16.mxu0 0
        %999 = vmatpush1.bf16.xpose.msra.mxu0 0
        %1000 = vmatprep.subr.bf16.mxu0 0
        %1001 = vmatpush1.bf16.xpose.msra.mxu0 0
        %1002 = vmatprep.mubr.bf16.mxu0 0
        %1003 = vmatmul.mubr.bf16.gmra.mrb[0].mxu0 %v923
        %v1004 = vpop.f32.mrb[0].mxu0
        %v1005 = vadd.f32 %v905, %v1004
        %v1006 = vpop.f32.mrb[0].mxu0
        %v1007 = vpop.f32.mrb[0].mxu0
        %v1008 = vadd.f32 %v906, %v1007
        %v1009 = vpop.f32.mrb[0].mxu0
        %1010 = vmatprep.mubr.bf16.mxu0 0
        %1011 = vmatmul.mubr.bf16.gmra.mrb[0].mxu0 %v926
        %v1012 = vpop.f32.mrb[0].mxu0
        %v1013 = vadd.f32 %v907, %v1012
        %v1014 = vpop.f32.mrb[0].mxu0
        %v1015 = vpop.f32.mrb[0].mxu0
        %v1016 = vadd.f32 %v908, %v1015
        %v1017 = vpop.f32.mrb[0].mxu0
        %1018 = vmatprep.mubr.bf16.mxu0 0
        %1019 = vmatmul.mubr.bf16.gmra.mrb[0].mxu0 %v929
        %v1020 = vpop.f32.mrb[0].mxu0
        %v1021 = vadd.f32 %v909, %v1020
        %v1022 = vpop.f32.mrb[0].mxu0
        %v1023 = vpop.f32.mrb[0].mxu0
        %v1024 = vadd.f32 %v910, %v1023
        %v1025 = vpop.f32.mrb[0].mxu0
        %1026 = vmatprep.mubr.bf16.mxu0 0
        %1027 = vmatmul.mubr.bf16.gmra.mrb[0].mxu0 %v932
        %v1028 = vpop.f32.mrb[0].mxu0
        %v1029 = vadd.f32 %v911, %v1028
        %v1030 = vpop.f32.mrb[0].mxu0
        %v1031 = vpop.f32.mrb[0].mxu0
        %v1032 = vadd.f32 %v912, %v1031
        %v1033 = vpop.f32.mrb[0].mxu0
        %1034 = vmatprep.mubr.bf16.mxu0 0
        %1035 = vmatmul.mubr.bf16.gmra.mrb[0].mxu0 %v935
        %v1036 = vpop.f32.mrb[0].mxu0
        %v1037 = vadd.f32 %v913, %v1036
        %v1038 = vpop.f32.mrb[0].mxu0
        %v1039 = vpop.f32.mrb[0].mxu0
        %v1040 = vadd.f32 %v914, %v1039
        %v1041 = vpop.f32.mrb[0].mxu0
        %1042 = vmatprep.mubr.bf16.mxu0 0
        %1043 = vmatmul.mubr.bf16.gmra.mrb[0].mxu0 %v938
        %v1044 = vpop.f32.mrb[0].mxu0
        %v1045 = vadd.f32 %v915, %v1044
        %v1046 = vpop.f32.mrb[0].mxu0
        %v1047 = vpop.f32.mrb[0].mxu0
        %v1048 = vadd.f32 %v916, %v1047
        %v1049 = vpop.f32.mrb[0].mxu0
        %1050 = vmatprep.mubr.bf16.mxu0 0
        %1051 = vmatmul.mubr.bf16.gmra.mrb[0].mxu0 %v941
        %v1052 = vpop.f32.mrb[0].mxu0
        %v1053 = vadd.f32 %v917, %v1052
        %v1054 = vpop.f32.mrb[0].mxu0
        %v1055 = vpop.f32.mrb[0].mxu0
        %v1056 = vadd.f32 %v918, %v1055
        %v1057 = vpop.f32.mrb[0].mxu0
        %1058 = vmatprep.mubr.bf16.mxu0 0
        %1059 = vmatmul.mubr.bf16.gmra.mrb[0].mxu0 %v944
        %v1060 = vpop.f32.mrb[0].mxu0
        %v1061 = vadd.f32 %v919, %v1060
        %v1062 = vpop.f32.mrb[0].mxu0
        %v1063 = vpop.f32.mrb[0].mxu0
        %v1064 = vadd.f32 %v920, %v1063
        %v1065 = vpop.f32.mrb[0].mxu0
        %1066 = vdwg.mxu0
        %v1068 = vsel %vm921, %v865, 0
        %v1071 = vsel %vm921, %v866, 0
        %v1074 = vsel %vm921, %v867, 0
        %v1077 = vsel %vm921, %v868, 0
        %v1080 = vsel %vm921, %v869, 0
        %v1083 = vsel %vm921, %v870, 0
        %v1086 = vsel %vm921, %v871, 0
        %v1089 = vsel %vm921, %v872, 0
        %v1092 = vsel %vm921, %v881, 0
        %v1095 = vsel %vm921, %v882, 0
        %v1098 = vsel %vm921, %v883, 0
        %v1101 = vsel %vm921, %v884, 0
        %v1104 = vsel %vm921, %v885, 0
        %v1107 = vsel %vm921, %v886, 0
        %v1110 = vsel %vm921, %v887, 0
        %v1113 = vsel %vm921, %v888, 0
        %1115 = vmatprep.subr.bf16.mxu0 0
        %1116 = vmatpush1.bf16.xpose.msra.mxu0 %v1092
        %1117 = vmatprep.subr.bf16.mxu0 0
        %1118 = vmatpush1.bf16.xpose.msra.mxu0 %v1095
        %1119 = vmatprep.subr.bf16.mxu0 0
        %1120 = vmatpush1.bf16.xpose.msra.mxu0 %v1098
        %1121 = vmatprep.subr.bf16.mxu0 0
        %1122 = vmatpush1.bf16.xpose.msra.mxu0 %v1101
        %1123 = vmatprep.subr.bf16.mxu0 0
        %1124 = vmatpush1.bf16.xpose.msra.mxu0 %v1104
        %1125 = vmatprep.subr.bf16.mxu0 0
        %1126 = vmatpush1.bf16.xpose.msra.mxu0 %v1107
        %1127 = vmatprep.subr.bf16.mxu0 0
        %1128 = vmatpush1.bf16.xpose.msra.mxu0 %v1110
        %1129 = vmatprep.subr.bf16.mxu0 0
        %1130 = vmatpush1.bf16.xpose.msra.mxu0 %v1113
        %1131 = vmatprep.subr.bf16.mxu0 0
        %1132 = vmatpush1.bf16.xpose.msra.mxu0 0
        %1133 = vmatprep.subr.bf16.mxu0 0
        %1134 = vmatpush1.bf16.xpose.msra.mxu0 0
        %1135 = vmatprep.subr.bf16.mxu0 0
        %1136 = vmatpush1.bf16.xpose.msra.mxu0 0
        %1137 = vmatprep.subr.bf16.mxu0 0
        %1138 = vmatpush1.bf16.xpose.msra.mxu0 0
        %1139 = vmatprep.subr.bf16.mxu0 0
        %1140 = vmatpush1.bf16.xpose.msra.mxu0 0
        %1141 = vmatprep.subr.bf16.mxu0 0
        %1142 = vmatpush1.bf16.xpose.msra.mxu0 0
        %1143 = vmatprep.subr.bf16.mxu0 0
        %1144 = vmatpush1.bf16.xpose.msra.mxu0 0
        %1145 = vmatprep.subr.bf16.mxu0 0
        %1146 = vmatpush1.bf16.xpose.msra.mxu0 0
        %1147 = vmatprep.mubr.bf16.mxu0 0
        %1148 = vmatmul.mubr.bf16.gmra.mrb[0].mxu0 %v1068
        %v1149 = vpop.f32.mrb[0].mxu0
        %v1150 = vadd.f32 %v905, %v1149
        %v1151 = vpop.f32.mrb[0].mxu0
        %v1152 = vpop.f32.mrb[0].mxu0
        %v1153 = vadd.f32 %v906, %v1152
        %v1154 = vpop.f32.mrb[0].mxu0
        %1155 = vmatprep.mubr.bf16.mxu0 0
        %1156 = vmatmul.mubr.bf16.gmra.mrb[0].mxu0 %v1071
        %v1157 = vpop.f32.mrb[0].mxu0
        %v1158 = vadd.f32 %v907, %v1157
        %v1159 = vpop.f32.mrb[0].mxu0
        %v1160 = vpop.f32.mrb[0].mxu0
        %v1161 = vadd.f32 %v908, %v1160
        %v1162 = vpop.f32.mrb[0].mxu0
        %1163 = vmatprep.mubr.bf16.mxu0 0
        %1164 = vmatmul.mubr.bf16.gmra.mrb[0].mxu0 %v1074
        %v1165 = vpop.f32.mrb[0].mxu0
        %v1166 = vadd.f32 %v909, %v1165
        %v1167 = vpop.f32.mrb[0].mxu0
        %v1168 = vpop.f32.mrb[0].mxu0
        %v1169 = vadd.f32 %v910, %v1168
        %v1170 = vpop.f32.mrb[0].mxu0
        %1171 = vmatprep.mubr.bf16.mxu0 0
        %1172 = vmatmul.mubr.bf16.gmra.mrb[0].mxu0 %v1077
        %v1173 = vpop.f32.mrb[0].mxu0
        %v1174 = vadd.f32 %v911, %v1173
        %v1175 = vpop.f32.mrb[0].mxu0
        %v1176 = vpop.f32.mrb[0].mxu0
        %v1177 = vadd.f32 %v912, %v1176
        %v1178 = vpop.f32.mrb[0].mxu0
        %1179 = vmatprep.mubr.bf16.mxu0 0
        %1180 = vmatmul.mubr.bf16.gmra.mrb[0].mxu0 %v1080
        %v1181 = vpop.f32.mrb[0].mxu0
        %v1182 = vadd.f32 %v913, %v1181
        %v1183 = vpop.f32.mrb[0].mxu0
        %v1184 = vpop.f32.mrb[0].mxu0
        %v1185 = vadd.f32 %v914, %v1184
        %v1186 = vpop.f32.mrb[0].mxu0
        %1187 = vmatprep.mubr.bf16.mxu0 0
        %1188 = vmatmul.mubr.bf16.gmra.mrb[0].mxu0 %v1083
        %v1189 = vpop.f32.mrb[0].mxu0
        %v1190 = vadd.f32 %v915, %v1189
        %v1191 = vpop.f32.mrb[0].mxu0
        %v1192 = vpop.f32.mrb[0].mxu0
        %v1193 = vadd.f32 %v916, %v1192
        %v1194 = vpop.f32.mrb[0].mxu0
        %1195 = vmatprep.mubr.bf16.mxu0 0
        %1196 = vmatmul.mubr.bf16.gmra.mrb[0].mxu0 %v1086
        %v1197 = vpop.f32.mrb[0].mxu0
        %v1198 = vadd.f32 %v917, %v1197
        %v1199 = vpop.f32.mrb[0].mxu0
        %v1200 = vpop.f32.mrb[0].mxu0
        %v1201 = vadd.f32 %v918, %v1200
        %v1202 = vpop.f32.mrb[0].mxu0
        %1203 = vmatprep.mubr.bf16.mxu0 0
        %1204 = vmatmul.mubr.bf16.gmra.mrb[0].mxu0 %v1089
        %v1205 = vpop.f32.mrb[0].mxu0
        %v1206 = vadd.f32 %v919, %v1205
        %v1207 = vpop.f32.mrb[0].mxu0
        %v1208 = vpop.f32.mrb[0].mxu0
        %v1209 = vadd.f32 %v920, %v1208
        %v1210 = vpop.f32.mrb[0].mxu0
        %1211 = vdwg.mxu0
        %1212 = vmax.xlane.f32.xlu0 %v1005
        %v1213 = vpop.xlane.xlu0 %1212
        %1214 = vmax.xlane.f32.xlu0 %v1008
        %v1215 = vpop.xlane.xlu0 %1214
        %1216 = vmax.xlane.f32.xlu0 %v1013
        %v1217 = vpop.xlane.xlu0 %1216
        %1218 = vmax.xlane.f32.xlu0 %v1016
        %v1219 = vpop.xlane.xlu0 %1218
        %1220 = vmax.xlane.f32.xlu0 %v1021
        %v1221 = vpop.xlane.xlu0 %1220
        %1222 = vmax.xlane.f32.xlu0 %v1024
        %v1223 = vpop.xlane.xlu0 %1222
        %1224 = vmax.xlane.f32.xlu0 %v1029
        %v1225 = vpop.xlane.xlu0 %1224
        %1226 = vmax.xlane.f32.xlu0 %v1032
        %v1227 = vpop.xlane.xlu0 %1226
        %1228 = vmax.xlane.f32.xlu0 %v1037
        %v1229 = vpop.xlane.xlu0 %1228
        %1230 = vmax.xlane.f32.xlu0 %v1040
        %v1231 = vpop.xlane.xlu0 %1230
        %1232 = vmax.xlane.f32.xlu0 %v1045
        %v1233 = vpop.xlane.xlu0 %1232
        %1234 = vmax.xlane.f32.xlu0 %v1048
        %v1235 = vpop.xlane.xlu0 %1234
        %1236 = vmax.xlane.f32.xlu0 %v1053
        %v1237 = vpop.xlane.xlu0 %1236
        %1238 = vmax.xlane.f32.xlu0 %v1056
        %v1239 = vpop.xlane.xlu0 %1238
        %1240 = vmax.xlane.f32.xlu0 %v1061
        %v1241 = vpop.xlane.xlu0 %1240
        %1242 = vmax.xlane.f32.xlu0 %v1064
        %v1243 = vpop.xlane.xlu0 %1242
        %1244 = vmax.xlane.f32.xlu0 %v1150
        %v1245 = vpop.xlane.xlu0 %1244
        %1246 = vmax.xlane.f32.xlu0 %v1153
        %v1247 = vpop.xlane.xlu0 %1246
        %1248 = vmax.xlane.f32.xlu0 %v1158
        %v1249 = vpop.xlane.xlu0 %1248
        %1250 = vmax.xlane.f32.xlu0 %v1161
        %v1251 = vpop.xlane.xlu0 %1250
        %1252 = vmax.xlane.f32.xlu0 %v1166
        %v1253 = vpop.xlane.xlu0 %1252
        %1254 = vmax.xlane.f32.xlu0 %v1169
        %v1255 = vpop.xlane.xlu0 %1254
        %1256 = vmax.xlane.f32.xlu0 %v1174
        %v1257 = vpop.xlane.xlu0 %1256
        %1258 = vmax.xlane.f32.xlu0 %v1177
        %v1259 = vpop.xlane.xlu0 %1258
        %1260 = vmax.xlane.f32.xlu0 %v1182
        %v1261 = vpop.xlane.xlu0 %1260
        %1262 = vmax.xlane.f32.xlu0 %v1185
        %v1263 = vpop.xlane.xlu0 %1262
        %1264 = vmax.xlane.f32.xlu0 %v1190
        %v1265 = vpop.xlane.xlu0 %1264
        %1266 = vmax.xlane.f32.xlu0 %v1193
        %v1267 = vpop.xlane.xlu0 %1266
        %1268 = vmax.xlane.f32.xlu0 %v1198
        %v1269 = vpop.xlane.xlu0 %1268
        %1270 = vmax.xlane.f32.xlu0 %v1201
        %v1271 = vpop.xlane.xlu0 %1270
        %1272 = vmax.xlane.f32.xlu0 %v1206
        %v1273 = vpop.xlane.xlu0 %1272
        %1274 = vmax.xlane.f32.xlu0 %v1209
        %v1275 = vpop.xlane.xlu0 %1274
        %v1276 = vsub.f32 %v1005, %v1213
        %v1277 = vsub.f32 %v1008, %v1215
        %v1278 = vsub.f32 %v1013, %v1217
        %v1279 = vsub.f32 %v1016, %v1219
        %v1280 = vsub.f32 %v1021, %v1221
        %v1281 = vsub.f32 %v1024, %v1223
        %v1282 = vsub.f32 %v1029, %v1225
        %v1283 = vsub.f32 %v1032, %v1227
        %v1284 = vsub.f32 %v1037, %v1229
        %v1285 = vsub.f32 %v1040, %v1231
        %v1286 = vsub.f32 %v1045, %v1233
        %v1287 = vsub.f32 %v1048, %v1235
        %v1288 = vsub.f32 %v1053, %v1237
        %v1289 = vsub.f32 %v1056, %v1239
        %v1290 = vsub.f32 %v1061, %v1241
        %v1291 = vsub.f32 %v1064, %v1243
        %v1292 = vsub.f32 %v1150, %v1245
        %v1293 = vsub.f32 %v1153, %v1247
        %v1294 = vsub.f32 %v1158, %v1249
        %v1295 = vsub.f32 %v1161, %v1251
        %v1296 = vsub.f32 %v1166, %v1253
        %v1297 = vsub.f32 %v1169, %v1255
        %v1298 = vsub.f32 %v1174, %v1257
        %v1299 = vsub.f32 %v1177, %v1259
        %v1300 = vsub.f32 %v1182, %v1261
        %v1301 = vsub.f32 %v1185, %v1263
        %v1302 = vsub.f32 %v1190, %v1265
        %v1303 = vsub.f32 %v1193, %v1267
        %v1304 = vsub.f32 %v1198, %v1269
        %v1305 = vsub.f32 %v1201, %v1271
        %v1306 = vsub.f32 %v1206, %v1273
        %v1307 = vsub.f32 %v1209, %v1275
        %v1308 = vmul.f32 %v1276, 1.442695
        %v1309 = vpow.pop %v1308
        %v1310 = vmul.f32 %v1277, 1.442695
        %v1311 = vpow.pop %v1310
        %v1312 = vmul.f32 %v1278, 1.442695
        %v1313 = vpow.pop %v1312
        %v1314 = vmul.f32 %v1279, 1.442695
        %v1315 = vpow.pop %v1314
        %v1316 = vmul.f32 %v1280, 1.442695
        %v1317 = vpow.pop %v1316
        %v1318 = vmul.f32 %v1281, 1.442695
        %v1319 = vpow.pop %v1318
        %v1320 = vmul.f32 %v1282, 1.442695
        %v1321 = vpow.pop %v1320
        %v1322 = vmul.f32 %v1283, 1.442695
        %v1323 = vpow.pop %v1322
        %v1324 = vmul.f32 %v1284, 1.442695
        %v1325 = vpow.pop %v1324
        %v1326 = vmul.f32 %v1285, 1.442695
        %v1327 = vpow.pop %v1326
        %v1328 = vmul.f32 %v1286, 1.442695
        %v1329 = vpow.pop %v1328
        %v1330 = vmul.f32 %v1287, 1.442695
        %v1331 = vpow.pop %v1330
        %v1332 = vmul.f32 %v1288, 1.442695
        %v1333 = vpow.pop %v1332
        %v1334 = vmul.f32 %v1289, 1.442695
        %v1335 = vpow.pop %v1334
        %v1336 = vmul.f32 %v1290, 1.442695
        %v1337 = vpow.pop %v1336
        %v1338 = vmul.f32 %v1291, 1.442695
        %v1339 = vpow.pop %v1338
        %v1340 = vmul.f32 %v1292, 1.442695
        %v1341 = vpow.pop %v1340
        %v1342 = vmul.f32 %v1293, 1.442695
        %v1343 = vpow.pop %v1342
        %v1344 = vmul.f32 %v1294, 1.442695
        %v1345 = vpow.pop %v1344
        %v1346 = vmul.f32 %v1295, 1.442695
        %v1347 = vpow.pop %v1346
        %v1348 = vmul.f32 %v1296, 1.442695
        %v1349 = vpow.pop %v1348
        %v1350 = vmul.f32 %v1297, 1.442695
        %v1351 = vpow.pop %v1350
        %v1352 = vmul.f32 %v1298, 1.442695
        %v1353 = vpow.pop %v1352
        %v1354 = vmul.f32 %v1299, 1.442695
        %v1355 = vpow.pop %v1354
        %v1356 = vmul.f32 %v1300, 1.442695
        %v1357 = vpow.pop %v1356
        %v1358 = vmul.f32 %v1301, 1.442695
        %v1359 = vpow.pop %v1358
        %v1360 = vmul.f32 %v1302, 1.442695
        %v1361 = vpow.pop %v1360
        %v1362 = vmul.f32 %v1303, 1.442695
        %v1363 = vpow.pop %v1362
        %v1364 = vmul.f32 %v1304, 1.442695
        %v1365 = vpow.pop %v1364
        %v1366 = vmul.f32 %v1305, 1.442695
        %v1367 = vpow.pop %v1366
        %v1368 = vmul.f32 %v1306, 1.442695
        %v1369 = vpow.pop %v1368
        %v1370 = vmul.f32 %v1307, 1.442695
        %v1371 = vpow.pop %v1370
        %1372 = vadd.xlane.f32.xlu0 %v1309
        %v1373 = vpop.xlane.xlu0 %1372
        %1374 = vadd.xlane.f32.xlu0 %v1311
        %v1375 = vpop.xlane.xlu0 %1374
        %1376 = vadd.xlane.f32.xlu0 %v1313
        %v1377 = vpop.xlane.xlu0 %1376
        %1378 = vadd.xlane.f32.xlu0 %v1315
        %v1379 = vpop.xlane.xlu0 %1378
        %1380 = vadd.xlane.f32.xlu0 %v1317
        %v1381 = vpop.xlane.xlu0 %1380
        %1382 = vadd.xlane.f32.xlu0 %v1319
        %v1383 = vpop.xlane.xlu0 %1382
        %1384 = vadd.xlane.f32.xlu0 %v1321
        %v1385 = vpop.xlane.xlu0 %1384
        %1386 = vadd.xlane.f32.xlu0 %v1323
        %v1387 = vpop.xlane.xlu0 %1386
        %1388 = vadd.xlane.f32.xlu0 %v1325
        %v1389 = vpop.xlane.xlu0 %1388
        %1390 = vadd.xlane.f32.xlu0 %v1327
        %v1391 = vpop.xlane.xlu0 %1390
        %1392 = vadd.xlane.f32.xlu0 %v1329
        %v1393 = vpop.xlane.xlu0 %1392
        %1394 = vadd.xlane.f32.xlu0 %v1331
        %v1395 = vpop.xlane.xlu0 %1394
        %1396 = vadd.xlane.f32.xlu0 %v1333
        %v1397 = vpop.xlane.xlu0 %1396
        %1398 = vadd.xlane.f32.xlu0 %v1335
        %v1399 = vpop.xlane.xlu0 %1398
        %1400 = vadd.xlane.f32.xlu0 %v1337
        %v1401 = vpop.xlane.xlu0 %1400
        %1402 = vadd.xlane.f32.xlu0 %v1339
        %v1403 = vpop.xlane.xlu0 %1402
        %1404 = vadd.xlane.f32.xlu0 %v1341
        %v1405 = vpop.xlane.xlu0 %1404
        %1406 = vadd.xlane.f32.xlu0 %v1343
        %v1407 = vpop.xlane.xlu0 %1406
        %1408 = vadd.xlane.f32.xlu0 %v1345
        %v1409 = vpop.xlane.xlu0 %1408
        %1410 = vadd.xlane.f32.xlu0 %v1347
        %v1411 = vpop.xlane.xlu0 %1410
        %1412 = vadd.xlane.f32.xlu0 %v1349
        %v1413 = vpop.xlane.xlu0 %1412
        %1414 = vadd.xlane.f32.xlu0 %v1351
        %v1415 = vpop.xlane.xlu0 %1414
        %1416 = vadd.xlane.f32.xlu0 %v1353
        %v1417 = vpop.xlane.xlu0 %1416
        %1418 = vadd.xlane.f32.xlu0 %v1355
        %v1419 = vpop.xlane.xlu0 %1418
        %1420 = vadd.xlane.f32.xlu0 %v1357
        %v1421 = vpop.xlane.xlu0 %1420
        %1422 = vadd.xlane.f32.xlu0 %v1359
        %v1423 = vpop.xlane.xlu0 %1422
        %1424 = vadd.xlane.f32.xlu0 %v1361
        %v1425 = vpop.xlane.xlu0 %1424
        %1426 = vadd.xlane.f32.xlu0 %v1363
        %v1427 = vpop.xlane.xlu0 %1426
        %1428 = vadd.xlane.f32.xlu0 %v1365
        %v1429 = vpop.xlane.xlu0 %1428
        %1430 = vadd.xlane.f32.xlu0 %v1367
        %v1431 = vpop.xlane.xlu0 %1430
        %1432 = vadd.xlane.f32.xlu0 %v1369
        %v1433 = vpop.xlane.xlu0 %1432
        %1434 = vadd.xlane.f32.xlu0 %v1371
        %v1435 = vpop.xlane.xlu0 %1434
        %v1436 = vrcp.pop %v1373
        %v1437 = vrcp.pop %v1375
        %v1438 = vrcp.pop %v1377
        %v1439 = vrcp.pop %v1379
        %v1440 = vrcp.pop %v1381
        %v1441 = vrcp.pop %v1383
        %v1442 = vrcp.pop %v1385
        %v1443 = vrcp.pop %v1387
        %v1444 = vrcp.pop %v1389
        %v1445 = vrcp.pop %v1391
        %v1446 = vrcp.pop %v1393
        %v1447 = vrcp.pop %v1395
        %v1448 = vrcp.pop %v1397
        %v1449 = vrcp.pop %v1399
        %v1450 = vrcp.pop %v1401
        %v1451 = vrcp.pop %v1403
        %v1452 = vrcp.pop %v1405
        %v1453 = vrcp.pop %v1407
        %v1454 = vrcp.pop %v1409
        %v1455 = vrcp.pop %v1411
        %v1456 = vrcp.pop %v1413
        %v1457 = vrcp.pop %v1415
        %v1458 = vrcp.pop %v1417
        %v1459 = vrcp.pop %v1419
        %v1460 = vrcp.pop %v1421
        %v1461 = vrcp.pop %v1423
        %v1462 = vrcp.pop %v1425
        %v1463 = vrcp.pop %v1427
        %v1464 = vrcp.pop %v1429
        %v1465 = vrcp.pop %v1431
        %v1466 = vrcp.pop %v1433
        %v1467 = vrcp.pop %v1435
        %v1468 = vmul.f32 %v1309, %v1436
        %v1469 = vmul.f32 %v1311, %v1437
        %v1470 = vmul.f32 %v1313, %v1438
        %v1471 = vmul.f32 %v1315, %v1439
        %v1472 = vmul.f32 %v1317, %v1440
        %v1473 = vmul.f32 %v1319, %v1441
        %v1474 = vmul.f32 %v1321, %v1442
        %v1475 = vmul.f32 %v1323, %v1443
        %v1476 = vmul.f32 %v1325, %v1444
        %v1477 = vmul.f32 %v1327, %v1445
        %v1478 = vmul.f32 %v1329, %v1446
        %v1479 = vmul.f32 %v1331, %v1447
        %v1480 = vmul.f32 %v1333, %v1448
        %v1481 = vmul.f32 %v1335, %v1449
        %v1482 = vmul.f32 %v1337, %v1450
        %v1483 = vmul.f32 %v1339, %v1451
        %v1484 = vmul.f32 %v1341, %v1452
        %v1485 = vmul.f32 %v1343, %v1453
        %v1486 = vmul.f32 %v1345, %v1454
        %v1487 = vmul.f32 %v1347, %v1455
        %v1488 = vmul.f32 %v1349, %v1456
        %v1489 = vmul.f32 %v1351, %v1457
        %v1490 = vmul.f32 %v1353, %v1458
        %v1491 = vmul.f32 %v1355, %v1459
        %v1492 = vmul.f32 %v1357, %v1460
        %v1493 = vmul.f32 %v1359, %v1461
        %v1494 = vmul.f32 %v1361, %v1462
        %v1495 = vmul.f32 %v1363, %v1463
        %v1496 = vmul.f32 %v1365, %v1464
        %v1497 = vmul.f32 %v1367, %v1465
        %v1498 = vmul.f32 %v1369, %v1466
        %v1499 = vmul.f32 %v1371, %v1467
        %v1500 = vpack.c.bf16 %v1469, %v1468
        %v1501 = vpack.c.bf16 %v1471, %v1470
        %v1502 = vpack.c.bf16 %v1473, %v1472
        %v1503 = vpack.c.bf16 %v1475, %v1474
        %v1504 = vpack.c.bf16 %v1477, %v1476
        %v1505 = vpack.c.bf16 %v1479, %v1478
        %v1506 = vpack.c.bf16 %v1481, %v1480
        %v1507 = vpack.c.bf16 %v1483, %v1482
        %v1508 = vpack.c.bf16 %v1485, %v1484
        %v1509 = vpack.c.bf16 %v1487, %v1486
        %v1510 = vpack.c.bf16 %v1489, %v1488
        %v1511 = vpack.c.bf16 %v1491, %v1490
        %v1512 = vpack.c.bf16 %v1493, %v1492
        %v1513 = vpack.c.bf16 %v1495, %v1494
        %v1514 = vpack.c.bf16 %v1497, %v1496
        %v1515 = vpack.c.bf16 %v1499, %v1498
        %1516 = vmatprep.subr.bf16.mxu0 0
        %1517 = vmatpush1.bf16.msra.mxu0 %v889
        %1518 = vmatprep.subr.bf16.mxu0 0
        %1519 = vmatpush1.bf16.msra.mxu0 %v890
        %1520 = vmatprep.subr.bf16.mxu0 0
        %1521 = vmatpush1.bf16.msra.mxu0 %v891
        %1522 = vmatprep.subr.bf16.mxu0 0
        %1523 = vmatpush1.bf16.msra.mxu0 %v892
        %1524 = vmatprep.subr.bf16.mxu0 0
        %1525 = vmatpush1.bf16.msra.mxu0 %v893
        %1526 = vmatprep.subr.bf16.mxu0 0
        %1527 = vmatpush1.bf16.msra.mxu0 %v894
        %1528 = vmatprep.subr.bf16.mxu0 0
        %1529 = vmatpush1.bf16.msra.mxu0 %v895
        %1530 = vmatprep.subr.bf16.mxu0 0
        %1531 = vmatpush1.bf16.msra.mxu0 %v896
        %1532 = vmatprep.subr.bf16.mxu0 0
        %1533 = vmatpush1.bf16.msra.mxu0 0
        %1534 = vmatprep.subr.bf16.mxu0 0
        %1535 = vmatpush1.bf16.msra.mxu0 0
        %1536 = vmatprep.subr.bf16.mxu0 0
        %1537 = vmatpush1.bf16.msra.mxu0 0
        %1538 = vmatprep.subr.bf16.mxu0 0
        %1539 = vmatpush1.bf16.msra.mxu0 0
        %1540 = vmatprep.subr.bf16.mxu0 0
        %1541 = vmatpush1.bf16.msra.mxu0 0
        %1542 = vmatprep.subr.bf16.mxu0 0
        %1543 = vmatpush1.bf16.msra.mxu0 0
        %1544 = vmatprep.subr.bf16.mxu0 0
        %1545 = vmatpush1.bf16.msra.mxu0 0
        %1546 = vmatprep.subr.bf16.mxu0 0
        %1547 = vmatpush1.bf16.msra.mxu0 0
        %1548 = vmatprep.mubr.bf16.mxu0 0
        %1549 = vmatmul.mubr.bf16.gmra.mrb[0].mxu0 %v1500
        %v1550 = vpop.f32.mrb[0].mxu0
        %v1551 = vadd.f32 0.0, %v1550
        %v1552 = vpop.f32.mrb[0].mxu0
        %v1553 = vpop.f32.mrb[0].mxu0
        %v1554 = vadd.f32 0.0, %v1553
        %v1555 = vpop.f32.mrb[0].mxu0
        %1556 = vmatprep.mubr.bf16.mxu0 0
        %1557 = vmatmul.mubr.bf16.gmra.mrb[0].mxu0 %v1501
        %v1558 = vpop.f32.mrb[0].mxu0
        %v1559 = vadd.f32 0.0, %v1558
        %v1560 = vpop.f32.mrb[0].mxu0
        %v1561 = vpop.f32.mrb[0].mxu0
        %v1562 = vadd.f32 0.0, %v1561
        %v1563 = vpop.f32.mrb[0].mxu0
        %1564 = vmatprep.mubr.bf16.mxu0 0
        %1565 = vmatmul.mubr.bf16.gmra.mrb[0].mxu0 %v1502
        %v1566 = vpop.f32.mrb[0].mxu0
        %v1567 = vadd.f32 0.0, %v1566
        %v1568 = vpop.f32.mrb[0].mxu0
        %v1569 = vpop.f32.mrb[0].mxu0
        %v1570 = vadd.f32 0.0, %v1569
        %v1571 = vpop.f32.mrb[0].mxu0
        %1572 = vmatprep.mubr.bf16.mxu0 0
        %1573 = vmatmul.mubr.bf16.gmra.mrb[0].mxu0 %v1503
        %v1574 = vpop.f32.mrb[0].mxu0
        %v1575 = vadd.f32 0.0, %v1574
        %v1576 = vpop.f32.mrb[0].mxu0
        %v1577 = vpop.f32.mrb[0].mxu0
        %v1578 = vadd.f32 0.0, %v1577
        %v1579 = vpop.f32.mrb[0].mxu0
        %1580 = vmatprep.mubr.bf16.mxu0 0
        %1581 = vmatmul.mubr.bf16.gmra.mrb[0].mxu0 %v1504
        %v1582 = vpop.f32.mrb[0].mxu0
        %v1583 = vadd.f32 0.0, %v1582
        %v1584 = vpop.f32.mrb[0].mxu0
        %v1585 = vpop.f32.mrb[0].mxu0
        %v1586 = vadd.f32 0.0, %v1585
        %v1587 = vpop.f32.mrb[0].mxu0
        %1588 = vmatprep.mubr.bf16.mxu0 0
        %1589 = vmatmul.mubr.bf16.gmra.mrb[0].mxu0 %v1505
        %v1590 = vpop.f32.mrb[0].mxu0
        %v1591 = vadd.f32 0.0, %v1590
        %v1592 = vpop.f32.mrb[0].mxu0
        %v1593 = vpop.f32.mrb[0].mxu0
        %v1594 = vadd.f32 0.0, %v1593
        %v1595 = vpop.f32.mrb[0].mxu0
        %1596 = vmatprep.mubr.bf16.mxu0 0
        %1597 = vmatmul.mubr.bf16.gmra.mrb[0].mxu0 %v1506
        %v1598 = vpop.f32.mrb[0].mxu0
        %v1599 = vadd.f32 0.0, %v1598
        %v1600 = vpop.f32.mrb[0].mxu0
        %v1601 = vpop.f32.mrb[0].mxu0
        %v1602 = vadd.f32 0.0, %v1601
        %v1603 = vpop.f32.mrb[0].mxu0
        %1604 = vmatprep.mubr.bf16.mxu0 0
        %1605 = vmatmul.mubr.bf16.gmra.mrb[0].mxu0 %v1507
        %v1606 = vpop.f32.mrb[0].mxu0
        %v1607 = vadd.f32 0.0, %v1606
        %v1608 = vpop.f32.mrb[0].mxu0
        %v1609 = vpop.f32.mrb[0].mxu0
        %v1610 = vadd.f32 0.0, %v1609
        %v1611 = vpop.f32.mrb[0].mxu0
        %1612 = vdwg.mxu0
        %1613 = vmatprep.subr.bf16.mxu0 0
        %1614 = vmatpush1.bf16.msra.mxu0 %v897
        %1615 = vmatprep.subr.bf16.mxu0 0
        %1616 = vmatpush1.bf16.msra.mxu0 %v898
        %1617 = vmatprep.subr.bf16.mxu0 0
        %1618 = vmatpush1.bf16.msra.mxu0 %v899
        %1619 = vmatprep.subr.bf16.mxu0 0
        %1620 = vmatpush1.bf16.msra.mxu0 %v900
        %1621 = vmatprep.subr.bf16.mxu0 0
        %1622 = vmatpush1.bf16.msra.mxu0 %v901
        %1623 = vmatprep.subr.bf16.mxu0 0
        %1624 = vmatpush1.bf16.msra.mxu0 %v902
        %1625 = vmatprep.subr.bf16.mxu0 0
        %1626 = vmatpush1.bf16.msra.mxu0 %v903
        %1627 = vmatprep.subr.bf16.mxu0 0
        %1628 = vmatpush1.bf16.msra.mxu0 %v904
        %1629 = vmatprep.subr.bf16.mxu0 0
        %1630 = vmatpush1.bf16.msra.mxu0 0
        %1631 = vmatprep.subr.bf16.mxu0 0
        %1632 = vmatpush1.bf16.msra.mxu0 0
        %1633 = vmatprep.subr.bf16.mxu0 0
        %1634 = vmatpush1.bf16.msra.mxu0 0
        %1635 = vmatprep.subr.bf16.mxu0 0
        %1636 = vmatpush1.bf16.msra.mxu0 0
        %1637 = vmatprep.subr.bf16.mxu0 0
        %1638 = vmatpush1.bf16.msra.mxu0 0
        %1639 = vmatprep.subr.bf16.mxu0 0
        %1640 = vmatpush1.bf16.msra.mxu0 0
        %1641 = vmatprep.subr.bf16.mxu0 0
        %1642 = vmatpush1.bf16.msra.mxu0 0
        %1643 = vmatprep.subr.bf16.mxu0 0
        %1644 = vmatpush1.bf16.msra.mxu0 0
        %1645 = vmatprep.mubr.bf16.mxu0 0
        %1646 = vmatmul.mubr.bf16.gmra.mrb[0].mxu0 %v1508
        %v1647 = vpop.f32.mrb[0].mxu0
        %v1648 = vadd.f32 0.0, %v1647
        %v1649 = vpop.f32.mrb[0].mxu0
        %v1650 = vpop.f32.mrb[0].mxu0
        %v1651 = vadd.f32 0.0, %v1650
        %v1652 = vpop.f32.mrb[0].mxu0
        %1653 = vmatprep.mubr.bf16.mxu0 0
        %1654 = vmatmul.mubr.bf16.gmra.mrb[0].mxu0 %v1509
        %v1655 = vpop.f32.mrb[0].mxu0
        %v1656 = vadd.f32 0.0, %v1655
        %v1657 = vpop.f32.mrb[0].mxu0
        %v1658 = vpop.f32.mrb[0].mxu0
        %v1659 = vadd.f32 0.0, %v1658
        %v1660 = vpop.f32.mrb[0].mxu0
        %1661 = vmatprep.mubr.bf16.mxu0 0
        %1662 = vmatmul.mubr.bf16.gmra.mrb[0].mxu0 %v1510
        %v1663 = vpop.f32.mrb[0].mxu0
        %v1664 = vadd.f32 0.0, %v1663
        %v1665 = vpop.f32.mrb[0].mxu0
        %v1666 = vpop.f32.mrb[0].mxu0
        %v1667 = vadd.f32 0.0, %v1666
        %v1668 = vpop.f32.mrb[0].mxu0
        %1669 = vmatprep.mubr.bf16.mxu0 0
        %1670 = vmatmul.mubr.bf16.gmra.mrb[0].mxu0 %v1511
        %v1671 = vpop.f32.mrb[0].mxu0
        %v1672 = vadd.f32 0.0, %v1671
        %v1673 = vpop.f32.mrb[0].mxu0
        %v1674 = vpop.f32.mrb[0].mxu0
        %v1675 = vadd.f32 0.0, %v1674
        %v1676 = vpop.f32.mrb[0].mxu0
        %1677 = vmatprep.mubr.bf16.mxu0 0
        %1678 = vmatmul.mubr.bf16.gmra.mrb[0].mxu0 %v1512
        %v1679 = vpop.f32.mrb[0].mxu0
        %v1680 = vadd.f32 0.0, %v1679
        %v1681 = vpop.f32.mrb[0].mxu0
        %v1682 = vpop.f32.mrb[0].mxu0
        %v1683 = vadd.f32 0.0, %v1682
        %v1684 = vpop.f32.mrb[0].mxu0
        %1685 = vmatprep.mubr.bf16.mxu0 0
        %1686 = vmatmul.mubr.bf16.gmra.mrb[0].mxu0 %v1513
        %v1687 = vpop.f32.mrb[0].mxu0
        %v1688 = vadd.f32 0.0, %v1687
        %v1689 = vpop.f32.mrb[0].mxu0
        %v1690 = vpop.f32.mrb[0].mxu0
        %v1691 = vadd.f32 0.0, %v1690
        %v1692 = vpop.f32.mrb[0].mxu0
        %1693 = vmatprep.mubr.bf16.mxu0 0
        %1694 = vmatmul.mubr.bf16.gmra.mrb[0].mxu0 %v1514
        %v1695 = vpop.f32.mrb[0].mxu0
        %v1696 = vadd.f32 0.0, %v1695
        %v1697 = vpop.f32.mrb[0].mxu0
        %v1698 = vpop.f32.mrb[0].mxu0
        %v1699 = vadd.f32 0.0, %v1698
        %v1700 = vpop.f32.mrb[0].mxu0
        %1701 = vmatprep.mubr.bf16.mxu0 0
        %1702 = vmatmul.mubr.bf16.gmra.mrb[0].mxu0 %v1515
        %v1703 = vpop.f32.mrb[0].mxu0
        %v1704 = vadd.f32 0.0, %v1703
        %v1705 = vpop.f32.mrb[0].mxu0
        %v1706 = vpop.f32.mrb[0].mxu0
        %v1707 = vadd.f32 0.0, %v1706
        %v1708 = vpop.f32.mrb[0].mxu0
        %1709 = vdwg.mxu0
        %v1710 = vpack.c.bf16 %v1554, %v1551
        %v1711 = vpack.c.bf16 %v1562, %v1559
        %v1712 = vpack.c.bf16 %v1570, %v1567
        %v1713 = vpack.c.bf16 %v1578, %v1575
        %v1714 = vpack.c.bf16 %v1586, %v1583
        %v1715 = vpack.c.bf16 %v1594, %v1591
        %v1716 = vpack.c.bf16 %v1602, %v1599
        %v1717 = vpack.c.bf16 %v1610, %v1607
        %v1718 = vpack.c.bf16 %v1651, %v1648
        %v1719 = vpack.c.bf16 %v1659, %v1656
        %v1720 = vpack.c.bf16 %v1667, %v1664
        %v1721 = vpack.c.bf16 %v1675, %v1672
        %v1722 = vpack.c.bf16 %v1683, %v1680
        %v1723 = vpack.c.bf16 %v1691, %v1688
        %v1724 = vpack.c.bf16 %v1699, %v1696
        %v1725 = vpack.c.bf16 %v1707, %v1704
        %1726 = vst.msk [vmem:[#allocation3] sm:$0xff] %vm921, %v1710
        %1727 = vst.msk [vmem:[#allocation3 + $0x8] sm:$0xff] %vm921, %v1711
        %1728 = vst.msk [vmem:[#allocation3 + $0x10] sm:$0xff] %vm921, %v1712
        %1729 = vst.msk [vmem:[#allocation3 + $0x18] sm:$0xff] %vm921, %v1713
        %1730 = vst.msk [vmem:[#allocation3 + $0x20] sm:$0xff] %vm921, %v1714
        %1731 = vst.msk [vmem:[#allocation3 + $0x28] sm:$0xff] %vm921, %v1715
        %1732 = vst.msk [vmem:[#allocation3 + $0x30] sm:$0xff] %vm921, %v1716
        %1733 = vst.msk [vmem:[#allocation3 + $0x38] sm:$0xff] %vm921, %v1717
        %1734 = vst.msk [vmem:[#allocation3 + $0x40] sm:$0xff] %vm921, %v1718
        %1735 = vst.msk [vmem:[#allocation3 + $0x48] sm:$0xff] %vm921, %v1719
        %1736 = vst.msk [vmem:[#allocation3 + $0x50] sm:$0xff] %vm921, %v1720
        %1737 = vst.msk [vmem:[#allocation3 + $0x58] sm:$0xff] %vm921, %v1721
        %1738 = vst.msk [vmem:[#allocation3 + $0x60] sm:$0xff] %vm921, %v1722
        %1739 = vst.msk [vmem:[#allocation3 + $0x68] sm:$0xff] %vm921, %v1723
        %1740 = vst.msk [vmem:[#allocation3 + $0x70] sm:$0xff] %vm921, %v1724
        %1741 = vst.msk [vmem:[#allocation3 + $0x78] sm:$0xff] %vm921, %v1725
        %v1742 = vld [vmem:[#allocation2] sm:$0xff]
        %v1743 = vld [vmem:[#allocation2 + $0x18] sm:$0xff]
        %v1744 = vld [vmem:[#allocation2 + $0x30] sm:$0xff]
        %v1745 = vld [vmem:[#allocation2 + $0x48] sm:$0xff]
        %v1746 = vld [vmem:[#allocation2 + $0x60] sm:$0xff]
        %v1747 = vld [vmem:[#allocation2 + $0x78] sm:$0xff]
        %v1748 = vld [vmem:[#allocation2 + $0x90] sm:$0xff]
        %v1749 = vld [vmem:[#allocation2 + $0xa8] sm:$0xff]
        %v1750 = vld [vmem:[#allocation2 + $0xc0] sm:$0xff]
        %v1751 = vld [vmem:[#allocation2 + $0xd8] sm:$0xff]
        %v1752 = vld [vmem:[#allocation2 + $0xf0] sm:$0xff]
        %v1753 = vld [vmem:[#allocation2 + $0x108] sm:$0xff]
        %v1754 = vld [vmem:[#allocation2 + $0x120] sm:$0xff]
        %v1755 = vld [vmem:[#allocation2 + $0x138] sm:$0xff]
        %v1756 = vld [vmem:[#allocation2 + $0x150] sm:$0xff]
        %v1757 = vld [vmem:[#allocation2 + $0x168] sm:$0xff]
        %v1758 = vld [vmem:[#allocation2 + $0x8] sm:$0xff]
        %v1759 = vld [vmem:[#allocation2 + $0x20] sm:$0xff]
        %v1760 = vld [vmem:[#allocation2 + $0x38] sm:$0xff]
        %v1761 = vld [vmem:[#allocation2 + $0x50] sm:$0xff]
        %v1762 = vld [vmem:[#allocation2 + $0x68] sm:$0xff]
        %v1763 = vld [vmem:[#allocation2 + $0x80] sm:$0xff]
        %v1764 = vld [vmem:[#allocation2 + $0x98] sm:$0xff]
        %v1765 = vld [vmem:[#allocation2 + $0xb0] sm:$0xff]
        %v1766 = vld [vmem:[#allocation2 + $0xc8] sm:$0xff]
        %v1767 = vld [vmem:[#allocation2 + $0xe0] sm:$0xff]
        %v1768 = vld [vmem:[#allocation2 + $0xf8] sm:$0xff]
        %v1769 = vld [vmem:[#allocation2 + $0x110] sm:$0xff]
        %v1770 = vld [vmem:[#allocation2 + $0x128] sm:$0xff]
        %v1771 = vld [vmem:[#allocation2 + $0x140] sm:$0xff]
        %v1772 = vld [vmem:[#allocation2 + $0x158] sm:$0xff]
        %v1773 = vld [vmem:[#allocation2 + $0x170] sm:$0xff]
        %v1774 = vld [vmem:[#allocation2 + $0x10] sm:$0xff]
        %v1775 = vld [vmem:[#allocation2 + $0x28] sm:$0xff]
        %v1776 = vld [vmem:[#allocation2 + $0x40] sm:$0xff]
        %v1777 = vld [vmem:[#allocation2 + $0x58] sm:$0xff]
        %v1778 = vld [vmem:[#allocation2 + $0x70] sm:$0xff]
        %v1779 = vld [vmem:[#allocation2 + $0x88] sm:$0xff]
        %v1780 = vld [vmem:[#allocation2 + $0xa0] sm:$0xff]
        %v1781 = vld [vmem:[#allocation2 + $0xb8] sm:$0xff]
        %v1782 = vld [vmem:[#allocation2 + $0xd0] sm:$0xff]
        %v1783 = vld [vmem:[#allocation2 + $0xe8] sm:$0xff]
        %v1784 = vld [vmem:[#allocation2 + $0x100] sm:$0xff]
        %v1785 = vld [vmem:[#allocation2 + $0x118] sm:$0xff]
        %v1786 = vld [vmem:[#allocation2 + $0x130] sm:$0xff]
        %v1787 = vld [vmem:[#allocation2 + $0x148] sm:$0xff]
        %v1788 = vld [vmem:[#allocation2 + $0x160] sm:$0xff]
        %v1789 = vld [vmem:[#allocation2 + $0x178] sm:$0xff]
        %s1790 = scalar_lea.vmem %s2, 128
        %v1791 = vld [vmem:[%s1790] sm:$0xff]
        %v1792 = vld [vmem:[%s1790 + $0x8] sm:$0xff]
        %v1793 = vld [vmem:[%s1790 + $0x10] sm:$0xff]
        %v1794 = vld [vmem:[%s1790 + $0x18] sm:$0xff]
        %v1795 = vld [vmem:[%s1790 + $0x20] sm:$0xff]
        %v1796 = vld [vmem:[%s1790 + $0x28] sm:$0xff]
        %v1797 = vld [vmem:[%s1790 + $0x30] sm:$0xff]
        %v1798 = vld [vmem:[%s1790 + $0x38] sm:$0xff]
        %v1799 = vld [vmem:[%s1790 + $0x40] sm:$0xff]
        %v1800 = vld [vmem:[%s1790 + $0x48] sm:$0xff]
        %v1801 = vld [vmem:[%s1790 + $0x50] sm:$0xff]
        %v1802 = vld [vmem:[%s1790 + $0x58] sm:$0xff]
        %v1803 = vld [vmem:[%s1790 + $0x60] sm:$0xff]
        %v1804 = vld [vmem:[%s1790 + $0x68] sm:$0xff]
        %v1805 = vld [vmem:[%s1790 + $0x70] sm:$0xff]
        %v1806 = vld [vmem:[%s1790 + $0x78] sm:$0xff]
        %1815 = vrot.lane.b32.xlu0 %v1742, 96
        %v1816 = vpop.permute.xlu0 %1815
        %1817 = vrot.lane.b32.xlu0 %v1743, 96
        %v1818 = vpop.permute.xlu0 %1817
        %1819 = vrot.lane.b32.xlu0 %v1744, 96
        %v1820 = vpop.permute.xlu0 %1819
        %1821 = vrot.lane.b32.xlu0 %v1745, 96
        %v1822 = vpop.permute.xlu0 %1821
        %1823 = vrot.lane.b32.xlu0 %v1746, 96
        %v1824 = vpop.permute.xlu0 %1823
        %1825 = vrot.lane.b32.xlu0 %v1747, 96
        %v1826 = vpop.permute.xlu0 %1825
        %1827 = vrot.lane.b32.xlu0 %v1748, 96
        %v1828 = vpop.permute.xlu0 %1827
        %1829 = vrot.lane.b32.xlu0 %v1749, 96
        %v1830 = vpop.permute.xlu0 %1829
        %1839 = vrot.lane.b32.xlu0 %v1758, 96
        %v1840 = vpop.permute.xlu0 %1839
        %1841 = vrot.lane.b32.xlu0 %v1759, 96
        %v1842 = vpop.permute.xlu0 %1841
        %1843 = vrot.lane.b32.xlu0 %v1760, 96
        %v1844 = vpop.permute.xlu0 %1843
        %1845 = vrot.lane.b32.xlu0 %v1761, 96
        %v1846 = vpop.permute.xlu0 %1845
        %1847 = vrot.lane.b32.xlu0 %v1762, 96
        %v1848 = vpop.permute.xlu0 %1847
        %1849 = vrot.lane.b32.xlu0 %v1763, 96
        %v1850 = vpop.permute.xlu0 %1849
        %1851 = vrot.lane.b32.xlu0 %v1764, 96
        %v1852 = vpop.permute.xlu0 %1851
        %1853 = vrot.lane.b32.xlu0 %v1765, 96
        %v1854 = vpop.permute.xlu0 %1853
        %v1856 = vsel %vm921, %v1816, 0
        %v1859 = vsel %vm921, %v1818, 0
        %v1862 = vsel %vm921, %v1820, 0
        %v1865 = vsel %vm921, %v1822, 0
        %v1868 = vsel %vm921, %v1824, 0
        %v1871 = vsel %vm921, %v1826, 0
        %v1874 = vsel %vm921, %v1828, 0
        %v1877 = vsel %vm921, %v1830, 0
        %v1880 = vsel %vm921, %v1840, 0
        %v1883 = vsel %vm921, %v1842, 0
        %v1886 = vsel %vm921, %v1844, 0
        %v1889 = vsel %vm921, %v1846, 0
        %v1892 = vsel %vm921, %v1848, 0
        %v1895 = vsel %vm921, %v1850, 0
        %v1898 = vsel %vm921, %v1852, 0
        %v1901 = vsel %vm921, %v1854, 0
        %1903 = vmatprep.subr.bf16.mxu0 0
        %1904 = vmatpush1.bf16.xpose.msra.mxu0 %v1880
        %1905 = vmatprep.subr.bf16.mxu0 0
        %1906 = vmatpush1.bf16.xpose.msra.mxu0 %v1883
        %1907 = vmatprep.subr.bf16.mxu0 0
        %1908 = vmatpush1.bf16.xpose.msra.mxu0 %v1886
        %1909 = vmatprep.subr.bf16.mxu0 0
        %1910 = vmatpush1.bf16.xpose.msra.mxu0 %v1889
        %1911 = vmatprep.subr.bf16.mxu0 0
        %1912 = vmatpush1.bf16.xpose.msra.mxu0 %v1892
        %1913 = vmatprep.subr.bf16.mxu0 0
        %1914 = vmatpush1.bf16.xpose.msra.mxu0 %v1895
        %1915 = vmatprep.subr.bf16.mxu0 0
        %1916 = vmatpush1.bf16.xpose.msra.mxu0 %v1898
        %1917 = vmatprep.subr.bf16.mxu0 0
        %1918 = vmatpush1.bf16.xpose.msra.mxu0 %v1901
        %1919 = vmatprep.subr.bf16.mxu0 0
        %1920 = vmatpush1.bf16.xpose.msra.mxu0 0
        %1921 = vmatprep.subr.bf16.mxu0 0
        %1922 = vmatpush1.bf16.xpose.msra.mxu0 0
        %1923 = vmatprep.subr.bf16.mxu0 0
        %1924 = vmatpush1.bf16.xpose.msra.mxu0 0
        %1925 = vmatprep.subr.bf16.mxu0 0
        %1926 = vmatpush1.bf16.xpose.msra.mxu0 0
        %1927 = vmatprep.subr.bf16.mxu0 0
        %1928 = vmatpush1.bf16.xpose.msra.mxu0 0
        %1929 = vmatprep.subr.bf16.mxu0 0
        %1930 = vmatpush1.bf16.xpose.msra.mxu0 0
        %1931 = vmatprep.subr.bf16.mxu0 0
        %1932 = vmatpush1.bf16.xpose.msra.mxu0 0
        %1933 = vmatprep.subr.bf16.mxu0 0
        %1934 = vmatpush1.bf16.xpose.msra.mxu0 0
        %1935 = vmatprep.mubr.bf16.mxu0 0
        %1936 = vmatmul.mubr.bf16.gmra.mrb[0].mxu0 %v1856
        %v1937 = vpop.f32.mrb[0].mxu0
        %v1938 = vadd.f32 %v1791, %v1937
        %v1939 = vpop.f32.mrb[0].mxu0
        %v1940 = vpop.f32.mrb[0].mxu0
        %v1941 = vadd.f32 %v1792, %v1940
        %v1942 = vpop.f32.mrb[0].mxu0
        %1943 = vmatprep.mubr.bf16.mxu0 0
        %1944 = vmatmul.mubr.bf16.gmra.mrb[0].mxu0 %v1859
        %v1945 = vpop.f32.mrb[0].mxu0
        %v1946 = vadd.f32 %v1793, %v1945
        %v1947 = vpop.f32.mrb[0].mxu0
        %v1948 = vpop.f32.mrb[0].mxu0
        %v1949 = vadd.f32 %v1794, %v1948
        %v1950 = vpop.f32.mrb[0].mxu0
        %1951 = vmatprep.mubr.bf16.mxu0 0
        %1952 = vmatmul.mubr.bf16.gmra.mrb[0].mxu0 %v1862
        %v1953 = vpop.f32.mrb[0].mxu0
        %v1954 = vadd.f32 %v1795, %v1953
        %v1955 = vpop.f32.mrb[0].mxu0
        %v1956 = vpop.f32.mrb[0].mxu0
        %v1957 = vadd.f32 %v1796, %v1956
        %v1958 = vpop.f32.mrb[0].mxu0
        %1959 = vmatprep.mubr.bf16.mxu0 0
        %1960 = vmatmul.mubr.bf16.gmra.mrb[0].mxu0 %v1865
        %v1961 = vpop.f32.mrb[0].mxu0
        %v1962 = vadd.f32 %v1797, %v1961
        %v1963 = vpop.f32.mrb[0].mxu0
        %v1964 = vpop.f32.mrb[0].mxu0
        %v1965 = vadd.f32 %v1798, %v1964
        %v1966 = vpop.f32.mrb[0].mxu0
        %1967 = vmatprep.mubr.bf16.mxu0 0
        %1968 = vmatmul.mubr.bf16.gmra.mrb[0].mxu0 %v1868
        %v1969 = vpop.f32.mrb[0].mxu0
        %v1970 = vadd.f32 %v1799, %v1969
        %v1971 = vpop.f32.mrb[0].mxu0
        %v1972 = vpop.f32.mrb[0].mxu0
        %v1973 = vadd.f32 %v1800, %v1972
        %v1974 = vpop.f32.mrb[0].mxu0
        %1975 = vmatprep.mubr.bf16.mxu0 0
        %1976 = vmatmul.mubr.bf16.gmra.mrb[0].mxu0 %v1871
        %v1977 = vpop.f32.mrb[0].mxu0
        %v1978 = vadd.f32 %v1801, %v1977
        %v1979 = vpop.f32.mrb[0].mxu0
        %v1980 = vpop.f32.mrb[0].mxu0
        %v1981 = vadd.f32 %v1802, %v1980
        %v1982 = vpop.f32.mrb[0].mxu0
        %1983 = vmatprep.mubr.bf16.mxu0 0
        %1984 = vmatmul.mubr.bf16.gmra.mrb[0].mxu0 %v1874
        %v1985 = vpop.f32.mrb[0].mxu0
        %v1986 = vadd.f32 %v1803, %v1985
        %v1987 = vpop.f32.mrb[0].mxu0
        %v1988 = vpop.f32.mrb[0].mxu0
        %v1989 = vadd.f32 %v1804, %v1988
        %v1990 = vpop.f32.mrb[0].mxu0
        %1991 = vmatprep.mubr.bf16.mxu0 0
        %1992 = vmatmul.mubr.bf16.gmra.mrb[0].mxu0 %v1877
        %v1993 = vpop.f32.mrb[0].mxu0
        %v1994 = vadd.f32 %v1805, %v1993
        %v1995 = vpop.f32.mrb[0].mxu0
        %v1996 = vpop.f32.mrb[0].mxu0
        %v1997 = vadd.f32 %v1806, %v1996
        %v1998 = vpop.f32.mrb[0].mxu0
        %1999 = vdwg.mxu0
        %2008 = vrot.lane.b32.xlu0 %v1750, 96
        %v2009 = vpop.permute.xlu0 %2008
        %2010 = vrot.lane.b32.xlu0 %v1751, 96
        %v2011 = vpop.permute.xlu0 %2010
        %2012 = vrot.lane.b32.xlu0 %v1752, 96
        %v2013 = vpop.permute.xlu0 %2012
        %2014 = vrot.lane.b32.xlu0 %v1753, 96
        %v2015 = vpop.permute.xlu0 %2014
        %2016 = vrot.lane.b32.xlu0 %v1754, 96
        %v2017 = vpop.permute.xlu0 %2016
        %2018 = vrot.lane.b32.xlu0 %v1755, 96
        %v2019 = vpop.permute.xlu0 %2018
        %2020 = vrot.lane.b32.xlu0 %v1756, 96
        %v2021 = vpop.permute.xlu0 %2020
        %2022 = vrot.lane.b32.xlu0 %v1757, 96
        %v2023 = vpop.permute.xlu0 %2022
        %2032 = vrot.lane.b32.xlu0 %v1766, 96
        %v2033 = vpop.permute.xlu0 %2032
        %2034 = vrot.lane.b32.xlu0 %v1767, 96
        %v2035 = vpop.permute.xlu0 %2034
        %2036 = vrot.lane.b32.xlu0 %v1768, 96
        %v2037 = vpop.permute.xlu0 %2036
        %2038 = vrot.lane.b32.xlu0 %v1769, 96
        %v2039 = vpop.permute.xlu0 %2038
        %2040 = vrot.lane.b32.xlu0 %v1770, 96
        %v2041 = vpop.permute.xlu0 %2040
        %2042 = vrot.lane.b32.xlu0 %v1771, 96
        %v2043 = vpop.permute.xlu0 %2042
        %2044 = vrot.lane.b32.xlu0 %v1772, 96
        %v2045 = vpop.permute.xlu0 %2044
        %2046 = vrot.lane.b32.xlu0 %v1773, 96
        %v2047 = vpop.permute.xlu0 %2046
        %v2049 = vsel %vm921, %v2009, 0
        %v2052 = vsel %vm921, %v2011, 0
        %v2055 = vsel %vm921, %v2013, 0
        %v2058 = vsel %vm921, %v2015, 0
        %v2061 = vsel %vm921, %v2017, 0
        %v2064 = vsel %vm921, %v2019, 0
        %v2067 = vsel %vm921, %v2021, 0
        %v2070 = vsel %vm921, %v2023, 0
        %v2073 = vsel %vm921, %v2033, 0
        %v2076 = vsel %vm921, %v2035, 0
        %v2079 = vsel %vm921, %v2037, 0
        %v2082 = vsel %vm921, %v2039, 0
        %v2085 = vsel %vm921, %v2041, 0
        %v2088 = vsel %vm921, %v2043, 0
        %v2091 = vsel %vm921, %v2045, 0
        %v2094 = vsel %vm921, %v2047, 0
        %2096 = vmatprep.subr.bf16.mxu0 0
        %2097 = vmatpush1.bf16.xpose.msra.mxu0 %v2073
        %2098 = vmatprep.subr.bf16.mxu0 0
        %2099 = vmatpush1.bf16.xpose.msra.mxu0 %v2076
        %2100 = vmatprep.subr.bf16.mxu0 0
        %2101 = vmatpush1.bf16.xpose.msra.mxu0 %v2079
        %2102 = vmatprep.subr.bf16.mxu0 0
        %2103 = vmatpush1.bf16.xpose.msra.mxu0 %v2082
        %2104 = vmatprep.subr.bf16.mxu0 0
        %2105 = vmatpush1.bf16.xpose.msra.mxu0 %v2085
        %2106 = vmatprep.subr.bf16.mxu0 0
        %2107 = vmatpush1.bf16.xpose.msra.mxu0 %v2088
        %2108 = vmatprep.subr.bf16.mxu0 0
        %2109 = vmatpush1.bf16.xpose.msra.mxu0 %v2091
        %2110 = vmatprep.subr.bf16.mxu0 0
        %2111 = vmatpush1.bf16.xpose.msra.mxu0 %v2094
        %2112 = vmatprep.subr.bf16.mxu0 0
        %2113 = vmatpush1.bf16.xpose.msra.mxu0 0
        %2114 = vmatprep.subr.bf16.mxu0 0
        %2115 = vmatpush1.bf16.xpose.msra.mxu0 0
        %2116 = vmatprep.subr.bf16.mxu0 0
        %2117 = vmatpush1.bf16.xpose.msra.mxu0 0
        %2118 = vmatprep.subr.bf16.mxu0 0
        %2119 = vmatpush1.bf16.xpose.msra.mxu0 0
        %2120 = vmatprep.subr.bf16.mxu0 0
        %2121 = vmatpush1.bf16.xpose.msra.mxu0 0
        %2122 = vmatprep.subr.bf16.mxu0 0
        %2123 = vmatpush1.bf16.xpose.msra.mxu0 0
        %2124 = vmatprep.subr.bf16.mxu0 0
        %2125 = vmatpush1.bf16.xpose.msra.mxu0 0
        %2126 = vmatprep.subr.bf16.mxu0 0
        %2127 = vmatpush1.bf16.xpose.msra.mxu0 0
        %2128 = vmatprep.mubr.bf16.mxu0 0
        %2129 = vmatmul.mubr.bf16.gmra.mrb[0].mxu0 %v2049
        %v2130 = vpop.f32.mrb[0].mxu0
        %v2131 = vadd.f32 %v1791, %v2130
        %v2132 = vpop.f32.mrb[0].mxu0
        %v2133 = vpop.f32.mrb[0].mxu0
        %v2134 = vadd.f32 %v1792, %v2133
        %v2135 = vpop.f32.mrb[0].mxu0
        %2136 = vmatprep.mubr.bf16.mxu0 0
        %2137 = vmatmul.mubr.bf16.gmra.mrb[0].mxu0 %v2052
        %v2138 = vpop.f32.mrb[0].mxu0
        %v2139 = vadd.f32 %v1793, %v2138
        %v2140 = vpop.f32.mrb[0].mxu0
        %v2141 = vpop.f32.mrb[0].mxu0
        %v2142 = vadd.f32 %v1794, %v2141
        %v2143 = vpop.f32.mrb[0].mxu0
        %2144 = vmatprep.mubr.bf16.mxu0 0
        %2145 = vmatmul.mubr.bf16.gmra.mrb[0].mxu0 %v2055
        %v2146 = vpop.f32.mrb[0].mxu0
        %v2147 = vadd.f32 %v1795, %v2146
        %v2148 = vpop.f32.mrb[0].mxu0
        %v2149 = vpop.f32.mrb[0].mxu0
        %v2150 = vadd.f32 %v1796, %v2149
        %v2151 = vpop.f32.mrb[0].mxu0
        %2152 = vmatprep.mubr.bf16.mxu0 0
        %2153 = vmatmul.mubr.bf16.gmra.mrb[0].mxu0 %v2058
        %v2154 = vpop.f32.mrb[0].mxu0
        %v2155 = vadd.f32 %v1797, %v2154
        %v2156 = vpop.f32.mrb[0].mxu0
        %v2157 = vpop.f32.mrb[0].mxu0
        %v2158 = vadd.f32 %v1798, %v2157
        %v2159 = vpop.f32.mrb[0].mxu0
        %2160 = vmatprep.mubr.bf16.mxu0 0
        %2161 = vmatmul.mubr.bf16.gmra.mrb[0].mxu0 %v2061
        %v2162 = vpop.f32.mrb[0].mxu0
        %v2163 = vadd.f32 %v1799, %v2162
        %v2164 = vpop.f32.mrb[0].mxu0
        %v2165 = vpop.f32.mrb[0].mxu0
        %v2166 = vadd.f32 %v1800, %v2165
        %v2167 = vpop.f32.mrb[0].mxu0
        %2168 = vmatprep.mubr.bf16.mxu0 0
        %2169 = vmatmul.mubr.bf16.gmra.mrb[0].mxu0 %v2064
        %v2170 = vpop.f32.mrb[0].mxu0
        %v2171 = vadd.f32 %v1801, %v2170
        %v2172 = vpop.f32.mrb[0].mxu0
        %v2173 = vpop.f32.mrb[0].mxu0
        %v2174 = vadd.f32 %v1802, %v2173
        %v2175 = vpop.f32.mrb[0].mxu0
        %2176 = vmatprep.mubr.bf16.mxu0 0
        %2177 = vmatmul.mubr.bf16.gmra.mrb[0].mxu0 %v2067
        %v2178 = vpop.f32.mrb[0].mxu0
        %v2179 = vadd.f32 %v1803, %v2178
        %v2180 = vpop.f32.mrb[0].mxu0
        %v2181 = vpop.f32.mrb[0].mxu0
        %v2182 = vadd.f32 %v1804, %v2181
        %v2183 = vpop.f32.mrb[0].mxu0
        %2184 = vmatprep.mubr.bf16.mxu0 0
        %2185 = vmatmul.mubr.bf16.gmra.mrb[0].mxu0 %v2070
        %v2186 = vpop.f32.mrb[0].mxu0
        %v2187 = vadd.f32 %v1805, %v2186
        %v2188 = vpop.f32.mrb[0].mxu0
        %v2189 = vpop.f32.mrb[0].mxu0
        %v2190 = vadd.f32 %v1806, %v2189
        %v2191 = vpop.f32.mrb[0].mxu0
        %2192 = vdwg.mxu0
        %2193 = vmax.xlane.f32.xlu0 %v1938
        %v2194 = vpop.xlane.xlu0 %2193
        %2195 = vmax.xlane.f32.xlu0 %v1941
        %v2196 = vpop.xlane.xlu0 %2195
        %2197 = vmax.xlane.f32.xlu0 %v1946
        %v2198 = vpop.xlane.xlu0 %2197
        %2199 = vmax.xlane.f32.xlu0 %v1949
        %v2200 = vpop.xlane.xlu0 %2199
        %2201 = vmax.xlane.f32.xlu0 %v1954
        %v2202 = vpop.xlane.xlu0 %2201
        %2203 = vmax.xlane.f32.xlu0 %v1957
        %v2204 = vpop.xlane.xlu0 %2203
        %2205 = vmax.xlane.f32.xlu0 %v1962
        %v2206 = vpop.xlane.xlu0 %2205
        %2207 = vmax.xlane.f32.xlu0 %v1965
        %v2208 = vpop.xlane.xlu0 %2207
        %2209 = vmax.xlane.f32.xlu0 %v1970
        %v2210 = vpop.xlane.xlu0 %2209
        %2211 = vmax.xlane.f32.xlu0 %v1973
        %v2212 = vpop.xlane.xlu0 %2211
        %2213 = vmax.xlane.f32.xlu0 %v1978
        %v2214 = vpop.xlane.xlu0 %2213
        %2215 = vmax.xlane.f32.xlu0 %v1981
        %v2216 = vpop.xlane.xlu0 %2215
        %2217 = vmax.xlane.f32.xlu0 %v1986
        %v2218 = vpop.xlane.xlu0 %2217
        %2219 = vmax.xlane.f32.xlu0 %v1989
        %v2220 = vpop.xlane.xlu0 %2219
        %2221 = vmax.xlane.f32.xlu0 %v1994
        %v2222 = vpop.xlane.xlu0 %2221
        %2223 = vmax.xlane.f32.xlu0 %v1997
        %v2224 = vpop.xlane.xlu0 %2223
        %2225 = vmax.xlane.f32.xlu0 %v2131
        %v2226 = vpop.xlane.xlu0 %2225
        %2227 = vmax.xlane.f32.xlu0 %v2134
        %v2228 = vpop.xlane.xlu0 %2227
        %2229 = vmax.xlane.f32.xlu0 %v2139
        %v2230 = vpop.xlane.xlu0 %2229
        %2231 = vmax.xlane.f32.xlu0 %v2142
        %v2232 = vpop.xlane.xlu0 %2231
        %2233 = vmax.xlane.f32.xlu0 %v2147
        %v2234 = vpop.xlane.xlu0 %2233
        %2235 = vmax.xlane.f32.xlu0 %v2150
        %v2236 = vpop.xlane.xlu0 %2235
        %2237 = vmax.xlane.f32.xlu0 %v2155
        %v2238 = vpop.xlane.xlu0 %2237
        %2239 = vmax.xlane.f32.xlu0 %v2158
        %v2240 = vpop.xlane.xlu0 %2239
        %2241 = vmax.xlane.f32.xlu0 %v2163
        %v2242 = vpop.xlane.xlu0 %2241
        %2243 = vmax.xlane.f32.xlu0 %v2166
        %v2244 = vpop.xlane.xlu0 %2243
        %2245 = vmax.xlane.f32.xlu0 %v2171
        %v2246 = vpop.xlane.xlu0 %2245
        %2247 = vmax.xlane.f32.xlu0 %v2174
        %v2248 = vpop.xlane.xlu0 %2247
        %2249 = vmax.xlane.f32.xlu0 %v2179
        %v2250 = vpop.xlane.xlu0 %2249
        %2251 = vmax.xlane.f32.xlu0 %v2182
        %v2252 = vpop.xlane.xlu0 %2251
        %2253 = vmax.xlane.f32.xlu0 %v2187
        %v2254 = vpop.xlane.xlu0 %2253
        %2255 = vmax.xlane.f32.xlu0 %v2190
        %v2256 = vpop.xlane.xlu0 %2255
        %v2257 = vsub.f32 %v1938, %v2194
        %v2258 = vsub.f32 %v1941, %v2196
        %v2259 = vsub.f32 %v1946, %v2198
        %v2260 = vsub.f32 %v1949, %v2200
        %v2261 = vsub.f32 %v1954, %v2202
        %v2262 = vsub.f32 %v1957, %v2204
        %v2263 = vsub.f32 %v1962, %v2206
        %v2264 = vsub.f32 %v1965, %v2208
        %v2265 = vsub.f32 %v1970, %v2210
        %v2266 = vsub.f32 %v1973, %v2212
        %v2267 = vsub.f32 %v1978, %v2214
        %v2268 = vsub.f32 %v1981, %v2216
        %v2269 = vsub.f32 %v1986, %v2218
        %v2270 = vsub.f32 %v1989, %v2220
        %v2271 = vsub.f32 %v1994, %v2222
        %v2272 = vsub.f32 %v1997, %v2224
        %v2273 = vsub.f32 %v2131, %v2226
        %v2274 = vsub.f32 %v2134, %v2228
        %v2275 = vsub.f32 %v2139, %v2230
        %v2276 = vsub.f32 %v2142, %v2232
        %v2277 = vsub.f32 %v2147, %v2234
        %v2278 = vsub.f32 %v2150, %v2236
        %v2279 = vsub.f32 %v2155, %v2238
        %v2280 = vsub.f32 %v2158, %v2240
        %v2281 = vsub.f32 %v2163, %v2242
        %v2282 = vsub.f32 %v2166, %v2244
        %v2283 = vsub.f32 %v2171, %v2246
        %v2284 = vsub.f32 %v2174, %v2248
        %v2285 = vsub.f32 %v2179, %v2250
        %v2286 = vsub.f32 %v2182, %v2252
        %v2287 = vsub.f32 %v2187, %v2254
        %v2288 = vsub.f32 %v2190, %v2256
        %v2289 = vmul.f32 %v2257, 1.442695
        %v2290 = vpow.pop %v2289
        %v2291 = vmul.f32 %v2258, 1.442695
        %v2292 = vpow.pop %v2291
        %v2293 = vmul.f32 %v2259, 1.442695
        %v2294 = vpow.pop %v2293
        %v2295 = vmul.f32 %v2260, 1.442695
        %v2296 = vpow.pop %v2295
        %v2297 = vmul.f32 %v2261, 1.442695
        %v2298 = vpow.pop %v2297
        %v2299 = vmul.f32 %v2262, 1.442695
        %v2300 = vpow.pop %v2299
        %v2301 = vmul.f32 %v2263, 1.442695
        %v2302 = vpow.pop %v2301
        %v2303 = vmul.f32 %v2264, 1.442695
        %v2304 = vpow.pop %v2303
        %v2305 = vmul.f32 %v2265, 1.442695
        %v2306 = vpow.pop %v2305
        %v2307 = vmul.f32 %v2266, 1.442695
        %v2308 = vpow.pop %v2307
        %v2309 = vmul.f32 %v2267, 1.442695
        %v2310 = vpow.pop %v2309
        %v2311 = vmul.f32 %v2268, 1.442695
        %v2312 = vpow.pop %v2311
        %v2313 = vmul.f32 %v2269, 1.442695
        %v2314 = vpow.pop %v2313
        %v2315 = vmul.f32 %v2270, 1.442695
        %v2316 = vpow.pop %v2315
        %v2317 = vmul.f32 %v2271, 1.442695
        %v2318 = vpow.pop %v2317
        %v2319 = vmul.f32 %v2272, 1.442695
        %v2320 = vpow.pop %v2319
        %v2321 = vmul.f32 %v2273, 1.442695
        %v2322 = vpow.pop %v2321
        %v2323 = vmul.f32 %v2274, 1.442695
        %v2324 = vpow.pop %v2323
        %v2325 = vmul.f32 %v2275, 1.442695
        %v2326 = vpow.pop %v2325
        %v2327 = vmul.f32 %v2276, 1.442695
        %v2328 = vpow.pop %v2327
        %v2329 = vmul.f32 %v2277, 1.442695
        %v2330 = vpow.pop %v2329
        %v2331 = vmul.f32 %v2278, 1.442695
        %v2332 = vpow.pop %v2331
        %v2333 = vmul.f32 %v2279, 1.442695
        %v2334 = vpow.pop %v2333
        %v2335 = vmul.f32 %v2280, 1.442695
        %v2336 = vpow.pop %v2335
        %v2337 = vmul.f32 %v2281, 1.442695
        %v2338 = vpow.pop %v2337
        %v2339 = vmul.f32 %v2282, 1.442695
        %v2340 = vpow.pop %v2339
        %v2341 = vmul.f32 %v2283, 1.442695
        %v2342 = vpow.pop %v2341
        %v2343 = vmul.f32 %v2284, 1.442695
        %v2344 = vpow.pop %v2343
        %v2345 = vmul.f32 %v2285, 1.442695
        %v2346 = vpow.pop %v2345
        %v2347 = vmul.f32 %v2286, 1.442695
        %v2348 = vpow.pop %v2347
        %v2349 = vmul.f32 %v2287, 1.442695
        %v2350 = vpow.pop %v2349
        %v2351 = vmul.f32 %v2288, 1.442695
        %v2352 = vpow.pop %v2351
        %2353 = vadd.xlane.f32.xlu0 %v2290
        %v2354 = vpop.xlane.xlu0 %2353
        %2355 = vadd.xlane.f32.xlu0 %v2292
        %v2356 = vpop.xlane.xlu0 %2355
        %2357 = vadd.xlane.f32.xlu0 %v2294
        %v2358 = vpop.xlane.xlu0 %2357
        %2359 = vadd.xlane.f32.xlu0 %v2296
        %v2360 = vpop.xlane.xlu0 %2359
        %2361 = vadd.xlane.f32.xlu0 %v2298
        %v2362 = vpop.xlane.xlu0 %2361
        %2363 = vadd.xlane.f32.xlu0 %v2300
        %v2364 = vpop.xlane.xlu0 %2363
        %2365 = vadd.xlane.f32.xlu0 %v2302
        %v2366 = vpop.xlane.xlu0 %2365
        %2367 = vadd.xlane.f32.xlu0 %v2304
        %v2368 = vpop.xlane.xlu0 %2367
        %2369 = vadd.xlane.f32.xlu0 %v2306
        %v2370 = vpop.xlane.xlu0 %2369
        %2371 = vadd.xlane.f32.xlu0 %v2308
        %v2372 = vpop.xlane.xlu0 %2371
        %2373 = vadd.xlane.f32.xlu0 %v2310
        %v2374 = vpop.xlane.xlu0 %2373
        %2375 = vadd.xlane.f32.xlu0 %v2312
        %v2376 = vpop.xlane.xlu0 %2375
        %2377 = vadd.xlane.f32.xlu0 %v2314
        %v2378 = vpop.xlane.xlu0 %2377
        %2379 = vadd.xlane.f32.xlu0 %v2316
        %v2380 = vpop.xlane.xlu0 %2379
        %2381 = vadd.xlane.f32.xlu0 %v2318
        %v2382 = vpop.xlane.xlu0 %2381
        %2383 = vadd.xlane.f32.xlu0 %v2320
        %v2384 = vpop.xlane.xlu0 %2383
        %2385 = vadd.xlane.f32.xlu0 %v2322
        %v2386 = vpop.xlane.xlu0 %2385
        %2387 = vadd.xlane.f32.xlu0 %v2324
        %v2388 = vpop.xlane.xlu0 %2387
        %2389 = vadd.xlane.f32.xlu0 %v2326
        %v2390 = vpop.xlane.xlu0 %2389
        %2391 = vadd.xlane.f32.xlu0 %v2328
        %v2392 = vpop.xlane.xlu0 %2391
        %2393 = vadd.xlane.f32.xlu0 %v2330
        %v2394 = vpop.xlane.xlu0 %2393
        %2395 = vadd.xlane.f32.xlu0 %v2332
        %v2396 = vpop.xlane.xlu0 %2395
        %2397 = vadd.xlane.f32.xlu0 %v2334
        %v2398 = vpop.xlane.xlu0 %2397
        %2399 = vadd.xlane.f32.xlu0 %v2336
        %v2400 = vpop.xlane.xlu0 %2399
        %2401 = vadd.xlane.f32.xlu0 %v2338
        %v2402 = vpop.xlane.xlu0 %2401
        %2403 = vadd.xlane.f32.xlu0 %v2340
        %v2404 = vpop.xlane.xlu0 %2403
        %2405 = vadd.xlane.f32.xlu0 %v2342
        %v2406 = vpop.xlane.xlu0 %2405
        %2407 = vadd.xlane.f32.xlu0 %v2344
        %v2408 = vpop.xlane.xlu0 %2407
        %2409 = vadd.xlane.f32.xlu0 %v2346
        %v2410 = vpop.xlane.xlu0 %2409
        %2411 = vadd.xlane.f32.xlu0 %v2348
        %v2412 = vpop.xlane.xlu0 %2411
        %2413 = vadd.xlane.f32.xlu0 %v2350
        %v2414 = vpop.xlane.xlu0 %2413
        %2415 = vadd.xlane.f32.xlu0 %v2352
        %v2416 = vpop.xlane.xlu0 %2415
        %v2417 = vrcp.pop %v2354
        %v2418 = vrcp.pop %v2356
        %v2419 = vrcp.pop %v2358
        %v2420 = vrcp.pop %v2360
        %v2421 = vrcp.pop %v2362
        %v2422 = vrcp.pop %v2364
        %v2423 = vrcp.pop %v2366
        %v2424 = vrcp.pop %v2368
        %v2425 = vrcp.pop %v2370
        %v2426 = vrcp.pop %v2372
        %v2427 = vrcp.pop %v2374
        %v2428 = vrcp.pop %v2376
        %v2429 = vrcp.pop %v2378
        %v2430 = vrcp.pop %v2380
        %v2431 = vrcp.pop %v2382
        %v2432 = vrcp.pop %v2384
        %v2433 = vrcp.pop %v2386
        %v2434 = vrcp.pop %v2388
        %v2435 = vrcp.pop %v2390
        %v2436 = vrcp.pop %v2392
        %v2437 = vrcp.pop %v2394
        %v2438 = vrcp.pop %v2396
        %v2439 = vrcp.pop %v2398
        %v2440 = vrcp.pop %v2400
        %v2441 = vrcp.pop %v2402
        %v2442 = vrcp.pop %v2404
        %v2443 = vrcp.pop %v2406
        %v2444 = vrcp.pop %v2408
        %v2445 = vrcp.pop %v2410
        %v2446 = vrcp.pop %v2412
        %v2447 = vrcp.pop %v2414
        %v2448 = vrcp.pop %v2416
        %v2449 = vmul.f32 %v2290, %v2417
        %v2450 = vmul.f32 %v2292, %v2418
        %v2451 = vmul.f32 %v2294, %v2419
        %v2452 = vmul.f32 %v2296, %v2420
        %v2453 = vmul.f32 %v2298, %v2421
        %v2454 = vmul.f32 %v2300, %v2422
        %v2455 = vmul.f32 %v2302, %v2423
        %v2456 = vmul.f32 %v2304, %v2424
        %v2457 = vmul.f32 %v2306, %v2425
        %v2458 = vmul.f32 %v2308, %v2426
        %v2459 = vmul.f32 %v2310, %v2427
        %v2460 = vmul.f32 %v2312, %v2428
        %v2461 = vmul.f32 %v2314, %v2429
        %v2462 = vmul.f32 %v2316, %v2430
        %v2463 = vmul.f32 %v2318, %v2431
        %v2464 = vmul.f32 %v2320, %v2432
        %v2465 = vmul.f32 %v2322, %v2433
        %v2466 = vmul.f32 %v2324, %v2434
        %v2467 = vmul.f32 %v2326, %v2435
        %v2468 = vmul.f32 %v2328, %v2436
        %v2469 = vmul.f32 %v2330, %v2437
        %v2470 = vmul.f32 %v2332, %v2438
        %v2471 = vmul.f32 %v2334, %v2439
        %v2472 = vmul.f32 %v2336, %v2440
        %v2473 = vmul.f32 %v2338, %v2441
        %v2474 = vmul.f32 %v2340, %v2442
        %v2475 = vmul.f32 %v2342, %v2443
        %v2476 = vmul.f32 %v2344, %v2444
        %v2477 = vmul.f32 %v2346, %v2445
        %v2478 = vmul.f32 %v2348, %v2446
        %v2479 = vmul.f32 %v2350, %v2447
        %v2480 = vmul.f32 %v2352, %v2448
        %v2481 = vpack.c.bf16 %v2450, %v2449
        %v2482 = vpack.c.bf16 %v2452, %v2451
        %v2483 = vpack.c.bf16 %v2454, %v2453
        %v2484 = vpack.c.bf16 %v2456, %v2455
        %v2485 = vpack.c.bf16 %v2458, %v2457
        %v2486 = vpack.c.bf16 %v2460, %v2459
        %v2487 = vpack.c.bf16 %v2462, %v2461
        %v2488 = vpack.c.bf16 %v2464, %v2463
        %v2489 = vpack.c.bf16 %v2466, %v2465
        %v2490 = vpack.c.bf16 %v2468, %v2467
        %v2491 = vpack.c.bf16 %v2470, %v2469
        %v2492 = vpack.c.bf16 %v2472, %v2471
        %v2493 = vpack.c.bf16 %v2474, %v2473
        %v2494 = vpack.c.bf16 %v2476, %v2475
        %v2495 = vpack.c.bf16 %v2478, %v2477
        %v2496 = vpack.c.bf16 %v2480, %v2479
        %2505 = vrot.lane.b32.xlu0 %v1774, 96
        %v2506 = vpop.permute.xlu0 %2505
        %2507 = vrot.lane.b32.xlu0 %v1775, 96
        %v2508 = vpop.permute.xlu0 %2507
        %2509 = vrot.lane.b32.xlu0 %v1776, 96
        %v2510 = vpop.permute.xlu0 %2509
        %2511 = vrot.lane.b32.xlu0 %v1777, 96
        %v2512 = vpop.permute.xlu0 %2511
        %2513 = vrot.lane.b32.xlu0 %v1778, 96
        %v2514 = vpop.permute.xlu0 %2513
        %2515 = vrot.lane.b32.xlu0 %v1779, 96
        %v2516 = vpop.permute.xlu0 %2515
        %2517 = vrot.lane.b32.xlu0 %v1780, 96
        %v2518 = vpop.permute.xlu0 %2517
        %2519 = vrot.lane.b32.xlu0 %v1781, 96
        %v2520 = vpop.permute.xlu0 %2519
        %2529 = vmatprep.subr.bf16.mxu0 0
        %2530 = vmatpush1.bf16.msra.mxu0 %v2506
        %2531 = vmatprep.subr.bf16.mxu0 0
        %2532 = vmatpush1.bf16.msra.mxu0 %v2508
        %2533 = vmatprep.subr.bf16.mxu0 0
        %2534 = vmatpush1.bf16.msra.mxu0 %v2510
        %2535 = vmatprep.subr.bf16.mxu0 0
        %2536 = vmatpush1.bf16.msra.mxu0 %v2512
        %2537 = vmatprep.subr.bf16.mxu0 0
        %2538 = vmatpush1.bf16.msra.mxu0 %v2514
        %2539 = vmatprep.subr.bf16.mxu0 0
        %2540 = vmatpush1.bf16.msra.mxu0 %v2516
        %2541 = vmatprep.subr.bf16.mxu0 0
        %2542 = vmatpush1.bf16.msra.mxu0 %v2518
        %2543 = vmatprep.subr.bf16.mxu0 0
        %2544 = vmatpush1.bf16.msra.mxu0 %v2520
        %2545 = vmatprep.subr.bf16.mxu0 0
        %2546 = vmatpush1.bf16.msra.mxu0 0
        %2547 = vmatprep.subr.bf16.mxu0 0
        %2548 = vmatpush1.bf16.msra.mxu0 0
        %2549 = vmatprep.subr.bf16.mxu0 0
        %2550 = vmatpush1.bf16.msra.mxu0 0
        %2551 = vmatprep.subr.bf16.mxu0 0
        %2552 = vmatpush1.bf16.msra.mxu0 0
        %2553 = vmatprep.subr.bf16.mxu0 0
        %2554 = vmatpush1.bf16.msra.mxu0 0
        %2555 = vmatprep.subr.bf16.mxu0 0
        %2556 = vmatpush1.bf16.msra.mxu0 0
        %2557 = vmatprep.subr.bf16.mxu0 0
        %2558 = vmatpush1.bf16.msra.mxu0 0
        %2559 = vmatprep.subr.bf16.mxu0 0
        %2560 = vmatpush1.bf16.msra.mxu0 0
        %2561 = vmatprep.mubr.bf16.mxu0 0
        %2562 = vmatmul.mubr.bf16.gmra.mrb[0].mxu0 %v2481
        %v2563 = vpop.f32.mrb[0].mxu0
        %v2564 = vadd.f32 0.0, %v2563
        %v2565 = vpop.f32.mrb[0].mxu0
        %v2566 = vpop.f32.mrb[0].mxu0
        %v2567 = vadd.f32 0.0, %v2566
        %v2568 = vpop.f32.mrb[0].mxu0
        %2569 = vmatprep.mubr.bf16.mxu0 0
        %2570 = vmatmul.mubr.bf16.gmra.mrb[0].mxu0 %v2482
        %v2571 = vpop.f32.mrb[0].mxu0
        %v2572 = vadd.f32 0.0, %v2571
        %v2573 = vpop.f32.mrb[0].mxu0
        %v2574 = vpop.f32.mrb[0].mxu0
        %v2575 = vadd.f32 0.0, %v2574
        %v2576 = vpop.f32.mrb[0].mxu0
        %2577 = vmatprep.mubr.bf16.mxu0 0
        %2578 = vmatmul.mubr.bf16.gmra.mrb[0].mxu0 %v2483
        %v2579 = vpop.f32.mrb[0].mxu0
        %v2580 = vadd.f32 0.0, %v2579
        %v2581 = vpop.f32.mrb[0].mxu0
        %v2582 = vpop.f32.mrb[0].mxu0
        %v2583 = vadd.f32 0.0, %v2582
        %v2584 = vpop.f32.mrb[0].mxu0
        %2585 = vmatprep.mubr.bf16.mxu0 0
        %2586 = vmatmul.mubr.bf16.gmra.mrb[0].mxu0 %v2484
        %v2587 = vpop.f32.mrb[0].mxu0
        %v2588 = vadd.f32 0.0, %v2587
        %v2589 = vpop.f32.mrb[0].mxu0
        %v2590 = vpop.f32.mrb[0].mxu0
        %v2591 = vadd.f32 0.0, %v2590
        %v2592 = vpop.f32.mrb[0].mxu0
        %2593 = vmatprep.mubr.bf16.mxu0 0
        %2594 = vmatmul.mubr.bf16.gmra.mrb[0].mxu0 %v2485
        %v2595 = vpop.f32.mrb[0].mxu0
        %v2596 = vadd.f32 0.0, %v2595
        %v2597 = vpop.f32.mrb[0].mxu0
        %v2598 = vpop.f32.mrb[0].mxu0
        %v2599 = vadd.f32 0.0, %v2598
        %v2600 = vpop.f32.mrb[0].mxu0
        %2601 = vmatprep.mubr.bf16.mxu0 0
        %2602 = vmatmul.mubr.bf16.gmra.mrb[0].mxu0 %v2486
        %v2603 = vpop.f32.mrb[0].mxu0
        %v2604 = vadd.f32 0.0, %v2603
        %v2605 = vpop.f32.mrb[0].mxu0
        %v2606 = vpop.f32.mrb[0].mxu0
        %v2607 = vadd.f32 0.0, %v2606
        %v2608 = vpop.f32.mrb[0].mxu0
        %2609 = vmatprep.mubr.bf16.mxu0 0
        %2610 = vmatmul.mubr.bf16.gmra.mrb[0].mxu0 %v2487
        %v2611 = vpop.f32.mrb[0].mxu0
        %v2612 = vadd.f32 0.0, %v2611
        %v2613 = vpop.f32.mrb[0].mxu0
        %v2614 = vpop.f32.mrb[0].mxu0
        %v2615 = vadd.f32 0.0, %v2614
        %v2616 = vpop.f32.mrb[0].mxu0
        %2617 = vmatprep.mubr.bf16.mxu0 0
        %2618 = vmatmul.mubr.bf16.gmra.mrb[0].mxu0 %v2488
        %v2619 = vpop.f32.mrb[0].mxu0
        %v2620 = vadd.f32 0.0, %v2619
        %v2621 = vpop.f32.mrb[0].mxu0
        %v2622 = vpop.f32.mrb[0].mxu0
        %v2623 = vadd.f32 0.0, %v2622
        %v2624 = vpop.f32.mrb[0].mxu0
        %2625 = vdwg.mxu0
        %2634 = vrot.lane.b32.xlu0 %v1782, 96
        %v2635 = vpop.permute.xlu0 %2634
        %2636 = vrot.lane.b32.xlu0 %v1783, 96
        %v2637 = vpop.permute.xlu0 %2636
        %2638 = vrot.lane.b32.xlu0 %v1784, 96
        %v2639 = vpop.permute.xlu0 %2638
        %2640 = vrot.lane.b32.xlu0 %v1785, 96
        %v2641 = vpop.permute.xlu0 %2640
        %2642 = vrot.lane.b32.xlu0 %v1786, 96
        %v2643 = vpop.permute.xlu0 %2642
        %2644 = vrot.lane.b32.xlu0 %v1787, 96
        %v2645 = vpop.permute.xlu0 %2644
        %2646 = vrot.lane.b32.xlu0 %v1788, 96
        %v2647 = vpop.permute.xlu0 %2646
        %2648 = vrot.lane.b32.xlu0 %v1789, 96
        %v2649 = vpop.permute.xlu0 %2648
        %2658 = vmatprep.subr.bf16.mxu0 0
        %2659 = vmatpush1.bf16.msra.mxu0 %v2635
        %2660 = vmatprep.subr.bf16.mxu0 0
        %2661 = vmatpush1.bf16.msra.mxu0 %v2637
        %2662 = vmatprep.subr.bf16.mxu0 0
        %2663 = vmatpush1.bf16.msra.mxu0 %v2639
        %2664 = vmatprep.subr.bf16.mxu0 0
        %2665 = vmatpush1.bf16.msra.mxu0 %v2641
        %2666 = vmatprep.subr.bf16.mxu0 0
        %2667 = vmatpush1.bf16.msra.mxu0 %v2643
        %2668 = vmatprep.subr.bf16.mxu0 0
        %2669 = vmatpush1.bf16.msra.mxu0 %v2645
        %2670 = vmatprep.subr.bf16.mxu0 0
        %2671 = vmatpush1.bf16.msra.mxu0 %v2647
        %2672 = vmatprep.subr.bf16.mxu0 0
        %2673 = vmatpush1.bf16.msra.mxu0 %v2649
        %2674 = vmatprep.subr.bf16.mxu0 0
        %2675 = vmatpush1.bf16.msra.mxu0 0
        %2676 = vmatprep.subr.bf16.mxu0 0
        %2677 = vmatpush1.bf16.msra.mxu0 0
        %2678 = vmatprep.subr.bf16.mxu0 0
        %2679 = vmatpush1.bf16.msra.mxu0 0
        %2680 = vmatprep.subr.bf16.mxu0 0
        %2681 = vmatpush1.bf16.msra.mxu0 0
        %2682 = vmatprep.subr.bf16.mxu0 0
        %2683 = vmatpush1.bf16.msra.mxu0 0
        %2684 = vmatprep.subr.bf16.mxu0 0
        %2685 = vmatpush1.bf16.msra.mxu0 0
        %2686 = vmatprep.subr.bf16.mxu0 0
        %2687 = vmatpush1.bf16.msra.mxu0 0
        %2688 = vmatprep.subr.bf16.mxu0 0
        %2689 = vmatpush1.bf16.msra.mxu0 0
        %2690 = vmatprep.mubr.bf16.mxu0 0
        %2691 = vmatmul.mubr.bf16.gmra.mrb[0].mxu0 %v2489
        %v2692 = vpop.f32.mrb[0].mxu0
        %v2693 = vadd.f32 0.0, %v2692
        %v2694 = vpop.f32.mrb[0].mxu0
        %v2695 = vpop.f32.mrb[0].mxu0
        %v2696 = vadd.f32 0.0, %v2695
        %v2697 = vpop.f32.mrb[0].mxu0
        %2698 = vmatprep.mubr.bf16.mxu0 0
        %2699 = vmatmul.mubr.bf16.gmra.mrb[0].mxu0 %v2490
        %v2700 = vpop.f32.mrb[0].mxu0
        %v2701 = vadd.f32 0.0, %v2700
        %v2702 = vpop.f32.mrb[0].mxu0
        %v2703 = vpop.f32.mrb[0].mxu0
        %v2704 = vadd.f32 0.0, %v2703
        %v2705 = vpop.f32.mrb[0].mxu0
        %2706 = vmatprep.mubr.bf16.mxu0 0
        %2707 = vmatmul.mubr.bf16.gmra.mrb[0].mxu0 %v2491
        %v2708 = vpop.f32.mrb[0].mxu0
        %v2709 = vadd.f32 0.0, %v2708
        %v2710 = vpop.f32.mrb[0].mxu0
        %v2711 = vpop.f32.mrb[0].mxu0
        %v2712 = vadd.f32 0.0, %v2711
        %v2713 = vpop.f32.mrb[0].mxu0
        %2714 = vmatprep.mubr.bf16.mxu0 0
        %2715 = vmatmul.mubr.bf16.gmra.mrb[0].mxu0 %v2492
        %v2716 = vpop.f32.mrb[0].mxu0
        %v2717 = vadd.f32 0.0, %v2716
        %v2718 = vpop.f32.mrb[0].mxu0
        %v2719 = vpop.f32.mrb[0].mxu0
        %v2720 = vadd.f32 0.0, %v2719
        %v2721 = vpop.f32.mrb[0].mxu0
        %2722 = vmatprep.mubr.bf16.mxu0 0
        %2723 = vmatmul.mubr.bf16.gmra.mrb[0].mxu0 %v2493
        %v2724 = vpop.f32.mrb[0].mxu0
        %v2725 = vadd.f32 0.0, %v2724
        %v2726 = vpop.f32.mrb[0].mxu0
        %v2727 = vpop.f32.mrb[0].mxu0
        %v2728 = vadd.f32 0.0, %v2727
        %v2729 = vpop.f32.mrb[0].mxu0
        %2730 = vmatprep.mubr.bf16.mxu0 0
        %2731 = vmatmul.mubr.bf16.gmra.mrb[0].mxu0 %v2494
        %v2732 = vpop.f32.mrb[0].mxu0
        %v2733 = vadd.f32 0.0, %v2732
        %v2734 = vpop.f32.mrb[0].mxu0
        %v2735 = vpop.f32.mrb[0].mxu0
        %v2736 = vadd.f32 0.0, %v2735
        %v2737 = vpop.f32.mrb[0].mxu0
        %2738 = vmatprep.mubr.bf16.mxu0 0
        %2739 = vmatmul.mubr.bf16.gmra.mrb[0].mxu0 %v2495
        %v2740 = vpop.f32.mrb[0].mxu0
        %v2741 = vadd.f32 0.0, %v2740
        %v2742 = vpop.f32.mrb[0].mxu0
        %v2743 = vpop.f32.mrb[0].mxu0
        %v2744 = vadd.f32 0.0, %v2743
        %v2745 = vpop.f32.mrb[0].mxu0
        %2746 = vmatprep.mubr.bf16.mxu0 0
        %2747 = vmatmul.mubr.bf16.gmra.mrb[0].mxu0 %v2496
        %v2748 = vpop.f32.mrb[0].mxu0
        %v2749 = vadd.f32 0.0, %v2748
        %v2750 = vpop.f32.mrb[0].mxu0
        %v2751 = vpop.f32.mrb[0].mxu0
        %v2752 = vadd.f32 0.0, %v2751
        %v2753 = vpop.f32.mrb[0].mxu0
        %2754 = vdwg.mxu0
        %v2755 = vpack.c.bf16 %v2567, %v2564
        %v2756 = vpack.c.bf16 %v2575, %v2572
        %v2757 = vpack.c.bf16 %v2583, %v2580
        %v2758 = vpack.c.bf16 %v2591, %v2588
        %v2759 = vpack.c.bf16 %v2599, %v2596
        %v2760 = vpack.c.bf16 %v2607, %v2604
        %v2761 = vpack.c.bf16 %v2615, %v2612
        %v2762 = vpack.c.bf16 %v2623, %v2620
        %v2763 = vpack.c.bf16 %v2696, %v2693
        %v2764 = vpack.c.bf16 %v2704, %v2701
        %v2765 = vpack.c.bf16 %v2712, %v2709
        %v2766 = vpack.c.bf16 %v2720, %v2717
        %v2767 = vpack.c.bf16 %v2728, %v2725
        %v2768 = vpack.c.bf16 %v2736, %v2733
        %v2769 = vpack.c.bf16 %v2744, %v2741
        %v2770 = vpack.c.bf16 %v2752, %v2749
        %2787 = vrot.lane.b32.xlu0 %v2755, 32
        %v2788 = vpop.permute.xlu0 %2787
        %2789 = vrot.lane.b32.xlu0 %v2756, 32
        %v2790 = vpop.permute.xlu0 %2789
        %2791 = vrot.lane.b32.xlu0 %v2757, 32
        %v2792 = vpop.permute.xlu0 %2791
        %2793 = vrot.lane.b32.xlu0 %v2758, 32
        %v2794 = vpop.permute.xlu0 %2793
        %2795 = vrot.lane.b32.xlu0 %v2759, 32
        %v2796 = vpop.permute.xlu0 %2795
        %2797 = vrot.lane.b32.xlu0 %v2760, 32
        %v2798 = vpop.permute.xlu0 %2797
        %2799 = vrot.lane.b32.xlu0 %v2761, 32
        %v2800 = vpop.permute.xlu0 %2799
        %2801 = vrot.lane.b32.xlu0 %v2762, 32
        %v2802 = vpop.permute.xlu0 %2801
        %2803 = vrot.lane.b32.xlu0 %v2763, 32
        %v2804 = vpop.permute.xlu0 %2803
        %2805 = vrot.lane.b32.xlu0 %v2764, 32
        %v2806 = vpop.permute.xlu0 %2805
        %2807 = vrot.lane.b32.xlu0 %v2765, 32
        %v2808 = vpop.permute.xlu0 %2807
        %2809 = vrot.lane.b32.xlu0 %v2766, 32
        %v2810 = vpop.permute.xlu0 %2809
        %2811 = vrot.lane.b32.xlu0 %v2767, 32
        %v2812 = vpop.permute.xlu0 %2811
        %2813 = vrot.lane.b32.xlu0 %v2768, 32
        %v2814 = vpop.permute.xlu0 %2813
        %2815 = vrot.lane.b32.xlu0 %v2769, 32
        %v2816 = vpop.permute.xlu0 %2815
        %2817 = vrot.lane.b32.xlu0 %v2770, 32
        %v2818 = vpop.permute.xlu0 %2817
        %vm2835 = vcmask 523520
        %2836 = vst.msk [vmem:[#allocation3] sm:$0xff] %vm2835, %v2788
        %2837 = vst.msk [vmem:[#allocation3 + $0x8] sm:$0xff] %vm2835, %v2790
        %2838 = vst.msk [vmem:[#allocation3 + $0x10] sm:$0xff] %vm2835, %v2792
        %2839 = vst.msk [vmem:[#allocation3 + $0x18] sm:$0xff] %vm2835, %v2794
        %2840 = vst.msk [vmem:[#allocation3 + $0x20] sm:$0xff] %vm2835, %v2796
        %2841 = vst.msk [vmem:[#allocation3 + $0x28] sm:$0xff] %vm2835, %v2798
        %2842 = vst.msk [vmem:[#allocation3 + $0x30] sm:$0xff] %vm2835, %v2800
        %2843 = vst.msk [vmem:[#allocation3 + $0x38] sm:$0xff] %vm2835, %v2802
        %2844 = vst.msk [vmem:[#allocation3 + $0x40] sm:$0xff] %vm2835, %v2804
        %2845 = vst.msk [vmem:[#allocation3 + $0x48] sm:$0xff] %vm2835, %v2806
        %2846 = vst.msk [vmem:[#allocation3 + $0x50] sm:$0xff] %vm2835, %v2808
        %2847 = vst.msk [vmem:[#allocation3 + $0x58] sm:$0xff] %vm2835, %v2810
        %2848 = vst.msk [vmem:[#allocation3 + $0x60] sm:$0xff] %vm2835, %v2812
        %2849 = vst.msk [vmem:[#allocation3 + $0x68] sm:$0xff] %vm2835, %v2814
        %2850 = vst.msk [vmem:[#allocation3 + $0x70] sm:$0xff] %vm2835, %v2816
        %2851 = vst.msk [vmem:[#allocation3 + $0x78] sm:$0xff] %vm2835, %v2818
        %v2852 = vld [vmem:[#allocation2] sm:$0xff]
        %v2853 = vld [vmem:[#allocation2 + $0x18] sm:$0xff]
        %v2854 = vld [vmem:[#allocation2 + $0x30] sm:$0xff]
        %v2855 = vld [vmem:[#allocation2 + $0x48] sm:$0xff]
        %v2856 = vld [vmem:[#allocation2 + $0x60] sm:$0xff]
        %v2857 = vld [vmem:[#allocation2 + $0x78] sm:$0xff]
        %v2858 = vld [vmem:[#allocation2 + $0x90] sm:$0xff]
        %v2859 = vld [vmem:[#allocation2 + $0xa8] sm:$0xff]
        %v2860 = vld [vmem:[#allocation2 + $0xc0] sm:$0xff]
        %v2861 = vld [vmem:[#allocation2 + $0xd8] sm:$0xff]
        %v2862 = vld [vmem:[#allocation2 + $0xf0] sm:$0xff]
        %v2863 = vld [vmem:[#allocation2 + $0x108] sm:$0xff]
        %v2864 = vld [vmem:[#allocation2 + $0x120] sm:$0xff]
        %v2865 = vld [vmem:[#allocation2 + $0x138] sm:$0xff]
        %v2866 = vld [vmem:[#allocation2 + $0x150] sm:$0xff]
        %v2867 = vld [vmem:[#allocation2 + $0x168] sm:$0xff]
        %v2868 = vld [vmem:[#allocation2 + $0x8] sm:$0xff]
        %v2869 = vld [vmem:[#allocation2 + $0x20] sm:$0xff]
        %v2870 = vld [vmem:[#allocation2 + $0x38] sm:$0xff]
        %v2871 = vld [vmem:[#allocation2 + $0x50] sm:$0xff]
        %v2872 = vld [vmem:[#allocation2 + $0x68] sm:$0xff]
        %v2873 = vld [vmem:[#allocation2 + $0x80] sm:$0xff]
        %v2874 = vld [vmem:[#allocation2 + $0x98] sm:$0xff]
        %v2875 = vld [vmem:[#allocation2 + $0xb0] sm:$0xff]
        %v2876 = vld [vmem:[#allocation2 + $0xc8] sm:$0xff]
        %v2877 = vld [vmem:[#allocation2 + $0xe0] sm:$0xff]
        %v2878 = vld [vmem:[#allocation2 + $0xf8] sm:$0xff]
        %v2879 = vld [vmem:[#allocation2 + $0x110] sm:$0xff]
        %v2880 = vld [vmem:[#allocation2 + $0x128] sm:$0xff]
        %v2881 = vld [vmem:[#allocation2 + $0x140] sm:$0xff]
        %v2882 = vld [vmem:[#allocation2 + $0x158] sm:$0xff]
        %v2883 = vld [vmem:[#allocation2 + $0x170] sm:$0xff]
        %v2884 = vld [vmem:[#allocation2 + $0x10] sm:$0xff]
        %v2885 = vld [vmem:[#allocation2 + $0x28] sm:$0xff]
        %v2886 = vld [vmem:[#allocation2 + $0x40] sm:$0xff]
        %v2887 = vld [vmem:[#allocation2 + $0x58] sm:$0xff]
        %v2888 = vld [vmem:[#allocation2 + $0x70] sm:$0xff]
        %v2889 = vld [vmem:[#allocation2 + $0x88] sm:$0xff]
        %v2890 = vld [vmem:[#allocation2 + $0xa0] sm:$0xff]
        %v2891 = vld [vmem:[#allocation2 + $0xb8] sm:$0xff]
        %v2892 = vld [vmem:[#allocation2 + $0xd0] sm:$0xff]
        %v2893 = vld [vmem:[#allocation2 + $0xe8] sm:$0xff]
        %v2894 = vld [vmem:[#allocation2 + $0x100] sm:$0xff]
        %v2895 = vld [vmem:[#allocation2 + $0x118] sm:$0xff]
        %v2896 = vld [vmem:[#allocation2 + $0x130] sm:$0xff]
        %v2897 = vld [vmem:[#allocation2 + $0x148] sm:$0xff]
        %v2898 = vld [vmem:[#allocation2 + $0x160] sm:$0xff]
        %v2899 = vld [vmem:[#allocation2 + $0x178] sm:$0xff]
        %s2900 = scalar_lea.vmem %s2, 256
        %v2901 = vld [vmem:[%s2900] sm:$0xff]
        %v2902 = vld [vmem:[%s2900 + $0x8] sm:$0xff]
        %v2903 = vld [vmem:[%s2900 + $0x10] sm:$0xff]
        %v2904 = vld [vmem:[%s2900 + $0x18] sm:$0xff]
        %v2905 = vld [vmem:[%s2900 + $0x20] sm:$0xff]
        %v2906 = vld [vmem:[%s2900 + $0x28] sm:$0xff]
        %v2907 = vld [vmem:[%s2900 + $0x30] sm:$0xff]
        %v2908 = vld [vmem:[%s2900 + $0x38] sm:$0xff]
        %v2909 = vld [vmem:[%s2900 + $0x40] sm:$0xff]
        %v2910 = vld [vmem:[%s2900 + $0x48] sm:$0xff]
        %v2911 = vld [vmem:[%s2900 + $0x50] sm:$0xff]
        %v2912 = vld [vmem:[%s2900 + $0x58] sm:$0xff]
        %v2913 = vld [vmem:[%s2900 + $0x60] sm:$0xff]
        %v2914 = vld [vmem:[%s2900 + $0x68] sm:$0xff]
        %v2915 = vld [vmem:[%s2900 + $0x70] sm:$0xff]
        %v2916 = vld [vmem:[%s2900 + $0x78] sm:$0xff]
        %2925 = vrot.lane.b32.xlu0 %v2852, 64
        %v2926 = vpop.permute.xlu0 %2925
        %2927 = vrot.lane.b32.xlu0 %v2853, 64
        %v2928 = vpop.permute.xlu0 %2927
        %2929 = vrot.lane.b32.xlu0 %v2854, 64
        %v2930 = vpop.permute.xlu0 %2929
        %2931 = vrot.lane.b32.xlu0 %v2855, 64
        %v2932 = vpop.permute.xlu0 %2931
        %2933 = vrot.lane.b32.xlu0 %v2856, 64
        %v2934 = vpop.permute.xlu0 %2933
        %2935 = vrot.lane.b32.xlu0 %v2857, 64
        %v2936 = vpop.permute.xlu0 %2935
        %2937 = vrot.lane.b32.xlu0 %v2858, 64
        %v2938 = vpop.permute.xlu0 %2937
        %2939 = vrot.lane.b32.xlu0 %v2859, 64
        %v2940 = vpop.permute.xlu0 %2939
        %2949 = vrot.lane.b32.xlu0 %v2868, 64
        %v2950 = vpop.permute.xlu0 %2949
        %2951 = vrot.lane.b32.xlu0 %v2869, 64
        %v2952 = vpop.permute.xlu0 %2951
        %2953 = vrot.lane.b32.xlu0 %v2870, 64
        %v2954 = vpop.permute.xlu0 %2953
        %2955 = vrot.lane.b32.xlu0 %v2871, 64
        %v2956 = vpop.permute.xlu0 %2955
        %2957 = vrot.lane.b32.xlu0 %v2872, 64
        %v2958 = vpop.permute.xlu0 %2957
        %2959 = vrot.lane.b32.xlu0 %v2873, 64
        %v2960 = vpop.permute.xlu0 %2959
        %2961 = vrot.lane.b32.xlu0 %v2874, 64
        %v2962 = vpop.permute.xlu0 %2961
        %2963 = vrot.lane.b32.xlu0 %v2875, 64
        %v2964 = vpop.permute.xlu0 %2963
        %v2966 = vsel %vm921, %v2926, 0
        %v2969 = vsel %vm921, %v2928, 0
        %v2972 = vsel %vm921, %v2930, 0
        %v2975 = vsel %vm921, %v2932, 0
        %v2978 = vsel %vm921, %v2934, 0
        %v2981 = vsel %vm921, %v2936, 0
        %v2984 = vsel %vm921, %v2938, 0
        %v2987 = vsel %vm921, %v2940, 0
        %v2990 = vsel %vm921, %v2950, 0
        %v2993 = vsel %vm921, %v2952, 0
        %v2996 = vsel %vm921, %v2954, 0
        %v2999 = vsel %vm921, %v2956, 0
        %v3002 = vsel %vm921, %v2958, 0
        %v3005 = vsel %vm921, %v2960, 0
        %v3008 = vsel %vm921, %v2962, 0
        %v3011 = vsel %vm921, %v2964, 0
        %3013 = vmatprep.subr.bf16.mxu0 0
        %3014 = vmatpush1.bf16.xpose.msra.mxu0 %v2990
        %3015 = vmatprep.subr.bf16.mxu0 0
        %3016 = vmatpush1.bf16.xpose.msra.mxu0 %v2993
        %3017 = vmatprep.subr.bf16.mxu0 0
        %3018 = vmatpush1.bf16.xpose.msra.mxu0 %v2996
        %3019 = vmatprep.subr.bf16.mxu0 0
        %3020 = vmatpush1.bf16.xpose.msra.mxu0 %v2999
        %3021 = vmatprep.subr.bf16.mxu0 0
        %3022 = vmatpush1.bf16.xpose.msra.mxu0 %v3002
        %3023 = vmatprep.subr.bf16.mxu0 0
        %3024 = vmatpush1.bf16.xpose.msra.mxu0 %v3005
        %3025 = vmatprep.subr.bf16.mxu0 0
        %3026 = vmatpush1.bf16.xpose.msra.mxu0 %v3008
        %3027 = vmatprep.subr.bf16.mxu0 0
        %3028 = vmatpush1.bf16.xpose.msra.mxu0 %v3011
        %3029 = vmatprep.subr.bf16.mxu0 0
        %3030 = vmatpush1.bf16.xpose.msra.mxu0 0
        %3031 = vmatprep.subr.bf16.mxu0 0
        %3032 = vmatpush1.bf16.xpose.msra.mxu0 0
        %3033 = vmatprep.subr.bf16.mxu0 0
        %3034 = vmatpush1.bf16.xpose.msra.mxu0 0
        %3035 = vmatprep.subr.bf16.mxu0 0
        %3036 = vmatpush1.bf16.xpose.msra.mxu0 0
        %3037 = vmatprep.subr.bf16.mxu0 0
        %3038 = vmatpush1.bf16.xpose.msra.mxu0 0
        %3039 = vmatprep.subr.bf16.mxu0 0
        %3040 = vmatpush1.bf16.xpose.msra.mxu0 0
        %3041 = vmatprep.subr.bf16.mxu0 0
        %3042 = vmatpush1.bf16.xpose.msra.mxu0 0
        %3043 = vmatprep.subr.bf16.mxu0 0
        %3044 = vmatpush1.bf16.xpose.msra.mxu0 0
        %3045 = vmatprep.mubr.bf16.mxu0 0
        %3046 = vmatmul.mubr.bf16.gmra.mrb[0].mxu0 %v2966
        %v3047 = vpop.f32.mrb[0].mxu0
        %v3048 = vadd.f32 %v2901, %v3047
        %v3049 = vpop.f32.mrb[0].mxu0
        %v3050 = vpop.f32.mrb[0].mxu0
        %v3051 = vadd.f32 %v2902, %v3050
        %v3052 = vpop.f32.mrb[0].mxu0
        %3053 = vmatprep.mubr.bf16.mxu0 0
        %3054 = vmatmul.mubr.bf16.gmra.mrb[0].mxu0 %v2969
        %v3055 = vpop.f32.mrb[0].mxu0
        %v3056 = vadd.f32 %v2903, %v3055
        %v3057 = vpop.f32.mrb[0].mxu0
        %v3058 = vpop.f32.mrb[0].mxu0
        %v3059 = vadd.f32 %v2904, %v3058
        %v3060 = vpop.f32.mrb[0].mxu0
        %3061 = vmatprep.mubr.bf16.mxu0 0
        %3062 = vmatmul.mubr.bf16.gmra.mrb[0].mxu0 %v2972
        %v3063 = vpop.f32.mrb[0].mxu0
        %v3064 = vadd.f32 %v2905, %v3063
        %v3065 = vpop.f32.mrb[0].mxu0
        %v3066 = vpop.f32.mrb[0].mxu0
        %v3067 = vadd.f32 %v2906, %v3066
        %v3068 = vpop.f32.mrb[0].mxu0
        %3069 = vmatprep.mubr.bf16.mxu0 0
        %3070 = vmatmul.mubr.bf16.gmra.mrb[0].mxu0 %v2975
        %v3071 = vpop.f32.mrb[0].mxu0
        %v3072 = vadd.f32 %v2907, %v3071
        %v3073 = vpop.f32.mrb[0].mxu0
        %v3074 = vpop.f32.mrb[0].mxu0
        %v3075 = vadd.f32 %v2908, %v3074
        %v3076 = vpop.f32.mrb[0].mxu0
        %3077 = vmatprep.mubr.bf16.mxu0 0
        %3078 = vmatmul.mubr.bf16.gmra.mrb[0].mxu0 %v2978
        %v3079 = vpop.f32.mrb[0].mxu0
        %v3080 = vadd.f32 %v2909, %v3079
        %v3081 = vpop.f32.mrb[0].mxu0
        %v3082 = vpop.f32.mrb[0].mxu0
        %v3083 = vadd.f32 %v2910, %v3082
        %v3084 = vpop.f32.mrb[0].mxu0
        %3085 = vmatprep.mubr.bf16.mxu0 0
        %3086 = vmatmul.mubr.bf16.gmra.mrb[0].mxu0 %v2981
        %v3087 = vpop.f32.mrb[0].mxu0
        %v3088 = vadd.f32 %v2911, %v3087
        %v3089 = vpop.f32.mrb[0].mxu0
        %v3090 = vpop.f32.mrb[0].mxu0
        %v3091 = vadd.f32 %v2912, %v3090
        %v3092 = vpop.f32.mrb[0].mxu0
        %3093 = vmatprep.mubr.bf16.mxu0 0
        %3094 = vmatmul.mubr.bf16.gmra.mrb[0].mxu0 %v2984
        %v3095 = vpop.f32.mrb[0].mxu0
        %v3096 = vadd.f32 %v2913, %v3095
        %v3097 = vpop.f32.mrb[0].mxu0
        %v3098 = vpop.f32.mrb[0].mxu0
        %v3099 = vadd.f32 %v2914, %v3098
        %v3100 = vpop.f32.mrb[0].mxu0
        %3101 = vmatprep.mubr.bf16.mxu0 0
        %3102 = vmatmul.mubr.bf16.gmra.mrb[0].mxu0 %v2987
        %v3103 = vpop.f32.mrb[0].mxu0
        %v3104 = vadd.f32 %v2915, %v3103
        %v3105 = vpop.f32.mrb[0].mxu0
        %v3106 = vpop.f32.mrb[0].mxu0
        %v3107 = vadd.f32 %v2916, %v3106
        %v3108 = vpop.f32.mrb[0].mxu0
        %3109 = vdwg.mxu0
        %3118 = vrot.lane.b32.xlu0 %v2860, 64
        %v3119 = vpop.permute.xlu0 %3118
        %3120 = vrot.lane.b32.xlu0 %v2861, 64
        %v3121 = vpop.permute.xlu0 %3120
        %3122 = vrot.lane.b32.xlu0 %v2862, 64
        %v3123 = vpop.permute.xlu0 %3122
        %3124 = vrot.lane.b32.xlu0 %v2863, 64
        %v3125 = vpop.permute.xlu0 %3124
        %3126 = vrot.lane.b32.xlu0 %v2864, 64
        %v3127 = vpop.permute.xlu0 %3126
        %3128 = vrot.lane.b32.xlu0 %v2865, 64
        %v3129 = vpop.permute.xlu0 %3128
        %3130 = vrot.lane.b32.xlu0 %v2866, 64
        %v3131 = vpop.permute.xlu0 %3130
        %3132 = vrot.lane.b32.xlu0 %v2867, 64
        %v3133 = vpop.permute.xlu0 %3132
        %3142 = vrot.lane.b32.xlu0 %v2876, 64
        %v3143 = vpop.permute.xlu0 %3142
        %3144 = vrot.lane.b32.xlu0 %v2877, 64
        %v3145 = vpop.permute.xlu0 %3144
        %3146 = vrot.lane.b32.xlu0 %v2878, 64
        %v3147 = vpop.permute.xlu0 %3146
        %3148 = vrot.lane.b32.xlu0 %v2879, 64
        %v3149 = vpop.permute.xlu0 %3148
        %3150 = vrot.lane.b32.xlu0 %v2880, 64
        %v3151 = vpop.permute.xlu0 %3150
        %3152 = vrot.lane.b32.xlu0 %v2881, 64
        %v3153 = vpop.permute.xlu0 %3152
        %3154 = vrot.lane.b32.xlu0 %v2882, 64
        %v3155 = vpop.permute.xlu0 %3154
        %3156 = vrot.lane.b32.xlu0 %v2883, 64
        %v3157 = vpop.permute.xlu0 %3156
        %v3159 = vsel %vm921, %v3119, 0
        %v3162 = vsel %vm921, %v3121, 0
        %v3165 = vsel %vm921, %v3123, 0
        %v3168 = vsel %vm921, %v3125, 0
        %v3171 = vsel %vm921, %v3127, 0
        %v3174 = vsel %vm921, %v3129, 0
        %v3177 = vsel %vm921, %v3131, 0
        %v3180 = vsel %vm921, %v3133, 0
        %v3183 = vsel %vm921, %v3143, 0
        %v3186 = vsel %vm921, %v3145, 0
        %v3189 = vsel %vm921, %v3147, 0
        %v3192 = vsel %vm921, %v3149, 0
        %v3195 = vsel %vm921, %v3151, 0
        %v3198 = vsel %vm921, %v3153, 0
        %v3201 = vsel %vm921, %v3155, 0
        %v3204 = vsel %vm921, %v3157, 0
        %3206 = vmatprep.subr.bf16.mxu0 0
        %3207 = vmatpush1.bf16.xpose.msra.mxu0 %v3183
        %3208 = vmatprep.subr.bf16.mxu0 0
        %3209 = vmatpush1.bf16.xpose.msra.mxu0 %v3186
        %3210 = vmatprep.subr.bf16.mxu0 0
        %3211 = vmatpush1.bf16.xpose.msra.mxu0 %v3189
        %3212 = vmatprep.subr.bf16.mxu0 0
        %3213 = vmatpush1.bf16.xpose.msra.mxu0 %v3192
        %3214 = vmatprep.subr.bf16.mxu0 0
        %3215 = vmatpush1.bf16.xpose.msra.mxu0 %v3195
        %3216 = vmatprep.subr.bf16.mxu0 0
        %3217 = vmatpush1.bf16.xpose.msra.mxu0 %v3198
        %3218 = vmatprep.subr.bf16.mxu0 0
        %3219 = vmatpush1.bf16.xpose.msra.mxu0 %v3201
        %3220 = vmatprep.subr.bf16.mxu0 0
        %3221 = vmatpush1.bf16.xpose.msra.mxu0 %v3204
        %3222 = vmatprep.subr.bf16.mxu0 0
        %3223 = vmatpush1.bf16.xpose.msra.mxu0 0
        %3224 = vmatprep.subr.bf16.mxu0 0
        %3225 = vmatpush1.bf16.xpose.msra.mxu0 0
        %3226 = vmatprep.subr.bf16.mxu0 0
        %3227 = vmatpush1.bf16.xpose.msra.mxu0 0
        %3228 = vmatprep.subr.bf16.mxu0 0
        %3229 = vmatpush1.bf16.xpose.msra.mxu0 0
        %3230 = vmatprep.subr.bf16.mxu0 0
        %3231 = vmatpush1.bf16.xpose.msra.mxu0 0
        %3232 = vmatprep.subr.bf16.mxu0 0
        %3233 = vmatpush1.bf16.xpose.msra.mxu0 0
        %3234 = vmatprep.subr.bf16.mxu0 0
        %3235 = vmatpush1.bf16.xpose.msra.mxu0 0
        %3236 = vmatprep.subr.bf16.mxu0 0
        %3237 = vmatpush1.bf16.xpose.msra.mxu0 0
        %3238 = vmatprep.mubr.bf16.mxu0 0
        %3239 = vmatmul.mubr.bf16.gmra.mrb[0].mxu0 %v3159
        %v3240 = vpop.f32.mrb[0].mxu0
        %v3241 = vadd.f32 %v2901, %v3240
        %v3242 = vpop.f32.mrb[0].mxu0
        %v3243 = vpop.f32.mrb[0].mxu0
        %v3244 = vadd.f32 %v2902, %v3243
        %v3245 = vpop.f32.mrb[0].mxu0
        %3246 = vmatprep.mubr.bf16.mxu0 0
        %3247 = vmatmul.mubr.bf16.gmra.mrb[0].mxu0 %v3162
        %v3248 = vpop.f32.mrb[0].mxu0
        %v3249 = vadd.f32 %v2903, %v3248
        %v3250 = vpop.f32.mrb[0].mxu0
        %v3251 = vpop.f32.mrb[0].mxu0
        %v3252 = vadd.f32 %v2904, %v3251
        %v3253 = vpop.f32.mrb[0].mxu0
        %3254 = vmatprep.mubr.bf16.mxu0 0
        %3255 = vmatmul.mubr.bf16.gmra.mrb[0].mxu0 %v3165
        %v3256 = vpop.f32.mrb[0].mxu0
        %v3257 = vadd.f32 %v2905, %v3256
        %v3258 = vpop.f32.mrb[0].mxu0
        %v3259 = vpop.f32.mrb[0].mxu0
        %v3260 = vadd.f32 %v2906, %v3259
        %v3261 = vpop.f32.mrb[0].mxu0
        %3262 = vmatprep.mubr.bf16.mxu0 0
        %3263 = vmatmul.mubr.bf16.gmra.mrb[0].mxu0 %v3168
        %v3264 = vpop.f32.mrb[0].mxu0
        %v3265 = vadd.f32 %v2907, %v3264
        %v3266 = vpop.f32.mrb[0].mxu0
        %v3267 = vpop.f32.mrb[0].mxu0
        %v3268 = vadd.f32 %v2908, %v3267
        %v3269 = vpop.f32.mrb[0].mxu0
        %3270 = vmatprep.mubr.bf16.mxu0 0
        %3271 = vmatmul.mubr.bf16.gmra.mrb[0].mxu0 %v3171
        %v3272 = vpop.f32.mrb[0].mxu0
        %v3273 = vadd.f32 %v2909, %v3272
        %v3274 = vpop.f32.mrb[0].mxu0
        %v3275 = vpop.f32.mrb[0].mxu0
        %v3276 = vadd.f32 %v2910, %v3275
        %v3277 = vpop.f32.mrb[0].mxu0
        %3278 = vmatprep.mubr.bf16.mxu0 0
        %3279 = vmatmul.mubr.bf16.gmra.mrb[0].mxu0 %v3174
        %v3280 = vpop.f32.mrb[0].mxu0
        %v3281 = vadd.f32 %v2911, %v3280
        %v3282 = vpop.f32.mrb[0].mxu0
        %v3283 = vpop.f32.mrb[0].mxu0
        %v3284 = vadd.f32 %v2912, %v3283
        %v3285 = vpop.f32.mrb[0].mxu0
        %3286 = vmatprep.mubr.bf16.mxu0 0
        %3287 = vmatmul.mubr.bf16.gmra.mrb[0].mxu0 %v3177
        %v3288 = vpop.f32.mrb[0].mxu0
        %v3289 = vadd.f32 %v2913, %v3288
        %v3290 = vpop.f32.mrb[0].mxu0
        %v3291 = vpop.f32.mrb[0].mxu0
        %v3292 = vadd.f32 %v2914, %v3291
        %v3293 = vpop.f32.mrb[0].mxu0
        %3294 = vmatprep.mubr.bf16.mxu0 0
        %3295 = vmatmul.mubr.bf16.gmra.mrb[0].mxu0 %v3180
        %v3296 = vpop.f32.mrb[0].mxu0
        %v3297 = vadd.f32 %v2915, %v3296
        %v3298 = vpop.f32.mrb[0].mxu0
        %v3299 = vpop.f32.mrb[0].mxu0
        %v3300 = vadd.f32 %v2916, %v3299
        %v3301 = vpop.f32.mrb[0].mxu0
        %3302 = vdwg.mxu0
        %3303 = vmax.xlane.f32.xlu0 %v3048
        %v3304 = vpop.xlane.xlu0 %3303
        %3305 = vmax.xlane.f32.xlu0 %v3051
        %v3306 = vpop.xlane.xlu0 %3305
        %3307 = vmax.xlane.f32.xlu0 %v3056
        %v3308 = vpop.xlane.xlu0 %3307
        %3309 = vmax.xlane.f32.xlu0 %v3059
        %v3310 = vpop.xlane.xlu0 %3309
        %3311 = vmax.xlane.f32.xlu0 %v3064
        %v3312 = vpop.xlane.xlu0 %3311
        %3313 = vmax.xlane.f32.xlu0 %v3067
        %v3314 = vpop.xlane.xlu0 %3313
        %3315 = vmax.xlane.f32.xlu0 %v3072
        %v3316 = vpop.xlane.xlu0 %3315
        %3317 = vmax.xlane.f32.xlu0 %v3075
        %v3318 = vpop.xlane.xlu0 %3317
        %3319 = vmax.xlane.f32.xlu0 %v3080
        %v3320 = vpop.xlane.xlu0 %3319
        %3321 = vmax.xlane.f32.xlu0 %v3083
        %v3322 = vpop.xlane.xlu0 %3321
        %3323 = vmax.xlane.f32.xlu0 %v3088
        %v3324 = vpop.xlane.xlu0 %3323
        %3325 = vmax.xlane.f32.xlu0 %v3091
        %v3326 = vpop.xlane.xlu0 %3325
        %3327 = vmax.xlane.f32.xlu0 %v3096
        %v3328 = vpop.xlane.xlu0 %3327
        %3329 = vmax.xlane.f32.xlu0 %v3099
        %v3330 = vpop.xlane.xlu0 %3329
        %3331 = vmax.xlane.f32.xlu0 %v3104
        %v3332 = vpop.xlane.xlu0 %3331
        %3333 = vmax.xlane.f32.xlu0 %v3107
        %v3334 = vpop.xlane.xlu0 %3333
        %3335 = vmax.xlane.f32.xlu0 %v3241
        %v3336 = vpop.xlane.xlu0 %3335
        %3337 = vmax.xlane.f32.xlu0 %v3244
        %v3338 = vpop.xlane.xlu0 %3337
        %3339 = vmax.xlane.f32.xlu0 %v3249
        %v3340 = vpop.xlane.xlu0 %3339
        %3341 = vmax.xlane.f32.xlu0 %v3252
        %v3342 = vpop.xlane.xlu0 %3341
        %3343 = vmax.xlane.f32.xlu0 %v3257
        %v3344 = vpop.xlane.xlu0 %3343
        %3345 = vmax.xlane.f32.xlu0 %v3260
        %v3346 = vpop.xlane.xlu0 %3345
        %3347 = vmax.xlane.f32.xlu0 %v3265
        %v3348 = vpop.xlane.xlu0 %3347
        %3349 = vmax.xlane.f32.xlu0 %v3268
        %v3350 = vpop.xlane.xlu0 %3349
        %3351 = vmax.xlane.f32.xlu0 %v3273
        %v3352 = vpop.xlane.xlu0 %3351
        %3353 = vmax.xlane.f32.xlu0 %v3276
        %v3354 = vpop.xlane.xlu0 %3353
        %3355 = vmax.xlane.f32.xlu0 %v3281
        %v3356 = vpop.xlane.xlu0 %3355
        %3357 = vmax.xlane.f32.xlu0 %v3284
        %v3358 = vpop.xlane.xlu0 %3357
        %3359 = vmax.xlane.f32.xlu0 %v3289
        %v3360 = vpop.xlane.xlu0 %3359
        %3361 = vmax.xlane.f32.xlu0 %v3292
        %v3362 = vpop.xlane.xlu0 %3361
        %3363 = vmax.xlane.f32.xlu0 %v3297
        %v3364 = vpop.xlane.xlu0 %3363
        %3365 = vmax.xlane.f32.xlu0 %v3300
        %v3366 = vpop.xlane.xlu0 %3365
        %v3367 = vsub.f32 %v3048, %v3304
        %v3368 = vsub.f32 %v3051, %v3306
        %v3369 = vsub.f32 %v3056, %v3308
        %v3370 = vsub.f32 %v3059, %v3310
        %v3371 = vsub.f32 %v3064, %v3312
        %v3372 = vsub.f32 %v3067, %v3314
        %v3373 = vsub.f32 %v3072, %v3316
        %v3374 = vsub.f32 %v3075, %v3318
        %v3375 = vsub.f32 %v3080, %v3320
        %v3376 = vsub.f32 %v3083, %v3322
        %v3377 = vsub.f32 %v3088, %v3324
        %v3378 = vsub.f32 %v3091, %v3326
        %v3379 = vsub.f32 %v3096, %v3328
        %v3380 = vsub.f32 %v3099, %v3330
        %v3381 = vsub.f32 %v3104, %v3332
        %v3382 = vsub.f32 %v3107, %v3334
        %v3383 = vsub.f32 %v3241, %v3336
        %v3384 = vsub.f32 %v3244, %v3338
        %v3385 = vsub.f32 %v3249, %v3340
        %v3386 = vsub.f32 %v3252, %v3342
        %v3387 = vsub.f32 %v3257, %v3344
        %v3388 = vsub.f32 %v3260, %v3346
        %v3389 = vsub.f32 %v3265, %v3348
        %v3390 = vsub.f32 %v3268, %v3350
        %v3391 = vsub.f32 %v3273, %v3352
        %v3392 = vsub.f32 %v3276, %v3354
        %v3393 = vsub.f32 %v3281, %v3356
        %v3394 = vsub.f32 %v3284, %v3358
        %v3395 = vsub.f32 %v3289, %v3360
        %v3396 = vsub.f32 %v3292, %v3362
        %v3397 = vsub.f32 %v3297, %v3364
        %v3398 = vsub.f32 %v3300, %v3366
        %v3399 = vmul.f32 %v3367, 1.442695
        %v3400 = vpow.pop %v3399
        %v3401 = vmul.f32 %v3368, 1.442695
        %v3402 = vpow.pop %v3401
        %v3403 = vmul.f32 %v3369, 1.442695
        %v3404 = vpow.pop %v3403
        %v3405 = vmul.f32 %v3370, 1.442695
        %v3406 = vpow.pop %v3405
        %v3407 = vmul.f32 %v3371, 1.442695
        %v3408 = vpow.pop %v3407
        %v3409 = vmul.f32 %v3372, 1.442695
        %v3410 = vpow.pop %v3409
        %v3411 = vmul.f32 %v3373, 1.442695
        %v3412 = vpow.pop %v3411
        %v3413 = vmul.f32 %v3374, 1.442695
        %v3414 = vpow.pop %v3413
        %v3415 = vmul.f32 %v3375, 1.442695
        %v3416 = vpow.pop %v3415
        %v3417 = vmul.f32 %v3376, 1.442695
        %v3418 = vpow.pop %v3417
        %v3419 = vmul.f32 %v3377, 1.442695
        %v3420 = vpow.pop %v3419
        %v3421 = vmul.f32 %v3378, 1.442695
        %v3422 = vpow.pop %v3421
        %v3423 = vmul.f32 %v3379, 1.442695
        %v3424 = vpow.pop %v3423
        %v3425 = vmul.f32 %v3380, 1.442695
        %v3426 = vpow.pop %v3425
        %v3427 = vmul.f32 %v3381, 1.442695
        %v3428 = vpow.pop %v3427
        %v3429 = vmul.f32 %v3382, 1.442695
        %v3430 = vpow.pop %v3429
        %v3431 = vmul.f32 %v3383, 1.442695
        %v3432 = vpow.pop %v3431
        %v3433 = vmul.f32 %v3384, 1.442695
        %v3434 = vpow.pop %v3433
        %v3435 = vmul.f32 %v3385, 1.442695
        %v3436 = vpow.pop %v3435
        %v3437 = vmul.f32 %v3386, 1.442695
        %v3438 = vpow.pop %v3437
        %v3439 = vmul.f32 %v3387, 1.442695
        %v3440 = vpow.pop %v3439
        %v3441 = vmul.f32 %v3388, 1.442695
        %v3442 = vpow.pop %v3441
        %v3443 = vmul.f32 %v3389, 1.442695
        %v3444 = vpow.pop %v3443
        %v3445 = vmul.f32 %v3390, 1.442695
        %v3446 = vpow.pop %v3445
        %v3447 = vmul.f32 %v3391, 1.442695
        %v3448 = vpow.pop %v3447
        %v3449 = vmul.f32 %v3392, 1.442695
        %v3450 = vpow.pop %v3449
        %v3451 = vmul.f32 %v3393, 1.442695
        %v3452 = vpow.pop %v3451
        %v3453 = vmul.f32 %v3394, 1.442695
        %v3454 = vpow.pop %v3453
        %v3455 = vmul.f32 %v3395, 1.442695
        %v3456 = vpow.pop %v3455
        %v3457 = vmul.f32 %v3396, 1.442695
        %v3458 = vpow.pop %v3457
        %v3459 = vmul.f32 %v3397, 1.442695
        %v3460 = vpow.pop %v3459
        %v3461 = vmul.f32 %v3398, 1.442695
        %v3462 = vpow.pop %v3461
        %3463 = vadd.xlane.f32.xlu0 %v3400
        %v3464 = vpop.xlane.xlu0 %3463
        %3465 = vadd.xlane.f32.xlu0 %v3402
        %v3466 = vpop.xlane.xlu0 %3465
        %3467 = vadd.xlane.f32.xlu0 %v3404
        %v3468 = vpop.xlane.xlu0 %3467
        %3469 = vadd.xlane.f32.xlu0 %v3406
        %v3470 = vpop.xlane.xlu0 %3469
        %3471 = vadd.xlane.f32.xlu0 %v3408
        %v3472 = vpop.xlane.xlu0 %3471
        %3473 = vadd.xlane.f32.xlu0 %v3410
        %v3474 = vpop.xlane.xlu0 %3473
        %3475 = vadd.xlane.f32.xlu0 %v3412
        %v3476 = vpop.xlane.xlu0 %3475
        %3477 = vadd.xlane.f32.xlu0 %v3414
        %v3478 = vpop.xlane.xlu0 %3477
        %3479 = vadd.xlane.f32.xlu0 %v3416
        %v3480 = vpop.xlane.xlu0 %3479
        %3481 = vadd.xlane.f32.xlu0 %v3418
        %v3482 = vpop.xlane.xlu0 %3481
        %3483 = vadd.xlane.f32.xlu0 %v3420
        %v3484 = vpop.xlane.xlu0 %3483
        %3485 = vadd.xlane.f32.xlu0 %v3422
        %v3486 = vpop.xlane.xlu0 %3485
        %3487 = vadd.xlane.f32.xlu0 %v3424
        %v3488 = vpop.xlane.xlu0 %3487
        %3489 = vadd.xlane.f32.xlu0 %v3426
        %v3490 = vpop.xlane.xlu0 %3489
        %3491 = vadd.xlane.f32.xlu0 %v3428
        %v3492 = vpop.xlane.xlu0 %3491
        %3493 = vadd.xlane.f32.xlu0 %v3430
        %v3494 = vpop.xlane.xlu0 %3493
        %3495 = vadd.xlane.f32.xlu0 %v3432
        %v3496 = vpop.xlane.xlu0 %3495
        %3497 = vadd.xlane.f32.xlu0 %v3434
        %v3498 = vpop.xlane.xlu0 %3497
        %3499 = vadd.xlane.f32.xlu0 %v3436
        %v3500 = vpop.xlane.xlu0 %3499
        %3501 = vadd.xlane.f32.xlu0 %v3438
        %v3502 = vpop.xlane.xlu0 %3501
        %3503 = vadd.xlane.f32.xlu0 %v3440
        %v3504 = vpop.xlane.xlu0 %3503
        %3505 = vadd.xlane.f32.xlu0 %v3442
        %v3506 = vpop.xlane.xlu0 %3505
        %3507 = vadd.xlane.f32.xlu0 %v3444
        %v3508 = vpop.xlane.xlu0 %3507
        %3509 = vadd.xlane.f32.xlu0 %v3446
        %v3510 = vpop.xlane.xlu0 %3509
        %3511 = vadd.xlane.f32.xlu0 %v3448
        %v3512 = vpop.xlane.xlu0 %3511
        %3513 = vadd.xlane.f32.xlu0 %v3450
        %v3514 = vpop.xlane.xlu0 %3513
        %3515 = vadd.xlane.f32.xlu0 %v3452
        %v3516 = vpop.xlane.xlu0 %3515
        %3517 = vadd.xlane.f32.xlu0 %v3454
        %v3518 = vpop.xlane.xlu0 %3517
        %3519 = vadd.xlane.f32.xlu0 %v3456
        %v3520 = vpop.xlane.xlu0 %3519
        %3521 = vadd.xlane.f32.xlu0 %v3458
        %v3522 = vpop.xlane.xlu0 %3521
        %3523 = vadd.xlane.f32.xlu0 %v3460
        %v3524 = vpop.xlane.xlu0 %3523
        %3525 = vadd.xlane.f32.xlu0 %v3462
        %v3526 = vpop.xlane.xlu0 %3525
        %v3527 = vrcp.pop %v3464
        %v3528 = vrcp.pop %v3466
        %v3529 = vrcp.pop %v3468
        %v3530 = vrcp.pop %v3470
        %v3531 = vrcp.pop %v3472
        %v3532 = vrcp.pop %v3474
        %v3533 = vrcp.pop %v3476
        %v3534 = vrcp.pop %v3478
        %v3535 = vrcp.pop %v3480
        %v3536 = vrcp.pop %v3482
        %v3537 = vrcp.pop %v3484
        %v3538 = vrcp.pop %v3486
        %v3539 = vrcp.pop %v3488
        %v3540 = vrcp.pop %v3490
        %v3541 = vrcp.pop %v3492
        %v3542 = vrcp.pop %v3494
        %v3543 = vrcp.pop %v3496
        %v3544 = vrcp.pop %v3498
        %v3545 = vrcp.pop %v3500
        %v3546 = vrcp.pop %v3502
        %v3547 = vrcp.pop %v3504
        %v3548 = vrcp.pop %v3506
        %v3549 = vrcp.pop %v3508
        %v3550 = vrcp.pop %v3510
        %v3551 = vrcp.pop %v3512
        %v3552 = vrcp.pop %v3514
        %v3553 = vrcp.pop %v3516
        %v3554 = vrcp.pop %v3518
        %v3555 = vrcp.pop %v3520
        %v3556 = vrcp.pop %v3522
        %v3557 = vrcp.pop %v3524
        %v3558 = vrcp.pop %v3526
        %v3559 = vmul.f32 %v3400, %v3527
        %v3560 = vmul.f32 %v3402, %v3528
        %v3561 = vmul.f32 %v3404, %v3529
        %v3562 = vmul.f32 %v3406, %v3530
        %v3563 = vmul.f32 %v3408, %v3531
        %v3564 = vmul.f32 %v3410, %v3532
        %v3565 = vmul.f32 %v3412, %v3533
        %v3566 = vmul.f32 %v3414, %v3534
        %v3567 = vmul.f32 %v3416, %v3535
        %v3568 = vmul.f32 %v3418, %v3536
        %v3569 = vmul.f32 %v3420, %v3537
        %v3570 = vmul.f32 %v3422, %v3538
        %v3571 = vmul.f32 %v3424, %v3539
        %v3572 = vmul.f32 %v3426, %v3540
        %v3573 = vmul.f32 %v3428, %v3541
        %v3574 = vmul.f32 %v3430, %v3542
        %v3575 = vmul.f32 %v3432, %v3543
        %v3576 = vmul.f32 %v3434, %v3544
        %v3577 = vmul.f32 %v3436, %v3545
        %v3578 = vmul.f32 %v3438, %v3546
        %v3579 = vmul.f32 %v3440, %v3547
        %v3580 = vmul.f32 %v3442, %v3548
        %v3581 = vmul.f32 %v3444, %v3549
        %v3582 = vmul.f32 %v3446, %v3550
        %v3583 = vmul.f32 %v3448, %v3551
        %v3584 = vmul.f32 %v3450, %v3552
        %v3585 = vmul.f32 %v3452, %v3553
        %v3586 = vmul.f32 %v3454, %v3554
        %v3587 = vmul.f32 %v3456, %v3555
        %v3588 = vmul.f32 %v3458, %v3556
        %v3589 = vmul.f32 %v3460, %v3557
        %v3590 = vmul.f32 %v3462, %v3558
        %v3591 = vpack.c.bf16 %v3560, %v3559
        %v3592 = vpack.c.bf16 %v3562, %v3561
        %v3593 = vpack.c.bf16 %v3564, %v3563
        %v3594 = vpack.c.bf16 %v3566, %v3565
        %v3595 = vpack.c.bf16 %v3568, %v3567
        %v3596 = vpack.c.bf16 %v3570, %v3569
        %v3597 = vpack.c.bf16 %v3572, %v3571
        %v3598 = vpack.c.bf16 %v3574, %v3573
        %v3599 = vpack.c.bf16 %v3576, %v3575
        %v3600 = vpack.c.bf16 %v3578, %v3577
        %v3601 = vpack.c.bf16 %v3580, %v3579
        %v3602 = vpack.c.bf16 %v3582, %v3581
        %v3603 = vpack.c.bf16 %v3584, %v3583
        %v3604 = vpack.c.bf16 %v3586, %v3585
        %v3605 = vpack.c.bf16 %v3588, %v3587
        %v3606 = vpack.c.bf16 %v3590, %v3589
        %3615 = vrot.lane.b32.xlu0 %v2884, 64
        %v3616 = vpop.permute.xlu0 %3615
        %3617 = vrot.lane.b32.xlu0 %v2885, 64
        %v3618 = vpop.permute.xlu0 %3617
        %3619 = vrot.lane.b32.xlu0 %v2886, 64
        %v3620 = vpop.permute.xlu0 %3619
        %3621 = vrot.lane.b32.xlu0 %v2887, 64
        %v3622 = vpop.permute.xlu0 %3621
        %3623 = vrot.lane.b32.xlu0 %v2888, 64
        %v3624 = vpop.permute.xlu0 %3623
        %3625 = vrot.lane.b32.xlu0 %v2889, 64
        %v3626 = vpop.permute.xlu0 %3625
        %3627 = vrot.lane.b32.xlu0 %v2890, 64
        %v3628 = vpop.permute.xlu0 %3627
        %3629 = vrot.lane.b32.xlu0 %v2891, 64
        %v3630 = vpop.permute.xlu0 %3629
        %3639 = vmatprep.subr.bf16.mxu0 0
        %3640 = vmatpush1.bf16.msra.mxu0 %v3616
        %3641 = vmatprep.subr.bf16.mxu0 0
        %3642 = vmatpush1.bf16.msra.mxu0 %v3618
        %3643 = vmatprep.subr.bf16.mxu0 0
        %3644 = vmatpush1.bf16.msra.mxu0 %v3620
        %3645 = vmatprep.subr.bf16.mxu0 0
        %3646 = vmatpush1.bf16.msra.mxu0 %v3622
        %3647 = vmatprep.subr.bf16.mxu0 0
        %3648 = vmatpush1.bf16.msra.mxu0 %v3624
        %3649 = vmatprep.subr.bf16.mxu0 0
        %3650 = vmatpush1.bf16.msra.mxu0 %v3626
        %3651 = vmatprep.subr.bf16.mxu0 0
        %3652 = vmatpush1.bf16.msra.mxu0 %v3628
        %3653 = vmatprep.subr.bf16.mxu0 0
        %3654 = vmatpush1.bf16.msra.mxu0 %v3630
        %3655 = vmatprep.subr.bf16.mxu0 0
        %3656 = vmatpush1.bf16.msra.mxu0 0
        %3657 = vmatprep.subr.bf16.mxu0 0
        %3658 = vmatpush1.bf16.msra.mxu0 0
        %3659 = vmatprep.subr.bf16.mxu0 0
        %3660 = vmatpush1.bf16.msra.mxu0 0
        %3661 = vmatprep.subr.bf16.mxu0 0
        %3662 = vmatpush1.bf16.msra.mxu0 0
        %3663 = vmatprep.subr.bf16.mxu0 0
        %3664 = vmatpush1.bf16.msra.mxu0 0
        %3665 = vmatprep.subr.bf16.mxu0 0
        %3666 = vmatpush1.bf16.msra.mxu0 0
        %3667 = vmatprep.subr.bf16.mxu0 0
        %3668 = vmatpush1.bf16.msra.mxu0 0
        %3669 = vmatprep.subr.bf16.mxu0 0
        %3670 = vmatpush1.bf16.msra.mxu0 0
        %3671 = vmatprep.mubr.bf16.mxu0 0
        %3672 = vmatmul.mubr.bf16.gmra.mrb[0].mxu0 %v3591
        %v3673 = vpop.f32.mrb[0].mxu0
        %v3674 = vadd.f32 0.0, %v3673
        %v3675 = vpop.f32.mrb[0].mxu0
        %v3676 = vpop.f32.mrb[0].mxu0
        %v3677 = vadd.f32 0.0, %v3676
        %v3678 = vpop.f32.mrb[0].mxu0
        %3679 = vmatprep.mubr.bf16.mxu0 0
        %3680 = vmatmul.mubr.bf16.gmra.mrb[0].mxu0 %v3592
        %v3681 = vpop.f32.mrb[0].mxu0
        %v3682 = vadd.f32 0.0, %v3681
        %v3683 = vpop.f32.mrb[0].mxu0
        %v3684 = vpop.f32.mrb[0].mxu0
        %v3685 = vadd.f32 0.0, %v3684
        %v3686 = vpop.f32.mrb[0].mxu0
        %3687 = vmatprep.mubr.bf16.mxu0 0
        %3688 = vmatmul.mubr.bf16.gmra.mrb[0].mxu0 %v3593
        %v3689 = vpop.f32.mrb[0].mxu0
        %v3690 = vadd.f32 0.0, %v3689
        %v3691 = vpop.f32.mrb[0].mxu0
        %v3692 = vpop.f32.mrb[0].mxu0
        %v3693 = vadd.f32 0.0, %v3692
        %v3694 = vpop.f32.mrb[0].mxu0
        %3695 = vmatprep.mubr.bf16.mxu0 0
        %3696 = vmatmul.mubr.bf16.gmra.mrb[0].mxu0 %v3594
        %v3697 = vpop.f32.mrb[0].mxu0
        %v3698 = vadd.f32 0.0, %v3697
        %v3699 = vpop.f32.mrb[0].mxu0
        %v3700 = vpop.f32.mrb[0].mxu0
        %v3701 = vadd.f32 0.0, %v3700
        %v3702 = vpop.f32.mrb[0].mxu0
        %3703 = vmatprep.mubr.bf16.mxu0 0
        %3704 = vmatmul.mubr.bf16.gmra.mrb[0].mxu0 %v3595
        %v3705 = vpop.f32.mrb[0].mxu0
        %v3706 = vadd.f32 0.0, %v3705
        %v3707 = vpop.f32.mrb[0].mxu0
        %v3708 = vpop.f32.mrb[0].mxu0
        %v3709 = vadd.f32 0.0, %v3708
        %v3710 = vpop.f32.mrb[0].mxu0
        %3711 = vmatprep.mubr.bf16.mxu0 0
        %3712 = vmatmul.mubr.bf16.gmra.mrb[0].mxu0 %v3596
        %v3713 = vpop.f32.mrb[0].mxu0
        %v3714 = vadd.f32 0.0, %v3713
        %v3715 = vpop.f32.mrb[0].mxu0
        %v3716 = vpop.f32.mrb[0].mxu0
        %v3717 = vadd.f32 0.0, %v3716
        %v3718 = vpop.f32.mrb[0].mxu0
        %3719 = vmatprep.mubr.bf16.mxu0 0
        %3720 = vmatmul.mubr.bf16.gmra.mrb[0].mxu0 %v3597
        %v3721 = vpop.f32.mrb[0].mxu0
        %v3722 = vadd.f32 0.0, %v3721
        %v3723 = vpop.f32.mrb[0].mxu0
        %v3724 = vpop.f32.mrb[0].mxu0
        %v3725 = vadd.f32 0.0, %v3724
        %v3726 = vpop.f32.mrb[0].mxu0
        %3727 = vmatprep.mubr.bf16.mxu0 0
        %3728 = vmatmul.mubr.bf16.gmra.mrb[0].mxu0 %v3598
        %v3729 = vpop.f32.mrb[0].mxu0
        %v3730 = vadd.f32 0.0, %v3729
        %v3731 = vpop.f32.mrb[0].mxu0
        %v3732 = vpop.f32.mrb[0].mxu0
        %v3733 = vadd.f32 0.0, %v3732
        %v3734 = vpop.f32.mrb[0].mxu0
        %3735 = vdwg.mxu0
        %3744 = vrot.lane.b32.xlu0 %v2892, 64
        %v3745 = vpop.permute.xlu0 %3744
        %3746 = vrot.lane.b32.xlu0 %v2893, 64
        %v3747 = vpop.permute.xlu0 %3746
        %3748 = vrot.lane.b32.xlu0 %v2894, 64
        %v3749 = vpop.permute.xlu0 %3748
        %3750 = vrot.lane.b32.xlu0 %v2895, 64
        %v3751 = vpop.permute.xlu0 %3750
        %3752 = vrot.lane.b32.xlu0 %v2896, 64
        %v3753 = vpop.permute.xlu0 %3752
        %3754 = vrot.lane.b32.xlu0 %v2897, 64
        %v3755 = vpop.permute.xlu0 %3754
        %3756 = vrot.lane.b32.xlu0 %v2898, 64
        %v3757 = vpop.permute.xlu0 %3756
        %3758 = vrot.lane.b32.xlu0 %v2899, 64
        %v3759 = vpop.permute.xlu0 %3758
        %3768 = vmatprep.subr.bf16.mxu0 0
        %3769 = vmatpush1.bf16.msra.mxu0 %v3745
        %3770 = vmatprep.subr.bf16.mxu0 0
        %3771 = vmatpush1.bf16.msra.mxu0 %v3747
        %3772 = vmatprep.subr.bf16.mxu0 0
        %3773 = vmatpush1.bf16.msra.mxu0 %v3749
        %3774 = vmatprep.subr.bf16.mxu0 0
        %3775 = vmatpush1.bf16.msra.mxu0 %v3751
        %3776 = vmatprep.subr.bf16.mxu0 0
        %3777 = vmatpush1.bf16.msra.mxu0 %v3753
        %3778 = vmatprep.subr.bf16.mxu0 0
        %3779 = vmatpush1.bf16.msra.mxu0 %v3755
        %3780 = vmatprep.subr.bf16.mxu0 0
        %3781 = vmatpush1.bf16.msra.mxu0 %v3757
        %3782 = vmatprep.subr.bf16.mxu0 0
        %3783 = vmatpush1.bf16.msra.mxu0 %v3759
        %3784 = vmatprep.subr.bf16.mxu0 0
        %3785 = vmatpush1.bf16.msra.mxu0 0
        %3786 = vmatprep.subr.bf16.mxu0 0
        %3787 = vmatpush1.bf16.msra.mxu0 0
        %3788 = vmatprep.subr.bf16.mxu0 0
        %3789 = vmatpush1.bf16.msra.mxu0 0
        %3790 = vmatprep.subr.bf16.mxu0 0
        %3791 = vmatpush1.bf16.msra.mxu0 0
        %3792 = vmatprep.subr.bf16.mxu0 0
        %3793 = vmatpush1.bf16.msra.mxu0 0
        %3794 = vmatprep.subr.bf16.mxu0 0
        %3795 = vmatpush1.bf16.msra.mxu0 0
        %3796 = vmatprep.subr.bf16.mxu0 0
        %3797 = vmatpush1.bf16.msra.mxu0 0
        %3798 = vmatprep.subr.bf16.mxu0 0
        %3799 = vmatpush1.bf16.msra.mxu0 0
        %3800 = vmatprep.mubr.bf16.mxu0 0
        %3801 = vmatmul.mubr.bf16.gmra.mrb[0].mxu0 %v3599
        %v3802 = vpop.f32.mrb[0].mxu0
        %v3803 = vadd.f32 0.0, %v3802
        %v3804 = vpop.f32.mrb[0].mxu0
        %v3805 = vpop.f32.mrb[0].mxu0
        %v3806 = vadd.f32 0.0, %v3805
        %v3807 = vpop.f32.mrb[0].mxu0
        %3808 = vmatprep.mubr.bf16.mxu0 0
        %3809 = vmatmul.mubr.bf16.gmra.mrb[0].mxu0 %v3600
        %v3810 = vpop.f32.mrb[0].mxu0
        %v3811 = vadd.f32 0.0, %v3810
        %v3812 = vpop.f32.mrb[0].mxu0
        %v3813 = vpop.f32.mrb[0].mxu0
        %v3814 = vadd.f32 0.0, %v3813
        %v3815 = vpop.f32.mrb[0].mxu0
        %3816 = vmatprep.mubr.bf16.mxu0 0
        %3817 = vmatmul.mubr.bf16.gmra.mrb[0].mxu0 %v3601
        %v3818 = vpop.f32.mrb[0].mxu0
        %v3819 = vadd.f32 0.0, %v3818
        %v3820 = vpop.f32.mrb[0].mxu0
        %v3821 = vpop.f32.mrb[0].mxu0
        %v3822 = vadd.f32 0.0, %v3821
        %v3823 = vpop.f32.mrb[0].mxu0
        %3824 = vmatprep.mubr.bf16.mxu0 0
        %3825 = vmatmul.mubr.bf16.gmra.mrb[0].mxu0 %v3602
        %v3826 = vpop.f32.mrb[0].mxu0
        %v3827 = vadd.f32 0.0, %v3826
        %v3828 = vpop.f32.mrb[0].mxu0
        %v3829 = vpop.f32.mrb[0].mxu0
        %v3830 = vadd.f32 0.0, %v3829
        %v3831 = vpop.f32.mrb[0].mxu0
        %3832 = vmatprep.mubr.bf16.mxu0 0
        %3833 = vmatmul.mubr.bf16.gmra.mrb[0].mxu0 %v3603
        %v3834 = vpop.f32.mrb[0].mxu0
        %v3835 = vadd.f32 0.0, %v3834
        %v3836 = vpop.f32.mrb[0].mxu0
        %v3837 = vpop.f32.mrb[0].mxu0
        %v3838 = vadd.f32 0.0, %v3837
        %v3839 = vpop.f32.mrb[0].mxu0
        %3840 = vmatprep.mubr.bf16.mxu0 0
        %3841 = vmatmul.mubr.bf16.gmra.mrb[0].mxu0 %v3604
        %v3842 = vpop.f32.mrb[0].mxu0
        %v3843 = vadd.f32 0.0, %v3842
        %v3844 = vpop.f32.mrb[0].mxu0
        %v3845 = vpop.f32.mrb[0].mxu0
        %v3846 = vadd.f32 0.0, %v3845
        %v3847 = vpop.f32.mrb[0].mxu0
        %3848 = vmatprep.mubr.bf16.mxu0 0
        %3849 = vmatmul.mubr.bf16.gmra.mrb[0].mxu0 %v3605
        %v3850 = vpop.f32.mrb[0].mxu0
        %v3851 = vadd.f32 0.0, %v3850
        %v3852 = vpop.f32.mrb[0].mxu0
        %v3853 = vpop.f32.mrb[0].mxu0
        %v3854 = vadd.f32 0.0, %v3853
        %v3855 = vpop.f32.mrb[0].mxu0
        %3856 = vmatprep.mubr.bf16.mxu0 0
        %3857 = vmatmul.mubr.bf16.gmra.mrb[0].mxu0 %v3606
        %v3858 = vpop.f32.mrb[0].mxu0
        %v3859 = vadd.f32 0.0, %v3858
        %v3860 = vpop.f32.mrb[0].mxu0
        %v3861 = vpop.f32.mrb[0].mxu0
        %v3862 = vadd.f32 0.0, %v3861
        %v3863 = vpop.f32.mrb[0].mxu0
        %3864 = vdwg.mxu0
        %v3865 = vpack.c.bf16 %v3677, %v3674
        %v3866 = vpack.c.bf16 %v3685, %v3682
        %v3867 = vpack.c.bf16 %v3693, %v3690
        %v3868 = vpack.c.bf16 %v3701, %v3698
        %v3869 = vpack.c.bf16 %v3709, %v3706
        %v3870 = vpack.c.bf16 %v3717, %v3714
        %v3871 = vpack.c.bf16 %v3725, %v3722
        %v3872 = vpack.c.bf16 %v3733, %v3730
        %v3873 = vpack.c.bf16 %v3806, %v3803
        %v3874 = vpack.c.bf16 %v3814, %v3811
        %v3875 = vpack.c.bf16 %v3822, %v3819
        %v3876 = vpack.c.bf16 %v3830, %v3827
        %v3877 = vpack.c.bf16 %v3838, %v3835
        %v3878 = vpack.c.bf16 %v3846, %v3843
        %v3879 = vpack.c.bf16 %v3854, %v3851
        %v3880 = vpack.c.bf16 %v3862, %v3859
        %3897 = vrot.lane.b32.xlu0 %v3865, 64
        %v3898 = vpop.permute.xlu0 %3897
        %3899 = vrot.lane.b32.xlu0 %v3866, 64
        %v3900 = vpop.permute.xlu0 %3899
        %3901 = vrot.lane.b32.xlu0 %v3867, 64
        %v3902 = vpop.permute.xlu0 %3901
        %3903 = vrot.lane.b32.xlu0 %v3868, 64
        %v3904 = vpop.permute.xlu0 %3903
        %3905 = vrot.lane.b32.xlu0 %v3869, 64
        %v3906 = vpop.permute.xlu0 %3905
        %3907 = vrot.lane.b32.xlu0 %v3870, 64
        %v3908 = vpop.permute.xlu0 %3907
        %3909 = vrot.lane.b32.xlu0 %v3871, 64
        %v3910 = vpop.permute.xlu0 %3909
        %3911 = vrot.lane.b32.xlu0 %v3872, 64
        %v3912 = vpop.permute.xlu0 %3911
        %3913 = vrot.lane.b32.xlu0 %v3873, 64
        %v3914 = vpop.permute.xlu0 %3913
        %3915 = vrot.lane.b32.xlu0 %v3874, 64
        %v3916 = vpop.permute.xlu0 %3915
        %3917 = vrot.lane.b32.xlu0 %v3875, 64
        %v3918 = vpop.permute.xlu0 %3917
        %3919 = vrot.lane.b32.xlu0 %v3876, 64
        %v3920 = vpop.permute.xlu0 %3919
        %3921 = vrot.lane.b32.xlu0 %v3877, 64
        %v3922 = vpop.permute.xlu0 %3921
        %3923 = vrot.lane.b32.xlu0 %v3878, 64
        %v3924 = vpop.permute.xlu0 %3923
        %3925 = vrot.lane.b32.xlu0 %v3879, 64
        %v3926 = vpop.permute.xlu0 %3925
        %3927 = vrot.lane.b32.xlu0 %v3880, 64
        %v3928 = vpop.permute.xlu0 %3927
        %vm3945 = vcmask 785920
        %3946 = vst.msk [vmem:[#allocation3] sm:$0xff] %vm3945, %v3898
        %3947 = vst.msk [vmem:[#allocation3 + $0x8] sm:$0xff] %vm3945, %v3900
        %3948 = vst.msk [vmem:[#allocation3 + $0x10] sm:$0xff] %vm3945, %v3902
        %3949 = vst.msk [vmem:[#allocation3 + $0x18] sm:$0xff] %vm3945, %v3904
        %3950 = vst.msk [vmem:[#allocation3 + $0x20] sm:$0xff] %vm3945, %v3906
        %3951 = vst.msk [vmem:[#allocation3 + $0x28] sm:$0xff] %vm3945, %v3908
        %3952 = vst.msk [vmem:[#allocation3 + $0x30] sm:$0xff] %vm3945, %v3910
        %3953 = vst.msk [vmem:[#allocation3 + $0x38] sm:$0xff] %vm3945, %v3912
        %3954 = vst.msk [vmem:[#allocation3 + $0x40] sm:$0xff] %vm3945, %v3914
        %3955 = vst.msk [vmem:[#allocation3 + $0x48] sm:$0xff] %vm3945, %v3916
        %3956 = vst.msk [vmem:[#allocation3 + $0x50] sm:$0xff] %vm3945, %v3918
        %3957 = vst.msk [vmem:[#allocation3 + $0x58] sm:$0xff] %vm3945, %v3920
        %3958 = vst.msk [vmem:[#allocation3 + $0x60] sm:$0xff] %vm3945, %v3922
        %3959 = vst.msk [vmem:[#allocation3 + $0x68] sm:$0xff] %vm3945, %v3924
        %3960 = vst.msk [vmem:[#allocation3 + $0x70] sm:$0xff] %vm3945, %v3926
        %3961 = vst.msk [vmem:[#allocation3 + $0x78] sm:$0xff] %vm3945, %v3928
        %v3962 = vld [vmem:[#allocation2] sm:$0xff]
        %v3963 = vld [vmem:[#allocation2 + $0x18] sm:$0xff]
        %v3964 = vld [vmem:[#allocation2 + $0x30] sm:$0xff]
        %v3965 = vld [vmem:[#allocation2 + $0x48] sm:$0xff]
        %v3966 = vld [vmem:[#allocation2 + $0x60] sm:$0xff]
        %v3967 = vld [vmem:[#allocation2 + $0x78] sm:$0xff]
        %v3968 = vld [vmem:[#allocation2 + $0x90] sm:$0xff]
        %v3969 = vld [vmem:[#allocation2 + $0xa8] sm:$0xff]
        %v3970 = vld [vmem:[#allocation2 + $0xc0] sm:$0xff]
        %v3971 = vld [vmem:[#allocation2 + $0xd8] sm:$0xff]
        %v3972 = vld [vmem:[#allocation2 + $0xf0] sm:$0xff]
        %v3973 = vld [vmem:[#allocation2 + $0x108] sm:$0xff]
        %v3974 = vld [vmem:[#allocation2 + $0x120] sm:$0xff]
        %v3975 = vld [vmem:[#allocation2 + $0x138] sm:$0xff]
        %v3976 = vld [vmem:[#allocation2 + $0x150] sm:$0xff]
        %v3977 = vld [vmem:[#allocation2 + $0x168] sm:$0xff]
        %v3978 = vld [vmem:[#allocation2 + $0x8] sm:$0xff]
        %v3979 = vld [vmem:[#allocation2 + $0x20] sm:$0xff]
        %v3980 = vld [vmem:[#allocation2 + $0x38] sm:$0xff]
        %v3981 = vld [vmem:[#allocation2 + $0x50] sm:$0xff]
        %v3982 = vld [vmem:[#allocation2 + $0x68] sm:$0xff]
        %v3983 = vld [vmem:[#allocation2 + $0x80] sm:$0xff]
        %v3984 = vld [vmem:[#allocation2 + $0x98] sm:$0xff]
        %v3985 = vld [vmem:[#allocation2 + $0xb0] sm:$0xff]
        %v3986 = vld [vmem:[#allocation2 + $0xc8] sm:$0xff]
        %v3987 = vld [vmem:[#allocation2 + $0xe0] sm:$0xff]
        %v3988 = vld [vmem:[#allocation2 + $0xf8] sm:$0xff]
        %v3989 = vld [vmem:[#allocation2 + $0x110] sm:$0xff]
        %v3990 = vld [vmem:[#allocation2 + $0x128] sm:$0xff]
        %v3991 = vld [vmem:[#allocation2 + $0x140] sm:$0xff]
        %v3992 = vld [vmem:[#allocation2 + $0x158] sm:$0xff]
        %v3993 = vld [vmem:[#allocation2 + $0x170] sm:$0xff]
        %v3994 = vld [vmem:[#allocation2 + $0x10] sm:$0xff]
        %v3995 = vld [vmem:[#allocation2 + $0x28] sm:$0xff]
        %v3996 = vld [vmem:[#allocation2 + $0x40] sm:$0xff]
        %v3997 = vld [vmem:[#allocation2 + $0x58] sm:$0xff]
        %v3998 = vld [vmem:[#allocation2 + $0x70] sm:$0xff]
        %v3999 = vld [vmem:[#allocation2 + $0x88] sm:$0xff]
        %v4000 = vld [vmem:[#allocation2 + $0xa0] sm:$0xff]
        %v4001 = vld [vmem:[#allocation2 + $0xb8] sm:$0xff]
        %v4002 = vld [vmem:[#allocation2 + $0xd0] sm:$0xff]
        %v4003 = vld [vmem:[#allocation2 + $0xe8] sm:$0xff]
        %v4004 = vld [vmem:[#allocation2 + $0x100] sm:$0xff]
        %v4005 = vld [vmem:[#allocation2 + $0x118] sm:$0xff]
        %v4006 = vld [vmem:[#allocation2 + $0x130] sm:$0xff]
        %v4007 = vld [vmem:[#allocation2 + $0x148] sm:$0xff]
        %v4008 = vld [vmem:[#allocation2 + $0x160] sm:$0xff]
        %v4009 = vld [vmem:[#allocation2 + $0x178] sm:$0xff]
        %s4010 = scalar_lea.vmem %s2, 384
        %v4011 = vld [vmem:[%s4010] sm:$0xff]
        %v4012 = vld [vmem:[%s4010 + $0x8] sm:$0xff]
        %v4013 = vld [vmem:[%s4010 + $0x10] sm:$0xff]
        %v4014 = vld [vmem:[%s4010 + $0x18] sm:$0xff]
        %v4015 = vld [vmem:[%s4010 + $0x20] sm:$0xff]
        %v4016 = vld [vmem:[%s4010 + $0x28] sm:$0xff]
        %v4017 = vld [vmem:[%s4010 + $0x30] sm:$0xff]
        %v4018 = vld [vmem:[%s4010 + $0x38] sm:$0xff]
        %v4019 = vld [vmem:[%s4010 + $0x40] sm:$0xff]
        %v4020 = vld [vmem:[%s4010 + $0x48] sm:$0xff]
        %v4021 = vld [vmem:[%s4010 + $0x50] sm:$0xff]
        %v4022 = vld [vmem:[%s4010 + $0x58] sm:$0xff]
        %v4023 = vld [vmem:[%s4010 + $0x60] sm:$0xff]
        %v4024 = vld [vmem:[%s4010 + $0x68] sm:$0xff]
        %v4025 = vld [vmem:[%s4010 + $0x70] sm:$0xff]
        %v4026 = vld [vmem:[%s4010 + $0x78] sm:$0xff]
        %4035 = vrot.lane.b32.xlu0 %v3962, 32
        %v4036 = vpop.permute.xlu0 %4035
        %4037 = vrot.lane.b32.xlu0 %v3963, 32
        %v4038 = vpop.permute.xlu0 %4037
        %4039 = vrot.lane.b32.xlu0 %v3964, 32
        %v4040 = vpop.permute.xlu0 %4039
        %4041 = vrot.lane.b32.xlu0 %v3965, 32
        %v4042 = vpop.permute.xlu0 %4041
        %4043 = vrot.lane.b32.xlu0 %v3966, 32
        %v4044 = vpop.permute.xlu0 %4043
        %4045 = vrot.lane.b32.xlu0 %v3967, 32
        %v4046 = vpop.permute.xlu0 %4045
        %4047 = vrot.lane.b32.xlu0 %v3968, 32
        %v4048 = vpop.permute.xlu0 %4047
        %4049 = vrot.lane.b32.xlu0 %v3969, 32
        %v4050 = vpop.permute.xlu0 %4049
        %4059 = vrot.lane.b32.xlu0 %v3978, 32
        %v4060 = vpop.permute.xlu0 %4059
        %4061 = vrot.lane.b32.xlu0 %v3979, 32
        %v4062 = vpop.permute.xlu0 %4061
        %4063 = vrot.lane.b32.xlu0 %v3980, 32
        %v4064 = vpop.permute.xlu0 %4063
        %4065 = vrot.lane.b32.xlu0 %v3981, 32
        %v4066 = vpop.permute.xlu0 %4065
        %4067 = vrot.lane.b32.xlu0 %v3982, 32
        %v4068 = vpop.permute.xlu0 %4067
        %4069 = vrot.lane.b32.xlu0 %v3983, 32
        %v4070 = vpop.permute.xlu0 %4069
        %4071 = vrot.lane.b32.xlu0 %v3984, 32
        %v4072 = vpop.permute.xlu0 %4071
        %4073 = vrot.lane.b32.xlu0 %v3985, 32
        %v4074 = vpop.permute.xlu0 %4073
        %v4076 = vsel %vm921, %v4036, 0
        %v4079 = vsel %vm921, %v4038, 0
        %v4082 = vsel %vm921, %v4040, 0
        %v4085 = vsel %vm921, %v4042, 0
        %v4088 = vsel %vm921, %v4044, 0
        %v4091 = vsel %vm921, %v4046, 0
        %v4094 = vsel %vm921, %v4048, 0
        %v4097 = vsel %vm921, %v4050, 0
        %v4100 = vsel %vm921, %v4060, 0
        %v4103 = vsel %vm921, %v4062, 0
        %v4106 = vsel %vm921, %v4064, 0
        %v4109 = vsel %vm921, %v4066, 0
        %v4112 = vsel %vm921, %v4068, 0
        %v4115 = vsel %vm921, %v4070, 0
        %v4118 = vsel %vm921, %v4072, 0
        %v4121 = vsel %vm921, %v4074, 0
        %4123 = vmatprep.subr.bf16.mxu0 0
        %4124 = vmatpush1.bf16.xpose.msra.mxu0 %v4100
        %4125 = vmatprep.subr.bf16.mxu0 0
        %4126 = vmatpush1.bf16.xpose.msra.mxu0 %v4103
        %4127 = vmatprep.subr.bf16.mxu0 0
        %4128 = vmatpush1.bf16.xpose.msra.mxu0 %v4106
        %4129 = vmatprep.subr.bf16.mxu0 0
        %4130 = vmatpush1.bf16.xpose.msra.mxu0 %v4109
        %4131 = vmatprep.subr.bf16.mxu0 0
        %4132 = vmatpush1.bf16.xpose.msra.mxu0 %v4112
        %4133 = vmatprep.subr.bf16.mxu0 0
        %4134 = vmatpush1.bf16.xpose.msra.mxu0 %v4115
        %4135 = vmatprep.subr.bf16.mxu0 0
        %4136 = vmatpush1.bf16.xpose.msra.mxu0 %v4118
        %4137 = vmatprep.subr.bf16.mxu0 0
        %4138 = vmatpush1.bf16.xpose.msra.mxu0 %v4121
        %4139 = vmatprep.subr.bf16.mxu0 0
        %4140 = vmatpush1.bf16.xpose.msra.mxu0 0
        %4141 = vmatprep.subr.bf16.mxu0 0
        %4142 = vmatpush1.bf16.xpose.msra.mxu0 0
        %4143 = vmatprep.subr.bf16.mxu0 0
        %4144 = vmatpush1.bf16.xpose.msra.mxu0 0
        %4145 = vmatprep.subr.bf16.mxu0 0
        %4146 = vmatpush1.bf16.xpose.msra.mxu0 0
        %4147 = vmatprep.subr.bf16.mxu0 0
        %4148 = vmatpush1.bf16.xpose.msra.mxu0 0
        %4149 = vmatprep.subr.bf16.mxu0 0
        %4150 = vmatpush1.bf16.xpose.msra.mxu0 0
        %4151 = vmatprep.subr.bf16.mxu0 0
        %4152 = vmatpush1.bf16.xpose.msra.mxu0 0
        %4153 = vmatprep.subr.bf16.mxu0 0
        %4154 = vmatpush1.bf16.xpose.msra.mxu0 0
        %4155 = vmatprep.mubr.bf16.mxu0 0
        %4156 = vmatmul.mubr.bf16.gmra.mrb[0].mxu0 %v4076
        %v4157 = vpop.f32.mrb[0].mxu0
        %v4158 = vadd.f32 %v4011, %v4157
        %v4159 = vpop.f32.mrb[0].mxu0
        %v4160 = vpop.f32.mrb[0].mxu0
        %v4161 = vadd.f32 %v4012, %v4160
        %v4162 = vpop.f32.mrb[0].mxu0
        %4163 = vmatprep.mubr.bf16.mxu0 0
        %4164 = vmatmul.mubr.bf16.gmra.mrb[0].mxu0 %v4079
        %v4165 = vpop.f32.mrb[0].mxu0
        %v4166 = vadd.f32 %v4013, %v4165
        %v4167 = vpop.f32.mrb[0].mxu0
        %v4168 = vpop.f32.mrb[0].mxu0
        %v4169 = vadd.f32 %v4014, %v4168
        %v4170 = vpop.f32.mrb[0].mxu0
        %4171 = vmatprep.mubr.bf16.mxu0 0
        %4172 = vmatmul.mubr.bf16.gmra.mrb[0].mxu0 %v4082
        %v4173 = vpop.f32.mrb[0].mxu0
        %v4174 = vadd.f32 %v4015, %v4173
        %v4175 = vpop.f32.mrb[0].mxu0
        %v4176 = vpop.f32.mrb[0].mxu0
        %v4177 = vadd.f32 %v4016, %v4176
        %v4178 = vpop.f32.mrb[0].mxu0
        %4179 = vmatprep.mubr.bf16.mxu0 0
        %4180 = vmatmul.mubr.bf16.gmra.mrb[0].mxu0 %v4085
        %v4181 = vpop.f32.mrb[0].mxu0
        %v4182 = vadd.f32 %v4017, %v4181
        %v4183 = vpop.f32.mrb[0].mxu0
        %v4184 = vpop.f32.mrb[0].mxu0
        %v4185 = vadd.f32 %v4018, %v4184
        %v4186 = vpop.f32.mrb[0].mxu0
        %4187 = vmatprep.mubr.bf16.mxu0 0
        %4188 = vmatmul.mubr.bf16.gmra.mrb[0].mxu0 %v4088
        %v4189 = vpop.f32.mrb[0].mxu0
        %v4190 = vadd.f32 %v4019, %v4189
        %v4191 = vpop.f32.mrb[0].mxu0
        %v4192 = vpop.f32.mrb[0].mxu0
        %v4193 = vadd.f32 %v4020, %v4192
        %v4194 = vpop.f32.mrb[0].mxu0
        %4195 = vmatprep.mubr.bf16.mxu0 0
        %4196 = vmatmul.mubr.bf16.gmra.mrb[0].mxu0 %v4091
        %v4197 = vpop.f32.mrb[0].mxu0
        %v4198 = vadd.f32 %v4021, %v4197
        %v4199 = vpop.f32.mrb[0].mxu0
        %v4200 = vpop.f32.mrb[0].mxu0
        %v4201 = vadd.f32 %v4022, %v4200
        %v4202 = vpop.f32.mrb[0].mxu0
        %4203 = vmatprep.mubr.bf16.mxu0 0
        %4204 = vmatmul.mubr.bf16.gmra.mrb[0].mxu0 %v4094
        %v4205 = vpop.f32.mrb[0].mxu0
        %v4206 = vadd.f32 %v4023, %v4205
        %v4207 = vpop.f32.mrb[0].mxu0
        %v4208 = vpop.f32.mrb[0].mxu0
        %v4209 = vadd.f32 %v4024, %v4208
        %v4210 = vpop.f32.mrb[0].mxu0
        %4211 = vmatprep.mubr.bf16.mxu0 0
        %4212 = vmatmul.mubr.bf16.gmra.mrb[0].mxu0 %v4097
        %v4213 = vpop.f32.mrb[0].mxu0
        %v4214 = vadd.f32 %v4025, %v4213
        %v4215 = vpop.f32.mrb[0].mxu0
        %v4216 = vpop.f32.mrb[0].mxu0
        %v4217 = vadd.f32 %v4026, %v4216
        %v4218 = vpop.f32.mrb[0].mxu0
        %4219 = vdwg.mxu0
        %4228 = vrot.lane.b32.xlu0 %v3970, 32
        %v4229 = vpop.permute.xlu0 %4228
        %4230 = vrot.lane.b32.xlu0 %v3971, 32
        %v4231 = vpop.permute.xlu0 %4230
        %4232 = vrot.lane.b32.xlu0 %v3972, 32
        %v4233 = vpop.permute.xlu0 %4232
        %4234 = vrot.lane.b32.xlu0 %v3973, 32
        %v4235 = vpop.permute.xlu0 %4234
        %4236 = vrot.lane.b32.xlu0 %v3974, 32
        %v4237 = vpop.permute.xlu0 %4236
        %4238 = vrot.lane.b32.xlu0 %v3975, 32
        %v4239 = vpop.permute.xlu0 %4238
        %4240 = vrot.lane.b32.xlu0 %v3976, 32
        %v4241 = vpop.permute.xlu0 %4240
        %4242 = vrot.lane.b32.xlu0 %v3977, 32
        %v4243 = vpop.permute.xlu0 %4242
        %4252 = vrot.lane.b32.xlu0 %v3986, 32
        %v4253 = vpop.permute.xlu0 %4252
        %4254 = vrot.lane.b32.xlu0 %v3987, 32
        %v4255 = vpop.permute.xlu0 %4254
        %4256 = vrot.lane.b32.xlu0 %v3988, 32
        %v4257 = vpop.permute.xlu0 %4256
        %4258 = vrot.lane.b32.xlu0 %v3989, 32
        %v4259 = vpop.permute.xlu0 %4258
        %4260 = vrot.lane.b32.xlu0 %v3990, 32
        %v4261 = vpop.permute.xlu0 %4260
        %4262 = vrot.lane.b32.xlu0 %v3991, 32
        %v4263 = vpop.permute.xlu0 %4262
        %4264 = vrot.lane.b32.xlu0 %v3992, 32
        %v4265 = vpop.permute.xlu0 %4264
        %4266 = vrot.lane.b32.xlu0 %v3993, 32
        %v4267 = vpop.permute.xlu0 %4266
        %v4269 = vsel %vm921, %v4229, 0
        %v4272 = vsel %vm921, %v4231, 0
        %v4275 = vsel %vm921, %v4233, 0
        %v4278 = vsel %vm921, %v4235, 0
        %v4281 = vsel %vm921, %v4237, 0
        %v4284 = vsel %vm921, %v4239, 0
        %v4287 = vsel %vm921, %v4241, 0
        %v4290 = vsel %vm921, %v4243, 0
        %v4293 = vsel %vm921, %v4253, 0
        %v4296 = vsel %vm921, %v4255, 0
        %v4299 = vsel %vm921, %v4257, 0
        %v4302 = vsel %vm921, %v4259, 0
        %v4305 = vsel %vm921, %v4261, 0
        %v4308 = vsel %vm921, %v4263, 0
        %v4311 = vsel %vm921, %v4265, 0
        %v4314 = vsel %vm921, %v4267, 0
        %4316 = vmatprep.subr.bf16.mxu0 0
        %4317 = vmatpush1.bf16.xpose.msra.mxu0 %v4293
        %4318 = vmatprep.subr.bf16.mxu0 0
        %4319 = vmatpush1.bf16.xpose.msra.mxu0 %v4296
        %4320 = vmatprep.subr.bf16.mxu0 0
        %4321 = vmatpush1.bf16.xpose.msra.mxu0 %v4299
        %4322 = vmatprep.subr.bf16.mxu0 0
        %4323 = vmatpush1.bf16.xpose.msra.mxu0 %v4302
        %4324 = vmatprep.subr.bf16.mxu0 0
        %4325 = vmatpush1.bf16.xpose.msra.mxu0 %v4305
        %4326 = vmatprep.subr.bf16.mxu0 0
        %4327 = vmatpush1.bf16.xpose.msra.mxu0 %v4308
        %4328 = vmatprep.subr.bf16.mxu0 0
        %4329 = vmatpush1.bf16.xpose.msra.mxu0 %v4311
        %4330 = vmatprep.subr.bf16.mxu0 0
        %4331 = vmatpush1.bf16.xpose.msra.mxu0 %v4314
        %4332 = vmatprep.subr.bf16.mxu0 0
        %4333 = vmatpush1.bf16.xpose.msra.mxu0 0
        %4334 = vmatprep.subr.bf16.mxu0 0
        %4335 = vmatpush1.bf16.xpose.msra.mxu0 0
        %4336 = vmatprep.subr.bf16.mxu0 0
        %4337 = vmatpush1.bf16.xpose.msra.mxu0 0
        %4338 = vmatprep.subr.bf16.mxu0 0
        %4339 = vmatpush1.bf16.xpose.msra.mxu0 0
        %4340 = vmatprep.subr.bf16.mxu0 0
        %4341 = vmatpush1.bf16.xpose.msra.mxu0 0
        %4342 = vmatprep.subr.bf16.mxu0 0
        %4343 = vmatpush1.bf16.xpose.msra.mxu0 0
        %4344 = vmatprep.subr.bf16.mxu0 0
        %4345 = vmatpush1.bf16.xpose.msra.mxu0 0
        %4346 = vmatprep.subr.bf16.mxu0 0
        %4347 = vmatpush1.bf16.xpose.msra.mxu0 0
        %4348 = vmatprep.mubr.bf16.mxu0 0
        %4349 = vmatmul.mubr.bf16.gmra.mrb[0].mxu0 %v4269
        %v4350 = vpop.f32.mrb[0].mxu0
        %v4351 = vadd.f32 %v4011, %v4350
        %v4352 = vpop.f32.mrb[0].mxu0
        %v4353 = vpop.f32.mrb[0].mxu0
        %v4354 = vadd.f32 %v4012, %v4353
        %v4355 = vpop.f32.mrb[0].mxu0
        %4356 = vmatprep.mubr.bf16.mxu0 0
        %4357 = vmatmul.mubr.bf16.gmra.mrb[0].mxu0 %v4272
        %v4358 = vpop.f32.mrb[0].mxu0
        %v4359 = vadd.f32 %v4013, %v4358
        %v4360 = vpop.f32.mrb[0].mxu0
        %v4361 = vpop.f32.mrb[0].mxu0
        %v4362 = vadd.f32 %v4014, %v4361
        %v4363 = vpop.f32.mrb[0].mxu0
        %4364 = vmatprep.mubr.bf16.mxu0 0
        %4365 = vmatmul.mubr.bf16.gmra.mrb[0].mxu0 %v4275
        %v4366 = vpop.f32.mrb[0].mxu0
        %v4367 = vadd.f32 %v4015, %v4366
        %v4368 = vpop.f32.mrb[0].mxu0
        %v4369 = vpop.f32.mrb[0].mxu0
        %v4370 = vadd.f32 %v4016, %v4369
        %v4371 = vpop.f32.mrb[0].mxu0
        %4372 = vmatprep.mubr.bf16.mxu0 0
        %4373 = vmatmul.mubr.bf16.gmra.mrb[0].mxu0 %v4278
        %v4374 = vpop.f32.mrb[0].mxu0
        %v4375 = vadd.f32 %v4017, %v4374
        %v4376 = vpop.f32.mrb[0].mxu0
        %v4377 = vpop.f32.mrb[0].mxu0
        %v4378 = vadd.f32 %v4018, %v4377
        %v4379 = vpop.f32.mrb[0].mxu0
        %4380 = vmatprep.mubr.bf16.mxu0 0
        %4381 = vmatmul.mubr.bf16.gmra.mrb[0].mxu0 %v4281
        %v4382 = vpop.f32.mrb[0].mxu0
        %v4383 = vadd.f32 %v4019, %v4382
        %v4384 = vpop.f32.mrb[0].mxu0
        %v4385 = vpop.f32.mrb[0].mxu0
        %v4386 = vadd.f32 %v4020, %v4385
        %v4387 = vpop.f32.mrb[0].mxu0
        %4388 = vmatprep.mubr.bf16.mxu0 0
        %4389 = vmatmul.mubr.bf16.gmra.mrb[0].mxu0 %v4284
        %v4390 = vpop.f32.mrb[0].mxu0
        %v4391 = vadd.f32 %v4021, %v4390
        %v4392 = vpop.f32.mrb[0].mxu0
        %v4393 = vpop.f32.mrb[0].mxu0
        %v4394 = vadd.f32 %v4022, %v4393
        %v4395 = vpop.f32.mrb[0].mxu0
        %4396 = vmatprep.mubr.bf16.mxu0 0
        %4397 = vmatmul.mubr.bf16.gmra.mrb[0].mxu0 %v4287
        %v4398 = vpop.f32.mrb[0].mxu0
        %v4399 = vadd.f32 %v4023, %v4398
        %v4400 = vpop.f32.mrb[0].mxu0
        %v4401 = vpop.f32.mrb[0].mxu0
        %v4402 = vadd.f32 %v4024, %v4401
        %v4403 = vpop.f32.mrb[0].mxu0
        %4404 = vmatprep.mubr.bf16.mxu0 0
        %4405 = vmatmul.mubr.bf16.gmra.mrb[0].mxu0 %v4290
        %v4406 = vpop.f32.mrb[0].mxu0
        %v4407 = vadd.f32 %v4025, %v4406
        %v4408 = vpop.f32.mrb[0].mxu0
        %v4409 = vpop.f32.mrb[0].mxu0
        %v4410 = vadd.f32 %v4026, %v4409
        %v4411 = vpop.f32.mrb[0].mxu0
        %4412 = vdwg.mxu0
        %4413 = vmax.xlane.f32.xlu0 %v4158
        %v4414 = vpop.xlane.xlu0 %4413
        %4415 = vmax.xlane.f32.xlu0 %v4161
        %v4416 = vpop.xlane.xlu0 %4415
        %4417 = vmax.xlane.f32.xlu0 %v4166
        %v4418 = vpop.xlane.xlu0 %4417
        %4419 = vmax.xlane.f32.xlu0 %v4169
        %v4420 = vpop.xlane.xlu0 %4419
        %4421 = vmax.xlane.f32.xlu0 %v4174
        %v4422 = vpop.xlane.xlu0 %4421
        %4423 = vmax.xlane.f32.xlu0 %v4177
        %v4424 = vpop.xlane.xlu0 %4423
        %4425 = vmax.xlane.f32.xlu0 %v4182
        %v4426 = vpop.xlane.xlu0 %4425
        %4427 = vmax.xlane.f32.xlu0 %v4185
        %v4428 = vpop.xlane.xlu0 %4427
        %4429 = vmax.xlane.f32.xlu0 %v4190
        %v4430 = vpop.xlane.xlu0 %4429
        %4431 = vmax.xlane.f32.xlu0 %v4193
        %v4432 = vpop.xlane.xlu0 %4431
        %4433 = vmax.xlane.f32.xlu0 %v4198
        %v4434 = vpop.xlane.xlu0 %4433
        %4435 = vmax.xlane.f32.xlu0 %v4201
        %v4436 = vpop.xlane.xlu0 %4435
        %4437 = vmax.xlane.f32.xlu0 %v4206
        %v4438 = vpop.xlane.xlu0 %4437
        %4439 = vmax.xlane.f32.xlu0 %v4209
        %v4440 = vpop.xlane.xlu0 %4439
        %4441 = vmax.xlane.f32.xlu0 %v4214
        %v4442 = vpop.xlane.xlu0 %4441
        %4443 = vmax.xlane.f32.xlu0 %v4217
        %v4444 = vpop.xlane.xlu0 %4443
        %4445 = vmax.xlane.f32.xlu0 %v4351
        %v4446 = vpop.xlane.xlu0 %4445
        %4447 = vmax.xlane.f32.xlu0 %v4354
        %v4448 = vpop.xlane.xlu0 %4447
        %4449 = vmax.xlane.f32.xlu0 %v4359
        %v4450 = vpop.xlane.xlu0 %4449
        %4451 = vmax.xlane.f32.xlu0 %v4362
        %v4452 = vpop.xlane.xlu0 %4451
        %4453 = vmax.xlane.f32.xlu0 %v4367
        %v4454 = vpop.xlane.xlu0 %4453
        %4455 = vmax.xlane.f32.xlu0 %v4370
        %v4456 = vpop.xlane.xlu0 %4455
        %4457 = vmax.xlane.f32.xlu0 %v4375
        %v4458 = vpop.xlane.xlu0 %4457
        %4459 = vmax.xlane.f32.xlu0 %v4378
        %v4460 = vpop.xlane.xlu0 %4459
        %4461 = vmax.xlane.f32.xlu0 %v4383
        %v4462 = vpop.xlane.xlu0 %4461
        %4463 = vmax.xlane.f32.xlu0 %v4386
        %v4464 = vpop.xlane.xlu0 %4463
        %4465 = vmax.xlane.f32.xlu0 %v4391
        %v4466 = vpop.xlane.xlu0 %4465
        %4467 = vmax.xlane.f32.xlu0 %v4394
        %v4468 = vpop.xlane.xlu0 %4467
        %4469 = vmax.xlane.f32.xlu0 %v4399
        %v4470 = vpop.xlane.xlu0 %4469
        %4471 = vmax.xlane.f32.xlu0 %v4402
        %v4472 = vpop.xlane.xlu0 %4471
        %4473 = vmax.xlane.f32.xlu0 %v4407
        %v4474 = vpop.xlane.xlu0 %4473
        %4475 = vmax.xlane.f32.xlu0 %v4410
        %v4476 = vpop.xlane.xlu0 %4475
        %v4477 = vsub.f32 %v4158, %v4414
        %v4478 = vsub.f32 %v4161, %v4416
        %v4479 = vsub.f32 %v4166, %v4418
        %v4480 = vsub.f32 %v4169, %v4420
        %v4481 = vsub.f32 %v4174, %v4422
        %v4482 = vsub.f32 %v4177, %v4424
        %v4483 = vsub.f32 %v4182, %v4426
        %v4484 = vsub.f32 %v4185, %v4428
        %v4485 = vsub.f32 %v4190, %v4430
        %v4486 = vsub.f32 %v4193, %v4432
        %v4487 = vsub.f32 %v4198, %v4434
        %v4488 = vsub.f32 %v4201, %v4436
        %v4489 = vsub.f32 %v4206, %v4438
        %v4490 = vsub.f32 %v4209, %v4440
        %v4491 = vsub.f32 %v4214, %v4442
        %v4492 = vsub.f32 %v4217, %v4444
        %v4493 = vsub.f32 %v4351, %v4446
        %v4494 = vsub.f32 %v4354, %v4448
        %v4495 = vsub.f32 %v4359, %v4450
        %v4496 = vsub.f32 %v4362, %v4452
        %v4497 = vsub.f32 %v4367, %v4454
        %v4498 = vsub.f32 %v4370, %v4456
        %v4499 = vsub.f32 %v4375, %v4458
        %v4500 = vsub.f32 %v4378, %v4460
        %v4501 = vsub.f32 %v4383, %v4462
        %v4502 = vsub.f32 %v4386, %v4464
        %v4503 = vsub.f32 %v4391, %v4466
        %v4504 = vsub.f32 %v4394, %v4468
        %v4505 = vsub.f32 %v4399, %v4470
        %v4506 = vsub.f32 %v4402, %v4472
        %v4507 = vsub.f32 %v4407, %v4474
        %v4508 = vsub.f32 %v4410, %v4476
        %v4509 = vmul.f32 %v4477, 1.442695
        %v4510 = vpow.pop %v4509
        %v4511 = vmul.f32 %v4478, 1.442695
        %v4512 = vpow.pop %v4511
        %v4513 = vmul.f32 %v4479, 1.442695
        %v4514 = vpow.pop %v4513
        %v4515 = vmul.f32 %v4480, 1.442695
        %v4516 = vpow.pop %v4515
        %v4517 = vmul.f32 %v4481, 1.442695
        %v4518 = vpow.pop %v4517
        %v4519 = vmul.f32 %v4482, 1.442695
        %v4520 = vpow.pop %v4519
        %v4521 = vmul.f32 %v4483, 1.442695
        %v4522 = vpow.pop %v4521
        %v4523 = vmul.f32 %v4484, 1.442695
        %v4524 = vpow.pop %v4523
        %v4525 = vmul.f32 %v4485, 1.442695
        %v4526 = vpow.pop %v4525
        %v4527 = vmul.f32 %v4486, 1.442695
        %v4528 = vpow.pop %v4527
        %v4529 = vmul.f32 %v4487, 1.442695
        %v4530 = vpow.pop %v4529
        %v4531 = vmul.f32 %v4488, 1.442695
        %v4532 = vpow.pop %v4531
        %v4533 = vmul.f32 %v4489, 1.442695
        %v4534 = vpow.pop %v4533
        %v4535 = vmul.f32 %v4490, 1.442695
        %v4536 = vpow.pop %v4535
        %v4537 = vmul.f32 %v4491, 1.442695
        %v4538 = vpow.pop %v4537
        %v4539 = vmul.f32 %v4492, 1.442695
        %v4540 = vpow.pop %v4539
        %v4541 = vmul.f32 %v4493, 1.442695
        %v4542 = vpow.pop %v4541
        %v4543 = vmul.f32 %v4494, 1.442695
        %v4544 = vpow.pop %v4543
        %v4545 = vmul.f32 %v4495, 1.442695
        %v4546 = vpow.pop %v4545
        %v4547 = vmul.f32 %v4496, 1.442695
        %v4548 = vpow.pop %v4547
        %v4549 = vmul.f32 %v4497, 1.442695
        %v4550 = vpow.pop %v4549
        %v4551 = vmul.f32 %v4498, 1.442695
        %v4552 = vpow.pop %v4551
        %v4553 = vmul.f32 %v4499, 1.442695
        %v4554 = vpow.pop %v4553
        %v4555 = vmul.f32 %v4500, 1.442695
        %v4556 = vpow.pop %v4555
        %v4557 = vmul.f32 %v4501, 1.442695
        %v4558 = vpow.pop %v4557
        %v4559 = vmul.f32 %v4502, 1.442695
        %v4560 = vpow.pop %v4559
        %v4561 = vmul.f32 %v4503, 1.442695
        %v4562 = vpow.pop %v4561
        %v4563 = vmul.f32 %v4504, 1.442695
        %v4564 = vpow.pop %v4563
        %v4565 = vmul.f32 %v4505, 1.442695
        %v4566 = vpow.pop %v4565
        %v4567 = vmul.f32 %v4506, 1.442695
        %v4568 = vpow.pop %v4567
        %v4569 = vmul.f32 %v4507, 1.442695
        %v4570 = vpow.pop %v4569
        %v4571 = vmul.f32 %v4508, 1.442695
        %v4572 = vpow.pop %v4571
        %4573 = vadd.xlane.f32.xlu0 %v4510
        %v4574 = vpop.xlane.xlu0 %4573
        %4575 = vadd.xlane.f32.xlu0 %v4512
        %v4576 = vpop.xlane.xlu0 %4575
        %4577 = vadd.xlane.f32.xlu0 %v4514
        %v4578 = vpop.xlane.xlu0 %4577
        %4579 = vadd.xlane.f32.xlu0 %v4516
        %v4580 = vpop.xlane.xlu0 %4579
        %4581 = vadd.xlane.f32.xlu0 %v4518
        %v4582 = vpop.xlane.xlu0 %4581
        %4583 = vadd.xlane.f32.xlu0 %v4520
        %v4584 = vpop.xlane.xlu0 %4583
        %4585 = vadd.xlane.f32.xlu0 %v4522
        %v4586 = vpop.xlane.xlu0 %4585
        %4587 = vadd.xlane.f32.xlu0 %v4524
        %v4588 = vpop.xlane.xlu0 %4587
        %4589 = vadd.xlane.f32.xlu0 %v4526
        %v4590 = vpop.xlane.xlu0 %4589
        %4591 = vadd.xlane.f32.xlu0 %v4528
        %v4592 = vpop.xlane.xlu0 %4591
        %4593 = vadd.xlane.f32.xlu0 %v4530
        %v4594 = vpop.xlane.xlu0 %4593
        %4595 = vadd.xlane.f32.xlu0 %v4532
        %v4596 = vpop.xlane.xlu0 %4595
        %4597 = vadd.xlane.f32.xlu0 %v4534
        %v4598 = vpop.xlane.xlu0 %4597
        %4599 = vadd.xlane.f32.xlu0 %v4536
        %v4600 = vpop.xlane.xlu0 %4599
        %4601 = vadd.xlane.f32.xlu0 %v4538
        %v4602 = vpop.xlane.xlu0 %4601
        %4603 = vadd.xlane.f32.xlu0 %v4540
        %v4604 = vpop.xlane.xlu0 %4603
        %4605 = vadd.xlane.f32.xlu0 %v4542
        %v4606 = vpop.xlane.xlu0 %4605
        %4607 = vadd.xlane.f32.xlu0 %v4544
        %v4608 = vpop.xlane.xlu0 %4607
        %4609 = vadd.xlane.f32.xlu0 %v4546
        %v4610 = vpop.xlane.xlu0 %4609
        %4611 = vadd.xlane.f32.xlu0 %v4548
        %v4612 = vpop.xlane.xlu0 %4611
        %4613 = vadd.xlane.f32.xlu0 %v4550
        %v4614 = vpop.xlane.xlu0 %4613
        %4615 = vadd.xlane.f32.xlu0 %v4552
        %v4616 = vpop.xlane.xlu0 %4615
        %4617 = vadd.xlane.f32.xlu0 %v4554
        %v4618 = vpop.xlane.xlu0 %4617
        %4619 = vadd.xlane.f32.xlu0 %v4556
        %v4620 = vpop.xlane.xlu0 %4619
        %4621 = vadd.xlane.f32.xlu0 %v4558
        %v4622 = vpop.xlane.xlu0 %4621
        %4623 = vadd.xlane.f32.xlu0 %v4560
        %v4624 = vpop.xlane.xlu0 %4623
        %4625 = vadd.xlane.f32.xlu0 %v4562
        %v4626 = vpop.xlane.xlu0 %4625
        %4627 = vadd.xlane.f32.xlu0 %v4564
        %v4628 = vpop.xlane.xlu0 %4627
        %4629 = vadd.xlane.f32.xlu0 %v4566
        %v4630 = vpop.xlane.xlu0 %4629
        %4631 = vadd.xlane.f32.xlu0 %v4568
        %v4632 = vpop.xlane.xlu0 %4631
        %4633 = vadd.xlane.f32.xlu0 %v4570
        %v4634 = vpop.xlane.xlu0 %4633
        %4635 = vadd.xlane.f32.xlu0 %v4572
        %v4636 = vpop.xlane.xlu0 %4635
        %v4637 = vrcp.pop %v4574
        %v4638 = vrcp.pop %v4576
        %v4639 = vrcp.pop %v4578
        %v4640 = vrcp.pop %v4580
        %v4641 = vrcp.pop %v4582
        %v4642 = vrcp.pop %v4584
        %v4643 = vrcp.pop %v4586
        %v4644 = vrcp.pop %v4588
        %v4645 = vrcp.pop %v4590
        %v4646 = vrcp.pop %v4592
        %v4647 = vrcp.pop %v4594
        %v4648 = vrcp.pop %v4596
        %v4649 = vrcp.pop %v4598
        %v4650 = vrcp.pop %v4600
        %v4651 = vrcp.pop %v4602
        %v4652 = vrcp.pop %v4604
        %v4653 = vrcp.pop %v4606
        %v4654 = vrcp.pop %v4608
        %v4655 = vrcp.pop %v4610
        %v4656 = vrcp.pop %v4612
        %v4657 = vrcp.pop %v4614
        %v4658 = vrcp.pop %v4616
        %v4659 = vrcp.pop %v4618
        %v4660 = vrcp.pop %v4620
        %v4661 = vrcp.pop %v4622
        %v4662 = vrcp.pop %v4624
        %v4663 = vrcp.pop %v4626
        %v4664 = vrcp.pop %v4628
        %v4665 = vrcp.pop %v4630
        %v4666 = vrcp.pop %v4632
        %v4667 = vrcp.pop %v4634
        %v4668 = vrcp.pop %v4636
        %v4669 = vmul.f32 %v4510, %v4637
        %v4670 = vmul.f32 %v4512, %v4638
        %v4671 = vmul.f32 %v4514, %v4639
        %v4672 = vmul.f32 %v4516, %v4640
        %v4673 = vmul.f32 %v4518, %v4641
        %v4674 = vmul.f32 %v4520, %v4642
        %v4675 = vmul.f32 %v4522, %v4643
        %v4676 = vmul.f32 %v4524, %v4644
        %v4677 = vmul.f32 %v4526, %v4645
        %v4678 = vmul.f32 %v4528, %v4646
        %v4679 = vmul.f32 %v4530, %v4647
        %v4680 = vmul.f32 %v4532, %v4648
        %v4681 = vmul.f32 %v4534, %v4649
        %v4682 = vmul.f32 %v4536, %v4650
        %v4683 = vmul.f32 %v4538, %v4651
        %v4684 = vmul.f32 %v4540, %v4652
        %v4685 = vmul.f32 %v4542, %v4653
        %v4686 = vmul.f32 %v4544, %v4654
        %v4687 = vmul.f32 %v4546, %v4655
        %v4688 = vmul.f32 %v4548, %v4656
        %v4689 = vmul.f32 %v4550, %v4657
        %v4690 = vmul.f32 %v4552, %v4658
        %v4691 = vmul.f32 %v4554, %v4659
        %v4692 = vmul.f32 %v4556, %v4660
        %v4693 = vmul.f32 %v4558, %v4661
        %v4694 = vmul.f32 %v4560, %v4662
        %v4695 = vmul.f32 %v4562, %v4663
        %v4696 = vmul.f32 %v4564, %v4664
        %v4697 = vmul.f32 %v4566, %v4665
        %v4698 = vmul.f32 %v4568, %v4666
        %v4699 = vmul.f32 %v4570, %v4667
        %v4700 = vmul.f32 %v4572, %v4668
        %v4701 = vpack.c.bf16 %v4670, %v4669
        %v4702 = vpack.c.bf16 %v4672, %v4671
        %v4703 = vpack.c.bf16 %v4674, %v4673
        %v4704 = vpack.c.bf16 %v4676, %v4675
        %v4705 = vpack.c.bf16 %v4678, %v4677
        %v4706 = vpack.c.bf16 %v4680, %v4679
        %v4707 = vpack.c.bf16 %v4682, %v4681
        %v4708 = vpack.c.bf16 %v4684, %v4683
        %v4709 = vpack.c.bf16 %v4686, %v4685
        %v4710 = vpack.c.bf16 %v4688, %v4687
        %v4711 = vpack.c.bf16 %v4690, %v4689
        %v4712 = vpack.c.bf16 %v4692, %v4691
        %v4713 = vpack.c.bf16 %v4694, %v4693
        %v4714 = vpack.c.bf16 %v4696, %v4695
        %v4715 = vpack.c.bf16 %v4698, %v4697
        %v4716 = vpack.c.bf16 %v4700, %v4699
        %4725 = vrot.lane.b32.xlu0 %v3994, 32
        %v4726 = vpop.permute.xlu0 %4725
        %4727 = vrot.lane.b32.xlu0 %v3995, 32
        %v4728 = vpop.permute.xlu0 %4727
        %4729 = vrot.lane.b32.xlu0 %v3996, 32
        %v4730 = vpop.permute.xlu0 %4729
        %4731 = vrot.lane.b32.xlu0 %v3997, 32
        %v4732 = vpop.permute.xlu0 %4731
        %4733 = vrot.lane.b32.xlu0 %v3998, 32
        %v4734 = vpop.permute.xlu0 %4733
        %4735 = vrot.lane.b32.xlu0 %v3999, 32
        %v4736 = vpop.permute.xlu0 %4735
        %4737 = vrot.lane.b32.xlu0 %v4000, 32
        %v4738 = vpop.permute.xlu0 %4737
        %4739 = vrot.lane.b32.xlu0 %v4001, 32
        %v4740 = vpop.permute.xlu0 %4739
        %4749 = vmatprep.subr.bf16.mxu0 0
        %4750 = vmatpush1.bf16.msra.mxu0 %v4726
        %4751 = vmatprep.subr.bf16.mxu0 0
        %4752 = vmatpush1.bf16.msra.mxu0 %v4728
        %4753 = vmatprep.subr.bf16.mxu0 0
        %4754 = vmatpush1.bf16.msra.mxu0 %v4730
        %4755 = vmatprep.subr.bf16.mxu0 0
        %4756 = vmatpush1.bf16.msra.mxu0 %v4732
        %4757 = vmatprep.subr.bf16.mxu0 0
        %4758 = vmatpush1.bf16.msra.mxu0 %v4734
        %4759 = vmatprep.subr.bf16.mxu0 0
        %4760 = vmatpush1.bf16.msra.mxu0 %v4736
        %4761 = vmatprep.subr.bf16.mxu0 0
        %4762 = vmatpush1.bf16.msra.mxu0 %v4738
        %4763 = vmatprep.subr.bf16.mxu0 0
        %4764 = vmatpush1.bf16.msra.mxu0 %v4740
        %4765 = vmatprep.subr.bf16.mxu0 0
        %4766 = vmatpush1.bf16.msra.mxu0 0
        %4767 = vmatprep.subr.bf16.mxu0 0
        %4768 = vmatpush1.bf16.msra.mxu0 0
        %4769 = vmatprep.subr.bf16.mxu0 0
        %4770 = vmatpush1.bf16.msra.mxu0 0
        %4771 = vmatprep.subr.bf16.mxu0 0
        %4772 = vmatpush1.bf16.msra.mxu0 0
        %4773 = vmatprep.subr.bf16.mxu0 0
        %4774 = vmatpush1.bf16.msra.mxu0 0
        %4775 = vmatprep.subr.bf16.mxu0 0
        %4776 = vmatpush1.bf16.msra.mxu0 0
        %4777 = vmatprep.subr.bf16.mxu0 0
        %4778 = vmatpush1.bf16.msra.mxu0 0
        %4779 = vmatprep.subr.bf16.mxu0 0
        %4780 = vmatpush1.bf16.msra.mxu0 0
        %4781 = vmatprep.mubr.bf16.mxu0 0
        %4782 = vmatmul.mubr.bf16.gmra.mrb[0].mxu0 %v4701
        %v4783 = vpop.f32.mrb[0].mxu0
        %v4784 = vadd.f32 0.0, %v4783
        %v4785 = vpop.f32.mrb[0].mxu0
        %v4786 = vpop.f32.mrb[0].mxu0
        %v4787 = vadd.f32 0.0, %v4786
        %v4788 = vpop.f32.mrb[0].mxu0
        %4789 = vmatprep.mubr.bf16.mxu0 0
        %4790 = vmatmul.mubr.bf16.gmra.mrb[0].mxu0 %v4702
        %v4791 = vpop.f32.mrb[0].mxu0
        %v4792 = vadd.f32 0.0, %v4791
        %v4793 = vpop.f32.mrb[0].mxu0
        %v4794 = vpop.f32.mrb[0].mxu0
        %v4795 = vadd.f32 0.0, %v4794
        %v4796 = vpop.f32.mrb[0].mxu0
        %4797 = vmatprep.mubr.bf16.mxu0 0
        %4798 = vmatmul.mubr.bf16.gmra.mrb[0].mxu0 %v4703
        %v4799 = vpop.f32.mrb[0].mxu0
        %v4800 = vadd.f32 0.0, %v4799
        %v4801 = vpop.f32.mrb[0].mxu0
        %v4802 = vpop.f32.mrb[0].mxu0
        %v4803 = vadd.f32 0.0, %v4802
        %v4804 = vpop.f32.mrb[0].mxu0
        %4805 = vmatprep.mubr.bf16.mxu0 0
        %4806 = vmatmul.mubr.bf16.gmra.mrb[0].mxu0 %v4704
        %v4807 = vpop.f32.mrb[0].mxu0
        %v4808 = vadd.f32 0.0, %v4807
        %v4809 = vpop.f32.mrb[0].mxu0
        %v4810 = vpop.f32.mrb[0].mxu0
        %v4811 = vadd.f32 0.0, %v4810
        %v4812 = vpop.f32.mrb[0].mxu0
        %4813 = vmatprep.mubr.bf16.mxu0 0
        %4814 = vmatmul.mubr.bf16.gmra.mrb[0].mxu0 %v4705
        %v4815 = vpop.f32.mrb[0].mxu0
        %v4816 = vadd.f32 0.0, %v4815
        %v4817 = vpop.f32.mrb[0].mxu0
        %v4818 = vpop.f32.mrb[0].mxu0
        %v4819 = vadd.f32 0.0, %v4818
        %v4820 = vpop.f32.mrb[0].mxu0
        %4821 = vmatprep.mubr.bf16.mxu0 0
        %4822 = vmatmul.mubr.bf16.gmra.mrb[0].mxu0 %v4706
        %v4823 = vpop.f32.mrb[0].mxu0
        %v4824 = vadd.f32 0.0, %v4823
        %v4825 = vpop.f32.mrb[0].mxu0
        %v4826 = vpop.f32.mrb[0].mxu0
        %v4827 = vadd.f32 0.0, %v4826
        %v4828 = vpop.f32.mrb[0].mxu0
        %4829 = vmatprep.mubr.bf16.mxu0 0
        %4830 = vmatmul.mubr.bf16.gmra.mrb[0].mxu0 %v4707
        %v4831 = vpop.f32.mrb[0].mxu0
        %v4832 = vadd.f32 0.0, %v4831
        %v4833 = vpop.f32.mrb[0].mxu0
        %v4834 = vpop.f32.mrb[0].mxu0
        %v4835 = vadd.f32 0.0, %v4834
        %v4836 = vpop.f32.mrb[0].mxu0
        %4837 = vmatprep.mubr.bf16.mxu0 0
        %4838 = vmatmul.mubr.bf16.gmra.mrb[0].mxu0 %v4708
        %v4839 = vpop.f32.mrb[0].mxu0
        %v4840 = vadd.f32 0.0, %v4839
        %v4841 = vpop.f32.mrb[0].mxu0
        %v4842 = vpop.f32.mrb[0].mxu0
        %v4843 = vadd.f32 0.0, %v4842
        %v4844 = vpop.f32.mrb[0].mxu0
        %4845 = vdwg.mxu0
        %4854 = vrot.lane.b32.xlu0 %v4002, 32
        %v4855 = vpop.permute.xlu0 %4854
        %4856 = vrot.lane.b32.xlu0 %v4003, 32
        %v4857 = vpop.permute.xlu0 %4856
        %4858 = vrot.lane.b32.xlu0 %v4004, 32
        %v4859 = vpop.permute.xlu0 %4858
        %4860 = vrot.lane.b32.xlu0 %v4005, 32
        %v4861 = vpop.permute.xlu0 %4860
        %4862 = vrot.lane.b32.xlu0 %v4006, 32
        %v4863 = vpop.permute.xlu0 %4862
        %4864 = vrot.lane.b32.xlu0 %v4007, 32
        %v4865 = vpop.permute.xlu0 %4864
        %4866 = vrot.lane.b32.xlu0 %v4008, 32
        %v4867 = vpop.permute.xlu0 %4866
        %4868 = vrot.lane.b32.xlu0 %v4009, 32
        %v4869 = vpop.permute.xlu0 %4868
        %4878 = vmatprep.subr.bf16.mxu0 0
        %4879 = vmatpush1.bf16.msra.mxu0 %v4855
        %4880 = vmatprep.subr.bf16.mxu0 0
        %4881 = vmatpush1.bf16.msra.mxu0 %v4857
        %4882 = vmatprep.subr.bf16.mxu0 0
        %4883 = vmatpush1.bf16.msra.mxu0 %v4859
        %4884 = vmatprep.subr.bf16.mxu0 0
        %4885 = vmatpush1.bf16.msra.mxu0 %v4861
        %4886 = vmatprep.subr.bf16.mxu0 0
        %4887 = vmatpush1.bf16.msra.mxu0 %v4863
        %4888 = vmatprep.subr.bf16.mxu0 0
        %4889 = vmatpush1.bf16.msra.mxu0 %v4865
        %4890 = vmatprep.subr.bf16.mxu0 0
        %4891 = vmatpush1.bf16.msra.mxu0 %v4867
        %4892 = vmatprep.subr.bf16.mxu0 0
        %4893 = vmatpush1.bf16.msra.mxu0 %v4869
        %4894 = vmatprep.subr.bf16.mxu0 0
        %4895 = vmatpush1.bf16.msra.mxu0 0
        %4896 = vmatprep.subr.bf16.mxu0 0
        %4897 = vmatpush1.bf16.msra.mxu0 0
        %4898 = vmatprep.subr.bf16.mxu0 0
        %4899 = vmatpush1.bf16.msra.mxu0 0
        %4900 = vmatprep.subr.bf16.mxu0 0
        %4901 = vmatpush1.bf16.msra.mxu0 0
        %4902 = vmatprep.subr.bf16.mxu0 0
        %4903 = vmatpush1.bf16.msra.mxu0 0
        %4904 = vmatprep.subr.bf16.mxu0 0
        %4905 = vmatpush1.bf16.msra.mxu0 0
        %4906 = vmatprep.subr.bf16.mxu0 0
        %4907 = vmatpush1.bf16.msra.mxu0 0
        %4908 = vmatprep.subr.bf16.mxu0 0
        %4909 = vmatpush1.bf16.msra.mxu0 0
        %4910 = vmatprep.mubr.bf16.mxu0 0
        %4911 = vmatmul.mubr.bf16.gmra.mrb[0].mxu0 %v4709
        %v4912 = vpop.f32.mrb[0].mxu0
        %v4913 = vadd.f32 0.0, %v4912
        %v4914 = vpop.f32.mrb[0].mxu0
        %v4915 = vpop.f32.mrb[0].mxu0
        %v4916 = vadd.f32 0.0, %v4915
        %v4917 = vpop.f32.mrb[0].mxu0
        %4918 = vmatprep.mubr.bf16.mxu0 0
        %4919 = vmatmul.mubr.bf16.gmra.mrb[0].mxu0 %v4710
        %v4920 = vpop.f32.mrb[0].mxu0
        %v4921 = vadd.f32 0.0, %v4920
        %v4922 = vpop.f32.mrb[0].mxu0
        %v4923 = vpop.f32.mrb[0].mxu0
        %v4924 = vadd.f32 0.0, %v4923
        %v4925 = vpop.f32.mrb[0].mxu0
        %4926 = vmatprep.mubr.bf16.mxu0 0
        %4927 = vmatmul.mubr.bf16.gmra.mrb[0].mxu0 %v4711
        %v4928 = vpop.f32.mrb[0].mxu0
        %v4929 = vadd.f32 0.0, %v4928
        %v4930 = vpop.f32.mrb[0].mxu0
        %v4931 = vpop.f32.mrb[0].mxu0
        %v4932 = vadd.f32 0.0, %v4931
        %v4933 = vpop.f32.mrb[0].mxu0
        %4934 = vmatprep.mubr.bf16.mxu0 0
        %4935 = vmatmul.mubr.bf16.gmra.mrb[0].mxu0 %v4712
        %v4936 = vpop.f32.mrb[0].mxu0
        %v4937 = vadd.f32 0.0, %v4936
        %v4938 = vpop.f32.mrb[0].mxu0
        %v4939 = vpop.f32.mrb[0].mxu0
        %v4940 = vadd.f32 0.0, %v4939
        %v4941 = vpop.f32.mrb[0].mxu0
        %4942 = vmatprep.mubr.bf16.mxu0 0
        %4943 = vmatmul.mubr.bf16.gmra.mrb[0].mxu0 %v4713
        %v4944 = vpop.f32.mrb[0].mxu0
        %v4945 = vadd.f32 0.0, %v4944
        %v4946 = vpop.f32.mrb[0].mxu0
        %v4947 = vpop.f32.mrb[0].mxu0
        %v4948 = vadd.f32 0.0, %v4947
        %v4949 = vpop.f32.mrb[0].mxu0
        %4950 = vmatprep.mubr.bf16.mxu0 0
        %4951 = vmatmul.mubr.bf16.gmra.mrb[0].mxu0 %v4714
        %v4952 = vpop.f32.mrb[0].mxu0
        %v4953 = vadd.f32 0.0, %v4952
        %v4954 = vpop.f32.mrb[0].mxu0
        %v4955 = vpop.f32.mrb[0].mxu0
        %v4956 = vadd.f32 0.0, %v4955
        %v4957 = vpop.f32.mrb[0].mxu0
        %4958 = vmatprep.mubr.bf16.mxu0 0
        %4959 = vmatmul.mubr.bf16.gmra.mrb[0].mxu0 %v4715
        %v4960 = vpop.f32.mrb[0].mxu0
        %v4961 = vadd.f32 0.0, %v4960
        %v4962 = vpop.f32.mrb[0].mxu0
        %v4963 = vpop.f32.mrb[0].mxu0
        %v4964 = vadd.f32 0.0, %v4963
        %v4965 = vpop.f32.mrb[0].mxu0
        %4966 = vmatprep.mubr.bf16.mxu0 0
        %4967 = vmatmul.mubr.bf16.gmra.mrb[0].mxu0 %v4716
        %v4968 = vpop.f32.mrb[0].mxu0
        %v4969 = vadd.f32 0.0, %v4968
        %v4970 = vpop.f32.mrb[0].mxu0
        %v4971 = vpop.f32.mrb[0].mxu0
        %v4972 = vadd.f32 0.0, %v4971
        %v4973 = vpop.f32.mrb[0].mxu0
        %4974 = vdwg.mxu0
        %v4975 = vpack.c.bf16 %v4787, %v4784
        %v4976 = vpack.c.bf16 %v4795, %v4792
        %v4977 = vpack.c.bf16 %v4803, %v4800
        %v4978 = vpack.c.bf16 %v4811, %v4808
        %v4979 = vpack.c.bf16 %v4819, %v4816
        %v4980 = vpack.c.bf16 %v4827, %v4824
        %v4981 = vpack.c.bf16 %v4835, %v4832
        %v4982 = vpack.c.bf16 %v4843, %v4840
        %v4983 = vpack.c.bf16 %v4916, %v4913
        %v4984 = vpack.c.bf16 %v4924, %v4921
        %v4985 = vpack.c.bf16 %v4932, %v4929
        %v4986 = vpack.c.bf16 %v4940, %v4937
        %v4987 = vpack.c.bf16 %v4948, %v4945
        %v4988 = vpack.c.bf16 %v4956, %v4953
        %v4989 = vpack.c.bf16 %v4964, %v4961
        %v4990 = vpack.c.bf16 %v4972, %v4969
        %5007 = vrot.lane.b32.xlu0 %v4975, 96
        %v5008 = vpop.permute.xlu0 %5007
        %5009 = vrot.lane.b32.xlu0 %v4976, 96
        %v5010 = vpop.permute.xlu0 %5009
        %5011 = vrot.lane.b32.xlu0 %v4977, 96
        %v5012 = vpop.permute.xlu0 %5011
        %5013 = vrot.lane.b32.xlu0 %v4978, 96
        %v5014 = vpop.permute.xlu0 %5013
        %5015 = vrot.lane.b32.xlu0 %v4979, 96
        %v5016 = vpop.permute.xlu0 %5015
        %5017 = vrot.lane.b32.xlu0 %v4980, 96
        %v5018 = vpop.permute.xlu0 %5017
        %5019 = vrot.lane.b32.xlu0 %v4981, 96
        %v5020 = vpop.permute.xlu0 %5019
        %5021 = vrot.lane.b32.xlu0 %v4982, 96
        %v5022 = vpop.permute.xlu0 %5021
        %5023 = vrot.lane.b32.xlu0 %v4983, 96
        %v5024 = vpop.permute.xlu0 %5023
        %5025 = vrot.lane.b32.xlu0 %v4984, 96
        %v5026 = vpop.permute.xlu0 %5025
        %5027 = vrot.lane.b32.xlu0 %v4985, 96
        %v5028 = vpop.permute.xlu0 %5027
        %5029 = vrot.lane.b32.xlu0 %v4986, 96
        %v5030 = vpop.permute.xlu0 %5029
        %5031 = vrot.lane.b32.xlu0 %v4987, 96
        %v5032 = vpop.permute.xlu0 %5031
        %5033 = vrot.lane.b32.xlu0 %v4988, 96
        %v5034 = vpop.permute.xlu0 %5033
        %5035 = vrot.lane.b32.xlu0 %v4989, 96
        %v5036 = vpop.permute.xlu0 %5035
        %5037 = vrot.lane.b32.xlu0 %v4990, 96
        %v5038 = vpop.permute.xlu0 %5037
        %vm5055 = vcmask 1048320
        %5056 = vst.msk [vmem:[#allocation3] sm:$0xff] %vm5055, %v5008
        %5057 = vst.msk [vmem:[#allocation3 + $0x8] sm:$0xff] %vm5055, %v5010
        %5058 = vst.msk [vmem:[#allocation3 + $0x10] sm:$0xff] %vm5055, %v5012
        %5059 = vst.msk [vmem:[#allocation3 + $0x18] sm:$0xff] %vm5055, %v5014
        %5060 = vst.msk [vmem:[#allocation3 + $0x20] sm:$0xff] %vm5055, %v5016
        %5061 = vst.msk [vmem:[#allocation3 + $0x28] sm:$0xff] %vm5055, %v5018
        %5062 = vst.msk [vmem:[#allocation3 + $0x30] sm:$0xff] %vm5055, %v5020
        %5063 = vst.msk [vmem:[#allocation3 + $0x38] sm:$0xff] %vm5055, %v5022
        %5064 = vst.msk [vmem:[#allocation3 + $0x40] sm:$0xff] %vm5055, %v5024
        %5065 = vst.msk [vmem:[#allocation3 + $0x48] sm:$0xff] %vm5055, %v5026
        %5066 = vst.msk [vmem:[#allocation3 + $0x50] sm:$0xff] %vm5055, %v5028
        %5067 = vst.msk [vmem:[#allocation3 + $0x58] sm:$0xff] %vm5055, %v5030
        %5068 = vst.msk [vmem:[#allocation3 + $0x60] sm:$0xff] %vm5055, %v5032
        %5069 = vst.msk [vmem:[#allocation3 + $0x68] sm:$0xff] %vm5055, %v5034
        %5070 = vst.msk [vmem:[#allocation3 + $0x70] sm:$0xff] %vm5055, %v5036
        %5071 = vst.msk [vmem:[#allocation3 + $0x78] sm:$0xff] %vm5055, %v5038
        %v5072 = vld [vmem:[#allocation3] sm:$0xff]
        %v5073 = vld [vmem:[#allocation3 + $0x8] sm:$0xff]
        %v5074 = vld [vmem:[#allocation3 + $0x10] sm:$0xff]
        %v5075 = vld [vmem:[#allocation3 + $0x18] sm:$0xff]
        %v5076 = vld [vmem:[#allocation3 + $0x20] sm:$0xff]
        %v5077 = vld [vmem:[#allocation3 + $0x28] sm:$0xff]
        %v5078 = vld [vmem:[#allocation3 + $0x30] sm:$0xff]
        %v5079 = vld [vmem:[#allocation3 + $0x38] sm:$0xff]
        %v5080 = vld [vmem:[#allocation3 + $0x40] sm:$0xff]
        %v5081 = vld [vmem:[#allocation3 + $0x48] sm:$0xff]
        %v5082 = vld [vmem:[#allocation3 + $0x50] sm:$0xff]
        %v5083 = vld [vmem:[#allocation3 + $0x58] sm:$0xff]
        %v5084 = vld [vmem:[#allocation3 + $0x60] sm:$0xff]
        %v5085 = vld [vmem:[#allocation3 + $0x68] sm:$0xff]
        %v5086 = vld [vmem:[#allocation3 + $0x70] sm:$0xff]
        %v5087 = vld [vmem:[#allocation3 + $0x78] sm:$0xff]
        %v5088 = vld [vmem:[%s3] sm:$0xf]
        %v5089 = vld [vmem:[%s3 + $0x4] sm:$0xf]
        %v5090 = vld [vmem:[%s3 + $0x8] sm:$0xf]
        %v5091 = vld [vmem:[%s3 + $0xc] sm:$0xf]
        %v5092 = vld [vmem:[%s3 + $0x10] sm:$0xf]
        %v5093 = vld [vmem:[%s3 + $0x14] sm:$0xf]
        %v5094 = vld [vmem:[%s3 + $0x18] sm:$0xf]
        %v5095 = vld [vmem:[%s3 + $0x1c] sm:$0xf]
        %v5096 = vld [vmem:[%s3 + $0x20] sm:$0xf]
        %v5097 = vld [vmem:[%s3 + $0x24] sm:$0xf]
        %v5098 = vld [vmem:[%s3 + $0x28] sm:$0xf]
        %v5099 = vld [vmem:[%s3 + $0x2c] sm:$0xf]
        %v5100 = vld [vmem:[%s3 + $0x30] sm:$0xf]
        %v5101 = vld [vmem:[%s3 + $0x34] sm:$0xf]
        %v5102 = vld [vmem:[%s3 + $0x38] sm:$0xf]
        %v5103 = vld [vmem:[%s3 + $0x3c] sm:$0xf]
        %v5104 = vld [vmem:[%s4] sm:$0x1]
        %v5106 = vlaneseq
        %v5107 = vshrl.u32 %v5106, 7
        %v5108 = vsub.s32 0, %v5107
        %v5109 = vrot.slane %v5104, %v5108
        %v5127 = vunpack.c.l.b16 %v5088
        %v5128 = vunpack.c.l.b16 %v5089
        %v5129 = vunpack.c.l.b16 %v5090
        %v5130 = vunpack.c.l.b16 %v5091
        %v5131 = vunpack.c.l.b16 %v5092
        %v5132 = vunpack.c.l.b16 %v5093
        %v5133 = vunpack.c.l.b16 %v5094
        %v5134 = vunpack.c.l.b16 %v5095
        %v5135 = vunpack.c.l.b16 %v5096
        %v5136 = vunpack.c.l.b16 %v5097
        %v5137 = vunpack.c.l.b16 %v5098
        %v5138 = vunpack.c.l.b16 %v5099
        %v5139 = vunpack.c.l.b16 %v5100
        %v5140 = vunpack.c.l.b16 %v5101
        %v5141 = vunpack.c.l.b16 %v5102
        %v5142 = vunpack.c.l.b16 %v5103
        %v5143 = vpack.c.b16 %v5128, %v5127
        %v5144 = vpack.c.b16 %v5130, %v5129
        %v5145 = vpack.c.b16 %v5132, %v5131
        %v5146 = vpack.c.b16 %v5134, %v5133
        %v5147 = vpack.c.b16 %v5136, %v5135
        %v5148 = vpack.c.b16 %v5138, %v5137
        %v5149 = vpack.c.b16 %v5140, %v5139
        %v5150 = vpack.c.b16 %v5142, %v5141
        %5159 = vmatprep.subr.bf16.mxu0 0
        %5160 = vmatpush1.bf16.msra.mxu0 %v5143
        %5161 = vmatprep.subr.bf16.mxu0 0
        %5162 = vmatpush1.bf16.msra.mxu0 %v5144
        %5163 = vmatprep.subr.bf16.mxu0 0
        %5164 = vmatpush1.bf16.msra.mxu0 %v5145
        %5165 = vmatprep.subr.bf16.mxu0 0
        %5166 = vmatpush1.bf16.msra.mxu0 %v5146
        %5167 = vmatprep.subr.bf16.mxu0 0
        %5168 = vmatpush1.bf16.msra.mxu0 %v5147
        %5169 = vmatprep.subr.bf16.mxu0 0
        %5170 = vmatpush1.bf16.msra.mxu0 %v5148
        %5171 = vmatprep.subr.bf16.mxu0 0
        %5172 = vmatpush1.bf16.msra.mxu0 %v5149
        %5173 = vmatprep.subr.bf16.mxu0 0
        %5174 = vmatpush1.bf16.msra.mxu0 %v5150
        %5175 = vmatprep.subr.bf16.mxu0 0
        %5176 = vmatpush1.bf16.msra.mxu0 0
        %5177 = vmatprep.subr.bf16.mxu0 0
        %5178 = vmatpush1.bf16.msra.mxu0 0
        %5179 = vmatprep.subr.bf16.mxu0 0
        %5180 = vmatpush1.bf16.msra.mxu0 0
        %5181 = vmatprep.subr.bf16.mxu0 0
        %5182 = vmatpush1.bf16.msra.mxu0 0
        %5183 = vmatprep.subr.bf16.mxu0 0
        %5184 = vmatpush1.bf16.msra.mxu0 0
        %5185 = vmatprep.subr.bf16.mxu0 0
        %5186 = vmatpush1.bf16.msra.mxu0 0
        %5187 = vmatprep.subr.bf16.mxu0 0
        %5188 = vmatpush1.bf16.msra.mxu0 0
        %5189 = vmatprep.subr.bf16.mxu0 0
        %5190 = vmatpush1.bf16.msra.mxu0 0
        %5191 = vmatprep.mubr.bf16.mxu0 0
        %5192 = vmatmul.mubr.bf16.gmra.mrb[0].mxu0 %v5072
        %v5193 = vpop.f32.mrb[0].mxu0
        %v5194 = vadd.f32 %v5109, %v5193
        %v5195 = vpop.f32.mrb[0].mxu0
        %v5196 = vpop.f32.mrb[0].mxu0
        %v5197 = vadd.f32 %v5109, %v5196
        %v5198 = vpop.f32.mrb[0].mxu0
        %5199 = vmatprep.mubr.bf16.mxu0 0
        %5200 = vmatmul.mubr.bf16.gmra.mrb[0].mxu0 %v5073
        %v5201 = vpop.f32.mrb[0].mxu0
        %v5202 = vadd.f32 %v5109, %v5201
        %v5203 = vpop.f32.mrb[0].mxu0
        %v5204 = vpop.f32.mrb[0].mxu0
        %v5205 = vadd.f32 %v5109, %v5204
        %v5206 = vpop.f32.mrb[0].mxu0
        %5207 = vmatprep.mubr.bf16.mxu0 0
        %5208 = vmatmul.mubr.bf16.gmra.mrb[0].mxu0 %v5074
        %v5209 = vpop.f32.mrb[0].mxu0
        %v5210 = vadd.f32 %v5109, %v5209
        %v5211 = vpop.f32.mrb[0].mxu0
        %v5212 = vpop.f32.mrb[0].mxu0
        %v5213 = vadd.f32 %v5109, %v5212
        %v5214 = vpop.f32.mrb[0].mxu0
        %5215 = vmatprep.mubr.bf16.mxu0 0
        %5216 = vmatmul.mubr.bf16.gmra.mrb[0].mxu0 %v5075
        %v5217 = vpop.f32.mrb[0].mxu0
        %v5218 = vadd.f32 %v5109, %v5217
        %v5219 = vpop.f32.mrb[0].mxu0
        %v5220 = vpop.f32.mrb[0].mxu0
        %v5221 = vadd.f32 %v5109, %v5220
        %v5222 = vpop.f32.mrb[0].mxu0
        %5223 = vmatprep.mubr.bf16.mxu0 0
        %5224 = vmatmul.mubr.bf16.gmra.mrb[0].mxu0 %v5076
        %v5225 = vpop.f32.mrb[0].mxu0
        %v5226 = vadd.f32 %v5109, %v5225
        %v5227 = vpop.f32.mrb[0].mxu0
        %v5228 = vpop.f32.mrb[0].mxu0
        %v5229 = vadd.f32 %v5109, %v5228
        %v5230 = vpop.f32.mrb[0].mxu0
        %5231 = vmatprep.mubr.bf16.mxu0 0
        %5232 = vmatmul.mubr.bf16.gmra.mrb[0].mxu0 %v5077
        %v5233 = vpop.f32.mrb[0].mxu0
        %v5234 = vadd.f32 %v5109, %v5233
        %v5235 = vpop.f32.mrb[0].mxu0
        %v5236 = vpop.f32.mrb[0].mxu0
        %v5237 = vadd.f32 %v5109, %v5236
        %v5238 = vpop.f32.mrb[0].mxu0
        %5239 = vmatprep.mubr.bf16.mxu0 0
        %5240 = vmatmul.mubr.bf16.gmra.mrb[0].mxu0 %v5078
        %v5241 = vpop.f32.mrb[0].mxu0
        %v5242 = vadd.f32 %v5109, %v5241
        %v5243 = vpop.f32.mrb[0].mxu0
        %v5244 = vpop.f32.mrb[0].mxu0
        %v5245 = vadd.f32 %v5109, %v5244
        %v5246 = vpop.f32.mrb[0].mxu0
        %5247 = vmatprep.mubr.bf16.mxu0 0
        %5248 = vmatmul.mubr.bf16.gmra.mrb[0].mxu0 %v5079
        %v5249 = vpop.f32.mrb[0].mxu0
        %v5250 = vadd.f32 %v5109, %v5249
        %v5251 = vpop.f32.mrb[0].mxu0
        %v5252 = vpop.f32.mrb[0].mxu0
        %v5253 = vadd.f32 %v5109, %v5252
        %v5254 = vpop.f32.mrb[0].mxu0
        %5255 = vmatprep.mubr.bf16.mxu0 0
        %5256 = vmatmul.mubr.bf16.gmra.mrb[0].mxu0 %v5080
        %v5257 = vpop.f32.mrb[0].mxu0
        %v5258 = vadd.f32 %v5109, %v5257
        %v5259 = vpop.f32.mrb[0].mxu0
        %v5260 = vpop.f32.mrb[0].mxu0
        %v5261 = vadd.f32 %v5109, %v5260
        %v5262 = vpop.f32.mrb[0].mxu0
        %5263 = vmatprep.mubr.bf16.mxu0 0
        %5264 = vmatmul.mubr.bf16.gmra.mrb[0].mxu0 %v5081
        %v5265 = vpop.f32.mrb[0].mxu0
        %v5266 = vadd.f32 %v5109, %v5265
        %v5267 = vpop.f32.mrb[0].mxu0
        %v5268 = vpop.f32.mrb[0].mxu0
        %v5269 = vadd.f32 %v5109, %v5268
        %v5270 = vpop.f32.mrb[0].mxu0
        %5271 = vmatprep.mubr.bf16.mxu0 0
        %5272 = vmatmul.mubr.bf16.gmra.mrb[0].mxu0 %v5082
        %v5273 = vpop.f32.mrb[0].mxu0
        %v5274 = vadd.f32 %v5109, %v5273
        %v5275 = vpop.f32.mrb[0].mxu0
        %v5276 = vpop.f32.mrb[0].mxu0
        %v5277 = vadd.f32 %v5109, %v5276
        %v5278 = vpop.f32.mrb[0].mxu0
        %5279 = vmatprep.mubr.bf16.mxu0 0
        %5280 = vmatmul.mubr.bf16.gmra.mrb[0].mxu0 %v5083
        %v5281 = vpop.f32.mrb[0].mxu0
        %v5282 = vadd.f32 %v5109, %v5281
        %v5283 = vpop.f32.mrb[0].mxu0
        %v5284 = vpop.f32.mrb[0].mxu0
        %v5285 = vadd.f32 %v5109, %v5284
        %v5286 = vpop.f32.mrb[0].mxu0
        %5287 = vmatprep.mubr.bf16.mxu0 0
        %5288 = vmatmul.mubr.bf16.gmra.mrb[0].mxu0 %v5084
        %v5289 = vpop.f32.mrb[0].mxu0
        %v5290 = vadd.f32 %v5109, %v5289
        %v5291 = vpop.f32.mrb[0].mxu0
        %v5292 = vpop.f32.mrb[0].mxu0
        %v5293 = vadd.f32 %v5109, %v5292
        %v5294 = vpop.f32.mrb[0].mxu0
        %5295 = vmatprep.mubr.bf16.mxu0 0
        %5296 = vmatmul.mubr.bf16.gmra.mrb[0].mxu0 %v5085
        %v5297 = vpop.f32.mrb[0].mxu0
        %v5298 = vadd.f32 %v5109, %v5297
        %v5299 = vpop.f32.mrb[0].mxu0
        %v5300 = vpop.f32.mrb[0].mxu0
        %v5301 = vadd.f32 %v5109, %v5300
        %v5302 = vpop.f32.mrb[0].mxu0
        %5303 = vmatprep.mubr.bf16.mxu0 0
        %5304 = vmatmul.mubr.bf16.gmra.mrb[0].mxu0 %v5086
        %v5305 = vpop.f32.mrb[0].mxu0
        %v5306 = vadd.f32 %v5109, %v5305
        %v5307 = vpop.f32.mrb[0].mxu0
        %v5308 = vpop.f32.mrb[0].mxu0
        %v5309 = vadd.f32 %v5109, %v5308
        %v5310 = vpop.f32.mrb[0].mxu0
        %5311 = vmatprep.mubr.bf16.mxu0 0
        %5312 = vmatmul.mubr.bf16.gmra.mrb[0].mxu0 %v5087
        %v5313 = vpop.f32.mrb[0].mxu0
        %v5314 = vadd.f32 %v5109, %v5313
        %v5315 = vpop.f32.mrb[0].mxu0
        %v5316 = vpop.f32.mrb[0].mxu0
        %v5317 = vadd.f32 %v5109, %v5316
        %v5318 = vpop.f32.mrb[0].mxu0
        %5319 = vdwg.mxu0
        %5320 = vst [vmem:[%s220] sm:$0xff] %v5194
        %5321 = vst [vmem:[%s220 + $0x8] sm:$0xff] %v5197
        %5322 = vst [vmem:[%s220 + $0x10] sm:$0xff] %v5202
        %5323 = vst [vmem:[%s220 + $0x18] sm:$0xff] %v5205
        %5324 = vst [vmem:[%s220 + $0x20] sm:$0xff] %v5210
        %5325 = vst [vmem:[%s220 + $0x28] sm:$0xff] %v5213
        %5326 = vst [vmem:[%s220 + $0x30] sm:$0xff] %v5218
        %5327 = vst [vmem:[%s220 + $0x38] sm:$0xff] %v5221
        %5328 = vst [vmem:[%s220 + $0x40] sm:$0xff] %v5226
        %5329 = vst [vmem:[%s220 + $0x48] sm:$0xff] %v5229
        %5330 = vst [vmem:[%s220 + $0x50] sm:$0xff] %v5234
        %5331 = vst [vmem:[%s220 + $0x58] sm:$0xff] %v5237
        %5332 = vst [vmem:[%s220 + $0x60] sm:$0xff] %v5242
        %5333 = vst [vmem:[%s220 + $0x68] sm:$0xff] %v5245
        %5334 = vst [vmem:[%s220 + $0x70] sm:$0xff] %v5250
        %5335 = vst [vmem:[%s220 + $0x78] sm:$0xff] %v5253
        %5336 = vst [vmem:[%s220 + $0x80] sm:$0xff] %v5258
        %5337 = vst [vmem:[%s220 + $0x88] sm:$0xff] %v5261
        %5338 = vst [vmem:[%s220 + $0x90] sm:$0xff] %v5266
        %5339 = vst [vmem:[%s220 + $0x98] sm:$0xff] %v5269
        %5340 = vst [vmem:[%s220 + $0xa0] sm:$0xff] %v5274
        %5341 = vst [vmem:[%s220 + $0xa8] sm:$0xff] %v5277
        %5342 = vst [vmem:[%s220 + $0xb0] sm:$0xff] %v5282
        %5343 = vst [vmem:[%s220 + $0xb8] sm:$0xff] %v5285
        %5344 = vst [vmem:[%s220 + $0xc0] sm:$0xff] %v5290
        %5345 = vst [vmem:[%s220 + $0xc8] sm:$0xff] %v5293
        %5346 = vst [vmem:[%s220 + $0xd0] sm:$0xff] %v5298
        %5347 = vst [vmem:[%s220 + $0xd8] sm:$0xff] %v5301
        %5348 = vst [vmem:[%s220 + $0xe0] sm:$0xff] %v5306
        %5349 = vst [vmem:[%s220 + $0xe8] sm:$0xff] %v5309
        %5350 = vst [vmem:[%s220 + $0xf0] sm:$0xff] %v5314
        %5351 = vst [vmem:[%s220 + $0xf8] sm:$0xff] %v5317
        %s5352 = sand.u32 %s137, 1
        %s5353 = scalar_lea.sflag [#allocation5], %s5352
        %s5354 = sand.u32 %s137, 1
        %s5355 = smul.addr %s5354, 256
        %s5356 = scalar_lea.vmem [#allocation4], %s5355
        // Predicated region
        $region41: #{tpu_custom_call.1} parent=39 // pred_check
          %p5357 = pneg %p147
        $region42: #{tpu_custom_call.1} parent=39 // pred_check_branch
          %5359 = sbr.rel (%p5357) target = $region44
        $region43: #{tpu_custom_call.1} parent=39 // pred_region
          %s5360 = smul.u32 2, %s19
          %s5362 = ssub.s32 4096, 4096
          %5363 = vsyncadd %s5353, %s5362
          %s5364 = smul.addr %s5360, 16
          %s5365 = smul.addr %s5364, 128
          %s5366 = scalar_lea.hbm %s5, %s5365
          %s5367 = sshll.u32 %s5356, 4
          %s5368 = int_to_ptr.vmem [resolvable:$true] %s5367
          %5373 = dma.vmem_to_hbm [thread:$0]  %s5368, 4096, %s5366, %s5353, 128, 128, 8
        $region44: #{tpu_custom_call.1} parent=39 // pred_fallthru
          _
      $region40: #{tpu_custom_call.1} parent=5 // pred_fallthru
        _
      %p5374 = scmp.le.s32.totalorder 2, %s14
      // Predicated region
      $region45: #{tpu_custom_call.1} parent=5 // pred_check
        %p5375 = pneg %p5374
      $region46: #{tpu_custom_call.1} parent=5 // pred_check_branch
        %5377 = sbr.rel (%p5375) target = $region48
      $region47: #{tpu_custom_call.1} parent=5 // pred_region
        %s5378 = ssub.s32 %s14, 2
        // Predicated region
        $region49: #{tpu_custom_call.1} parent=47 // pred_check
          %p5379 = pneg %p153
        $region50: #{tpu_custom_call.1} parent=47 // pred_check_branch
          %5381 = sbr.rel (%p5379) target = $region52
        $region51: #{tpu_custom_call.1} parent=47 // pred_region
          %s5382 = sand.u32 %s138, 1
          %s5383 = scalar_lea.sflag [#allocation5], %s5382
          %s5384 = sand.u32 %s138, 1
          %s5385 = smul.addr %s5384, 256
          %s5386 = scalar_lea.vmem [#allocation4], %s5385
          %5387 = dma.done %s5383, 4096
        $region52: #{tpu_custom_call.1} parent=47 // pred_fallthru
          _
      $region48: #{tpu_custom_call.1} parent=5 // pred_fallthru
        _
    $region6: #{tpu_custom_call.1} parent=1 // loop_footer
      %s18 = sadd.s32 1, %s14
    $region7: #{tpu_custom_call.1} parent=1 // loop_footer_branch
      %13 = sbr.rel target = $region3
    $region8: #{tpu_custom_call.1} parent=1 // loop_exit
      _
    %5388 = vsyncpa [#allocation5], 1
    %s5389 = scalar_lea.sflag [#allocation5], 1
    %5390 = vsyncpa %s5389, 1

</llo_original>
